<compile_context>
chip_gen: v7x
topology: tpu7x:2x2x1
jax: 0.10.0
libtpu: 0.0.40
codegen_flags: <defaults>
</compile_context>

<pallas_src>
import functools

import jax
import jax.numpy as jnp
from jax.experimental import pallas as pl
from jax.experimental.pallas import tpu as pltpu


def chess_mlp_kernel(x_ref, w1_ref, b1_ref, w2_ref, b2_ref, out_ref):
    """One grid step = one row tile. W1/W2/b1/b2 are VMEM-resident (constant
    index maps); fc1 -> relu -> fc2 -> softmax all happen in a single pass."""
    # fc1 + relu (bf16 operands, f32 accumulation on the MXU).
    h = jnp.dot(x_ref[...], w1_ref[...], preferred_element_type=jnp.float32)
    h = jnp.maximum(h + b1_ref[...], 0.0)
    # TODO(synk): dropout is identity in eval mode; training-mode dropout would
    # use pltpu.prng_seed / pltpu.prng_random_bits here.

    # fc2: full (hid, 4096) W2 is resident, one matmul per row tile.
    logits = (
        jnp.dot(h.astype(jnp.bfloat16), w2_ref[...],
                preferred_element_type=jnp.float32)
        + b2_ref[...]
    )

    # Row-wise softmax. approx reciprocal (EUP slot) + one Newton refinement
    # keeps sum(probs) == 1 within 1e-4.
    m = jnp.max(logits, axis=1, keepdims=True)
    e = jnp.exp(logits - m)
    denom = jnp.sum(e, axis=1, keepdims=True)
    r = pl.reciprocal(denom, approx=True)
    r = r * (2.0 - denom * r)
    out_ref[...] = e * r


def _round_up(a, b):
    return (a + b - 1) // b * b


@jax.jit
def chess_mlp_forward(board, w1, b1, w2, b2):
    """board: (B, C, H, W) float32; w1: (768, 512), w2: (512, 4096) stored
    pre-transposed as (in_features, out_features). Returns softmax probs."""
    B = board.shape[0]
    # bf16 activations + weights: halves HBM traffic; matmuls accumulate f32.
    x = board.reshape(B, -1).astype(jnp.bfloat16)
    in_f = x.shape[1]
    hid = w1.shape[1]
    out_f = w2.shape[1]

    # Row tile: multiple of 16 (bf16 sublane packing), capped at 256 (MXU width
    # on v6e/v7x). Padded rows are sliced off at the end.
    tm = min(256, _round_up(B, 16))
    b_pad = _round_up(B, tm)
    if b_pad != B:
        x = jnp.pad(x, ((0, b_pad - B), (0, 0)))

    w1b = w1.astype(jnp.bfloat16)
    w2b = w2.astype(jnp.bfloat16)
    b1_2d = b1.reshape(1, hid).astype(jnp.float32)
    b2_2d = b2.reshape(1, out_f).astype(jnp.float32)

    grid = (b_pad // tm,)

    out = pl.pallas_call(
        chess_mlp_kernel,
        out_shape=jax.ShapeDtypeStruct((b_pad, out_f), jnp.float32),
        grid_spec=pltpu.PrefetchScalarGridSpec(
            num_scalar_prefetch=0,
            grid=grid,
            in_specs=[
                pl.BlockSpec((tm, in_f), lambda m: (m, 0)),     # x row tile
                pl.BlockSpec((in_f, hid), lambda m: (0, 0)),    # W1 (resident)
                pl.BlockSpec((1, hid), lambda m: (0, 0)),       # b1 (resident)
                pl.BlockSpec((hid, out_f), lambda m: (0, 0)),   # W2 (resident)
                pl.BlockSpec((1, out_f), lambda m: (0, 0)),     # b2 (resident)
            ],
            out_specs=pl.BlockSpec((tm, out_f), lambda m: (m, 0)),
        ),
        compiler_params=pltpu.CompilerParams(
            dimension_semantics=("parallel",),
            vmem_limit_bytes=48 << 20,
        ),
    )(x, w1b, b1_2d, w2b, b2_2d)
    return out[:B]


def make_params(key, input_size=768, hidden_size=512, output_size=4096):
    """Deterministic synthetic init mimicking nn.Linear (uniform +-1/sqrt(fan_in)).
    Weights stored pre-transposed: (in_features, out_features)."""
    k1, k2, k3, k4 = jax.random.split(key, 4)
    lim1 = 1.0 / jnp.sqrt(input_size)
    lim2 = 1.0 / jnp.sqrt(hidden_size)
    w1 = jax.random.uniform(k1, (input_size, hidden_size), jnp.float32, -lim1, lim1)
    b1 = jax.random.uniform(k2, (hidden_size,), jnp.float32, -lim1, lim1)
    w2 = jax.random.uniform(k3, (hidden_size, output_size), jnp.float32, -lim2, lim2)
    b2 = jax.random.uniform(k4, (output_size,), jnp.float32, -lim2, lim2)
    return w1, b1, w2, b2


if __name__ == "__main__":
    key = jax.random.PRNGKey(0)
    k_in, k_par = jax.random.split(key)

    # Chess board encoding: 12 piece planes on an 8x8 board -> 768 features.
    B = 2
    board = jax.random.normal(k_in, (B, 12, 8, 8), dtype=jnp.float32)
    w1, b1, w2, b2 = make_params(k_par)

    probs = chess_mlp_forward(board, w1, b1, w2, b2)
    jax.block_until_ready(probs)
    assert probs.shape == (B, 4096)

    x = board.reshape(B, -1)

    # Reference with identical bf16 numerics (tight tolerance).
    xb = x.astype(jnp.bfloat16)
    hb = jnp.maximum(
        jnp.dot(xb, w1.astype(jnp.bfloat16),
                preferred_element_type=jnp.float32) + b1, 0.0)
    logits_b = jnp.dot(hb.astype(jnp.bfloat16), w2.astype(jnp.bfloat16),
                       preferred_element_type=jnp.float32) + b2
    ref_bf16 = jax.nn.softmax(logits_b, axis=1)
    assert jnp.allclose(probs, ref_bf16, atol=1e-5, rtol=1e-4)

    # Full-precision reference (looser tolerance due to bf16 inputs/weights).
    ref_f32 = jax.nn.softmax(jnp.maximum(x @ w1 + b1, 0.0) @ w2 + b2, axis=1)
    assert jnp.allclose(probs, ref_f32, atol=1e-4, rtol=2e-2)

    assert jnp.allclose(jnp.sum(probs, axis=1), 1.0, atol=1e-4)
    assert bool(jnp.all(jnp.isfinite(probs)))

    print("KERNEL_OK")
</pallas_src>

<mosaic_0001>
module attributes {stable_mosaic.version = 11 : i64} {
  func.func @chess_mlp_kernel(%arg0: i32, %arg1: memref<16x768xbf16, #tpu.memory_space<vmem>>, %arg2: memref<768x512xbf16, #tpu.memory_space<vmem>>, %arg3: memref<1x512xf32, #tpu.memory_space<vmem>>, %arg4: memref<512x4096xbf16, #tpu.memory_space<vmem>>, %arg5: memref<1x4096xf32, #tpu.memory_space<vmem>>, %arg6: memref<16x4096xf32, #tpu.memory_space<vmem>>) attributes {dimension_semantics = [#tpu.dimension_semantics<parallel>], iteration_bounds = array<i64: 1>, scalar_prefetch = 0 : i64, scratch_operands = 0 : i64, tpu.core_type = #tpu.core_type<tc>, window_params = [{transform_indices = @transform_0, window_bounds = array<i64: 16, 768>}, {pipeline_mode = #tpu.pipeline_mode<synchronous>, transform_indices = @transform_1, window_bounds = array<i64: 768, 512>}, {pipeline_mode = #tpu.pipeline_mode<synchronous>, transform_indices = @transform_2, window_bounds = array<i64: 1, 512>}, {pipeline_mode = #tpu.pipeline_mode<synchronous>, transform_indices = @transform_3, window_bounds = array<i64: 512, 4096>}, {pipeline_mode = #tpu.pipeline_mode<synchronous>, transform_indices = @transform_4, window_bounds = array<i64: 1, 4096>}, {transform_indices = @transform_5, window_bounds = array<i64: 16, 4096>}]} {
    %c0 = arith.constant 0 : index
    %c0_0 = arith.constant 0 : index
    %0 = vector.load %arg1[%c0, %c0_0] : memref<16x768xbf16, #tpu.memory_space<vmem>>, vector<16x768xbf16>
    %c0_1 = arith.constant 0 : index
    %c0_2 = arith.constant 0 : index
    %1 = vector.load %arg2[%c0_1, %c0_2] : memref<768x512xbf16, #tpu.memory_space<vmem>>, vector<768x512xbf16>
    %cst = arith.constant dense<0.000000e+00> : vector<16x512xf32>
    %2 = tpu.matmul %0, %1, %cst {dimension_numbers = #tpu.dot_dimension_numbers<[1], [0], [0], [1], [0, 0, 1, 1], [], []>} : vector<16x768xbf16>, vector<768x512xbf16>, vector<16x512xf32> -> vector<16x512xf32>
    %c0_3 = arith.constant 0 : index
    %c0_4 = arith.constant 0 : index
    %3 = vector.load %arg3[%c0_3, %c0_4] : memref<1x512xf32, #tpu.memory_space<vmem>>, vector<1x512xf32>
    %4 = vector.broadcast %3 : vector<1x512xf32> to vector<16x512xf32>
    %5 = arith.addf %2, %4 : vector<16x512xf32>
    %cst_5 = arith.constant 0.000000e+00 : f32
    %6 = vector.broadcast %cst_5 : f32 to vector<16x512xf32>
    %7 = arith.maximumf %5, %6 : vector<16x512xf32>
    %8 = arith.truncf %7 : vector<16x512xf32> to vector<16x512xbf16>
    %c0_6 = arith.constant 0 : index
    %c0_7 = arith.constant 0 : index
    %9 = vector.load %arg4[%c0_6, %c0_7] : memref<512x4096xbf16, #tpu.memory_space<vmem>>, vector<512x4096xbf16>
    %cst_8 = arith.constant dense<0.000000e+00> : vector<16x4096xf32>
    %10 = tpu.matmul %8, %9, %cst_8 {dimension_numbers = #tpu.dot_dimension_numbers<[1], [0], [0], [1], [0, 0, 1, 1], [], []>} : vector<16x512xbf16>, vector<512x4096xbf16>, vector<16x4096xf32> -> vector<16x4096xf32>
    %c0_9 = arith.constant 0 : index
    %c0_10 = arith.constant 0 : index
    %11 = vector.load %arg5[%c0_9, %c0_10] : memref<1x4096xf32, #tpu.memory_space<vmem>>, vector<1x4096xf32>
    %12 = vector.broadcast %11 : vector<1x4096xf32> to vector<16x4096xf32>
    %13 = arith.addf %10, %12 : vector<16x4096xf32>
    %cst_11 = arith.constant dense<0xFF800000> : vector<16xf32>
    %14 = vector.multi_reduction <maximumf>, %13, %cst_11 [1] : vector<16x4096xf32> to vector<16xf32>
    %15 = vector.shape_cast %14 : vector<16xf32> to vector<16x1xf32>
    %16 = vector.broadcast %15 : vector<16x1xf32> to vector<16x4096xf32>
    %17 = arith.subf %13, %16 : vector<16x4096xf32>
    %18 = math.exp %17 : vector<16x4096xf32>
    %cst_12 = arith.constant dense<0.000000e+00> : vector<16xf32>
    %19 = vector.multi_reduction <add>, %18, %cst_12 [1] : vector<16x4096xf32> to vector<16xf32>
    %20 = vector.shape_cast %19 : vector<16xf32> to vector<16x1xf32>
    %21 = tpu.reciprocal %20 {approx = true} : vector<16x1xf32> -> vector<16x1xf32>
    %22 = arith.mulf %20, %21 : vector<16x1xf32>
    %cst_13 = arith.constant 2.000000e+00 : f32
    %23 = vector.broadcast %cst_13 : f32 to vector<16x1xf32>
    %24 = arith.subf %23, %22 : vector<16x1xf32>
    %25 = arith.mulf %21, %24 : vector<16x1xf32>
    %26 = vector.broadcast %25 : vector<16x1xf32> to vector<16x4096xf32>
    %27 = arith.mulf %18, %26 : vector<16x4096xf32>
    %c0_14 = arith.constant 0 : index
    %c0_15 = arith.constant 0 : index
    %28 = vector.load %arg6[%c0_14, %c0_15] : memref<16x4096xf32, #tpu.memory_space<vmem>>, vector<16x4096xf32>
    tpu.vector_store %arg6[%c0_14, %c0_15], %27 {strides = array<i32>} : memref<16x4096xf32, #tpu.memory_space<vmem>>, vector<16x4096xf32>,
    return
  }
  func.func @transform_0(%arg0: i32) -> (i32, i32) {
    %c0_i32 = arith.constant 0 : i32
    %c0_i32_0 = arith.constant 0 : i32
    return %arg0, %c0_i32 : i32, i32
  }
  func.func @transform_1(%arg0: i32) -> (i32, i32) {
    %c0_i32 = arith.constant 0 : i32
    %c0_i32_0 = arith.constant 0 : i32
    %c0_i32_1 = arith.constant 0 : i32
    return %c0_i32, %c0_i32_0 : i32, i32
  }
  func.func @transform_2(%arg0: i32) -> (i32, i32) {
    %c0_i32 = arith.constant 0 : i32
    %c0_i32_0 = arith.constant 0 : i32
    %c0_i32_1 = arith.constant 0 : i32
    return %c0_i32, %c0_i32_0 : i32, i32
  }
  func.func @transform_3(%arg0: i32) -> (i32, i32) {
    %c0_i32 = arith.constant 0 : i32
    %c0_i32_0 = arith.constant 0 : i32
    %c0_i32_1 = arith.constant 0 : i32
    return %c0_i32, %c0_i32_0 : i32, i32
  }
  func.func @transform_4(%arg0: i32) -> (i32, i32) {
    %c0_i32 = arith.constant 0 : i32
    %c0_i32_0 = arith.constant 0 : i32
    %c0_i32_1 = arith.constant 0 : i32
    return %c0_i32, %c0_i32_0 : i32, i32
  }
  func.func @transform_5(%arg0: i32) -> (i32, i32) {
    %c0_i32 = arith.constant 0 : i32
    %c0_i32_0 = arith.constant 0 : i32
    return %arg0, %c0_i32 : i32, i32
  }
}

</mosaic_0001>

<llo_original>
// kernel: chess_mlp_forward.1
$region0: #{chess_mlp_forward.1}
  #allocation0 [shape = 'u32[]', space=smem, size = 0x4, offset = 0x4, fixed_abs, tag = 'smem constant byte address 0x4 - core index']
  #allocation1 [shape = 'u32[144,128]{1,0:T(1,128)}', space=vmem, size = 0x12000, scoped, tag = 'internal scratch']
  %s0 = inlined_call_operand.vmem [shape: bf16[16,768], index: 0, kind: input, shape index: {}]
  %s1 = inlined_call_operand.vmem [shape: bf16[768,512], index: 1, kind: input, shape index: {}]
  %s2 = inlined_call_operand.vmem [shape: f32[1,512], index: 2, kind: input, shape index: {}]
  %s3 = inlined_call_operand.vmem [shape: bf16[512,4096], index: 3, kind: input, shape index: {}]
  %s4 = inlined_call_operand.vmem [shape: f32[1,4096], index: 4, kind: input, shape index: {}]
  %s5 = inlined_call_operand.vmem [shape: f32[16,4096], index: 5, kind: output, shape index: {}]
  %s6 = sld [smem:[#allocation0]]
  $region30: #{chess_mlp_forward.1} parent=0
    _
  %s8 = ssub.s32 1, %s6
  %s9 = scalar_select 0, %s8, %s6
  // Predicated region
  $region2: #{chess_mlp_forward.1} parent=0 // pred_check
    _
  $region3: #{chess_mlp_forward.1} parent=0 // pred_check_branch
    %11 = sbr.rel (0) target = $region5
  $region4: #{chess_mlp_forward.1} parent=0 // pred_region
    _
  $region5: #{chess_mlp_forward.1} parent=0 // pred_fallthru
    _
  // Predicated region
  $region6: #{chess_mlp_forward.1} parent=0 // pred_check
    _
  $region7: #{chess_mlp_forward.1} parent=0 // pred_check_branch
    %13 = sbr.rel (0) target = $region9
  $region8: #{chess_mlp_forward.1} parent=0 // pred_region
    _
  $region9: #{chess_mlp_forward.1} parent=0 // pred_fallthru
    _
  // Predicated region
  $region10: #{chess_mlp_forward.1} parent=0 // pred_check
    _
  $region11: #{chess_mlp_forward.1} parent=0 // pred_check_branch
    %15 = sbr.rel (0) target = $region13
  $region12: #{chess_mlp_forward.1} parent=0 // pred_region
    _
  $region13: #{chess_mlp_forward.1} parent=0 // pred_fallthru
    _
  // Predicated region
  $region14: #{chess_mlp_forward.1} parent=0 // pred_check
    _
  $region15: #{chess_mlp_forward.1} parent=0 // pred_check_branch
    %17 = sbr.rel (0) target = $region17
  $region16: #{chess_mlp_forward.1} parent=0 // pred_region
    _
  $region17: #{chess_mlp_forward.1} parent=0 // pred_fallthru
    _
  // Predicated region
  $region18: #{chess_mlp_forward.1} parent=0 // pred_check
    _
  $region19: #{chess_mlp_forward.1} parent=0 // pred_check_branch
    %19 = sbr.rel (0) target = $region21
  $region20: #{chess_mlp_forward.1} parent=0 // pred_region
    _
  $region21: #{chess_mlp_forward.1} parent=0 // pred_fallthru
    _
  %v20 = vld [vmem:[%s0] sm:$0xff]
  %v21 = vld [vmem:[%s0 + $0x8] sm:$0xff]
  %v22 = vld [vmem:[%s0 + $0x10] sm:$0xff]
  %v23 = vld [vmem:[%s0 + $0x18] sm:$0xff]
  %v24 = vld [vmem:[%s0 + $0x20] sm:$0xff]
  %v25 = vld [vmem:[%s0 + $0x28] sm:$0xff]
  %v26 = vld [vmem:[%s1] sm:$0xff]
  %v27 = vld [vmem:[%s1 + $0x8] sm:$0xff]
  %v28 = vld [vmem:[%s1 + $0x10] sm:$0xff]
  %v29 = vld [vmem:[%s1 + $0x18] sm:$0xff]
  %v30 = vld [vmem:[%s1 + $0x20] sm:$0xff]
  %v31 = vld [vmem:[%s1 + $0x28] sm:$0xff]
  %v32 = vld [vmem:[%s1 + $0x30] sm:$0xff]
  %v33 = vld [vmem:[%s1 + $0x38] sm:$0xff]
  %v34 = vld [vmem:[%s1 + $0x40] sm:$0xff]
  %v35 = vld [vmem:[%s1 + $0x48] sm:$0xff]
  %v36 = vld [vmem:[%s1 + $0x50] sm:$0xff]
  %v37 = vld [vmem:[%s1 + $0x58] sm:$0xff]
  %v38 = vld [vmem:[%s1 + $0x60] sm:$0xff]
  %v39 = vld [vmem:[%s1 + $0x68] sm:$0xff]
  %v40 = vld [vmem:[%s1 + $0x70] sm:$0xff]
  %v41 = vld [vmem:[%s1 + $0x78] sm:$0xff]
  %v42 = vld [vmem:[%s1 + $0x80] sm:$0xff]
  %v43 = vld [vmem:[%s1 + $0x88] sm:$0xff]
  %v44 = vld [vmem:[%s1 + $0x90] sm:$0xff]
  %v45 = vld [vmem:[%s1 + $0x98] sm:$0xff]
  %v46 = vld [vmem:[%s1 + $0xa0] sm:$0xff]
  %v47 = vld [vmem:[%s1 + $0xa8] sm:$0xff]
  %v48 = vld [vmem:[%s1 + $0xb0] sm:$0xff]
  %v49 = vld [vmem:[%s1 + $0xb8] sm:$0xff]
  %v50 = vld [vmem:[%s1 + $0xc0] sm:$0xff]
  %v51 = vld [vmem:[%s1 + $0xc8] sm:$0xff]
  %v52 = vld [vmem:[%s1 + $0xd0] sm:$0xff]
  %v53 = vld [vmem:[%s1 + $0xd8] sm:$0xff]
  %v54 = vld [vmem:[%s1 + $0xe0] sm:$0xff]
  %v55 = vld [vmem:[%s1 + $0xe8] sm:$0xff]
  %v56 = vld [vmem:[%s1 + $0xf0] sm:$0xff]
  %v57 = vld [vmem:[%s1 + $0xf8] sm:$0xff]
  %v58 = vld [vmem:[%s1 + $0x100] sm:$0xff]
  %v59 = vld [vmem:[%s1 + $0x108] sm:$0xff]
  %v60 = vld [vmem:[%s1 + $0x110] sm:$0xff]
  %v61 = vld [vmem:[%s1 + $0x118] sm:$0xff]
  %v62 = vld [vmem:[%s1 + $0x120] sm:$0xff]
  %v63 = vld [vmem:[%s1 + $0x128] sm:$0xff]
  %v64 = vld [vmem:[%s1 + $0x130] sm:$0xff]
  %v65 = vld [vmem:[%s1 + $0x138] sm:$0xff]
  %v66 = vld [vmem:[%s1 + $0x140] sm:$0xff]
  %v67 = vld [vmem:[%s1 + $0x148] sm:$0xff]
  %v68 = vld [vmem:[%s1 + $0x150] sm:$0xff]
  %v69 = vld [vmem:[%s1 + $0x158] sm:$0xff]
  %v70 = vld [vmem:[%s1 + $0x160] sm:$0xff]
  %v71 = vld [vmem:[%s1 + $0x168] sm:$0xff]
  %v72 = vld [vmem:[%s1 + $0x170] sm:$0xff]
  %v73 = vld [vmem:[%s1 + $0x178] sm:$0xff]
  %v74 = vld [vmem:[%s1 + $0x180] sm:$0xff]
  %v75 = vld [vmem:[%s1 + $0x188] sm:$0xff]
  %v76 = vld [vmem:[%s1 + $0x190] sm:$0xff]
  %v77 = vld [vmem:[%s1 + $0x198] sm:$0xff]
  %v78 = vld [vmem:[%s1 + $0x1a0] sm:$0xff]
  %v79 = vld [vmem:[%s1 + $0x1a8] sm:$0xff]
  %v80 = vld [vmem:[%s1 + $0x1b0] sm:$0xff]
  %v81 = vld [vmem:[%s1 + $0x1b8] sm:$0xff]
  %v82 = vld [vmem:[%s1 + $0x1c0] sm:$0xff]
  %v83 = vld [vmem:[%s1 + $0x1c8] sm:$0xff]
  %v84 = vld [vmem:[%s1 + $0x1d0] sm:$0xff]
  %v85 = vld [vmem:[%s1 + $0x1d8] sm:$0xff]
  %v86 = vld [vmem:[%s1 + $0x1e0] sm:$0xff]
  %v87 = vld [vmem:[%s1 + $0x1e8] sm:$0xff]
  %v88 = vld [vmem:[%s1 + $0x1f0] sm:$0xff]
  %v89 = vld [vmem:[%s1 + $0x1f8] sm:$0xff]
  %v90 = vld [vmem:[%s1 + $0x200] sm:$0xff]
  %v91 = vld [vmem:[%s1 + $0x208] sm:$0xff]
  %v92 = vld [vmem:[%s1 + $0x210] sm:$0xff]
  %v93 = vld [vmem:[%s1 + $0x218] sm:$0xff]
  %v94 = vld [vmem:[%s1 + $0x220] sm:$0xff]
  %v95 = vld [vmem:[%s1 + $0x228] sm:$0xff]
  %v96 = vld [vmem:[%s1 + $0x230] sm:$0xff]
  %v97 = vld [vmem:[%s1 + $0x238] sm:$0xff]
  %v98 = vld [vmem:[%s1 + $0x240] sm:$0xff]
  %v99 = vld [vmem:[%s1 + $0x248] sm:$0xff]
  %v100 = vld [vmem:[%s1 + $0x250] sm:$0xff]
  %v101 = vld [vmem:[%s1 + $0x258] sm:$0xff]
  %v102 = vld [vmem:[%s1 + $0x260] sm:$0xff]
  %v103 = vld [vmem:[%s1 + $0x268] sm:$0xff]
  %v104 = vld [vmem:[%s1 + $0x270] sm:$0xff]
  %v105 = vld [vmem:[%s1 + $0x278] sm:$0xff]
  %v106 = vld [vmem:[%s1 + $0x280] sm:$0xff]
  %v107 = vld [vmem:[%s1 + $0x288] sm:$0xff]
  %v108 = vld [vmem:[%s1 + $0x290] sm:$0xff]
  %v109 = vld [vmem:[%s1 + $0x298] sm:$0xff]
  %v110 = vld [vmem:[%s1 + $0x2a0] sm:$0xff]
  %v111 = vld [vmem:[%s1 + $0x2a8] sm:$0xff]
  %v112 = vld [vmem:[%s1 + $0x2b0] sm:$0xff]
  %v113 = vld [vmem:[%s1 + $0x2b8] sm:$0xff]
  %v114 = vld [vmem:[%s1 + $0x2c0] sm:$0xff]
  %v115 = vld [vmem:[%s1 + $0x2c8] sm:$0xff]
  %v116 = vld [vmem:[%s1 + $0x2d0] sm:$0xff]
  %v117 = vld [vmem:[%s1 + $0x2d8] sm:$0xff]
  %v118 = vld [vmem:[%s1 + $0x2e0] sm:$0xff]
  %v119 = vld [vmem:[%s1 + $0x2e8] sm:$0xff]
  %v120 = vld [vmem:[%s1 + $0x2f0] sm:$0xff]
  %v121 = vld [vmem:[%s1 + $0x2f8] sm:$0xff]
  %v122 = vld [vmem:[%s1 + $0x300] sm:$0xff]
  %v123 = vld [vmem:[%s1 + $0x308] sm:$0xff]
  %v124 = vld [vmem:[%s1 + $0x310] sm:$0xff]
  %v125 = vld [vmem:[%s1 + $0x318] sm:$0xff]
  %v126 = vld [vmem:[%s1 + $0x320] sm:$0xff]
  %v127 = vld [vmem:[%s1 + $0x328] sm:$0xff]
  %v128 = vld [vmem:[%s1 + $0x330] sm:$0xff]
  %v129 = vld [vmem:[%s1 + $0x338] sm:$0xff]
  %v130 = vld [vmem:[%s1 + $0x340] sm:$0xff]
  %v131 = vld [vmem:[%s1 + $0x348] sm:$0xff]
  %v132 = vld [vmem:[%s1 + $0x350] sm:$0xff]
  %v133 = vld [vmem:[%s1 + $0x358] sm:$0xff]
  %v134 = vld [vmem:[%s1 + $0x360] sm:$0xff]
  %v135 = vld [vmem:[%s1 + $0x368] sm:$0xff]
  %v136 = vld [vmem:[%s1 + $0x370] sm:$0xff]
  %v137 = vld [vmem:[%s1 + $0x378] sm:$0xff]
  %v138 = vld [vmem:[%s1 + $0x380] sm:$0xff]
  %v139 = vld [vmem:[%s1 + $0x388] sm:$0xff]
  %v140 = vld [vmem:[%s1 + $0x390] sm:$0xff]
  %v141 = vld [vmem:[%s1 + $0x398] sm:$0xff]
  %v142 = vld [vmem:[%s1 + $0x3a0] sm:$0xff]
  %v143 = vld [vmem:[%s1 + $0x3a8] sm:$0xff]
  %v144 = vld [vmem:[%s1 + $0x3b0] sm:$0xff]
  %v145 = vld [vmem:[%s1 + $0x3b8] sm:$0xff]
  %v146 = vld [vmem:[%s1 + $0x3c0] sm:$0xff]
  %v147 = vld [vmem:[%s1 + $0x3c8] sm:$0xff]
  %v148 = vld [vmem:[%s1 + $0x3d0] sm:$0xff]
  %v149 = vld [vmem:[%s1 + $0x3d8] sm:$0xff]
  %v150 = vld [vmem:[%s1 + $0x3e0] sm:$0xff]
  %v151 = vld [vmem:[%s1 + $0x3e8] sm:$0xff]
  %v152 = vld [vmem:[%s1 + $0x3f0] sm:$0xff]
  %v153 = vld [vmem:[%s1 + $0x3f8] sm:$0xff]
  %v154 = vld [vmem:[%s1 + $0x400] sm:$0xff]
  %v155 = vld [vmem:[%s1 + $0x408] sm:$0xff]
  %v156 = vld [vmem:[%s1 + $0x410] sm:$0xff]
  %v157 = vld [vmem:[%s1 + $0x418] sm:$0xff]
  %v158 = vld [vmem:[%s1 + $0x420] sm:$0xff]
  %v159 = vld [vmem:[%s1 + $0x428] sm:$0xff]
  %v160 = vld [vmem:[%s1 + $0x430] sm:$0xff]
  %v161 = vld [vmem:[%s1 + $0x438] sm:$0xff]
  %v162 = vld [vmem:[%s1 + $0x440] sm:$0xff]
  %v163 = vld [vmem:[%s1 + $0x448] sm:$0xff]
  %v164 = vld [vmem:[%s1 + $0x450] sm:$0xff]
  %v165 = vld [vmem:[%s1 + $0x458] sm:$0xff]
  %v166 = vld [vmem:[%s1 + $0x460] sm:$0xff]
  %v167 = vld [vmem:[%s1 + $0x468] sm:$0xff]
  %v168 = vld [vmem:[%s1 + $0x470] sm:$0xff]
  %v169 = vld [vmem:[%s1 + $0x478] sm:$0xff]
  %v170 = vld [vmem:[%s1 + $0x480] sm:$0xff]
  %v171 = vld [vmem:[%s1 + $0x488] sm:$0xff]
  %v172 = vld [vmem:[%s1 + $0x490] sm:$0xff]
  %v173 = vld [vmem:[%s1 + $0x498] sm:$0xff]
  %v174 = vld [vmem:[%s1 + $0x4a0] sm:$0xff]
  %v175 = vld [vmem:[%s1 + $0x4a8] sm:$0xff]
  %v176 = vld [vmem:[%s1 + $0x4b0] sm:$0xff]
  %v177 = vld [vmem:[%s1 + $0x4b8] sm:$0xff]
  %v178 = vld [vmem:[%s1 + $0x4c0] sm:$0xff]
  %v179 = vld [vmem:[%s1 + $0x4c8] sm:$0xff]
  %v180 = vld [vmem:[%s1 + $0x4d0] sm:$0xff]
  %v181 = vld [vmem:[%s1 + $0x4d8] sm:$0xff]
  %v182 = vld [vmem:[%s1 + $0x4e0] sm:$0xff]
  %v183 = vld [vmem:[%s1 + $0x4e8] sm:$0xff]
  %v184 = vld [vmem:[%s1 + $0x4f0] sm:$0xff]
  %v185 = vld [vmem:[%s1 + $0x4f8] sm:$0xff]
  %v186 = vld [vmem:[%s1 + $0x500] sm:$0xff]
  %v187 = vld [vmem:[%s1 + $0x508] sm:$0xff]
  %v188 = vld [vmem:[%s1 + $0x510] sm:$0xff]
  %v189 = vld [vmem:[%s1 + $0x518] sm:$0xff]
  %v190 = vld [vmem:[%s1 + $0x520] sm:$0xff]
  %v191 = vld [vmem:[%s1 + $0x528] sm:$0xff]
  %v192 = vld [vmem:[%s1 + $0x530] sm:$0xff]
  %v193 = vld [vmem:[%s1 + $0x538] sm:$0xff]
  %v194 = vld [vmem:[%s1 + $0x540] sm:$0xff]
  %v195 = vld [vmem:[%s1 + $0x548] sm:$0xff]
  %v196 = vld [vmem:[%s1 + $0x550] sm:$0xff]
  %v197 = vld [vmem:[%s1 + $0x558] sm:$0xff]
  %v198 = vld [vmem:[%s1 + $0x560] sm:$0xff]
  %v199 = vld [vmem:[%s1 + $0x568] sm:$0xff]
  %v200 = vld [vmem:[%s1 + $0x570] sm:$0xff]
  %v201 = vld [vmem:[%s1 + $0x578] sm:$0xff]
  %v202 = vld [vmem:[%s1 + $0x580] sm:$0xff]
  %v203 = vld [vmem:[%s1 + $0x588] sm:$0xff]
  %v204 = vld [vmem:[%s1 + $0x590] sm:$0xff]
  %v205 = vld [vmem:[%s1 + $0x598] sm:$0xff]
  %v206 = vld [vmem:[%s1 + $0x5a0] sm:$0xff]
  %v207 = vld [vmem:[%s1 + $0x5a8] sm:$0xff]
  %v208 = vld [vmem:[%s1 + $0x5b0] sm:$0xff]
  %v209 = vld [vmem:[%s1 + $0x5b8] sm:$0xff]
  %v210 = vld [vmem:[%s1 + $0x5c0] sm:$0xff]
  %v211 = vld [vmem:[%s1 + $0x5c8] sm:$0xff]
  %v212 = vld [vmem:[%s1 + $0x5d0] sm:$0xff]
  %v213 = vld [vmem:[%s1 + $0x5d8] sm:$0xff]
  %v214 = vld [vmem:[%s1 + $0x5e0] sm:$0xff]
  %v215 = vld [vmem:[%s1 + $0x5e8] sm:$0xff]
  %v216 = vld [vmem:[%s1 + $0x5f0] sm:$0xff]
  %v217 = vld [vmem:[%s1 + $0x5f8] sm:$0xff]
  %v218 = vld [vmem:[%s2] sm:$0xf]
  %v220 = vlaneseq
  %v221 = vshrl.u32 %v220, 7
  %v222 = vsub.s32 0, %v221
  %v223 = vrot.slane %v218, %v222
  %v224 = vlaneseq
  %v225 = vshrl.u32 %v224, 7
  %v226 = vsub.s32 1, %v225
  %v227 = vrot.slane %v218, %v226
  %v228 = vlaneseq
  %v229 = vshrl.u32 %v228, 7
  %v230 = vsub.s32 2, %v229
  %v231 = vrot.slane %v218, %v230
  %v232 = vlaneseq
  %v233 = vshrl.u32 %v232, 7
  %v234 = vsub.s32 3, %v233
  %v235 = vrot.slane %v218, %v234
  %v246 = vunpack.c.l.b16 %v20
  %v247 = vunpack.c.h.b16 %v20
  %v248 = vunpack.c.l.b16 %v21
  %v249 = vunpack.c.h.b16 %v21
  %v250 = vunpack.c.l.b16 %v22
  %v251 = vunpack.c.h.b16 %v22
  %v252 = vunpack.c.l.b16 %v23
  %v253 = vunpack.c.h.b16 %v23
  %v254 = vunpack.c.l.b16 %v24
  %v255 = vunpack.c.h.b16 %v24
  %v256 = vunpack.c.l.b16 %v25
  %v257 = vunpack.c.h.b16 %v25
  %v258 = vpack.c.b16 %v252, %v246
  %v259 = vpack.c.b16 %v253, %v247
  %v260 = vpack.c.b16 %v254, %v248
  %v261 = vpack.c.b16 %v255, %v249
  %v262 = vpack.c.b16 %v256, %v250
  %v263 = vpack.c.b16 %v257, %v251
  %v462 = vunpack.c.l.b16 %v26
  %v463 = vunpack.c.h.b16 %v26
  %v464 = vunpack.c.l.b16 %v27
  %v465 = vunpack.c.h.b16 %v27
  %v466 = vunpack.c.l.b16 %v28
  %v467 = vunpack.c.h.b16 %v28
  %v468 = vunpack.c.l.b16 %v29
  %v469 = vunpack.c.h.b16 %v29
  %v470 = vunpack.c.l.b16 %v30
  %v471 = vunpack.c.h.b16 %v30
  %v472 = vunpack.c.l.b16 %v31
  %v473 = vunpack.c.h.b16 %v31
  %v474 = vunpack.c.l.b16 %v32
  %v475 = vunpack.c.h.b16 %v32
  %v476 = vunpack.c.l.b16 %v33
  %v477 = vunpack.c.h.b16 %v33
  %v478 = vunpack.c.l.b16 %v34
  %v479 = vunpack.c.h.b16 %v34
  %v480 = vunpack.c.l.b16 %v35
  %v481 = vunpack.c.h.b16 %v35
  %v482 = vunpack.c.l.b16 %v36
  %v483 = vunpack.c.h.b16 %v36
  %v484 = vunpack.c.l.b16 %v37
  %v485 = vunpack.c.h.b16 %v37
  %v486 = vunpack.c.l.b16 %v38
  %v487 = vunpack.c.h.b16 %v38
  %v488 = vunpack.c.l.b16 %v39
  %v489 = vunpack.c.h.b16 %v39
  %v490 = vunpack.c.l.b16 %v40
  %v491 = vunpack.c.h.b16 %v40
  %v492 = vunpack.c.l.b16 %v41
  %v493 = vunpack.c.h.b16 %v41
  %v494 = vunpack.c.l.b16 %v42
  %v495 = vunpack.c.h.b16 %v42
  %v496 = vunpack.c.l.b16 %v43
  %v497 = vunpack.c.h.b16 %v43
  %v498 = vunpack.c.l.b16 %v44
  %v499 = vunpack.c.h.b16 %v44
  %v500 = vunpack.c.l.b16 %v45
  %v501 = vunpack.c.h.b16 %v45
  %v502 = vunpack.c.l.b16 %v46
  %v503 = vunpack.c.h.b16 %v46
  %v504 = vunpack.c.l.b16 %v47
  %v505 = vunpack.c.h.b16 %v47
  %v506 = vunpack.c.l.b16 %v48
  %v507 = vunpack.c.h.b16 %v48
  %v508 = vunpack.c.l.b16 %v49
  %v509 = vunpack.c.h.b16 %v49
  %v510 = vunpack.c.l.b16 %v50
  %v511 = vunpack.c.h.b16 %v50
  %v512 = vunpack.c.l.b16 %v51
  %v513 = vunpack.c.h.b16 %v51
  %v514 = vunpack.c.l.b16 %v52
  %v515 = vunpack.c.h.b16 %v52
  %v516 = vunpack.c.l.b16 %v53
  %v517 = vunpack.c.h.b16 %v53
  %v518 = vunpack.c.l.b16 %v54
  %v519 = vunpack.c.h.b16 %v54
  %v520 = vunpack.c.l.b16 %v55
  %v521 = vunpack.c.h.b16 %v55
  %v522 = vunpack.c.l.b16 %v56
  %v523 = vunpack.c.h.b16 %v56
  %v524 = vunpack.c.l.b16 %v57
  %v525 = vunpack.c.h.b16 %v57
  %v526 = vunpack.c.l.b16 %v58
  %v527 = vunpack.c.h.b16 %v58
  %v528 = vunpack.c.l.b16 %v59
  %v529 = vunpack.c.h.b16 %v59
  %v530 = vunpack.c.l.b16 %v60
  %v531 = vunpack.c.h.b16 %v60
  %v532 = vunpack.c.l.b16 %v61
  %v533 = vunpack.c.h.b16 %v61
  %v534 = vunpack.c.l.b16 %v62
  %v535 = vunpack.c.h.b16 %v62
  %v536 = vunpack.c.l.b16 %v63
  %v537 = vunpack.c.h.b16 %v63
  %v538 = vunpack.c.l.b16 %v64
  %v539 = vunpack.c.h.b16 %v64
  %v540 = vunpack.c.l.b16 %v65
  %v541 = vunpack.c.h.b16 %v65
  %v542 = vunpack.c.l.b16 %v66
  %v543 = vunpack.c.h.b16 %v66
  %v544 = vunpack.c.l.b16 %v67
  %v545 = vunpack.c.h.b16 %v67
  %v546 = vunpack.c.l.b16 %v68
  %v547 = vunpack.c.h.b16 %v68
  %v548 = vunpack.c.l.b16 %v69
  %v549 = vunpack.c.h.b16 %v69
  %v550 = vunpack.c.l.b16 %v70
  %v551 = vunpack.c.h.b16 %v70
  %v552 = vunpack.c.l.b16 %v71
  %v553 = vunpack.c.h.b16 %v71
  %v554 = vunpack.c.l.b16 %v72
  %v555 = vunpack.c.h.b16 %v72
  %v556 = vunpack.c.l.b16 %v73
  %v557 = vunpack.c.h.b16 %v73
  %v558 = vunpack.c.l.b16 %v74
  %v559 = vunpack.c.h.b16 %v74
  %v560 = vunpack.c.l.b16 %v75
  %v561 = vunpack.c.h.b16 %v75
  %v562 = vunpack.c.l.b16 %v76
  %v563 = vunpack.c.h.b16 %v76
  %v564 = vunpack.c.l.b16 %v77
  %v565 = vunpack.c.h.b16 %v77
  %v566 = vunpack.c.l.b16 %v78
  %v567 = vunpack.c.h.b16 %v78
  %v568 = vunpack.c.l.b16 %v79
  %v569 = vunpack.c.h.b16 %v79
  %v570 = vunpack.c.l.b16 %v80
  %v571 = vunpack.c.h.b16 %v80
  %v572 = vunpack.c.l.b16 %v81
  %v573 = vunpack.c.h.b16 %v81
  %v574 = vunpack.c.l.b16 %v82
  %v575 = vunpack.c.h.b16 %v82
  %v576 = vunpack.c.l.b16 %v83
  %v577 = vunpack.c.h.b16 %v83
  %v578 = vunpack.c.l.b16 %v84
  %v579 = vunpack.c.h.b16 %v84
  %v580 = vunpack.c.l.b16 %v85
  %v581 = vunpack.c.h.b16 %v85
  %v582 = vunpack.c.l.b16 %v86
  %v583 = vunpack.c.h.b16 %v86
  %v584 = vunpack.c.l.b16 %v87
  %v585 = vunpack.c.h.b16 %v87
  %v586 = vunpack.c.l.b16 %v88
  %v587 = vunpack.c.h.b16 %v88
  %v588 = vunpack.c.l.b16 %v89
  %v589 = vunpack.c.h.b16 %v89
  %v590 = vunpack.c.l.b16 %v90
  %v591 = vunpack.c.h.b16 %v90
  %v592 = vunpack.c.l.b16 %v91
  %v593 = vunpack.c.h.b16 %v91
  %v594 = vunpack.c.l.b16 %v92
  %v595 = vunpack.c.h.b16 %v92
  %v596 = vunpack.c.l.b16 %v93
  %v597 = vunpack.c.h.b16 %v93
  %v598 = vunpack.c.l.b16 %v94
  %v599 = vunpack.c.h.b16 %v94
  %v600 = vunpack.c.l.b16 %v95
  %v601 = vunpack.c.h.b16 %v95
  %v602 = vunpack.c.l.b16 %v96
  %v603 = vunpack.c.h.b16 %v96
  %v604 = vunpack.c.l.b16 %v97
  %v605 = vunpack.c.h.b16 %v97
  %v606 = vunpack.c.l.b16 %v98
  %v607 = vunpack.c.h.b16 %v98
  %v608 = vunpack.c.l.b16 %v99
  %v609 = vunpack.c.h.b16 %v99
  %v610 = vunpack.c.l.b16 %v100
  %v611 = vunpack.c.h.b16 %v100
  %v612 = vunpack.c.l.b16 %v101
  %v613 = vunpack.c.h.b16 %v101
  %v614 = vunpack.c.l.b16 %v102
  %v615 = vunpack.c.h.b16 %v102
  %v616 = vunpack.c.l.b16 %v103
  %v617 = vunpack.c.h.b16 %v103
  %v618 = vunpack.c.l.b16 %v104
  %v619 = vunpack.c.h.b16 %v104
  %v620 = vunpack.c.l.b16 %v105
  %v621 = vunpack.c.h.b16 %v105
  %v622 = vunpack.c.l.b16 %v106
  %v623 = vunpack.c.h.b16 %v106
  %v624 = vunpack.c.l.b16 %v107
  %v625 = vunpack.c.h.b16 %v107
  %v626 = vunpack.c.l.b16 %v108
  %v627 = vunpack.c.h.b16 %v108
  %v628 = vunpack.c.l.b16 %v109
  %v629 = vunpack.c.h.b16 %v109
  %v630 = vunpack.c.l.b16 %v110
  %v631 = vunpack.c.h.b16 %v110
  %v632 = vunpack.c.l.b16 %v111
  %v633 = vunpack.c.h.b16 %v111
  %v634 = vunpack.c.l.b16 %v112
  %v635 = vunpack.c.h.b16 %v112
  %v636 = vunpack.c.l.b16 %v113
  %v637 = vunpack.c.h.b16 %v113
  %v638 = vunpack.c.l.b16 %v114
  %v639 = vunpack.c.h.b16 %v114
  %v640 = vunpack.c.l.b16 %v115
  %v641 = vunpack.c.h.b16 %v115
  %v642 = vunpack.c.l.b16 %v116
  %v643 = vunpack.c.h.b16 %v116
  %v644 = vunpack.c.l.b16 %v117
  %v645 = vunpack.c.h.b16 %v117
  %v646 = vunpack.c.l.b16 %v118
  %v647 = vunpack.c.h.b16 %v118
  %v648 = vunpack.c.l.b16 %v119
  %v649 = vunpack.c.h.b16 %v119
  %v650 = vunpack.c.l.b16 %v120
  %v651 = vunpack.c.h.b16 %v120
  %v652 = vunpack.c.l.b16 %v121
  %v653 = vunpack.c.h.b16 %v121
  %v654 = vunpack.c.l.b16 %v122
  %v655 = vunpack.c.h.b16 %v122
  %v656 = vunpack.c.l.b16 %v123
  %v657 = vunpack.c.h.b16 %v123
  %v658 = vunpack.c.l.b16 %v124
  %v659 = vunpack.c.h.b16 %v124
  %v660 = vunpack.c.l.b16 %v125
  %v661 = vunpack.c.h.b16 %v125
  %v662 = vunpack.c.l.b16 %v126
  %v663 = vunpack.c.h.b16 %v126
  %v664 = vunpack.c.l.b16 %v127
  %v665 = vunpack.c.h.b16 %v127
  %v666 = vunpack.c.l.b16 %v128
  %v667 = vunpack.c.h.b16 %v128
  %v668 = vunpack.c.l.b16 %v129
  %v669 = vunpack.c.h.b16 %v129
  %v670 = vunpack.c.l.b16 %v130
  %v671 = vunpack.c.h.b16 %v130
  %v672 = vunpack.c.l.b16 %v131
  %v673 = vunpack.c.h.b16 %v131
  %v674 = vunpack.c.l.b16 %v132
  %v675 = vunpack.c.h.b16 %v132
  %v676 = vunpack.c.l.b16 %v133
  %v677 = vunpack.c.h.b16 %v133
  %v678 = vunpack.c.l.b16 %v134
  %v679 = vunpack.c.h.b16 %v134
  %v680 = vunpack.c.l.b16 %v135
  %v681 = vunpack.c.h.b16 %v135
  %v682 = vunpack.c.l.b16 %v136
  %v683 = vunpack.c.h.b16 %v136
  %v684 = vunpack.c.l.b16 %v137
  %v685 = vunpack.c.h.b16 %v137
  %v686 = vunpack.c.l.b16 %v138
  %v687 = vunpack.c.h.b16 %v138
  %v688 = vunpack.c.l.b16 %v139
  %v689 = vunpack.c.h.b16 %v139
  %v690 = vunpack.c.l.b16 %v140
  %v691 = vunpack.c.h.b16 %v140
  %v692 = vunpack.c.l.b16 %v141
  %v693 = vunpack.c.h.b16 %v141
  %v694 = vunpack.c.l.b16 %v142
  %v695 = vunpack.c.h.b16 %v142
  %v696 = vunpack.c.l.b16 %v143
  %v697 = vunpack.c.h.b16 %v143
  %v698 = vunpack.c.l.b16 %v144
  %v699 = vunpack.c.h.b16 %v144
  %v700 = vunpack.c.l.b16 %v145
  %v701 = vunpack.c.h.b16 %v145
  %v702 = vunpack.c.l.b16 %v146
  %v703 = vunpack.c.h.b16 %v146
  %v704 = vunpack.c.l.b16 %v147
  %v705 = vunpack.c.h.b16 %v147
  %v706 = vunpack.c.l.b16 %v148
  %v707 = vunpack.c.h.b16 %v148
  %v708 = vunpack.c.l.b16 %v149
  %v709 = vunpack.c.h.b16 %v149
  %v710 = vunpack.c.l.b16 %v150
  %v711 = vunpack.c.h.b16 %v150
  %v712 = vunpack.c.l.b16 %v151
  %v713 = vunpack.c.h.b16 %v151
  %v714 = vunpack.c.l.b16 %v152
  %v715 = vunpack.c.h.b16 %v152
  %v716 = vunpack.c.l.b16 %v153
  %v717 = vunpack.c.h.b16 %v153
  %v718 = vunpack.c.l.b16 %v154
  %v719 = vunpack.c.h.b16 %v154
  %v720 = vunpack.c.l.b16 %v155
  %v721 = vunpack.c.h.b16 %v155
  %v722 = vunpack.c.l.b16 %v156
  %v723 = vunpack.c.h.b16 %v156
  %v724 = vunpack.c.l.b16 %v157
  %v725 = vunpack.c.h.b16 %v157
  %v726 = vunpack.c.l.b16 %v158
  %v727 = vunpack.c.h.b16 %v158
  %v728 = vunpack.c.l.b16 %v159
  %v729 = vunpack.c.h.b16 %v159
  %v730 = vunpack.c.l.b16 %v160
  %v731 = vunpack.c.h.b16 %v160
  %v732 = vunpack.c.l.b16 %v161
  %v733 = vunpack.c.h.b16 %v161
  %v734 = vunpack.c.l.b16 %v162
  %v735 = vunpack.c.h.b16 %v162
  %v736 = vunpack.c.l.b16 %v163
  %v737 = vunpack.c.h.b16 %v163
  %v738 = vunpack.c.l.b16 %v164
  %v739 = vunpack.c.h.b16 %v164
  %v740 = vunpack.c.l.b16 %v165
  %v741 = vunpack.c.h.b16 %v165
  %v742 = vunpack.c.l.b16 %v166
  %v743 = vunpack.c.h.b16 %v166
  %v744 = vunpack.c.l.b16 %v167
  %v745 = vunpack.c.h.b16 %v167
  %v746 = vunpack.c.l.b16 %v168
  %v747 = vunpack.c.h.b16 %v168
  %v748 = vunpack.c.l.b16 %v169
  %v749 = vunpack.c.h.b16 %v169
  %v750 = vunpack.c.l.b16 %v170
  %v751 = vunpack.c.h.b16 %v170
  %v752 = vunpack.c.l.b16 %v171
  %v753 = vunpack.c.h.b16 %v171
  %v754 = vunpack.c.l.b16 %v172
  %v755 = vunpack.c.h.b16 %v172
  %v756 = vunpack.c.l.b16 %v173
  %v757 = vunpack.c.h.b16 %v173
  %v758 = vunpack.c.l.b16 %v174
  %v759 = vunpack.c.h.b16 %v174
  %v760 = vunpack.c.l.b16 %v175
  %v761 = vunpack.c.h.b16 %v175
  %v762 = vunpack.c.l.b16 %v176
  %v763 = vunpack.c.h.b16 %v176
  %v764 = vunpack.c.l.b16 %v177
  %v765 = vunpack.c.h.b16 %v177
  %v766 = vunpack.c.l.b16 %v178
  %v767 = vunpack.c.h.b16 %v178
  %v768 = vunpack.c.l.b16 %v179
  %v769 = vunpack.c.h.b16 %v179
  %v770 = vunpack.c.l.b16 %v180
  %v771 = vunpack.c.h.b16 %v180
  %v772 = vunpack.c.l.b16 %v181
  %v773 = vunpack.c.h.b16 %v181
  %v774 = vunpack.c.l.b16 %v182
  %v775 = vunpack.c.h.b16 %v182
  %v776 = vunpack.c.l.b16 %v183
  %v777 = vunpack.c.h.b16 %v183
  %v778 = vunpack.c.l.b16 %v184
  %v779 = vunpack.c.h.b16 %v184
  %v780 = vunpack.c.l.b16 %v185
  %v781 = vunpack.c.h.b16 %v185
  %v782 = vunpack.c.l.b16 %v186
  %v783 = vunpack.c.h.b16 %v186
  %v784 = vunpack.c.l.b16 %v187
  %v785 = vunpack.c.h.b16 %v187
  %v786 = vunpack.c.l.b16 %v188
  %v787 = vunpack.c.h.b16 %v188
  %v788 = vunpack.c.l.b16 %v189
  %v789 = vunpack.c.h.b16 %v189
  %v790 = vunpack.c.l.b16 %v190
  %v791 = vunpack.c.h.b16 %v190
  %v792 = vunpack.c.l.b16 %v191
  %v793 = vunpack.c.h.b16 %v191
  %v794 = vunpack.c.l.b16 %v192
  %v795 = vunpack.c.h.b16 %v192
  %v796 = vunpack.c.l.b16 %v193
  %v797 = vunpack.c.h.b16 %v193
  %v798 = vunpack.c.l.b16 %v194
  %v799 = vunpack.c.h.b16 %v194
  %v800 = vunpack.c.l.b16 %v195
  %v801 = vunpack.c.h.b16 %v195
  %v802 = vunpack.c.l.b16 %v196
  %v803 = vunpack.c.h.b16 %v196
  %v804 = vunpack.c.l.b16 %v197
  %v805 = vunpack.c.h.b16 %v197
  %v806 = vunpack.c.l.b16 %v198
  %v807 = vunpack.c.h.b16 %v198
  %v808 = vunpack.c.l.b16 %v199
  %v809 = vunpack.c.h.b16 %v199
  %v810 = vunpack.c.l.b16 %v200
  %v811 = vunpack.c.h.b16 %v200
  %v812 = vunpack.c.l.b16 %v201
  %v813 = vunpack.c.h.b16 %v201
  %v814 = vunpack.c.l.b16 %v202
  %v815 = vunpack.c.h.b16 %v202
  %v816 = vunpack.c.l.b16 %v203
  %v817 = vunpack.c.h.b16 %v203
  %v818 = vunpack.c.l.b16 %v204
  %v819 = vunpack.c.h.b16 %v204
  %v820 = vunpack.c.l.b16 %v205
  %v821 = vunpack.c.h.b16 %v205
  %v822 = vunpack.c.l.b16 %v206
  %v823 = vunpack.c.h.b16 %v206
  %v824 = vunpack.c.l.b16 %v207
  %v825 = vunpack.c.h.b16 %v207
  %v826 = vunpack.c.l.b16 %v208
  %v827 = vunpack.c.h.b16 %v208
  %v828 = vunpack.c.l.b16 %v209
  %v829 = vunpack.c.h.b16 %v209
  %v830 = vunpack.c.l.b16 %v210
  %v831 = vunpack.c.h.b16 %v210
  %v832 = vunpack.c.l.b16 %v211
  %v833 = vunpack.c.h.b16 %v211
  %v834 = vunpack.c.l.b16 %v212
  %v835 = vunpack.c.h.b16 %v212
  %v836 = vunpack.c.l.b16 %v213
  %v837 = vunpack.c.h.b16 %v213
  %v838 = vunpack.c.l.b16 %v214
  %v839 = vunpack.c.h.b16 %v214
  %v840 = vunpack.c.l.b16 %v215
  %v841 = vunpack.c.h.b16 %v215
  %v842 = vunpack.c.l.b16 %v216
  %v843 = vunpack.c.h.b16 %v216
  %v844 = vunpack.c.l.b16 %v217
  %v845 = vunpack.c.h.b16 %v217
  %v846 = vpack.c.b16 %v466, %v462
  %v847 = vpack.c.b16 %v467, %v463
  %v848 = vpack.c.b16 %v468, %v464
  %v849 = vpack.c.b16 %v469, %v465
  %v850 = vpack.c.b16 %v474, %v470
  %v851 = vpack.c.b16 %v475, %v471
  %v852 = vpack.c.b16 %v476, %v472
  %v853 = vpack.c.b16 %v477, %v473
  %v854 = vpack.c.b16 %v482, %v478
  %v855 = vpack.c.b16 %v483, %v479
  %v856 = vpack.c.b16 %v484, %v480
  %v857 = vpack.c.b16 %v485, %v481
  %v858 = vpack.c.b16 %v490, %v486
  %v859 = vpack.c.b16 %v491, %v487
  %v860 = vpack.c.b16 %v492, %v488
  %v861 = vpack.c.b16 %v493, %v489
  %v862 = vpack.c.b16 %v498, %v494
  %v863 = vpack.c.b16 %v499, %v495
  %v864 = vpack.c.b16 %v500, %v496
  %v865 = vpack.c.b16 %v501, %v497
  %v866 = vpack.c.b16 %v506, %v502
  %v867 = vpack.c.b16 %v507, %v503
  %v868 = vpack.c.b16 %v508, %v504
  %v869 = vpack.c.b16 %v509, %v505
  %v870 = vpack.c.b16 %v514, %v510
  %v871 = vpack.c.b16 %v515, %v511
  %v872 = vpack.c.b16 %v516, %v512
  %v873 = vpack.c.b16 %v517, %v513
  %v874 = vpack.c.b16 %v522, %v518
  %v875 = vpack.c.b16 %v523, %v519
  %v876 = vpack.c.b16 %v524, %v520
  %v877 = vpack.c.b16 %v525, %v521
  %v878 = vpack.c.b16 %v530, %v526
  %v879 = vpack.c.b16 %v531, %v527
  %v880 = vpack.c.b16 %v532, %v528
  %v881 = vpack.c.b16 %v533, %v529
  %v882 = vpack.c.b16 %v538, %v534
  %v883 = vpack.c.b16 %v539, %v535
  %v884 = vpack.c.b16 %v540, %v536
  %v885 = vpack.c.b16 %v541, %v537
  %v886 = vpack.c.b16 %v546, %v542
  %v887 = vpack.c.b16 %v547, %v543
  %v888 = vpack.c.b16 %v548, %v544
  %v889 = vpack.c.b16 %v549, %v545
  %v890 = vpack.c.b16 %v554, %v550
  %v891 = vpack.c.b16 %v555, %v551
  %v892 = vpack.c.b16 %v556, %v552
  %v893 = vpack.c.b16 %v557, %v553
  %v894 = vpack.c.b16 %v562, %v558
  %v895 = vpack.c.b16 %v563, %v559
  %v896 = vpack.c.b16 %v564, %v560
  %v897 = vpack.c.b16 %v565, %v561
  %v898 = vpack.c.b16 %v570, %v566
  %v899 = vpack.c.b16 %v571, %v567
  %v900 = vpack.c.b16 %v572, %v568
  %v901 = vpack.c.b16 %v573, %v569
  %v902 = vpack.c.b16 %v578, %v574
  %v903 = vpack.c.b16 %v579, %v575
  %v904 = vpack.c.b16 %v580, %v576
  %v905 = vpack.c.b16 %v581, %v577
  %v906 = vpack.c.b16 %v586, %v582
  %v907 = vpack.c.b16 %v587, %v583
  %v908 = vpack.c.b16 %v588, %v584
  %v909 = vpack.c.b16 %v589, %v585
  %v910 = vpack.c.b16 %v594, %v590
  %v911 = vpack.c.b16 %v595, %v591
  %v912 = vpack.c.b16 %v596, %v592
  %v913 = vpack.c.b16 %v597, %v593
  %v914 = vpack.c.b16 %v602, %v598
  %v915 = vpack.c.b16 %v603, %v599
  %v916 = vpack.c.b16 %v604, %v600
  %v917 = vpack.c.b16 %v605, %v601
  %v918 = vpack.c.b16 %v610, %v606
  %v919 = vpack.c.b16 %v611, %v607
  %v920 = vpack.c.b16 %v612, %v608
  %v921 = vpack.c.b16 %v613, %v609
  %v922 = vpack.c.b16 %v618, %v614
  %v923 = vpack.c.b16 %v619, %v615
  %v924 = vpack.c.b16 %v620, %v616
  %v925 = vpack.c.b16 %v621, %v617
  %v926 = vpack.c.b16 %v626, %v622
  %v927 = vpack.c.b16 %v627, %v623
  %v928 = vpack.c.b16 %v628, %v624
  %v929 = vpack.c.b16 %v629, %v625
  %v930 = vpack.c.b16 %v634, %v630
  %v931 = vpack.c.b16 %v635, %v631
  %v932 = vpack.c.b16 %v636, %v632
  %v933 = vpack.c.b16 %v637, %v633
  %v934 = vpack.c.b16 %v642, %v638
  %v935 = vpack.c.b16 %v643, %v639
  %v936 = vpack.c.b16 %v644, %v640
  %v937 = vpack.c.b16 %v645, %v641
  %v938 = vpack.c.b16 %v650, %v646
  %v939 = vpack.c.b16 %v651, %v647
  %v940 = vpack.c.b16 %v652, %v648
  %v941 = vpack.c.b16 %v653, %v649
  %v942 = vpack.c.b16 %v658, %v654
  %v943 = vpack.c.b16 %v659, %v655
  %v944 = vpack.c.b16 %v660, %v656
  %v945 = vpack.c.b16 %v661, %v657
  %v946 = vpack.c.b16 %v666, %v662
  %v947 = vpack.c.b16 %v667, %v663
  %v948 = vpack.c.b16 %v668, %v664
  %v949 = vpack.c.b16 %v669, %v665
  %v950 = vpack.c.b16 %v674, %v670
  %v951 = vpack.c.b16 %v675, %v671
  %v952 = vpack.c.b16 %v676, %v672
  %v953 = vpack.c.b16 %v677, %v673
  %v954 = vpack.c.b16 %v682, %v678
  %v955 = vpack.c.b16 %v683, %v679
  %v956 = vpack.c.b16 %v684, %v680
  %v957 = vpack.c.b16 %v685, %v681
  %v958 = vpack.c.b16 %v690, %v686
  %v959 = vpack.c.b16 %v691, %v687
  %v960 = vpack.c.b16 %v692, %v688
  %v961 = vpack.c.b16 %v693, %v689
  %v962 = vpack.c.b16 %v698, %v694
  %v963 = vpack.c.b16 %v699, %v695
  %v964 = vpack.c.b16 %v700, %v696
  %v965 = vpack.c.b16 %v701, %v697
  %v966 = vpack.c.b16 %v706, %v702
  %v967 = vpack.c.b16 %v707, %v703
  %v968 = vpack.c.b16 %v708, %v704
  %v969 = vpack.c.b16 %v709, %v705
  %v970 = vpack.c.b16 %v714, %v710
  %v971 = vpack.c.b16 %v715, %v711
  %v972 = vpack.c.b16 %v716, %v712
  %v973 = vpack.c.b16 %v717, %v713
  %v974 = vpack.c.b16 %v722, %v718
  %v975 = vpack.c.b16 %v723, %v719
  %v976 = vpack.c.b16 %v724, %v720
  %v977 = vpack.c.b16 %v725, %v721
  %v978 = vpack.c.b16 %v730, %v726
  %v979 = vpack.c.b16 %v731, %v727
  %v980 = vpack.c.b16 %v732, %v728
  %v981 = vpack.c.b16 %v733, %v729
  %v982 = vpack.c.b16 %v738, %v734
  %v983 = vpack.c.b16 %v739, %v735
  %v984 = vpack.c.b16 %v740, %v736
  %v985 = vpack.c.b16 %v741, %v737
  %v986 = vpack.c.b16 %v746, %v742
  %v987 = vpack.c.b16 %v747, %v743
  %v988 = vpack.c.b16 %v748, %v744
  %v989 = vpack.c.b16 %v749, %v745
  %v990 = vpack.c.b16 %v754, %v750
  %v991 = vpack.c.b16 %v755, %v751
  %v992 = vpack.c.b16 %v756, %v752
  %v993 = vpack.c.b16 %v757, %v753
  %v994 = vpack.c.b16 %v762, %v758
  %v995 = vpack.c.b16 %v763, %v759
  %v996 = vpack.c.b16 %v764, %v760
  %v997 = vpack.c.b16 %v765, %v761
  %v998 = vpack.c.b16 %v770, %v766
  %v999 = vpack.c.b16 %v771, %v767
  %v1000 = vpack.c.b16 %v772, %v768
  %v1001 = vpack.c.b16 %v773, %v769
  %v1002 = vpack.c.b16 %v778, %v774
  %v1003 = vpack.c.b16 %v779, %v775
  %v1004 = vpack.c.b16 %v780, %v776
  %v1005 = vpack.c.b16 %v781, %v777
  %v1006 = vpack.c.b16 %v786, %v782
  %v1007 = vpack.c.b16 %v787, %v783
  %v1008 = vpack.c.b16 %v788, %v784
  %v1009 = vpack.c.b16 %v789, %v785
  %v1010 = vpack.c.b16 %v794, %v790
  %v1011 = vpack.c.b16 %v795, %v791
  %v1012 = vpack.c.b16 %v796, %v792
  %v1013 = vpack.c.b16 %v797, %v793
  %v1014 = vpack.c.b16 %v802, %v798
  %v1015 = vpack.c.b16 %v803, %v799
  %v1016 = vpack.c.b16 %v804, %v800
  %v1017 = vpack.c.b16 %v805, %v801
  %v1018 = vpack.c.b16 %v810, %v806
  %v1019 = vpack.c.b16 %v811, %v807
  %v1020 = vpack.c.b16 %v812, %v808
  %v1021 = vpack.c.b16 %v813, %v809
  %v1022 = vpack.c.b16 %v818, %v814
  %v1023 = vpack.c.b16 %v819, %v815
  %v1024 = vpack.c.b16 %v820, %v816
  %v1025 = vpack.c.b16 %v821, %v817
  %v1026 = vpack.c.b16 %v826, %v822
  %v1027 = vpack.c.b16 %v827, %v823
  %v1028 = vpack.c.b16 %v828, %v824
  %v1029 = vpack.c.b16 %v829, %v825
  %v1030 = vpack.c.b16 %v834, %v830
  %v1031 = vpack.c.b16 %v835, %v831
  %v1032 = vpack.c.b16 %v836, %v832
  %v1033 = vpack.c.b16 %v837, %v833
  %v1034 = vpack.c.b16 %v842, %v838
  %v1035 = vpack.c.b16 %v843, %v839
  %v1036 = vpack.c.b16 %v844, %v840
  %v1037 = vpack.c.b16 %v845, %v841
  %1230 = vmatprep.subr.bf16.mxu0 %v847
  %1231 = vmatpush1.bf16.msra.mxu0 %v846
  %1232 = vmatprep.subr.bf16.mxu0 %v851
  %1233 = vmatpush1.bf16.msra.mxu0 %v850
  %1234 = vmatprep.subr.bf16.mxu0 %v855
  %1235 = vmatpush1.bf16.msra.mxu0 %v854
  %1236 = vmatprep.subr.bf16.mxu0 %v859
  %1237 = vmatpush1.bf16.msra.mxu0 %v858
  %1238 = vmatprep.subr.bf16.mxu0 %v863
  %1239 = vmatpush1.bf16.msra.mxu0 %v862
  %1240 = vmatprep.subr.bf16.mxu0 %v867
  %1241 = vmatpush1.bf16.msra.mxu0 %v866
  %1242 = vmatprep.subr.bf16.mxu0 %v871
  %1243 = vmatpush1.bf16.msra.mxu0 %v870
  %1244 = vmatprep.subr.bf16.mxu0 %v875
  %1245 = vmatpush1.bf16.msra.mxu0 %v874
  %1246 = vmatprep.subr.bf16.mxu0 %v879
  %1247 = vmatpush1.bf16.msra.mxu0 %v878
  %1248 = vmatprep.subr.bf16.mxu0 %v883
  %1249 = vmatpush1.bf16.msra.mxu0 %v882
  %1250 = vmatprep.subr.bf16.mxu0 %v887
  %1251 = vmatpush1.bf16.msra.mxu0 %v886
  %1252 = vmatprep.subr.bf16.mxu0 %v891
  %1253 = vmatpush1.bf16.msra.mxu0 %v890
  %1254 = vmatprep.subr.bf16.mxu0 %v895
  %1255 = vmatpush1.bf16.msra.mxu0 %v894
  %1256 = vmatprep.subr.bf16.mxu0 %v899
  %1257 = vmatpush1.bf16.msra.mxu0 %v898
  %1258 = vmatprep.subr.bf16.mxu0 %v903
  %1259 = vmatpush1.bf16.msra.mxu0 %v902
  %1260 = vmatprep.subr.bf16.mxu0 %v907
  %1261 = vmatpush1.bf16.msra.mxu0 %v906
  %1262 = vmatprep.mubr.bf16.mxu0 %v259
  %1263 = vmatmul.mubr.bf16.gmra.mrb[0].mxu0 %v258
  %v1264 = vpop.f32.mrb[0].mxu0
  %v1265 = vadd.f32 %v223, %v1264
  %v1266 = vpop.f32.mrb[0].mxu0
  %v1267 = vadd.f32 %v227, %v1266
  %v1268 = vpop.f32.mrb[0].mxu0
  %v1269 = vadd.f32 %v223, %v1268
  %v1270 = vpop.f32.mrb[0].mxu0
  %v1271 = vadd.f32 %v227, %v1270
  %1272 = vdwg.mxu0
  %1273 = vmatprep.subr.bf16.mxu0 %v911
  %1274 = vmatpush1.bf16.msra.mxu0 %v910
  %1275 = vmatprep.subr.bf16.mxu0 %v915
  %1276 = vmatpush1.bf16.msra.mxu0 %v914
  %1277 = vmatprep.subr.bf16.mxu0 %v919
  %1278 = vmatpush1.bf16.msra.mxu0 %v918
  %1279 = vmatprep.subr.bf16.mxu0 %v923
  %1280 = vmatpush1.bf16.msra.mxu0 %v922
  %1281 = vmatprep.subr.bf16.mxu0 %v927
  %1282 = vmatpush1.bf16.msra.mxu0 %v926
  %1283 = vmatprep.subr.bf16.mxu0 %v931
  %1284 = vmatpush1.bf16.msra.mxu0 %v930
  %1285 = vmatprep.subr.bf16.mxu0 %v935
  %1286 = vmatpush1.bf16.msra.mxu0 %v934
  %1287 = vmatprep.subr.bf16.mxu0 %v939
  %1288 = vmatpush1.bf16.msra.mxu0 %v938
  %1289 = vmatprep.subr.bf16.mxu0 %v943
  %1290 = vmatpush1.bf16.msra.mxu0 %v942
  %1291 = vmatprep.subr.bf16.mxu0 %v947
  %1292 = vmatpush1.bf16.msra.mxu0 %v946
  %1293 = vmatprep.subr.bf16.mxu0 %v951
  %1294 = vmatpush1.bf16.msra.mxu0 %v950
  %1295 = vmatprep.subr.bf16.mxu0 %v955
  %1296 = vmatpush1.bf16.msra.mxu0 %v954
  %1297 = vmatprep.subr.bf16.mxu0 %v959
  %1298 = vmatpush1.bf16.msra.mxu0 %v958
  %1299 = vmatprep.subr.bf16.mxu0 %v963
  %1300 = vmatpush1.bf16.msra.mxu0 %v962
  %1301 = vmatprep.subr.bf16.mxu0 %v967
  %1302 = vmatpush1.bf16.msra.mxu0 %v966
  %1303 = vmatprep.subr.bf16.mxu0 %v971
  %1304 = vmatpush1.bf16.msra.mxu0 %v970
  %1305 = vmatprep.mubr.bf16.mxu0 %v261
  %1306 = vmatmul.mubr.bf16.gmra.mrb[0].mxu0 %v260
  %v1307 = vpop.f32.mrb[0].mxu0
  %v1308 = vadd.f32 %v1265, %v1307
  %v1309 = vpop.f32.mrb[0].mxu0
  %v1310 = vadd.f32 %v1267, %v1309
  %v1311 = vpop.f32.mrb[0].mxu0
  %v1312 = vadd.f32 %v1269, %v1311
  %v1313 = vpop.f32.mrb[0].mxu0
  %v1314 = vadd.f32 %v1271, %v1313
  %1315 = vdwg.mxu0
  %1316 = vmatprep.subr.bf16.mxu0 %v975
  %1317 = vmatpush1.bf16.msra.mxu0 %v974
  %1318 = vmatprep.subr.bf16.mxu0 %v979
  %1319 = vmatpush1.bf16.msra.mxu0 %v978
  %1320 = vmatprep.subr.bf16.mxu0 %v983
  %1321 = vmatpush1.bf16.msra.mxu0 %v982
  %1322 = vmatprep.subr.bf16.mxu0 %v987
  %1323 = vmatpush1.bf16.msra.mxu0 %v986
  %1324 = vmatprep.subr.bf16.mxu0 %v991
  %1325 = vmatpush1.bf16.msra.mxu0 %v990
  %1326 = vmatprep.subr.bf16.mxu0 %v995
  %1327 = vmatpush1.bf16.msra.mxu0 %v994
  %1328 = vmatprep.subr.bf16.mxu0 %v999
  %1329 = vmatpush1.bf16.msra.mxu0 %v998
  %1330 = vmatprep.subr.bf16.mxu0 %v1003
  %1331 = vmatpush1.bf16.msra.mxu0 %v1002
  %1332 = vmatprep.subr.bf16.mxu0 %v1007
  %1333 = vmatpush1.bf16.msra.mxu0 %v1006
  %1334 = vmatprep.subr.bf16.mxu0 %v1011
  %1335 = vmatpush1.bf16.msra.mxu0 %v1010
  %1336 = vmatprep.subr.bf16.mxu0 %v1015
  %1337 = vmatpush1.bf16.msra.mxu0 %v1014
  %1338 = vmatprep.subr.bf16.mxu0 %v1019
  %1339 = vmatpush1.bf16.msra.mxu0 %v1018
  %1340 = vmatprep.subr.bf16.mxu0 %v1023
  %1341 = vmatpush1.bf16.msra.mxu0 %v1022
  %1342 = vmatprep.subr.bf16.mxu0 %v1027
  %1343 = vmatpush1.bf16.msra.mxu0 %v1026
  %1344 = vmatprep.subr.bf16.mxu0 %v1031
  %1345 = vmatpush1.bf16.msra.mxu0 %v1030
  %1346 = vmatprep.subr.bf16.mxu0 %v1035
  %1347 = vmatpush1.bf16.msra.mxu0 %v1034
  %1348 = vmatprep.mubr.bf16.mxu0 %v263
  %1349 = vmatmul.mubr.bf16.gmra.mrb[0].mxu0 %v262
  %v1350 = vpop.f32.mrb[0].mxu0
  %v1351 = vadd.f32 %v1308, %v1350
  %v1352 = vpop.f32.mrb[0].mxu0
  %v1353 = vadd.f32 %v1310, %v1352
  %v1354 = vpop.f32.mrb[0].mxu0
  %v1355 = vadd.f32 %v1312, %v1354
  %v1356 = vpop.f32.mrb[0].mxu0
  %v1357 = vadd.f32 %v1314, %v1356
  %1358 = vdwg.mxu0
  %1359 = vmatprep.subr.bf16.mxu0 %v849
  %1360 = vmatpush1.bf16.msra.mxu0 %v848
  %1361 = vmatprep.subr.bf16.mxu0 %v853
  %1362 = vmatpush1.bf16.msra.mxu0 %v852
  %1363 = vmatprep.subr.bf16.mxu0 %v857
  %1364 = vmatpush1.bf16.msra.mxu0 %v856
  %1365 = vmatprep.subr.bf16.mxu0 %v861
  %1366 = vmatpush1.bf16.msra.mxu0 %v860
  %1367 = vmatprep.subr.bf16.mxu0 %v865
  %1368 = vmatpush1.bf16.msra.mxu0 %v864
  %1369 = vmatprep.subr.bf16.mxu0 %v869
  %1370 = vmatpush1.bf16.msra.mxu0 %v868
  %1371 = vmatprep.subr.bf16.mxu0 %v873
  %1372 = vmatpush1.bf16.msra.mxu0 %v872
  %1373 = vmatprep.subr.bf16.mxu0 %v877
  %1374 = vmatpush1.bf16.msra.mxu0 %v876
  %1375 = vmatprep.subr.bf16.mxu0 %v881
  %1376 = vmatpush1.bf16.msra.mxu0 %v880
  %1377 = vmatprep.subr.bf16.mxu0 %v885
  %1378 = vmatpush1.bf16.msra.mxu0 %v884
  %1379 = vmatprep.subr.bf16.mxu0 %v889
  %1380 = vmatpush1.bf16.msra.mxu0 %v888
  %1381 = vmatprep.subr.bf16.mxu0 %v893
  %1382 = vmatpush1.bf16.msra.mxu0 %v892
  %1383 = vmatprep.subr.bf16.mxu0 %v897
  %1384 = vmatpush1.bf16.msra.mxu0 %v896
  %1385 = vmatprep.subr.bf16.mxu0 %v901
  %1386 = vmatpush1.bf16.msra.mxu0 %v900
  %1387 = vmatprep.subr.bf16.mxu0 %v905
  %1388 = vmatpush1.bf16.msra.mxu0 %v904
  %1389 = vmatprep.subr.bf16.mxu0 %v909
  %1390 = vmatpush1.bf16.msra.mxu0 %v908
  %1391 = vmatprep.mubr.bf16.mxu0 %v259
  %1392 = vmatmul.mubr.bf16.gmra.mrb[0].mxu0 %v258
  %v1393 = vpop.f32.mrb[0].mxu0
  %v1394 = vadd.f32 %v231, %v1393
  %v1395 = vpop.f32.mrb[0].mxu0
  %v1396 = vadd.f32 %v235, %v1395
  %v1397 = vpop.f32.mrb[0].mxu0
  %v1398 = vadd.f32 %v231, %v1397
  %v1399 = vpop.f32.mrb[0].mxu0
  %v1400 = vadd.f32 %v235, %v1399
  %1401 = vdwg.mxu0
  %1402 = vmatprep.subr.bf16.mxu0 %v913
  %1403 = vmatpush1.bf16.msra.mxu0 %v912
  %1404 = vmatprep.subr.bf16.mxu0 %v917
  %1405 = vmatpush1.bf16.msra.mxu0 %v916
  %1406 = vmatprep.subr.bf16.mxu0 %v921
  %1407 = vmatpush1.bf16.msra.mxu0 %v920
  %1408 = vmatprep.subr.bf16.mxu0 %v925
  %1409 = vmatpush1.bf16.msra.mxu0 %v924
  %1410 = vmatprep.subr.bf16.mxu0 %v929
  %1411 = vmatpush1.bf16.msra.mxu0 %v928
  %1412 = vmatprep.subr.bf16.mxu0 %v933
  %1413 = vmatpush1.bf16.msra.mxu0 %v932
  %1414 = vmatprep.subr.bf16.mxu0 %v937
  %1415 = vmatpush1.bf16.msra.mxu0 %v936
  %1416 = vmatprep.subr.bf16.mxu0 %v941
  %1417 = vmatpush1.bf16.msra.mxu0 %v940
  %1418 = vmatprep.subr.bf16.mxu0 %v945
  %1419 = vmatpush1.bf16.msra.mxu0 %v944
  %1420 = vmatprep.subr.bf16.mxu0 %v949
  %1421 = vmatpush1.bf16.msra.mxu0 %v948
  %1422 = vmatprep.subr.bf16.mxu0 %v953
  %1423 = vmatpush1.bf16.msra.mxu0 %v952
  %1424 = vmatprep.subr.bf16.mxu0 %v957
  %1425 = vmatpush1.bf16.msra.mxu0 %v956
  %1426 = vmatprep.subr.bf16.mxu0 %v961
  %1427 = vmatpush1.bf16.msra.mxu0 %v960
  %1428 = vmatprep.subr.bf16.mxu0 %v965
  %1429 = vmatpush1.bf16.msra.mxu0 %v964
  %1430 = vmatprep.subr.bf16.mxu0 %v969
  %1431 = vmatpush1.bf16.msra.mxu0 %v968
  %1432 = vmatprep.subr.bf16.mxu0 %v973
  %1433 = vmatpush1.bf16.msra.mxu0 %v972
  %1434 = vmatprep.mubr.bf16.mxu0 %v261
  %1435 = vmatmul.mubr.bf16.gmra.mrb[0].mxu0 %v260
  %v1436 = vpop.f32.mrb[0].mxu0
  %v1437 = vadd.f32 %v1394, %v1436
  %v1438 = vpop.f32.mrb[0].mxu0
  %v1439 = vadd.f32 %v1396, %v1438
  %v1440 = vpop.f32.mrb[0].mxu0
  %v1441 = vadd.f32 %v1398, %v1440
  %v1442 = vpop.f32.mrb[0].mxu0
  %v1443 = vadd.f32 %v1400, %v1442
  %1444 = vdwg.mxu0
  %1445 = vmatprep.subr.bf16.mxu0 %v977
  %1446 = vmatpush1.bf16.msra.mxu0 %v976
  %1447 = vmatprep.subr.bf16.mxu0 %v981
  %1448 = vmatpush1.bf16.msra.mxu0 %v980
  %1449 = vmatprep.subr.bf16.mxu0 %v985
  %1450 = vmatpush1.bf16.msra.mxu0 %v984
  %1451 = vmatprep.subr.bf16.mxu0 %v989
  %1452 = vmatpush1.bf16.msra.mxu0 %v988
  %1453 = vmatprep.subr.bf16.mxu0 %v993
  %1454 = vmatpush1.bf16.msra.mxu0 %v992
  %1455 = vmatprep.subr.bf16.mxu0 %v997
  %1456 = vmatpush1.bf16.msra.mxu0 %v996
  %1457 = vmatprep.subr.bf16.mxu0 %v1001
  %1458 = vmatpush1.bf16.msra.mxu0 %v1000
  %1459 = vmatprep.subr.bf16.mxu0 %v1005
  %1460 = vmatpush1.bf16.msra.mxu0 %v1004
  %1461 = vmatprep.subr.bf16.mxu0 %v1009
  %1462 = vmatpush1.bf16.msra.mxu0 %v1008
  %1463 = vmatprep.subr.bf16.mxu0 %v1013
  %1464 = vmatpush1.bf16.msra.mxu0 %v1012
  %1465 = vmatprep.subr.bf16.mxu0 %v1017
  %1466 = vmatpush1.bf16.msra.mxu0 %v1016
  %1467 = vmatprep.subr.bf16.mxu0 %v1021
  %1468 = vmatpush1.bf16.msra.mxu0 %v1020
  %1469 = vmatprep.subr.bf16.mxu0 %v1025
  %1470 = vmatpush1.bf16.msra.mxu0 %v1024
  %1471 = vmatprep.subr.bf16.mxu0 %v1029
  %1472 = vmatpush1.bf16.msra.mxu0 %v1028
  %1473 = vmatprep.subr.bf16.mxu0 %v1033
  %1474 = vmatpush1.bf16.msra.mxu0 %v1032
  %1475 = vmatprep.subr.bf16.mxu0 %v1037
  %1476 = vmatpush1.bf16.msra.mxu0 %v1036
  %1477 = vmatprep.mubr.bf16.mxu0 %v263
  %1478 = vmatmul.mubr.bf16.gmra.mrb[0].mxu0 %v262
  %v1479 = vpop.f32.mrb[0].mxu0
  %v1480 = vadd.f32 %v1437, %v1479
  %v1481 = vpop.f32.mrb[0].mxu0
  %v1482 = vadd.f32 %v1439, %v1481
  %v1483 = vpop.f32.mrb[0].mxu0
  %v1484 = vadd.f32 %v1441, %v1483
  %v1485 = vpop.f32.mrb[0].mxu0
  %v1486 = vadd.f32 %v1443, %v1485
  %1487 = vdwg.mxu0
  %v1488 = vmax.f32 %v1351, 0.0
  %v1489 = vmax.f32 %v1353, 0.0
  %v1490 = vmax.f32 %v1480, 0.0
  %v1491 = vmax.f32 %v1482, 0.0
  %v1492 = vmax.f32 %v1355, 0.0
  %v1493 = vmax.f32 %v1357, 0.0
  %v1494 = vmax.f32 %v1484, 0.0
  %v1495 = vmax.f32 %v1486, 0.0
  %v1496 = vpack.c.bf16 %v1492, %v1488
  %v1497 = vpack.c.bf16 %v1493, %v1489
  %v1498 = vpack.c.bf16 %v1494, %v1490
  %v1499 = vpack.c.bf16 %v1495, %v1491
  %v1500 = vld [vmem:[%s3] sm:$0xff]
  %v1501 = vld [vmem:[%s3 + $0x8] sm:$0xff]
  %v1502 = vld [vmem:[%s3 + $0x10] sm:$0xff]
  %v1503 = vld [vmem:[%s3 + $0x18] sm:$0xff]
  %v1504 = vld [vmem:[%s3 + $0x20] sm:$0xff]
  %v1505 = vld [vmem:[%s3 + $0x28] sm:$0xff]
  %v1506 = vld [vmem:[%s3 + $0x30] sm:$0xff]
  %v1507 = vld [vmem:[%s3 + $0x38] sm:$0xff]
  %v1508 = vld [vmem:[%s3 + $0x40] sm:$0xff]
  %v1509 = vld [vmem:[%s3 + $0x48] sm:$0xff]
  %v1510 = vld [vmem:[%s3 + $0x50] sm:$0xff]
  %v1511 = vld [vmem:[%s3 + $0x58] sm:$0xff]
  %v1512 = vld [vmem:[%s3 + $0x60] sm:$0xff]
  %v1513 = vld [vmem:[%s3 + $0x68] sm:$0xff]
  %v1514 = vld [vmem:[%s3 + $0x70] sm:$0xff]
  %v1515 = vld [vmem:[%s3 + $0x78] sm:$0xff]
  %v1516 = vld [vmem:[%s3 + $0x80] sm:$0xff]
  %v1517 = vld [vmem:[%s3 + $0x88] sm:$0xff]
  %v1518 = vld [vmem:[%s3 + $0x90] sm:$0xff]
  %v1519 = vld [vmem:[%s3 + $0x98] sm:$0xff]
  %v1520 = vld [vmem:[%s3 + $0xa0] sm:$0xff]
  %v1521 = vld [vmem:[%s3 + $0xa8] sm:$0xff]
  %v1522 = vld [vmem:[%s3 + $0xb0] sm:$0xff]
  %v1523 = vld [vmem:[%s3 + $0xb8] sm:$0xff]
  %v1524 = vld [vmem:[%s3 + $0xc0] sm:$0xff]
  %v1525 = vld [vmem:[%s3 + $0xc8] sm:$0xff]
  %v1526 = vld [vmem:[%s3 + $0xd0] sm:$0xff]
  %v1527 = vld [vmem:[%s3 + $0xd8] sm:$0xff]
  %v1528 = vld [vmem:[%s3 + $0xe0] sm:$0xff]
  %v1529 = vld [vmem:[%s3 + $0xe8] sm:$0xff]
  %v1530 = vld [vmem:[%s3 + $0xf0] sm:$0xff]
  %v1531 = vld [vmem:[%s3 + $0xf8] sm:$0xff]
  %v1532 = vld [vmem:[%s3 + $0x100] sm:$0xff]
  %v1533 = vld [vmem:[%s3 + $0x108] sm:$0xff]
  %v1534 = vld [vmem:[%s3 + $0x110] sm:$0xff]
  %v1535 = vld [vmem:[%s3 + $0x118] sm:$0xff]
  %v1536 = vld [vmem:[%s3 + $0x120] sm:$0xff]
  %v1537 = vld [vmem:[%s3 + $0x128] sm:$0xff]
  %v1538 = vld [vmem:[%s3 + $0x130] sm:$0xff]
  %v1539 = vld [vmem:[%s3 + $0x138] sm:$0xff]
  %v1540 = vld [vmem:[%s3 + $0x140] sm:$0xff]
  %v1541 = vld [vmem:[%s3 + $0x148] sm:$0xff]
  %v1542 = vld [vmem:[%s3 + $0x150] sm:$0xff]
  %v1543 = vld [vmem:[%s3 + $0x158] sm:$0xff]
  %v1544 = vld [vmem:[%s3 + $0x160] sm:$0xff]
  %v1545 = vld [vmem:[%s3 + $0x168] sm:$0xff]
  %v1546 = vld [vmem:[%s3 + $0x170] sm:$0xff]
  %v1547 = vld [vmem:[%s3 + $0x178] sm:$0xff]
  %v1548 = vld [vmem:[%s3 + $0x180] sm:$0xff]
  %v1549 = vld [vmem:[%s3 + $0x188] sm:$0xff]
  %v1550 = vld [vmem:[%s3 + $0x190] sm:$0xff]
  %v1551 = vld [vmem:[%s3 + $0x198] sm:$0xff]
  %v1552 = vld [vmem:[%s3 + $0x1a0] sm:$0xff]
  %v1553 = vld [vmem:[%s3 + $0x1a8] sm:$0xff]
  %v1554 = vld [vmem:[%s3 + $0x1b0] sm:$0xff]
  %v1555 = vld [vmem:[%s3 + $0x1b8] sm:$0xff]
  %v1556 = vld [vmem:[%s3 + $0x1c0] sm:$0xff]
  %v1557 = vld [vmem:[%s3 + $0x1c8] sm:$0xff]
  %v1558 = vld [vmem:[%s3 + $0x1d0] sm:$0xff]
  %v1559 = vld [vmem:[%s3 + $0x1d8] sm:$0xff]
  %v1560 = vld [vmem:[%s3 + $0x1e0] sm:$0xff]
  %v1561 = vld [vmem:[%s3 + $0x1e8] sm:$0xff]
  %v1562 = vld [vmem:[%s3 + $0x1f0] sm:$0xff]
  %v1563 = vld [vmem:[%s3 + $0x1f8] sm:$0xff]
  %v1564 = vld [vmem:[%s3 + $0x200] sm:$0xff]
  %v1565 = vld [vmem:[%s3 + $0x208] sm:$0xff]
  %v1566 = vld [vmem:[%s3 + $0x210] sm:$0xff]
  %v1567 = vld [vmem:[%s3 + $0x218] sm:$0xff]
  %v1568 = vld [vmem:[%s3 + $0x220] sm:$0xff]
  %v1569 = vld [vmem:[%s3 + $0x228] sm:$0xff]
  %v1570 = vld [vmem:[%s3 + $0x230] sm:$0xff]
  %v1571 = vld [vmem:[%s3 + $0x238] sm:$0xff]
  %v1572 = vld [vmem:[%s3 + $0x240] sm:$0xff]
  %v1573 = vld [vmem:[%s3 + $0x248] sm:$0xff]
  %v1574 = vld [vmem:[%s3 + $0x250] sm:$0xff]
  %v1575 = vld [vmem:[%s3 + $0x258] sm:$0xff]
  %v1576 = vld [vmem:[%s3 + $0x260] sm:$0xff]
  %v1577 = vld [vmem:[%s3 + $0x268] sm:$0xff]
  %v1578 = vld [vmem:[%s3 + $0x270] sm:$0xff]
  %v1579 = vld [vmem:[%s3 + $0x278] sm:$0xff]
  %v1580 = vld [vmem:[%s3 + $0x280] sm:$0xff]
  %v1581 = vld [vmem:[%s3 + $0x288] sm:$0xff]
  %v1582 = vld [vmem:[%s3 + $0x290] sm:$0xff]
  %v1583 = vld [vmem:[%s3 + $0x298] sm:$0xff]
  %v1584 = vld [vmem:[%s3 + $0x2a0] sm:$0xff]
  %v1585 = vld [vmem:[%s3 + $0x2a8] sm:$0xff]
  %v1586 = vld [vmem:[%s3 + $0x2b0] sm:$0xff]
  %v1587 = vld [vmem:[%s3 + $0x2b8] sm:$0xff]
  %v1588 = vld [vmem:[%s3 + $0x2c0] sm:$0xff]
  %v1589 = vld [vmem:[%s3 + $0x2c8] sm:$0xff]
  %v1590 = vld [vmem:[%s3 + $0x2d0] sm:$0xff]
  %v1591 = vld [vmem:[%s3 + $0x2d8] sm:$0xff]
  %v1592 = vld [vmem:[%s3 + $0x2e0] sm:$0xff]
  %v1593 = vld [vmem:[%s3 + $0x2e8] sm:$0xff]
  %v1594 = vld [vmem:[%s3 + $0x2f0] sm:$0xff]
  %v1595 = vld [vmem:[%s3 + $0x2f8] sm:$0xff]
  %v1596 = vld [vmem:[%s3 + $0x300] sm:$0xff]
  %v1597 = vld [vmem:[%s3 + $0x308] sm:$0xff]
  %v1598 = vld [vmem:[%s3 + $0x310] sm:$0xff]
  %v1599 = vld [vmem:[%s3 + $0x318] sm:$0xff]
  %v1600 = vld [vmem:[%s3 + $0x320] sm:$0xff]
  %v1601 = vld [vmem:[%s3 + $0x328] sm:$0xff]
  %v1602 = vld [vmem:[%s3 + $0x330] sm:$0xff]
  %v1603 = vld [vmem:[%s3 + $0x338] sm:$0xff]
  %v1604 = vld [vmem:[%s3 + $0x340] sm:$0xff]
  %v1605 = vld [vmem:[%s3 + $0x348] sm:$0xff]
  %v1606 = vld [vmem:[%s3 + $0x350] sm:$0xff]
  %v1607 = vld [vmem:[%s3 + $0x358] sm:$0xff]
  %v1608 = vld [vmem:[%s3 + $0x360] sm:$0xff]
  %v1609 = vld [vmem:[%s3 + $0x368] sm:$0xff]
  %v1610 = vld [vmem:[%s3 + $0x370] sm:$0xff]
  %v1611 = vld [vmem:[%s3 + $0x378] sm:$0xff]
  %v1612 = vld [vmem:[%s3 + $0x380] sm:$0xff]
  %v1613 = vld [vmem:[%s3 + $0x388] sm:$0xff]
  %v1614 = vld [vmem:[%s3 + $0x390] sm:$0xff]
  %v1615 = vld [vmem:[%s3 + $0x398] sm:$0xff]
  %v1616 = vld [vmem:[%s3 + $0x3a0] sm:$0xff]
  %v1617 = vld [vmem:[%s3 + $0x3a8] sm:$0xff]
  %v1618 = vld [vmem:[%s3 + $0x3b0] sm:$0xff]
  %v1619 = vld [vmem:[%s3 + $0x3b8] sm:$0xff]
  %v1620 = vld [vmem:[%s3 + $0x3c0] sm:$0xff]
  %v1621 = vld [vmem:[%s3 + $0x3c8] sm:$0xff]
  %v1622 = vld [vmem:[%s3 + $0x3d0] sm:$0xff]
  %v1623 = vld [vmem:[%s3 + $0x3d8] sm:$0xff]
  %v1624 = vld [vmem:[%s3 + $0x3e0] sm:$0xff]
  %v1625 = vld [vmem:[%s3 + $0x3e8] sm:$0xff]
  %v1626 = vld [vmem:[%s3 + $0x3f0] sm:$0xff]
  %v1627 = vld [vmem:[%s3 + $0x3f8] sm:$0xff]
  %v1628 = vld [vmem:[%s3 + $0x400] sm:$0xff]
  %v1629 = vld [vmem:[%s3 + $0x408] sm:$0xff]
  %v1630 = vld [vmem:[%s3 + $0x410] sm:$0xff]
  %v1631 = vld [vmem:[%s3 + $0x418] sm:$0xff]
  %v1632 = vld [vmem:[%s3 + $0x420] sm:$0xff]
  %v1633 = vld [vmem:[%s3 + $0x428] sm:$0xff]
  %v1634 = vld [vmem:[%s3 + $0x430] sm:$0xff]
  %v1635 = vld [vmem:[%s3 + $0x438] sm:$0xff]
  %v1636 = vld [vmem:[%s3 + $0x440] sm:$0xff]
  %v1637 = vld [vmem:[%s3 + $0x448] sm:$0xff]
  %v1638 = vld [vmem:[%s3 + $0x450] sm:$0xff]
  %v1639 = vld [vmem:[%s3 + $0x458] sm:$0xff]
  %v1640 = vld [vmem:[%s3 + $0x460] sm:$0xff]
  %v1641 = vld [vmem:[%s3 + $0x468] sm:$0xff]
  %v1642 = vld [vmem:[%s3 + $0x470] sm:$0xff]
  %v1643 = vld [vmem:[%s3 + $0x478] sm:$0xff]
  %v1644 = vld [vmem:[%s3 + $0x480] sm:$0xff]
  %v1645 = vld [vmem:[%s3 + $0x488] sm:$0xff]
  %v1646 = vld [vmem:[%s3 + $0x490] sm:$0xff]
  %v1647 = vld [vmem:[%s3 + $0x498] sm:$0xff]
  %v1648 = vld [vmem:[%s3 + $0x4a0] sm:$0xff]
  %v1649 = vld [vmem:[%s3 + $0x4a8] sm:$0xff]
  %v1650 = vld [vmem:[%s3 + $0x4b0] sm:$0xff]
  %v1651 = vld [vmem:[%s3 + $0x4b8] sm:$0xff]
  %v1652 = vld [vmem:[%s3 + $0x4c0] sm:$0xff]
  %v1653 = vld [vmem:[%s3 + $0x4c8] sm:$0xff]
  %v1654 = vld [vmem:[%s3 + $0x4d0] sm:$0xff]
  %v1655 = vld [vmem:[%s3 + $0x4d8] sm:$0xff]
  %v1656 = vld [vmem:[%s3 + $0x4e0] sm:$0xff]
  %v1657 = vld [vmem:[%s3 + $0x4e8] sm:$0xff]
  %v1658 = vld [vmem:[%s3 + $0x4f0] sm:$0xff]
  %v1659 = vld [vmem:[%s3 + $0x4f8] sm:$0xff]
  %v1660 = vld [vmem:[%s3 + $0x500] sm:$0xff]
  %v1661 = vld [vmem:[%s3 + $0x508] sm:$0xff]
  %v1662 = vld [vmem:[%s3 + $0x510] sm:$0xff]
  %v1663 = vld [vmem:[%s3 + $0x518] sm:$0xff]
  %v1664 = vld [vmem:[%s3 + $0x520] sm:$0xff]
  %v1665 = vld [vmem:[%s3 + $0x528] sm:$0xff]
  %v1666 = vld [vmem:[%s3 + $0x530] sm:$0xff]
  %v1667 = vld [vmem:[%s3 + $0x538] sm:$0xff]
  %v1668 = vld [vmem:[%s3 + $0x540] sm:$0xff]
  %v1669 = vld [vmem:[%s3 + $0x548] sm:$0xff]
  %v1670 = vld [vmem:[%s3 + $0x550] sm:$0xff]
  %v1671 = vld [vmem:[%s3 + $0x558] sm:$0xff]
  %v1672 = vld [vmem:[%s3 + $0x560] sm:$0xff]
  %v1673 = vld [vmem:[%s3 + $0x568] sm:$0xff]
  %v1674 = vld [vmem:[%s3 + $0x570] sm:$0xff]
  %v1675 = vld [vmem:[%s3 + $0x578] sm:$0xff]
  %v1676 = vld [vmem:[%s3 + $0x580] sm:$0xff]
  %v1677 = vld [vmem:[%s3 + $0x588] sm:$0xff]
  %v1678 = vld [vmem:[%s3 + $0x590] sm:$0xff]
  %v1679 = vld [vmem:[%s3 + $0x598] sm:$0xff]
  %v1680 = vld [vmem:[%s3 + $0x5a0] sm:$0xff]
  %v1681 = vld [vmem:[%s3 + $0x5a8] sm:$0xff]
  %v1682 = vld [vmem:[%s3 + $0x5b0] sm:$0xff]
  %v1683 = vld [vmem:[%s3 + $0x5b8] sm:$0xff]
  %v1684 = vld [vmem:[%s3 + $0x5c0] sm:$0xff]
  %v1685 = vld [vmem:[%s3 + $0x5c8] sm:$0xff]
  %v1686 = vld [vmem:[%s3 + $0x5d0] sm:$0xff]
  %v1687 = vld [vmem:[%s3 + $0x5d8] sm:$0xff]
  %v1688 = vld [vmem:[%s3 + $0x5e0] sm:$0xff]
  %v1689 = vld [vmem:[%s3 + $0x5e8] sm:$0xff]
  %v1690 = vld [vmem:[%s3 + $0x5f0] sm:$0xff]
  %v1691 = vld [vmem:[%s3 + $0x5f8] sm:$0xff]
  %v1692 = vld [vmem:[%s3 + $0x600] sm:$0xff]
  %v1693 = vld [vmem:[%s3 + $0x608] sm:$0xff]
  %v1694 = vld [vmem:[%s3 + $0x610] sm:$0xff]
  %v1695 = vld [vmem:[%s3 + $0x618] sm:$0xff]
  %v1696 = vld [vmem:[%s3 + $0x620] sm:$0xff]
  %v1697 = vld [vmem:[%s3 + $0x628] sm:$0xff]
  %v1698 = vld [vmem:[%s3 + $0x630] sm:$0xff]
  %v1699 = vld [vmem:[%s3 + $0x638] sm:$0xff]
  %v1700 = vld [vmem:[%s3 + $0x640] sm:$0xff]
  %v1701 = vld [vmem:[%s3 + $0x648] sm:$0xff]
  %v1702 = vld [vmem:[%s3 + $0x650] sm:$0xff]
  %v1703 = vld [vmem:[%s3 + $0x658] sm:$0xff]
  %v1704 = vld [vmem:[%s3 + $0x660] sm:$0xff]
  %v1705 = vld [vmem:[%s3 + $0x668] sm:$0xff]
  %v1706 = vld [vmem:[%s3 + $0x670] sm:$0xff]
  %v1707 = vld [vmem:[%s3 + $0x678] sm:$0xff]
  %v1708 = vld [vmem:[%s3 + $0x680] sm:$0xff]
  %v1709 = vld [vmem:[%s3 + $0x688] sm:$0xff]
  %v1710 = vld [vmem:[%s3 + $0x690] sm:$0xff]
  %v1711 = vld [vmem:[%s3 + $0x698] sm:$0xff]
  %v1712 = vld [vmem:[%s3 + $0x6a0] sm:$0xff]
  %v1713 = vld [vmem:[%s3 + $0x6a8] sm:$0xff]
  %v1714 = vld [vmem:[%s3 + $0x6b0] sm:$0xff]
  %v1715 = vld [vmem:[%s3 + $0x6b8] sm:$0xff]
  %v1716 = vld [vmem:[%s3 + $0x6c0] sm:$0xff]
  %v1717 = vld [vmem:[%s3 + $0x6c8] sm:$0xff]
  %v1718 = vld [vmem:[%s3 + $0x6d0] sm:$0xff]
  %v1719 = vld [vmem:[%s3 + $0x6d8] sm:$0xff]
  %v1720 = vld [vmem:[%s3 + $0x6e0] sm:$0xff]
  %v1721 = vld [vmem:[%s3 + $0x6e8] sm:$0xff]
  %v1722 = vld [vmem:[%s3 + $0x6f0] sm:$0xff]
  %v1723 = vld [vmem:[%s3 + $0x6f8] sm:$0xff]
  %v1724 = vld [vmem:[%s3 + $0x700] sm:$0xff]
  %v1725 = vld [vmem:[%s3 + $0x708] sm:$0xff]
  %v1726 = vld [vmem:[%s3 + $0x710] sm:$0xff]
  %v1727 = vld [vmem:[%s3 + $0x718] sm:$0xff]
  %v1728 = vld [vmem:[%s3 + $0x720] sm:$0xff]
  %v1729 = vld [vmem:[%s3 + $0x728] sm:$0xff]
  %v1730 = vld [vmem:[%s3 + $0x730] sm:$0xff]
  %v1731 = vld [vmem:[%s3 + $0x738] sm:$0xff]
  %v1732 = vld [vmem:[%s3 + $0x740] sm:$0xff]
  %v1733 = vld [vmem:[%s3 + $0x748] sm:$0xff]
  %v1734 = vld [vmem:[%s3 + $0x750] sm:$0xff]
  %v1735 = vld [vmem:[%s3 + $0x758] sm:$0xff]
  %v1736 = vld [vmem:[%s3 + $0x760] sm:$0xff]
  %v1737 = vld [vmem:[%s3 + $0x768] sm:$0xff]
  %v1738 = vld [vmem:[%s3 + $0x770] sm:$0xff]
  %v1739 = vld [vmem:[%s3 + $0x778] sm:$0xff]
  %v1740 = vld [vmem:[%s3 + $0x780] sm:$0xff]
  %v1741 = vld [vmem:[%s3 + $0x788] sm:$0xff]
  %v1742 = vld [vmem:[%s3 + $0x790] sm:$0xff]
  %v1743 = vld [vmem:[%s3 + $0x798] sm:$0xff]
  %v1744 = vld [vmem:[%s3 + $0x7a0] sm:$0xff]
  %v1745 = vld [vmem:[%s3 + $0x7a8] sm:$0xff]
  %v1746 = vld [vmem:[%s3 + $0x7b0] sm:$0xff]
  %v1747 = vld [vmem:[%s3 + $0x7b8] sm:$0xff]
  %v1748 = vld [vmem:[%s3 + $0x7c0] sm:$0xff]
  %v1749 = vld [vmem:[%s3 + $0x7c8] sm:$0xff]
  %v1750 = vld [vmem:[%s3 + $0x7d0] sm:$0xff]
  %v1751 = vld [vmem:[%s3 + $0x7d8] sm:$0xff]
  %v1752 = vld [vmem:[%s3 + $0x7e0] sm:$0xff]
  %v1753 = vld [vmem:[%s3 + $0x7e8] sm:$0xff]
  %v1754 = vld [vmem:[%s3 + $0x7f0] sm:$0xff]
  %v1755 = vld [vmem:[%s3 + $0x7f8] sm:$0xff]
  %v1756 = vld [vmem:[%s3 + $0x800] sm:$0xff]
  %v1757 = vld [vmem:[%s3 + $0x808] sm:$0xff]
  %v1758 = vld [vmem:[%s3 + $0x810] sm:$0xff]
  %v1759 = vld [vmem:[%s3 + $0x818] sm:$0xff]
  %v1760 = vld [vmem:[%s3 + $0x820] sm:$0xff]
  %v1761 = vld [vmem:[%s3 + $0x828] sm:$0xff]
  %v1762 = vld [vmem:[%s3 + $0x830] sm:$0xff]
  %v1763 = vld [vmem:[%s3 + $0x838] sm:$0xff]
  %v1764 = vld [vmem:[%s3 + $0x840] sm:$0xff]
  %v1765 = vld [vmem:[%s3 + $0x848] sm:$0xff]
  %v1766 = vld [vmem:[%s3 + $0x850] sm:$0xff]
  %v1767 = vld [vmem:[%s3 + $0x858] sm:$0xff]
  %v1768 = vld [vmem:[%s3 + $0x860] sm:$0xff]
  %v1769 = vld [vmem:[%s3 + $0x868] sm:$0xff]
  %v1770 = vld [vmem:[%s3 + $0x870] sm:$0xff]
  %v1771 = vld [vmem:[%s3 + $0x878] sm:$0xff]
  %v1772 = vld [vmem:[%s3 + $0x880] sm:$0xff]
  %v1773 = vld [vmem:[%s3 + $0x888] sm:$0xff]
  %v1774 = vld [vmem:[%s3 + $0x890] sm:$0xff]
  %v1775 = vld [vmem:[%s3 + $0x898] sm:$0xff]
  %v1776 = vld [vmem:[%s3 + $0x8a0] sm:$0xff]
  %v1777 = vld [vmem:[%s3 + $0x8a8] sm:$0xff]
  %v1778 = vld [vmem:[%s3 + $0x8b0] sm:$0xff]
  %v1779 = vld [vmem:[%s3 + $0x8b8] sm:$0xff]
  %v1780 = vld [vmem:[%s3 + $0x8c0] sm:$0xff]
  %v1781 = vld [vmem:[%s3 + $0x8c8] sm:$0xff]
  %v1782 = vld [vmem:[%s3 + $0x8d0] sm:$0xff]
  %v1783 = vld [vmem:[%s3 + $0x8d8] sm:$0xff]
  %v1784 = vld [vmem:[%s3 + $0x8e0] sm:$0xff]
  %v1785 = vld [vmem:[%s3 + $0x8e8] sm:$0xff]
  %v1786 = vld [vmem:[%s3 + $0x8f0] sm:$0xff]
  %v1787 = vld [vmem:[%s3 + $0x8f8] sm:$0xff]
  %v1788 = vld [vmem:[%s3 + $0x900] sm:$0xff]
  %v1789 = vld [vmem:[%s3 + $0x908] sm:$0xff]
  %v1790 = vld [vmem:[%s3 + $0x910] sm:$0xff]
  %v1791 = vld [vmem:[%s3 + $0x918] sm:$0xff]
  %v1792 = vld [vmem:[%s3 + $0x920] sm:$0xff]
  %v1793 = vld [vmem:[%s3 + $0x928] sm:$0xff]
  %v1794 = vld [vmem:[%s3 + $0x930] sm:$0xff]
  %v1795 = vld [vmem:[%s3 + $0x938] sm:$0xff]
  %v1796 = vld [vmem:[%s3 + $0x940] sm:$0xff]
  %v1797 = vld [vmem:[%s3 + $0x948] sm:$0xff]
  %v1798 = vld [vmem:[%s3 + $0x950] sm:$0xff]
  %v1799 = vld [vmem:[%s3 + $0x958] sm:$0xff]
  %v1800 = vld [vmem:[%s3 + $0x960] sm:$0xff]
  %v1801 = vld [vmem:[%s3 + $0x968] sm:$0xff]
  %v1802 = vld [vmem:[%s3 + $0x970] sm:$0xff]
  %v1803 = vld [vmem:[%s3 + $0x978] sm:$0xff]
  %v1804 = vld [vmem:[%s3 + $0x980] sm:$0xff]
  %v1805 = vld [vmem:[%s3 + $0x988] sm:$0xff]
  %v1806 = vld [vmem:[%s3 + $0x990] sm:$0xff]
  %v1807 = vld [vmem:[%s3 + $0x998] sm:$0xff]
  %v1808 = vld [vmem:[%s3 + $0x9a0] sm:$0xff]
  %v1809 = vld [vmem:[%s3 + $0x9a8] sm:$0xff]
  %v1810 = vld [vmem:[%s3 + $0x9b0] sm:$0xff]
  %v1811 = vld [vmem:[%s3 + $0x9b8] sm:$0xff]
  %v1812 = vld [vmem:[%s3 + $0x9c0] sm:$0xff]
  %v1813 = vld [vmem:[%s3 + $0x9c8] sm:$0xff]
  %v1814 = vld [vmem:[%s3 + $0x9d0] sm:$0xff]
  %v1815 = vld [vmem:[%s3 + $0x9d8] sm:$0xff]
  %v1816 = vld [vmem:[%s3 + $0x9e0] sm:$0xff]
  %v1817 = vld [vmem:[%s3 + $0x9e8] sm:$0xff]
  %v1818 = vld [vmem:[%s3 + $0x9f0] sm:$0xff]
  %v1819 = vld [vmem:[%s3 + $0x9f8] sm:$0xff]
  %v1820 = vld [vmem:[%s3 + $0xa00] sm:$0xff]
  %v1821 = vld [vmem:[%s3 + $0xa08] sm:$0xff]
  %v1822 = vld [vmem:[%s3 + $0xa10] sm:$0xff]
  %v1823 = vld [vmem:[%s3 + $0xa18] sm:$0xff]
  %v1824 = vld [vmem:[%s3 + $0xa20] sm:$0xff]
  %v1825 = vld [vmem:[%s3 + $0xa28] sm:$0xff]
  %v1826 = vld [vmem:[%s3 + $0xa30] sm:$0xff]
  %v1827 = vld [vmem:[%s3 + $0xa38] sm:$0xff]
  %v1828 = vld [vmem:[%s3 + $0xa40] sm:$0xff]
  %v1829 = vld [vmem:[%s3 + $0xa48] sm:$0xff]
  %v1830 = vld [vmem:[%s3 + $0xa50] sm:$0xff]
  %v1831 = vld [vmem:[%s3 + $0xa58] sm:$0xff]
  %v1832 = vld [vmem:[%s3 + $0xa60] sm:$0xff]
  %v1833 = vld [vmem:[%s3 + $0xa68] sm:$0xff]
  %v1834 = vld [vmem:[%s3 + $0xa70] sm:$0xff]
  %v1835 = vld [vmem:[%s3 + $0xa78] sm:$0xff]
  %v1836 = vld [vmem:[%s3 + $0xa80] sm:$0xff]
  %v1837 = vld [vmem:[%s3 + $0xa88] sm:$0xff]
  %v1838 = vld [vmem:[%s3 + $0xa90] sm:$0xff]
  %v1839 = vld [vmem:[%s3 + $0xa98] sm:$0xff]
  %v1840 = vld [vmem:[%s3 + $0xaa0] sm:$0xff]
  %v1841 = vld [vmem:[%s3 + $0xaa8] sm:$0xff]
  %v1842 = vld [vmem:[%s3 + $0xab0] sm:$0xff]
  %v1843 = vld [vmem:[%s3 + $0xab8] sm:$0xff]
  %v1844 = vld [vmem:[%s3 + $0xac0] sm:$0xff]
  %v1845 = vld [vmem:[%s3 + $0xac8] sm:$0xff]
  %v1846 = vld [vmem:[%s3 + $0xad0] sm:$0xff]
  %v1847 = vld [vmem:[%s3 + $0xad8] sm:$0xff]
  %v1848 = vld [vmem:[%s3 + $0xae0] sm:$0xff]
  %v1849 = vld [vmem:[%s3 + $0xae8] sm:$0xff]
  %v1850 = vld [vmem:[%s3 + $0xaf0] sm:$0xff]
  %v1851 = vld [vmem:[%s3 + $0xaf8] sm:$0xff]
  %v1852 = vld [vmem:[%s3 + $0xb00] sm:$0xff]
  %v1853 = vld [vmem:[%s3 + $0xb08] sm:$0xff]
  %v1854 = vld [vmem:[%s3 + $0xb10] sm:$0xff]
  %v1855 = vld [vmem:[%s3 + $0xb18] sm:$0xff]
  %v1856 = vld [vmem:[%s3 + $0xb20] sm:$0xff]
  %v1857 = vld [vmem:[%s3 + $0xb28] sm:$0xff]
  %v1858 = vld [vmem:[%s3 + $0xb30] sm:$0xff]
  %v1859 = vld [vmem:[%s3 + $0xb38] sm:$0xff]
  %v1860 = vld [vmem:[%s3 + $0xb40] sm:$0xff]
  %v1861 = vld [vmem:[%s3 + $0xb48] sm:$0xff]
  %v1862 = vld [vmem:[%s3 + $0xb50] sm:$0xff]
  %v1863 = vld [vmem:[%s3 + $0xb58] sm:$0xff]
  %v1864 = vld [vmem:[%s3 + $0xb60] sm:$0xff]
  %v1865 = vld [vmem:[%s3 + $0xb68] sm:$0xff]
  %v1866 = vld [vmem:[%s3 + $0xb70] sm:$0xff]
  %v1867 = vld [vmem:[%s3 + $0xb78] sm:$0xff]
  %v1868 = vld [vmem:[%s3 + $0xb80] sm:$0xff]
  %v1869 = vld [vmem:[%s3 + $0xb88] sm:$0xff]
  %v1870 = vld [vmem:[%s3 + $0xb90] sm:$0xff]
  %v1871 = vld [vmem:[%s3 + $0xb98] sm:$0xff]
  %v1872 = vld [vmem:[%s3 + $0xba0] sm:$0xff]
  %v1873 = vld [vmem:[%s3 + $0xba8] sm:$0xff]
  %v1874 = vld [vmem:[%s3 + $0xbb0] sm:$0xff]
  %v1875 = vld [vmem:[%s3 + $0xbb8] sm:$0xff]
  %v1876 = vld [vmem:[%s3 + $0xbc0] sm:$0xff]
  %v1877 = vld [vmem:[%s3 + $0xbc8] sm:$0xff]
  %v1878 = vld [vmem:[%s3 + $0xbd0] sm:$0xff]
  %v1879 = vld [vmem:[%s3 + $0xbd8] sm:$0xff]
  %v1880 = vld [vmem:[%s3 + $0xbe0] sm:$0xff]
  %v1881 = vld [vmem:[%s3 + $0xbe8] sm:$0xff]
  %v1882 = vld [vmem:[%s3 + $0xbf0] sm:$0xff]
  %v1883 = vld [vmem:[%s3 + $0xbf8] sm:$0xff]
  %v1884 = vld [vmem:[%s3 + $0xc00] sm:$0xff]
  %v1885 = vld [vmem:[%s3 + $0xc08] sm:$0xff]
  %v1886 = vld [vmem:[%s3 + $0xc10] sm:$0xff]
  %v1887 = vld [vmem:[%s3 + $0xc18] sm:$0xff]
  %v1888 = vld [vmem:[%s3 + $0xc20] sm:$0xff]
  %v1889 = vld [vmem:[%s3 + $0xc28] sm:$0xff]
  %v1890 = vld [vmem:[%s3 + $0xc30] sm:$0xff]
  %v1891 = vld [vmem:[%s3 + $0xc38] sm:$0xff]
  %v1892 = vld [vmem:[%s3 + $0xc40] sm:$0xff]
  %v1893 = vld [vmem:[%s3 + $0xc48] sm:$0xff]
  %v1894 = vld [vmem:[%s3 + $0xc50] sm:$0xff]
  %v1895 = vld [vmem:[%s3 + $0xc58] sm:$0xff]
  %v1896 = vld [vmem:[%s3 + $0xc60] sm:$0xff]
  %v1897 = vld [vmem:[%s3 + $0xc68] sm:$0xff]
  %v1898 = vld [vmem:[%s3 + $0xc70] sm:$0xff]
  %v1899 = vld [vmem:[%s3 + $0xc78] sm:$0xff]
  %v1900 = vld [vmem:[%s3 + $0xc80] sm:$0xff]
  %v1901 = vld [vmem:[%s3 + $0xc88] sm:$0xff]
  %v1902 = vld [vmem:[%s3 + $0xc90] sm:$0xff]
  %v1903 = vld [vmem:[%s3 + $0xc98] sm:$0xff]
  %v1904 = vld [vmem:[%s3 + $0xca0] sm:$0xff]
  %v1905 = vld [vmem:[%s3 + $0xca8] sm:$0xff]
  %v1906 = vld [vmem:[%s3 + $0xcb0] sm:$0xff]
  %v1907 = vld [vmem:[%s3 + $0xcb8] sm:$0xff]
  %v1908 = vld [vmem:[%s3 + $0xcc0] sm:$0xff]
  %v1909 = vld [vmem:[%s3 + $0xcc8] sm:$0xff]
  %v1910 = vld [vmem:[%s3 + $0xcd0] sm:$0xff]
  %v1911 = vld [vmem:[%s3 + $0xcd8] sm:$0xff]
  %v1912 = vld [vmem:[%s3 + $0xce0] sm:$0xff]
  %v1913 = vld [vmem:[%s3 + $0xce8] sm:$0xff]
  %v1914 = vld [vmem:[%s3 + $0xcf0] sm:$0xff]
  %v1915 = vld [vmem:[%s3 + $0xcf8] sm:$0xff]
  %v1916 = vld [vmem:[%s3 + $0xd00] sm:$0xff]
  %v1917 = vld [vmem:[%s3 + $0xd08] sm:$0xff]
  %v1918 = vld [vmem:[%s3 + $0xd10] sm:$0xff]
  %v1919 = vld [vmem:[%s3 + $0xd18] sm:$0xff]
  %v1920 = vld [vmem:[%s3 + $0xd20] sm:$0xff]
  %v1921 = vld [vmem:[%s3 + $0xd28] sm:$0xff]
  %v1922 = vld [vmem:[%s3 + $0xd30] sm:$0xff]
  %v1923 = vld [vmem:[%s3 + $0xd38] sm:$0xff]
  %v1924 = vld [vmem:[%s3 + $0xd40] sm:$0xff]
  %v1925 = vld [vmem:[%s3 + $0xd48] sm:$0xff]
  %v1926 = vld [vmem:[%s3 + $0xd50] sm:$0xff]
  %v1927 = vld [vmem:[%s3 + $0xd58] sm:$0xff]
  %v1928 = vld [vmem:[%s3 + $0xd60] sm:$0xff]
  %v1929 = vld [vmem:[%s3 + $0xd68] sm:$0xff]
  %v1930 = vld [vmem:[%s3 + $0xd70] sm:$0xff]
  %v1931 = vld [vmem:[%s3 + $0xd78] sm:$0xff]
  %v1932 = vld [vmem:[%s3 + $0xd80] sm:$0xff]
  %v1933 = vld [vmem:[%s3 + $0xd88] sm:$0xff]
  %v1934 = vld [vmem:[%s3 + $0xd90] sm:$0xff]
  %v1935 = vld [vmem:[%s3 + $0xd98] sm:$0xff]
  %v1936 = vld [vmem:[%s3 + $0xda0] sm:$0xff]
  %v1937 = vld [vmem:[%s3 + $0xda8] sm:$0xff]
  %v1938 = vld [vmem:[%s3 + $0xdb0] sm:$0xff]
  %v1939 = vld [vmem:[%s3 + $0xdb8] sm:$0xff]
  %v1940 = vld [vmem:[%s3 + $0xdc0] sm:$0xff]
  %v1941 = vld [vmem:[%s3 + $0xdc8] sm:$0xff]
  %v1942 = vld [vmem:[%s3 + $0xdd0] sm:$0xff]
  %v1943 = vld [vmem:[%s3 + $0xdd8] sm:$0xff]
  %v1944 = vld [vmem:[%s3 + $0xde0] sm:$0xff]
  %v1945 = vld [vmem:[%s3 + $0xde8] sm:$0xff]
  %v1946 = vld [vmem:[%s3 + $0xdf0] sm:$0xff]
  %v1947 = vld [vmem:[%s3 + $0xdf8] sm:$0xff]
  %v1948 = vld [vmem:[%s3 + $0xe00] sm:$0xff]
  %v1949 = vld [vmem:[%s3 + $0xe08] sm:$0xff]
  %v1950 = vld [vmem:[%s3 + $0xe10] sm:$0xff]
  %v1951 = vld [vmem:[%s3 + $0xe18] sm:$0xff]
  %v1952 = vld [vmem:[%s3 + $0xe20] sm:$0xff]
  %v1953 = vld [vmem:[%s3 + $0xe28] sm:$0xff]
  %v1954 = vld [vmem:[%s3 + $0xe30] sm:$0xff]
  %v1955 = vld [vmem:[%s3 + $0xe38] sm:$0xff]
  %v1956 = vld [vmem:[%s3 + $0xe40] sm:$0xff]
  %v1957 = vld [vmem:[%s3 + $0xe48] sm:$0xff]
  %v1958 = vld [vmem:[%s3 + $0xe50] sm:$0xff]
  %v1959 = vld [vmem:[%s3 + $0xe58] sm:$0xff]
  %v1960 = vld [vmem:[%s3 + $0xe60] sm:$0xff]
  %v1961 = vld [vmem:[%s3 + $0xe68] sm:$0xff]
  %v1962 = vld [vmem:[%s3 + $0xe70] sm:$0xff]
  %v1963 = vld [vmem:[%s3 + $0xe78] sm:$0xff]
  %v1964 = vld [vmem:[%s3 + $0xe80] sm:$0xff]
  %v1965 = vld [vmem:[%s3 + $0xe88] sm:$0xff]
  %v1966 = vld [vmem:[%s3 + $0xe90] sm:$0xff]
  %v1967 = vld [vmem:[%s3 + $0xe98] sm:$0xff]
  %v1968 = vld [vmem:[%s3 + $0xea0] sm:$0xff]
  %v1969 = vld [vmem:[%s3 + $0xea8] sm:$0xff]
  %v1970 = vld [vmem:[%s3 + $0xeb0] sm:$0xff]
  %v1971 = vld [vmem:[%s3 + $0xeb8] sm:$0xff]
  %v1972 = vld [vmem:[%s3 + $0xec0] sm:$0xff]
  %v1973 = vld [vmem:[%s3 + $0xec8] sm:$0xff]
  %v1974 = vld [vmem:[%s3 + $0xed0] sm:$0xff]
  %v1975 = vld [vmem:[%s3 + $0xed8] sm:$0xff]
  %v1976 = vld [vmem:[%s3 + $0xee0] sm:$0xff]
  %v1977 = vld [vmem:[%s3 + $0xee8] sm:$0xff]
  %v1978 = vld [vmem:[%s3 + $0xef0] sm:$0xff]
  %v1979 = vld [vmem:[%s3 + $0xef8] sm:$0xff]
  %v1980 = vld [vmem:[%s3 + $0xf00] sm:$0xff]
  %v1981 = vld [vmem:[%s3 + $0xf08] sm:$0xff]
  %v1982 = vld [vmem:[%s3 + $0xf10] sm:$0xff]
  %v1983 = vld [vmem:[%s3 + $0xf18] sm:$0xff]
  %v1984 = vld [vmem:[%s3 + $0xf20] sm:$0xff]
  %v1985 = vld [vmem:[%s3 + $0xf28] sm:$0xff]
  %v1986 = vld [vmem:[%s3 + $0xf30] sm:$0xff]
  %v1987 = vld [vmem:[%s3 + $0xf38] sm:$0xff]
  %v1988 = vld [vmem:[%s3 + $0xf40] sm:$0xff]
  %v1989 = vld [vmem:[%s3 + $0xf48] sm:$0xff]
  %v1990 = vld [vmem:[%s3 + $0xf50] sm:$0xff]
  %v1991 = vld [vmem:[%s3 + $0xf58] sm:$0xff]
  %v1992 = vld [vmem:[%s3 + $0xf60] sm:$0xff]
  %v1993 = vld [vmem:[%s3 + $0xf68] sm:$0xff]
  %v1994 = vld [vmem:[%s3 + $0xf70] sm:$0xff]
  %v1995 = vld [vmem:[%s3 + $0xf78] sm:$0xff]
  %v1996 = vld [vmem:[%s3 + $0xf80] sm:$0xff]
  %v1997 = vld [vmem:[%s3 + $0xf88] sm:$0xff]
  %v1998 = vld [vmem:[%s3 + $0xf90] sm:$0xff]
  %v1999 = vld [vmem:[%s3 + $0xf98] sm:$0xff]
  %v2000 = vld [vmem:[%s3 + $0xfa0] sm:$0xff]
  %v2001 = vld [vmem:[%s3 + $0xfa8] sm:$0xff]
  %v2002 = vld [vmem:[%s3 + $0xfb0] sm:$0xff]
  %v2003 = vld [vmem:[%s3 + $0xfb8] sm:$0xff]
  %v2004 = vld [vmem:[%s3 + $0xfc0] sm:$0xff]
  %v2005 = vld [vmem:[%s3 + $0xfc8] sm:$0xff]
  %v2006 = vld [vmem:[%s3 + $0xfd0] sm:$0xff]
  %v2007 = vld [vmem:[%s3 + $0xfd8] sm:$0xff]
  %v2008 = vld [vmem:[%s3 + $0xfe0] sm:$0xff]
  %v2009 = vld [vmem:[%s3 + $0xfe8] sm:$0xff]
  %v2010 = vld [vmem:[%s3 + $0xff0] sm:$0xff]
  %v2011 = vld [vmem:[%s3 + $0xff8] sm:$0xff]
  %v2012 = vld [vmem:[%s3 + $0x1000] sm:$0xff]
  %v2013 = vld [vmem:[%s3 + $0x1008] sm:$0xff]
  %v2014 = vld [vmem:[%s3 + $0x1010] sm:$0xff]
  %v2015 = vld [vmem:[%s3 + $0x1018] sm:$0xff]
  %v2016 = vld [vmem:[%s3 + $0x1020] sm:$0xff]
  %v2017 = vld [vmem:[%s3 + $0x1028] sm:$0xff]
  %v2018 = vld [vmem:[%s3 + $0x1030] sm:$0xff]
  %v2019 = vld [vmem:[%s3 + $0x1038] sm:$0xff]
  %v2020 = vld [vmem:[%s3 + $0x1040] sm:$0xff]
  %v2021 = vld [vmem:[%s3 + $0x1048] sm:$0xff]
  %v2022 = vld [vmem:[%s3 + $0x1050] sm:$0xff]
  %v2023 = vld [vmem:[%s3 + $0x1058] sm:$0xff]
  %v2024 = vld [vmem:[%s3 + $0x1060] sm:$0xff]
  %v2025 = vld [vmem:[%s3 + $0x1068] sm:$0xff]
  %v2026 = vld [vmem:[%s3 + $0x1070] sm:$0xff]
  %v2027 = vld [vmem:[%s3 + $0x1078] sm:$0xff]
  %v2028 = vld [vmem:[%s3 + $0x1080] sm:$0xff]
  %v2029 = vld [vmem:[%s3 + $0x1088] sm:$0xff]
  %v2030 = vld [vmem:[%s3 + $0x1090] sm:$0xff]
  %v2031 = vld [vmem:[%s3 + $0x1098] sm:$0xff]
  %v2032 = vld [vmem:[%s3 + $0x10a0] sm:$0xff]
  %v2033 = vld [vmem:[%s3 + $0x10a8] sm:$0xff]
  %v2034 = vld [vmem:[%s3 + $0x10b0] sm:$0xff]
  %v2035 = vld [vmem:[%s3 + $0x10b8] sm:$0xff]
  %v2036 = vld [vmem:[%s3 + $0x10c0] sm:$0xff]
  %v2037 = vld [vmem:[%s3 + $0x10c8] sm:$0xff]
  %v2038 = vld [vmem:[%s3 + $0x10d0] sm:$0xff]
  %v2039 = vld [vmem:[%s3 + $0x10d8] sm:$0xff]
  %v2040 = vld [vmem:[%s3 + $0x10e0] sm:$0xff]
  %v2041 = vld [vmem:[%s3 + $0x10e8] sm:$0xff]
  %v2042 = vld [vmem:[%s3 + $0x10f0] sm:$0xff]
  %v2043 = vld [vmem:[%s3 + $0x10f8] sm:$0xff]
  %v2044 = vld [vmem:[%s3 + $0x1100] sm:$0xff]
  %v2045 = vld [vmem:[%s3 + $0x1108] sm:$0xff]
  %v2046 = vld [vmem:[%s3 + $0x1110] sm:$0xff]
  %v2047 = vld [vmem:[%s3 + $0x1118] sm:$0xff]
  %v2048 = vld [vmem:[%s3 + $0x1120] sm:$0xff]
  %v2049 = vld [vmem:[%s3 + $0x1128] sm:$0xff]
  %v2050 = vld [vmem:[%s3 + $0x1130] sm:$0xff]
  %v2051 = vld [vmem:[%s3 + $0x1138] sm:$0xff]
  %v2052 = vld [vmem:[%s3 + $0x1140] sm:$0xff]
  %v2053 = vld [vmem:[%s3 + $0x1148] sm:$0xff]
  %v2054 = vld [vmem:[%s3 + $0x1150] sm:$0xff]
  %v2055 = vld [vmem:[%s3 + $0x1158] sm:$0xff]
  %v2056 = vld [vmem:[%s3 + $0x1160] sm:$0xff]
  %v2057 = vld [vmem:[%s3 + $0x1168] sm:$0xff]
  %v2058 = vld [vmem:[%s3 + $0x1170] sm:$0xff]
  %v2059 = vld [vmem:[%s3 + $0x1178] sm:$0xff]
  %v2060 = vld [vmem:[%s3 + $0x1180] sm:$0xff]
  %v2061 = vld [vmem:[%s3 + $0x1188] sm:$0xff]
  %v2062 = vld [vmem:[%s3 + $0x1190] sm:$0xff]
  %v2063 = vld [vmem:[%s3 + $0x1198] sm:$0xff]
  %v2064 = vld [vmem:[%s3 + $0x11a0] sm:$0xff]
  %v2065 = vld [vmem:[%s3 + $0x11a8] sm:$0xff]
  %v2066 = vld [vmem:[%s3 + $0x11b0] sm:$0xff]
  %v2067 = vld [vmem:[%s3 + $0x11b8] sm:$0xff]
  %v2068 = vld [vmem:[%s3 + $0x11c0] sm:$0xff]
  %v2069 = vld [vmem:[%s3 + $0x11c8] sm:$0xff]
  %v2070 = vld [vmem:[%s3 + $0x11d0] sm:$0xff]
  %v2071 = vld [vmem:[%s3 + $0x11d8] sm:$0xff]
  %v2072 = vld [vmem:[%s3 + $0x11e0] sm:$0xff]
  %v2073 = vld [vmem:[%s3 + $0x11e8] sm:$0xff]
  %v2074 = vld [vmem:[%s3 + $0x11f0] sm:$0xff]
  %v2075 = vld [vmem:[%s3 + $0x11f8] sm:$0xff]
  %v2076 = vld [vmem:[%s3 + $0x1200] sm:$0xff]
  %v2077 = vld [vmem:[%s3 + $0x1208] sm:$0xff]
  %v2078 = vld [vmem:[%s3 + $0x1210] sm:$0xff]
  %v2079 = vld [vmem:[%s3 + $0x1218] sm:$0xff]
  %v2080 = vld [vmem:[%s3 + $0x1220] sm:$0xff]
  %v2081 = vld [vmem:[%s3 + $0x1228] sm:$0xff]
  %v2082 = vld [vmem:[%s3 + $0x1230] sm:$0xff]
  %v2083 = vld [vmem:[%s3 + $0x1238] sm:$0xff]
  %v2084 = vld [vmem:[%s3 + $0x1240] sm:$0xff]
  %v2085 = vld [vmem:[%s3 + $0x1248] sm:$0xff]
  %v2086 = vld [vmem:[%s3 + $0x1250] sm:$0xff]
  %v2087 = vld [vmem:[%s3 + $0x1258] sm:$0xff]
  %v2088 = vld [vmem:[%s3 + $0x1260] sm:$0xff]
  %v2089 = vld [vmem:[%s3 + $0x1268] sm:$0xff]
  %v2090 = vld [vmem:[%s3 + $0x1270] sm:$0xff]
  %v2091 = vld [vmem:[%s3 + $0x1278] sm:$0xff]
  %v2092 = vld [vmem:[%s3 + $0x1280] sm:$0xff]
  %v2093 = vld [vmem:[%s3 + $0x1288] sm:$0xff]
  %v2094 = vld [vmem:[%s3 + $0x1290] sm:$0xff]
  %v2095 = vld [vmem:[%s3 + $0x1298] sm:$0xff]
  %v2096 = vld [vmem:[%s3 + $0x12a0] sm:$0xff]
  %v2097 = vld [vmem:[%s3 + $0x12a8] sm:$0xff]
  %v2098 = vld [vmem:[%s3 + $0x12b0] sm:$0xff]
  %v2099 = vld [vmem:[%s3 + $0x12b8] sm:$0xff]
  %v2100 = vld [vmem:[%s3 + $0x12c0] sm:$0xff]
  %v2101 = vld [vmem:[%s3 + $0x12c8] sm:$0xff]
  %v2102 = vld [vmem:[%s3 + $0x12d0] sm:$0xff]
  %v2103 = vld [vmem:[%s3 + $0x12d8] sm:$0xff]
  %v2104 = vld [vmem:[%s3 + $0x12e0] sm:$0xff]
  %v2105 = vld [vmem:[%s3 + $0x12e8] sm:$0xff]
  %v2106 = vld [vmem:[%s3 + $0x12f0] sm:$0xff]
  %v2107 = vld [vmem:[%s3 + $0x12f8] sm:$0xff]
  %v2108 = vld [vmem:[%s3 + $0x1300] sm:$0xff]
  %v2109 = vld [vmem:[%s3 + $0x1308] sm:$0xff]
  %v2110 = vld [vmem:[%s3 + $0x1310] sm:$0xff]
  %v2111 = vld [vmem:[%s3 + $0x1318] sm:$0xff]
  %v2112 = vld [vmem:[%s3 + $0x1320] sm:$0xff]
  %v2113 = vld [vmem:[%s3 + $0x1328] sm:$0xff]
  %v2114 = vld [vmem:[%s3 + $0x1330] sm:$0xff]
  %v2115 = vld [vmem:[%s3 + $0x1338] sm:$0xff]
  %v2116 = vld [vmem:[%s3 + $0x1340] sm:$0xff]
  %v2117 = vld [vmem:[%s3 + $0x1348] sm:$0xff]
  %v2118 = vld [vmem:[%s3 + $0x1350] sm:$0xff]
  %v2119 = vld [vmem:[%s3 + $0x1358] sm:$0xff]
  %v2120 = vld [vmem:[%s3 + $0x1360] sm:$0xff]
  %v2121 = vld [vmem:[%s3 + $0x1368] sm:$0xff]
  %v2122 = vld [vmem:[%s3 + $0x1370] sm:$0xff]
  %v2123 = vld [vmem:[%s3 + $0x1378] sm:$0xff]
  %v2124 = vld [vmem:[%s3 + $0x1380] sm:$0xff]
  %v2125 = vld [vmem:[%s3 + $0x1388] sm:$0xff]
  %v2126 = vld [vmem:[%s3 + $0x1390] sm:$0xff]
  %v2127 = vld [vmem:[%s3 + $0x1398] sm:$0xff]
  %v2128 = vld [vmem:[%s3 + $0x13a0] sm:$0xff]
  %v2129 = vld [vmem:[%s3 + $0x13a8] sm:$0xff]
  %v2130 = vld [vmem:[%s3 + $0x13b0] sm:$0xff]
  %v2131 = vld [vmem:[%s3 + $0x13b8] sm:$0xff]
  %v2132 = vld [vmem:[%s3 + $0x13c0] sm:$0xff]
  %v2133 = vld [vmem:[%s3 + $0x13c8] sm:$0xff]
  %v2134 = vld [vmem:[%s3 + $0x13d0] sm:$0xff]
  %v2135 = vld [vmem:[%s3 + $0x13d8] sm:$0xff]
  %v2136 = vld [vmem:[%s3 + $0x13e0] sm:$0xff]
  %v2137 = vld [vmem:[%s3 + $0x13e8] sm:$0xff]
  %v2138 = vld [vmem:[%s3 + $0x13f0] sm:$0xff]
  %v2139 = vld [vmem:[%s3 + $0x13f8] sm:$0xff]
  %v2140 = vld [vmem:[%s3 + $0x1400] sm:$0xff]
  %v2141 = vld [vmem:[%s3 + $0x1408] sm:$0xff]
  %v2142 = vld [vmem:[%s3 + $0x1410] sm:$0xff]
  %v2143 = vld [vmem:[%s3 + $0x1418] sm:$0xff]
  %v2144 = vld [vmem:[%s3 + $0x1420] sm:$0xff]
  %v2145 = vld [vmem:[%s3 + $0x1428] sm:$0xff]
  %v2146 = vld [vmem:[%s3 + $0x1430] sm:$0xff]
  %v2147 = vld [vmem:[%s3 + $0x1438] sm:$0xff]
  %v2148 = vld [vmem:[%s3 + $0x1440] sm:$0xff]
  %v2149 = vld [vmem:[%s3 + $0x1448] sm:$0xff]
  %v2150 = vld [vmem:[%s3 + $0x1450] sm:$0xff]
  %v2151 = vld [vmem:[%s3 + $0x1458] sm:$0xff]
  %v2152 = vld [vmem:[%s3 + $0x1460] sm:$0xff]
  %v2153 = vld [vmem:[%s3 + $0x1468] sm:$0xff]
  %v2154 = vld [vmem:[%s3 + $0x1470] sm:$0xff]
  %v2155 = vld [vmem:[%s3 + $0x1478] sm:$0xff]
  %v2156 = vld [vmem:[%s3 + $0x1480] sm:$0xff]
  %v2157 = vld [vmem:[%s3 + $0x1488] sm:$0xff]
  %v2158 = vld [vmem:[%s3 + $0x1490] sm:$0xff]
  %v2159 = vld [vmem:[%s3 + $0x1498] sm:$0xff]
  %v2160 = vld [vmem:[%s3 + $0x14a0] sm:$0xff]
  %v2161 = vld [vmem:[%s3 + $0x14a8] sm:$0xff]
  %v2162 = vld [vmem:[%s3 + $0x14b0] sm:$0xff]
  %v2163 = vld [vmem:[%s3 + $0x14b8] sm:$0xff]
  %v2164 = vld [vmem:[%s3 + $0x14c0] sm:$0xff]
  %v2165 = vld [vmem:[%s3 + $0x14c8] sm:$0xff]
  %v2166 = vld [vmem:[%s3 + $0x14d0] sm:$0xff]
  %v2167 = vld [vmem:[%s3 + $0x14d8] sm:$0xff]
  %v2168 = vld [vmem:[%s3 + $0x14e0] sm:$0xff]
  %v2169 = vld [vmem:[%s3 + $0x14e8] sm:$0xff]
  %v2170 = vld [vmem:[%s3 + $0x14f0] sm:$0xff]
  %v2171 = vld [vmem:[%s3 + $0x14f8] sm:$0xff]
  %v2172 = vld [vmem:[%s3 + $0x1500] sm:$0xff]
  %v2173 = vld [vmem:[%s3 + $0x1508] sm:$0xff]
  %v2174 = vld [vmem:[%s3 + $0x1510] sm:$0xff]
  %v2175 = vld [vmem:[%s3 + $0x1518] sm:$0xff]
  %v2176 = vld [vmem:[%s3 + $0x1520] sm:$0xff]
  %v2177 = vld [vmem:[%s3 + $0x1528] sm:$0xff]
  %v2178 = vld [vmem:[%s3 + $0x1530] sm:$0xff]
  %v2179 = vld [vmem:[%s3 + $0x1538] sm:$0xff]
  %v2180 = vld [vmem:[%s3 + $0x1540] sm:$0xff]
  %v2181 = vld [vmem:[%s3 + $0x1548] sm:$0xff]
  %v2182 = vld [vmem:[%s3 + $0x1550] sm:$0xff]
  %v2183 = vld [vmem:[%s3 + $0x1558] sm:$0xff]
  %v2184 = vld [vmem:[%s3 + $0x1560] sm:$0xff]
  %v2185 = vld [vmem:[%s3 + $0x1568] sm:$0xff]
  %v2186 = vld [vmem:[%s3 + $0x1570] sm:$0xff]
  %v2187 = vld [vmem:[%s3 + $0x1578] sm:$0xff]
  %v2188 = vld [vmem:[%s3 + $0x1580] sm:$0xff]
  %v2189 = vld [vmem:[%s3 + $0x1588] sm:$0xff]
  %v2190 = vld [vmem:[%s3 + $0x1590] sm:$0xff]
  %v2191 = vld [vmem:[%s3 + $0x1598] sm:$0xff]
  %v2192 = vld [vmem:[%s3 + $0x15a0] sm:$0xff]
  %v2193 = vld [vmem:[%s3 + $0x15a8] sm:$0xff]
  %v2194 = vld [vmem:[%s3 + $0x15b0] sm:$0xff]
  %v2195 = vld [vmem:[%s3 + $0x15b8] sm:$0xff]
  %v2196 = vld [vmem:[%s3 + $0x15c0] sm:$0xff]
  %v2197 = vld [vmem:[%s3 + $0x15c8] sm:$0xff]
  %v2198 = vld [vmem:[%s3 + $0x15d0] sm:$0xff]
  %v2199 = vld [vmem:[%s3 + $0x15d8] sm:$0xff]
  %v2200 = vld [vmem:[%s3 + $0x15e0] sm:$0xff]
  %v2201 = vld [vmem:[%s3 + $0x15e8] sm:$0xff]
  %v2202 = vld [vmem:[%s3 + $0x15f0] sm:$0xff]
  %v2203 = vld [vmem:[%s3 + $0x15f8] sm:$0xff]
  %v2204 = vld [vmem:[%s3 + $0x1600] sm:$0xff]
  %v2205 = vld [vmem:[%s3 + $0x1608] sm:$0xff]
  %v2206 = vld [vmem:[%s3 + $0x1610] sm:$0xff]
  %v2207 = vld [vmem:[%s3 + $0x1618] sm:$0xff]
  %v2208 = vld [vmem:[%s3 + $0x1620] sm:$0xff]
  %v2209 = vld [vmem:[%s3 + $0x1628] sm:$0xff]
  %v2210 = vld [vmem:[%s3 + $0x1630] sm:$0xff]
  %v2211 = vld [vmem:[%s3 + $0x1638] sm:$0xff]
  %v2212 = vld [vmem:[%s3 + $0x1640] sm:$0xff]
  %v2213 = vld [vmem:[%s3 + $0x1648] sm:$0xff]
  %v2214 = vld [vmem:[%s3 + $0x1650] sm:$0xff]
  %v2215 = vld [vmem:[%s3 + $0x1658] sm:$0xff]
  %v2216 = vld [vmem:[%s3 + $0x1660] sm:$0xff]
  %v2217 = vld [vmem:[%s3 + $0x1668] sm:$0xff]
  %v2218 = vld [vmem:[%s3 + $0x1670] sm:$0xff]
  %v2219 = vld [vmem:[%s3 + $0x1678] sm:$0xff]
  %v2220 = vld [vmem:[%s3 + $0x1680] sm:$0xff]
  %v2221 = vld [vmem:[%s3 + $0x1688] sm:$0xff]
  %v2222 = vld [vmem:[%s3 + $0x1690] sm:$0xff]
  %v2223 = vld [vmem:[%s3 + $0x1698] sm:$0xff]
  %v2224 = vld [vmem:[%s3 + $0x16a0] sm:$0xff]
  %v2225 = vld [vmem:[%s3 + $0x16a8] sm:$0xff]
  %v2226 = vld [vmem:[%s3 + $0x16b0] sm:$0xff]
  %v2227 = vld [vmem:[%s3 + $0x16b8] sm:$0xff]
  %v2228 = vld [vmem:[%s3 + $0x16c0] sm:$0xff]
  %v2229 = vld [vmem:[%s3 + $0x16c8] sm:$0xff]
  %v2230 = vld [vmem:[%s3 + $0x16d0] sm:$0xff]
  %v2231 = vld [vmem:[%s3 + $0x16d8] sm:$0xff]
  %v2232 = vld [vmem:[%s3 + $0x16e0] sm:$0xff]
  %v2233 = vld [vmem:[%s3 + $0x16e8] sm:$0xff]
  %v2234 = vld [vmem:[%s3 + $0x16f0] sm:$0xff]
  %v2235 = vld [vmem:[%s3 + $0x16f8] sm:$0xff]
  %v2236 = vld [vmem:[%s3 + $0x1700] sm:$0xff]
  %v2237 = vld [vmem:[%s3 + $0x1708] sm:$0xff]
  %v2238 = vld [vmem:[%s3 + $0x1710] sm:$0xff]
  %v2239 = vld [vmem:[%s3 + $0x1718] sm:$0xff]
  %v2240 = vld [vmem:[%s3 + $0x1720] sm:$0xff]
  %v2241 = vld [vmem:[%s3 + $0x1728] sm:$0xff]
  %v2242 = vld [vmem:[%s3 + $0x1730] sm:$0xff]
  %v2243 = vld [vmem:[%s3 + $0x1738] sm:$0xff]
  %v2244 = vld [vmem:[%s3 + $0x1740] sm:$0xff]
  %v2245 = vld [vmem:[%s3 + $0x1748] sm:$0xff]
  %v2246 = vld [vmem:[%s3 + $0x1750] sm:$0xff]
  %v2247 = vld [vmem:[%s3 + $0x1758] sm:$0xff]
  %v2248 = vld [vmem:[%s3 + $0x1760] sm:$0xff]
  %v2249 = vld [vmem:[%s3 + $0x1768] sm:$0xff]
  %v2250 = vld [vmem:[%s3 + $0x1770] sm:$0xff]
  %v2251 = vld [vmem:[%s3 + $0x1778] sm:$0xff]
  %v2252 = vld [vmem:[%s3 + $0x1780] sm:$0xff]
  %v2253 = vld [vmem:[%s3 + $0x1788] sm:$0xff]
  %v2254 = vld [vmem:[%s3 + $0x1790] sm:$0xff]
  %v2255 = vld [vmem:[%s3 + $0x1798] sm:$0xff]
  %v2256 = vld [vmem:[%s3 + $0x17a0] sm:$0xff]
  %v2257 = vld [vmem:[%s3 + $0x17a8] sm:$0xff]
  %v2258 = vld [vmem:[%s3 + $0x17b0] sm:$0xff]
  %v2259 = vld [vmem:[%s3 + $0x17b8] sm:$0xff]
  %v2260 = vld [vmem:[%s3 + $0x17c0] sm:$0xff]
  %v2261 = vld [vmem:[%s3 + $0x17c8] sm:$0xff]
  %v2262 = vld [vmem:[%s3 + $0x17d0] sm:$0xff]
  %v2263 = vld [vmem:[%s3 + $0x17d8] sm:$0xff]
  %v2264 = vld [vmem:[%s3 + $0x17e0] sm:$0xff]
  %v2265 = vld [vmem:[%s3 + $0x17e8] sm:$0xff]
  %v2266 = vld [vmem:[%s3 + $0x17f0] sm:$0xff]
  %v2267 = vld [vmem:[%s3 + $0x17f8] sm:$0xff]
  %v2268 = vld [vmem:[%s3 + $0x1800] sm:$0xff]
  %v2269 = vld [vmem:[%s3 + $0x1808] sm:$0xff]
  %v2270 = vld [vmem:[%s3 + $0x1810] sm:$0xff]
  %v2271 = vld [vmem:[%s3 + $0x1818] sm:$0xff]
  %v2272 = vld [vmem:[%s3 + $0x1820] sm:$0xff]
  %v2273 = vld [vmem:[%s3 + $0x1828] sm:$0xff]
  %v2274 = vld [vmem:[%s3 + $0x1830] sm:$0xff]
  %v2275 = vld [vmem:[%s3 + $0x1838] sm:$0xff]
  %v2276 = vld [vmem:[%s3 + $0x1840] sm:$0xff]
  %v2277 = vld [vmem:[%s3 + $0x1848] sm:$0xff]
  %v2278 = vld [vmem:[%s3 + $0x1850] sm:$0xff]
  %v2279 = vld [vmem:[%s3 + $0x1858] sm:$0xff]
  %v2280 = vld [vmem:[%s3 + $0x1860] sm:$0xff]
  %v2281 = vld [vmem:[%s3 + $0x1868] sm:$0xff]
  %v2282 = vld [vmem:[%s3 + $0x1870] sm:$0xff]
  %v2283 = vld [vmem:[%s3 + $0x1878] sm:$0xff]
  %v2284 = vld [vmem:[%s3 + $0x1880] sm:$0xff]
  %v2285 = vld [vmem:[%s3 + $0x1888] sm:$0xff]
  %v2286 = vld [vmem:[%s3 + $0x1890] sm:$0xff]
  %v2287 = vld [vmem:[%s3 + $0x1898] sm:$0xff]
  %v2288 = vld [vmem:[%s3 + $0x18a0] sm:$0xff]
  %v2289 = vld [vmem:[%s3 + $0x18a8] sm:$0xff]
  %v2290 = vld [vmem:[%s3 + $0x18b0] sm:$0xff]
  %v2291 = vld [vmem:[%s3 + $0x18b8] sm:$0xff]
  %v2292 = vld [vmem:[%s3 + $0x18c0] sm:$0xff]
  %v2293 = vld [vmem:[%s3 + $0x18c8] sm:$0xff]
  %v2294 = vld [vmem:[%s3 + $0x18d0] sm:$0xff]
  %v2295 = vld [vmem:[%s3 + $0x18d8] sm:$0xff]
  %v2296 = vld [vmem:[%s3 + $0x18e0] sm:$0xff]
  %v2297 = vld [vmem:[%s3 + $0x18e8] sm:$0xff]
  %v2298 = vld [vmem:[%s3 + $0x18f0] sm:$0xff]
  %v2299 = vld [vmem:[%s3 + $0x18f8] sm:$0xff]
  %v2300 = vld [vmem:[%s3 + $0x1900] sm:$0xff]
  %v2301 = vld [vmem:[%s3 + $0x1908] sm:$0xff]
  %v2302 = vld [vmem:[%s3 + $0x1910] sm:$0xff]
  %v2303 = vld [vmem:[%s3 + $0x1918] sm:$0xff]
  %v2304 = vld [vmem:[%s3 + $0x1920] sm:$0xff]
  %v2305 = vld [vmem:[%s3 + $0x1928] sm:$0xff]
  %v2306 = vld [vmem:[%s3 + $0x1930] sm:$0xff]
  %v2307 = vld [vmem:[%s3 + $0x1938] sm:$0xff]
  %v2308 = vld [vmem:[%s3 + $0x1940] sm:$0xff]
  %v2309 = vld [vmem:[%s3 + $0x1948] sm:$0xff]
  %v2310 = vld [vmem:[%s3 + $0x1950] sm:$0xff]
  %v2311 = vld [vmem:[%s3 + $0x1958] sm:$0xff]
  %v2312 = vld [vmem:[%s3 + $0x1960] sm:$0xff]
  %v2313 = vld [vmem:[%s3 + $0x1968] sm:$0xff]
  %v2314 = vld [vmem:[%s3 + $0x1970] sm:$0xff]
  %v2315 = vld [vmem:[%s3 + $0x1978] sm:$0xff]
  %v2316 = vld [vmem:[%s3 + $0x1980] sm:$0xff]
  %v2317 = vld [vmem:[%s3 + $0x1988] sm:$0xff]
  %v2318 = vld [vmem:[%s3 + $0x1990] sm:$0xff]
  %v2319 = vld [vmem:[%s3 + $0x1998] sm:$0xff]
  %v2320 = vld [vmem:[%s3 + $0x19a0] sm:$0xff]
  %v2321 = vld [vmem:[%s3 + $0x19a8] sm:$0xff]
  %v2322 = vld [vmem:[%s3 + $0x19b0] sm:$0xff]
  %v2323 = vld [vmem:[%s3 + $0x19b8] sm:$0xff]
  %v2324 = vld [vmem:[%s3 + $0x19c0] sm:$0xff]
  %v2325 = vld [vmem:[%s3 + $0x19c8] sm:$0xff]
  %v2326 = vld [vmem:[%s3 + $0x19d0] sm:$0xff]
  %v2327 = vld [vmem:[%s3 + $0x19d8] sm:$0xff]
  %v2328 = vld [vmem:[%s3 + $0x19e0] sm:$0xff]
  %v2329 = vld [vmem:[%s3 + $0x19e8] sm:$0xff]
  %v2330 = vld [vmem:[%s3 + $0x19f0] sm:$0xff]
  %v2331 = vld [vmem:[%s3 + $0x19f8] sm:$0xff]
  %v2332 = vld [vmem:[%s3 + $0x1a00] sm:$0xff]
  %v2333 = vld [vmem:[%s3 + $0x1a08] sm:$0xff]
  %v2334 = vld [vmem:[%s3 + $0x1a10] sm:$0xff]
  %v2335 = vld [vmem:[%s3 + $0x1a18] sm:$0xff]
  %v2336 = vld [vmem:[%s3 + $0x1a20] sm:$0xff]
  %v2337 = vld [vmem:[%s3 + $0x1a28] sm:$0xff]
  %v2338 = vld [vmem:[%s3 + $0x1a30] sm:$0xff]
  %v2339 = vld [vmem:[%s3 + $0x1a38] sm:$0xff]
  %v2340 = vld [vmem:[%s3 + $0x1a40] sm:$0xff]
  %v2341 = vld [vmem:[%s3 + $0x1a48] sm:$0xff]
  %v2342 = vld [vmem:[%s3 + $0x1a50] sm:$0xff]
  %v2343 = vld [vmem:[%s3 + $0x1a58] sm:$0xff]
  %v2344 = vld [vmem:[%s3 + $0x1a60] sm:$0xff]
  %v2345 = vld [vmem:[%s3 + $0x1a68] sm:$0xff]
  %v2346 = vld [vmem:[%s3 + $0x1a70] sm:$0xff]
  %v2347 = vld [vmem:[%s3 + $0x1a78] sm:$0xff]
  %v2348 = vld [vmem:[%s3 + $0x1a80] sm:$0xff]
  %v2349 = vld [vmem:[%s3 + $0x1a88] sm:$0xff]
  %v2350 = vld [vmem:[%s3 + $0x1a90] sm:$0xff]
  %v2351 = vld [vmem:[%s3 + $0x1a98] sm:$0xff]
  %v2352 = vld [vmem:[%s3 + $0x1aa0] sm:$0xff]
  %v2353 = vld [vmem:[%s3 + $0x1aa8] sm:$0xff]
  %v2354 = vld [vmem:[%s3 + $0x1ab0] sm:$0xff]
  %v2355 = vld [vmem:[%s3 + $0x1ab8] sm:$0xff]
  %v2356 = vld [vmem:[%s3 + $0x1ac0] sm:$0xff]
  %v2357 = vld [vmem:[%s3 + $0x1ac8] sm:$0xff]
  %v2358 = vld [vmem:[%s3 + $0x1ad0] sm:$0xff]
  %v2359 = vld [vmem:[%s3 + $0x1ad8] sm:$0xff]
  %v2360 = vld [vmem:[%s3 + $0x1ae0] sm:$0xff]
  %v2361 = vld [vmem:[%s3 + $0x1ae8] sm:$0xff]
  %v2362 = vld [vmem:[%s3 + $0x1af0] sm:$0xff]
  %v2363 = vld [vmem:[%s3 + $0x1af8] sm:$0xff]
  %v2364 = vld [vmem:[%s3 + $0x1b00] sm:$0xff]
  %v2365 = vld [vmem:[%s3 + $0x1b08] sm:$0xff]
  %v2366 = vld [vmem:[%s3 + $0x1b10] sm:$0xff]
  %v2367 = vld [vmem:[%s3 + $0x1b18] sm:$0xff]
  %v2368 = vld [vmem:[%s3 + $0x1b20] sm:$0xff]
  %v2369 = vld [vmem:[%s3 + $0x1b28] sm:$0xff]
  %v2370 = vld [vmem:[%s3 + $0x1b30] sm:$0xff]
  %v2371 = vld [vmem:[%s3 + $0x1b38] sm:$0xff]
  %v2372 = vld [vmem:[%s3 + $0x1b40] sm:$0xff]
  %v2373 = vld [vmem:[%s3 + $0x1b48] sm:$0xff]
  %v2374 = vld [vmem:[%s3 + $0x1b50] sm:$0xff]
  %v2375 = vld [vmem:[%s3 + $0x1b58] sm:$0xff]
  %v2376 = vld [vmem:[%s3 + $0x1b60] sm:$0xff]
  %v2377 = vld [vmem:[%s3 + $0x1b68] sm:$0xff]
  %v2378 = vld [vmem:[%s3 + $0x1b70] sm:$0xff]
  %v2379 = vld [vmem:[%s3 + $0x1b78] sm:$0xff]
  %v2380 = vld [vmem:[%s3 + $0x1b80] sm:$0xff]
  %v2381 = vld [vmem:[%s3 + $0x1b88] sm:$0xff]
  %v2382 = vld [vmem:[%s3 + $0x1b90] sm:$0xff]
  %v2383 = vld [vmem:[%s3 + $0x1b98] sm:$0xff]
  %v2384 = vld [vmem:[%s3 + $0x1ba0] sm:$0xff]
  %v2385 = vld [vmem:[%s3 + $0x1ba8] sm:$0xff]
  %v2386 = vld [vmem:[%s3 + $0x1bb0] sm:$0xff]
  %v2387 = vld [vmem:[%s3 + $0x1bb8] sm:$0xff]
  %v2388 = vld [vmem:[%s3 + $0x1bc0] sm:$0xff]
  %v2389 = vld [vmem:[%s3 + $0x1bc8] sm:$0xff]
  %v2390 = vld [vmem:[%s3 + $0x1bd0] sm:$0xff]
  %v2391 = vld [vmem:[%s3 + $0x1bd8] sm:$0xff]
  %v2392 = vld [vmem:[%s3 + $0x1be0] sm:$0xff]
  %v2393 = vld [vmem:[%s3 + $0x1be8] sm:$0xff]
  %v2394 = vld [vmem:[%s3 + $0x1bf0] sm:$0xff]
  %v2395 = vld [vmem:[%s3 + $0x1bf8] sm:$0xff]
  %v2396 = vld [vmem:[%s3 + $0x1c00] sm:$0xff]
  %v2397 = vld [vmem:[%s3 + $0x1c08] sm:$0xff]
  %v2398 = vld [vmem:[%s3 + $0x1c10] sm:$0xff]
  %v2399 = vld [vmem:[%s3 + $0x1c18] sm:$0xff]
  %v2400 = vld [vmem:[%s3 + $0x1c20] sm:$0xff]
  %v2401 = vld [vmem:[%s3 + $0x1c28] sm:$0xff]
  %v2402 = vld [vmem:[%s3 + $0x1c30] sm:$0xff]
  %v2403 = vld [vmem:[%s3 + $0x1c38] sm:$0xff]
  %v2404 = vld [vmem:[%s3 + $0x1c40] sm:$0xff]
  %v2405 = vld [vmem:[%s3 + $0x1c48] sm:$0xff]
  %v2406 = vld [vmem:[%s3 + $0x1c50] sm:$0xff]
  %v2407 = vld [vmem:[%s3 + $0x1c58] sm:$0xff]
  %v2408 = vld [vmem:[%s3 + $0x1c60] sm:$0xff]
  %v2409 = vld [vmem:[%s3 + $0x1c68] sm:$0xff]
  %v2410 = vld [vmem:[%s3 + $0x1c70] sm:$0xff]
  %v2411 = vld [vmem:[%s3 + $0x1c78] sm:$0xff]
  %v2412 = vld [vmem:[%s3 + $0x1c80] sm:$0xff]
  %v2413 = vld [vmem:[%s3 + $0x1c88] sm:$0xff]
  %v2414 = vld [vmem:[%s3 + $0x1c90] sm:$0xff]
  %v2415 = vld [vmem:[%s3 + $0x1c98] sm:$0xff]
  %v2416 = vld [vmem:[%s3 + $0x1ca0] sm:$0xff]
  %v2417 = vld [vmem:[%s3 + $0x1ca8] sm:$0xff]
  %v2418 = vld [vmem:[%s3 + $0x1cb0] sm:$0xff]
  %v2419 = vld [vmem:[%s3 + $0x1cb8] sm:$0xff]
  %v2420 = vld [vmem:[%s3 + $0x1cc0] sm:$0xff]
  %v2421 = vld [vmem:[%s3 + $0x1cc8] sm:$0xff]
  %v2422 = vld [vmem:[%s3 + $0x1cd0] sm:$0xff]
  %v2423 = vld [vmem:[%s3 + $0x1cd8] sm:$0xff]
  %v2424 = vld [vmem:[%s3 + $0x1ce0] sm:$0xff]
  %v2425 = vld [vmem:[%s3 + $0x1ce8] sm:$0xff]
  %v2426 = vld [vmem:[%s3 + $0x1cf0] sm:$0xff]
  %v2427 = vld [vmem:[%s3 + $0x1cf8] sm:$0xff]
  %v2428 = vld [vmem:[%s3 + $0x1d00] sm:$0xff]
  %v2429 = vld [vmem:[%s3 + $0x1d08] sm:$0xff]
  %v2430 = vld [vmem:[%s3 + $0x1d10] sm:$0xff]
  %v2431 = vld [vmem:[%s3 + $0x1d18] sm:$0xff]
  %v2432 = vld [vmem:[%s3 + $0x1d20] sm:$0xff]
  %v2433 = vld [vmem:[%s3 + $0x1d28] sm:$0xff]
  %v2434 = vld [vmem:[%s3 + $0x1d30] sm:$0xff]
  %v2435 = vld [vmem:[%s3 + $0x1d38] sm:$0xff]
  %v2436 = vld [vmem:[%s3 + $0x1d40] sm:$0xff]
  %v2437 = vld [vmem:[%s3 + $0x1d48] sm:$0xff]
  %v2438 = vld [vmem:[%s3 + $0x1d50] sm:$0xff]
  %v2439 = vld [vmem:[%s3 + $0x1d58] sm:$0xff]
  %v2440 = vld [vmem:[%s3 + $0x1d60] sm:$0xff]
  %v2441 = vld [vmem:[%s3 + $0x1d68] sm:$0xff]
  %v2442 = vld [vmem:[%s3 + $0x1d70] sm:$0xff]
  %v2443 = vld [vmem:[%s3 + $0x1d78] sm:$0xff]
  %v2444 = vld [vmem:[%s3 + $0x1d80] sm:$0xff]
  %v2445 = vld [vmem:[%s3 + $0x1d88] sm:$0xff]
  %v2446 = vld [vmem:[%s3 + $0x1d90] sm:$0xff]
  %v2447 = vld [vmem:[%s3 + $0x1d98] sm:$0xff]
  %v2448 = vld [vmem:[%s3 + $0x1da0] sm:$0xff]
  %v2449 = vld [vmem:[%s3 + $0x1da8] sm:$0xff]
  %v2450 = vld [vmem:[%s3 + $0x1db0] sm:$0xff]
  %v2451 = vld [vmem:[%s3 + $0x1db8] sm:$0xff]
  %v2452 = vld [vmem:[%s3 + $0x1dc0] sm:$0xff]
  %v2453 = vld [vmem:[%s3 + $0x1dc8] sm:$0xff]
  %v2454 = vld [vmem:[%s3 + $0x1dd0] sm:$0xff]
  %v2455 = vld [vmem:[%s3 + $0x1dd8] sm:$0xff]
  %v2456 = vld [vmem:[%s3 + $0x1de0] sm:$0xff]
  %v2457 = vld [vmem:[%s3 + $0x1de8] sm:$0xff]
  %v2458 = vld [vmem:[%s3 + $0x1df0] sm:$0xff]
  %v2459 = vld [vmem:[%s3 + $0x1df8] sm:$0xff]
  %v2460 = vld [vmem:[%s3 + $0x1e00] sm:$0xff]
  %v2461 = vld [vmem:[%s3 + $0x1e08] sm:$0xff]
  %v2462 = vld [vmem:[%s3 + $0x1e10] sm:$0xff]
  %v2463 = vld [vmem:[%s3 + $0x1e18] sm:$0xff]
  %v2464 = vld [vmem:[%s3 + $0x1e20] sm:$0xff]
  %v2465 = vld [vmem:[%s3 + $0x1e28] sm:$0xff]
  %v2466 = vld [vmem:[%s3 + $0x1e30] sm:$0xff]
  %v2467 = vld [vmem:[%s3 + $0x1e38] sm:$0xff]
  %v2468 = vld [vmem:[%s3 + $0x1e40] sm:$0xff]
  %v2469 = vld [vmem:[%s3 + $0x1e48] sm:$0xff]
  %v2470 = vld [vmem:[%s3 + $0x1e50] sm:$0xff]
  %v2471 = vld [vmem:[%s3 + $0x1e58] sm:$0xff]
  %v2472 = vld [vmem:[%s3 + $0x1e60] sm:$0xff]
  %v2473 = vld [vmem:[%s3 + $0x1e68] sm:$0xff]
  %v2474 = vld [vmem:[%s3 + $0x1e70] sm:$0xff]
  %v2475 = vld [vmem:[%s3 + $0x1e78] sm:$0xff]
  %v2476 = vld [vmem:[%s3 + $0x1e80] sm:$0xff]
  %v2477 = vld [vmem:[%s3 + $0x1e88] sm:$0xff]
  %v2478 = vld [vmem:[%s3 + $0x1e90] sm:$0xff]
  %v2479 = vld [vmem:[%s3 + $0x1e98] sm:$0xff]
  %v2480 = vld [vmem:[%s3 + $0x1ea0] sm:$0xff]
  %v2481 = vld [vmem:[%s3 + $0x1ea8] sm:$0xff]
  %v2482 = vld [vmem:[%s3 + $0x1eb0] sm:$0xff]
  %v2483 = vld [vmem:[%s3 + $0x1eb8] sm:$0xff]
  %v2484 = vld [vmem:[%s3 + $0x1ec0] sm:$0xff]
  %v2485 = vld [vmem:[%s3 + $0x1ec8] sm:$0xff]
  %v2486 = vld [vmem:[%s3 + $0x1ed0] sm:$0xff]
  %v2487 = vld [vmem:[%s3 + $0x1ed8] sm:$0xff]
  %v2488 = vld [vmem:[%s3 + $0x1ee0] sm:$0xff]
  %v2489 = vld [vmem:[%s3 + $0x1ee8] sm:$0xff]
  %v2490 = vld [vmem:[%s3 + $0x1ef0] sm:$0xff]
  %v2491 = vld [vmem:[%s3 + $0x1ef8] sm:$0xff]
  %v2492 = vld [vmem:[%s3 + $0x1f00] sm:$0xff]
  %v2493 = vld [vmem:[%s3 + $0x1f08] sm:$0xff]
  %v2494 = vld [vmem:[%s3 + $0x1f10] sm:$0xff]
  %v2495 = vld [vmem:[%s3 + $0x1f18] sm:$0xff]
  %v2496 = vld [vmem:[%s3 + $0x1f20] sm:$0xff]
  %v2497 = vld [vmem:[%s3 + $0x1f28] sm:$0xff]
  %v2498 = vld [vmem:[%s3 + $0x1f30] sm:$0xff]
  %v2499 = vld [vmem:[%s3 + $0x1f38] sm:$0xff]
  %v2500 = vld [vmem:[%s3 + $0x1f40] sm:$0xff]
  %v2501 = vld [vmem:[%s3 + $0x1f48] sm:$0xff]
  %v2502 = vld [vmem:[%s3 + $0x1f50] sm:$0xff]
  %v2503 = vld [vmem:[%s3 + $0x1f58] sm:$0xff]
  %v2504 = vld [vmem:[%s3 + $0x1f60] sm:$0xff]
  %v2505 = vld [vmem:[%s3 + $0x1f68] sm:$0xff]
  %v2506 = vld [vmem:[%s3 + $0x1f70] sm:$0xff]
  %v2507 = vld [vmem:[%s3 + $0x1f78] sm:$0xff]
  %v2508 = vld [vmem:[%s3 + $0x1f80] sm:$0xff]
  %v2509 = vld [vmem:[%s3 + $0x1f88] sm:$0xff]
  %v2510 = vld [vmem:[%s3 + $0x1f90] sm:$0xff]
  %v2511 = vld [vmem:[%s3 + $0x1f98] sm:$0xff]
  %v2512 = vld [vmem:[%s3 + $0x1fa0] sm:$0xff]
  %v2513 = vld [vmem:[%s3 + $0x1fa8] sm:$0xff]
  %v2514 = vld [vmem:[%s3 + $0x1fb0] sm:$0xff]
  %v2515 = vld [vmem:[%s3 + $0x1fb8] sm:$0xff]
  %v2516 = vld [vmem:[%s3 + $0x1fc0] sm:$0xff]
  %v2517 = vld [vmem:[%s3 + $0x1fc8] sm:$0xff]
  %v2518 = vld [vmem:[%s3 + $0x1fd0] sm:$0xff]
  %v2519 = vld [vmem:[%s3 + $0x1fd8] sm:$0xff]
  %v2520 = vld [vmem:[%s3 + $0x1fe0] sm:$0xff]
  %v2521 = vld [vmem:[%s3 + $0x1fe8] sm:$0xff]
  %v2522 = vld [vmem:[%s3 + $0x1ff0] sm:$0xff]
  %v2523 = vld [vmem:[%s3 + $0x1ff8] sm:$0xff]
  %v2524 = vld [vmem:[%s4] sm:$0xff]
  %v2525 = vld [vmem:[%s4 + $0x8] sm:$0xff]
  %v2526 = vld [vmem:[%s4 + $0x10] sm:$0xff]
  %v2527 = vld [vmem:[%s4 + $0x18] sm:$0xff]
  %v2532 = vlaneseq
  %v2533 = vshrl.u32 %v2532, 7
  %v2534 = vsub.s32 0, %v2533
  %v2535 = vrot.slane %v2524, %v2534
  %v2536 = vlaneseq
  %v2537 = vshrl.u32 %v2536, 7
  %v2538 = vsub.s32 1, %v2537
  %v2539 = vrot.slane %v2524, %v2538
  %v2540 = vlaneseq
  %v2541 = vshrl.u32 %v2540, 7
  %v2542 = vsub.s32 2, %v2541
  %v2543 = vrot.slane %v2524, %v2542
  %v2544 = vlaneseq
  %v2545 = vshrl.u32 %v2544, 7
  %v2546 = vsub.s32 3, %v2545
  %v2547 = vrot.slane %v2524, %v2546
  %v2548 = vlaneseq
  %v2549 = vshrl.u32 %v2548, 7
  %v2550 = vsub.s32 4, %v2549
  %v2551 = vrot.slane %v2524, %v2550
  %v2552 = vlaneseq
  %v2553 = vshrl.u32 %v2552, 7
  %v2554 = vsub.s32 5, %v2553
  %v2555 = vrot.slane %v2524, %v2554
  %v2556 = vlaneseq
  %v2557 = vshrl.u32 %v2556, 7
  %v2558 = vsub.s32 6, %v2557
  %v2559 = vrot.slane %v2524, %v2558
  %v2560 = vlaneseq
  %v2561 = vshrl.u32 %v2560, 7
  %v2562 = vsub.s32 7, %v2561
  %v2563 = vrot.slane %v2524, %v2562
  %v2564 = vlaneseq
  %v2565 = vshrl.u32 %v2564, 7
  %v2566 = vsub.s32 0, %v2565
  %v2567 = vrot.slane %v2525, %v2566
  %v2568 = vlaneseq
  %v2569 = vshrl.u32 %v2568, 7
  %v2570 = vsub.s32 1, %v2569
  %v2571 = vrot.slane %v2525, %v2570
  %v2572 = vlaneseq
  %v2573 = vshrl.u32 %v2572, 7
  %v2574 = vsub.s32 2, %v2573
  %v2575 = vrot.slane %v2525, %v2574
  %v2576 = vlaneseq
  %v2577 = vshrl.u32 %v2576, 7
  %v2578 = vsub.s32 3, %v2577
  %v2579 = vrot.slane %v2525, %v2578
  %v2580 = vlaneseq
  %v2581 = vshrl.u32 %v2580, 7
  %v2582 = vsub.s32 4, %v2581
  %v2583 = vrot.slane %v2525, %v2582
  %v2584 = vlaneseq
  %v2585 = vshrl.u32 %v2584, 7
  %v2586 = vsub.s32 5, %v2585
  %v2587 = vrot.slane %v2525, %v2586
  %v2588 = vlaneseq
  %v2589 = vshrl.u32 %v2588, 7
  %v2590 = vsub.s32 6, %v2589
  %v2591 = vrot.slane %v2525, %v2590
  %v2592 = vlaneseq
  %v2593 = vshrl.u32 %v2592, 7
  %v2594 = vsub.s32 7, %v2593
  %v2595 = vrot.slane %v2525, %v2594
  %v2596 = vlaneseq
  %v2597 = vshrl.u32 %v2596, 7
  %v2598 = vsub.s32 0, %v2597
  %v2599 = vrot.slane %v2526, %v2598
  %v2600 = vlaneseq
  %v2601 = vshrl.u32 %v2600, 7
  %v2602 = vsub.s32 1, %v2601
  %v2603 = vrot.slane %v2526, %v2602
  %v2604 = vlaneseq
  %v2605 = vshrl.u32 %v2604, 7
  %v2606 = vsub.s32 2, %v2605
  %v2607 = vrot.slane %v2526, %v2606
  %v2608 = vlaneseq
  %v2609 = vshrl.u32 %v2608, 7
  %v2610 = vsub.s32 3, %v2609
  %v2611 = vrot.slane %v2526, %v2610
  %v2612 = vlaneseq
  %v2613 = vshrl.u32 %v2612, 7
  %v2614 = vsub.s32 4, %v2613
  %v2615 = vrot.slane %v2526, %v2614
  %v2616 = vlaneseq
  %v2617 = vshrl.u32 %v2616, 7
  %v2618 = vsub.s32 5, %v2617
  %v2619 = vrot.slane %v2526, %v2618
  %v2620 = vlaneseq
  %v2621 = vshrl.u32 %v2620, 7
  %v2622 = vsub.s32 6, %v2621
  %v2623 = vrot.slane %v2526, %v2622
  %v2624 = vlaneseq
  %v2625 = vshrl.u32 %v2624, 7
  %v2626 = vsub.s32 7, %v2625
  %v2627 = vrot.slane %v2526, %v2626
  %v2628 = vlaneseq
  %v2629 = vshrl.u32 %v2628, 7
  %v2630 = vsub.s32 0, %v2629
  %v2631 = vrot.slane %v2527, %v2630
  %v2632 = vlaneseq
  %v2633 = vshrl.u32 %v2632, 7
  %v2634 = vsub.s32 1, %v2633
  %v2635 = vrot.slane %v2527, %v2634
  %v2636 = vlaneseq
  %v2637 = vshrl.u32 %v2636, 7
  %v2638 = vsub.s32 2, %v2637
  %v2639 = vrot.slane %v2527, %v2638
  %v2640 = vlaneseq
  %v2641 = vshrl.u32 %v2640, 7
  %v2642 = vsub.s32 3, %v2641
  %v2643 = vrot.slane %v2527, %v2642
  %v2644 = vlaneseq
  %v2645 = vshrl.u32 %v2644, 7
  %v2646 = vsub.s32 4, %v2645
  %v2647 = vrot.slane %v2527, %v2646
  %v2648 = vlaneseq
  %v2649 = vshrl.u32 %v2648, 7
  %v2650 = vsub.s32 5, %v2649
  %v2651 = vrot.slane %v2527, %v2650
  %v2652 = vlaneseq
  %v2653 = vshrl.u32 %v2652, 7
  %v2654 = vsub.s32 6, %v2653
  %v2655 = vrot.slane %v2527, %v2654
  %v2656 = vlaneseq
  %v2657 = vshrl.u32 %v2656, 7
  %v2658 = vsub.s32 7, %v2657
  %v2659 = vrot.slane %v2527, %v2658
  %v3716 = vunpack.c.l.b16 %v1500
  %v3717 = vunpack.c.h.b16 %v1500
  %v3718 = vunpack.c.l.b16 %v1501
  %v3719 = vunpack.c.h.b16 %v1501
  %v3720 = vunpack.c.l.b16 %v1502
  %v3721 = vunpack.c.h.b16 %v1502
  %v3722 = vunpack.c.l.b16 %v1503
  %v3723 = vunpack.c.h.b16 %v1503
  %v3724 = vunpack.c.l.b16 %v1504
  %v3725 = vunpack.c.h.b16 %v1504
  %v3726 = vunpack.c.l.b16 %v1505
  %v3727 = vunpack.c.h.b16 %v1505
  %v3728 = vunpack.c.l.b16 %v1506
  %v3729 = vunpack.c.h.b16 %v1506
  %v3730 = vunpack.c.l.b16 %v1507
  %v3731 = vunpack.c.h.b16 %v1507
  %v3732 = vunpack.c.l.b16 %v1508
  %v3733 = vunpack.c.h.b16 %v1508
  %v3734 = vunpack.c.l.b16 %v1509
  %v3735 = vunpack.c.h.b16 %v1509
  %v3736 = vunpack.c.l.b16 %v1510
  %v3737 = vunpack.c.h.b16 %v1510
  %v3738 = vunpack.c.l.b16 %v1511
  %v3739 = vunpack.c.h.b16 %v1511
  %v3740 = vunpack.c.l.b16 %v1512
  %v3741 = vunpack.c.h.b16 %v1512
  %v3742 = vunpack.c.l.b16 %v1513
  %v3743 = vunpack.c.h.b16 %v1513
  %v3744 = vunpack.c.l.b16 %v1514
  %v3745 = vunpack.c.h.b16 %v1514
  %v3746 = vunpack.c.l.b16 %v1515
  %v3747 = vunpack.c.h.b16 %v1515
  %v3748 = vunpack.c.l.b16 %v1516
  %v3749 = vunpack.c.h.b16 %v1516
  %v3750 = vunpack.c.l.b16 %v1517
  %v3751 = vunpack.c.h.b16 %v1517
  %v3752 = vunpack.c.l.b16 %v1518
  %v3753 = vunpack.c.h.b16 %v1518
  %v3754 = vunpack.c.l.b16 %v1519
  %v3755 = vunpack.c.h.b16 %v1519
  %v3756 = vunpack.c.l.b16 %v1520
  %v3757 = vunpack.c.h.b16 %v1520
  %v3758 = vunpack.c.l.b16 %v1521
  %v3759 = vunpack.c.h.b16 %v1521
  %v3760 = vunpack.c.l.b16 %v1522
  %v3761 = vunpack.c.h.b16 %v1522
  %v3762 = vunpack.c.l.b16 %v1523
  %v3763 = vunpack.c.h.b16 %v1523
  %v3764 = vunpack.c.l.b16 %v1524
  %v3765 = vunpack.c.h.b16 %v1524
  %v3766 = vunpack.c.l.b16 %v1525
  %v3767 = vunpack.c.h.b16 %v1525
  %v3768 = vunpack.c.l.b16 %v1526
  %v3769 = vunpack.c.h.b16 %v1526
  %v3770 = vunpack.c.l.b16 %v1527
  %v3771 = vunpack.c.h.b16 %v1527
  %v3772 = vunpack.c.l.b16 %v1528
  %v3773 = vunpack.c.h.b16 %v1528
  %v3774 = vunpack.c.l.b16 %v1529
  %v3775 = vunpack.c.h.b16 %v1529
  %v3776 = vunpack.c.l.b16 %v1530
  %v3777 = vunpack.c.h.b16 %v1530
  %v3778 = vunpack.c.l.b16 %v1531
  %v3779 = vunpack.c.h.b16 %v1531
  %v3780 = vunpack.c.l.b16 %v1532
  %v3781 = vunpack.c.h.b16 %v1532
  %v3782 = vunpack.c.l.b16 %v1533
  %v3783 = vunpack.c.h.b16 %v1533
  %v3784 = vunpack.c.l.b16 %v1534
  %v3785 = vunpack.c.h.b16 %v1534
  %v3786 = vunpack.c.l.b16 %v1535
  %v3787 = vunpack.c.h.b16 %v1535
  %v3788 = vunpack.c.l.b16 %v1536
  %v3789 = vunpack.c.h.b16 %v1536
  %v3790 = vunpack.c.l.b16 %v1537
  %v3791 = vunpack.c.h.b16 %v1537
  %v3792 = vunpack.c.l.b16 %v1538
  %v3793 = vunpack.c.h.b16 %v1538
  %v3794 = vunpack.c.l.b16 %v1539
  %v3795 = vunpack.c.h.b16 %v1539
  %v3796 = vunpack.c.l.b16 %v1540
  %v3797 = vunpack.c.h.b16 %v1540
  %v3798 = vunpack.c.l.b16 %v1541
  %v3799 = vunpack.c.h.b16 %v1541
  %v3800 = vunpack.c.l.b16 %v1542
  %v3801 = vunpack.c.h.b16 %v1542
  %v3802 = vunpack.c.l.b16 %v1543
  %v3803 = vunpack.c.h.b16 %v1543
  %v3804 = vunpack.c.l.b16 %v1544
  %v3805 = vunpack.c.h.b16 %v1544
  %v3806 = vunpack.c.l.b16 %v1545
  %v3807 = vunpack.c.h.b16 %v1545
  %v3808 = vunpack.c.l.b16 %v1546
  %v3809 = vunpack.c.h.b16 %v1546
  %v3810 = vunpack.c.l.b16 %v1547
  %v3811 = vunpack.c.h.b16 %v1547
  %v3812 = vunpack.c.l.b16 %v1548
  %v3813 = vunpack.c.h.b16 %v1548
  %v3814 = vunpack.c.l.b16 %v1549
  %v3815 = vunpack.c.h.b16 %v1549
  %v3816 = vunpack.c.l.b16 %v1550
  %v3817 = vunpack.c.h.b16 %v1550
  %v3818 = vunpack.c.l.b16 %v1551
  %v3819 = vunpack.c.h.b16 %v1551
  %v3820 = vunpack.c.l.b16 %v1552
  %v3821 = vunpack.c.h.b16 %v1552
  %v3822 = vunpack.c.l.b16 %v1553
  %v3823 = vunpack.c.h.b16 %v1553
  %v3824 = vunpack.c.l.b16 %v1554
  %v3825 = vunpack.c.h.b16 %v1554
  %v3826 = vunpack.c.l.b16 %v1555
  %v3827 = vunpack.c.h.b16 %v1555
  %v3828 = vunpack.c.l.b16 %v1556
  %v3829 = vunpack.c.h.b16 %v1556
  %v3830 = vunpack.c.l.b16 %v1557
  %v3831 = vunpack.c.h.b16 %v1557
  %v3832 = vunpack.c.l.b16 %v1558
  %v3833 = vunpack.c.h.b16 %v1558
  %v3834 = vunpack.c.l.b16 %v1559
  %v3835 = vunpack.c.h.b16 %v1559
  %v3836 = vunpack.c.l.b16 %v1560
  %v3837 = vunpack.c.h.b16 %v1560
  %v3838 = vunpack.c.l.b16 %v1561
  %v3839 = vunpack.c.h.b16 %v1561
  %v3840 = vunpack.c.l.b16 %v1562
  %v3841 = vunpack.c.h.b16 %v1562
  %v3842 = vunpack.c.l.b16 %v1563
  %v3843 = vunpack.c.h.b16 %v1563
  %v3844 = vunpack.c.l.b16 %v1564
  %v3845 = vunpack.c.h.b16 %v1564
  %v3846 = vunpack.c.l.b16 %v1565
  %v3847 = vunpack.c.h.b16 %v1565
  %v3848 = vunpack.c.l.b16 %v1566
  %v3849 = vunpack.c.h.b16 %v1566
  %v3850 = vunpack.c.l.b16 %v1567
  %v3851 = vunpack.c.h.b16 %v1567
  %v3852 = vunpack.c.l.b16 %v1568
  %v3853 = vunpack.c.h.b16 %v1568
  %v3854 = vunpack.c.l.b16 %v1569
  %v3855 = vunpack.c.h.b16 %v1569
  %v3856 = vunpack.c.l.b16 %v1570
  %v3857 = vunpack.c.h.b16 %v1570
  %v3858 = vunpack.c.l.b16 %v1571
  %v3859 = vunpack.c.h.b16 %v1571
  %v3860 = vunpack.c.l.b16 %v1572
  %v3861 = vunpack.c.h.b16 %v1572
  %v3862 = vunpack.c.l.b16 %v1573
  %v3863 = vunpack.c.h.b16 %v1573
  %v3864 = vunpack.c.l.b16 %v1574
  %v3865 = vunpack.c.h.b16 %v1574
  %v3866 = vunpack.c.l.b16 %v1575
  %v3867 = vunpack.c.h.b16 %v1575
  %v3868 = vunpack.c.l.b16 %v1576
  %v3869 = vunpack.c.h.b16 %v1576
  %v3870 = vunpack.c.l.b16 %v1577
  %v3871 = vunpack.c.h.b16 %v1577
  %v3872 = vunpack.c.l.b16 %v1578
  %v3873 = vunpack.c.h.b16 %v1578
  %v3874 = vunpack.c.l.b16 %v1579
  %v3875 = vunpack.c.h.b16 %v1579
  %v3876 = vunpack.c.l.b16 %v1580
  %v3877 = vunpack.c.h.b16 %v1580
  %v3878 = vunpack.c.l.b16 %v1581
  %v3879 = vunpack.c.h.b16 %v1581
  %v3880 = vunpack.c.l.b16 %v1582
  %v3881 = vunpack.c.h.b16 %v1582
  %v3882 = vunpack.c.l.b16 %v1583
  %v3883 = vunpack.c.h.b16 %v1583
  %v3884 = vunpack.c.l.b16 %v1584
  %v3885 = vunpack.c.h.b16 %v1584
  %v3886 = vunpack.c.l.b16 %v1585
  %v3887 = vunpack.c.h.b16 %v1585
  %v3888 = vunpack.c.l.b16 %v1586
  %v3889 = vunpack.c.h.b16 %v1586
  %v3890 = vunpack.c.l.b16 %v1587
  %v3891 = vunpack.c.h.b16 %v1587
  %v3892 = vunpack.c.l.b16 %v1588
  %v3893 = vunpack.c.h.b16 %v1588
  %v3894 = vunpack.c.l.b16 %v1589
  %v3895 = vunpack.c.h.b16 %v1589
  %v3896 = vunpack.c.l.b16 %v1590
  %v3897 = vunpack.c.h.b16 %v1590
  %v3898 = vunpack.c.l.b16 %v1591
  %v3899 = vunpack.c.h.b16 %v1591
  %v3900 = vunpack.c.l.b16 %v1592
  %v3901 = vunpack.c.h.b16 %v1592
  %v3902 = vunpack.c.l.b16 %v1593
  %v3903 = vunpack.c.h.b16 %v1593
  %v3904 = vunpack.c.l.b16 %v1594
  %v3905 = vunpack.c.h.b16 %v1594
  %v3906 = vunpack.c.l.b16 %v1595
  %v3907 = vunpack.c.h.b16 %v1595
  %v3908 = vunpack.c.l.b16 %v1596
  %v3909 = vunpack.c.h.b16 %v1596
  %v3910 = vunpack.c.l.b16 %v1597
  %v3911 = vunpack.c.h.b16 %v1597
  %v3912 = vunpack.c.l.b16 %v1598
  %v3913 = vunpack.c.h.b16 %v1598
  %v3914 = vunpack.c.l.b16 %v1599
  %v3915 = vunpack.c.h.b16 %v1599
  %v3916 = vunpack.c.l.b16 %v1600
  %v3917 = vunpack.c.h.b16 %v1600
  %v3918 = vunpack.c.l.b16 %v1601
  %v3919 = vunpack.c.h.b16 %v1601
  %v3920 = vunpack.c.l.b16 %v1602
  %v3921 = vunpack.c.h.b16 %v1602
  %v3922 = vunpack.c.l.b16 %v1603
  %v3923 = vunpack.c.h.b16 %v1603
  %v3924 = vunpack.c.l.b16 %v1604
  %v3925 = vunpack.c.h.b16 %v1604
  %v3926 = vunpack.c.l.b16 %v1605
  %v3927 = vunpack.c.h.b16 %v1605
  %v3928 = vunpack.c.l.b16 %v1606
  %v3929 = vunpack.c.h.b16 %v1606
  %v3930 = vunpack.c.l.b16 %v1607
  %v3931 = vunpack.c.h.b16 %v1607
  %v3932 = vunpack.c.l.b16 %v1608
  %v3933 = vunpack.c.h.b16 %v1608
  %v3934 = vunpack.c.l.b16 %v1609
  %v3935 = vunpack.c.h.b16 %v1609
  %v3936 = vunpack.c.l.b16 %v1610
  %v3937 = vunpack.c.h.b16 %v1610
  %v3938 = vunpack.c.l.b16 %v1611
  %v3939 = vunpack.c.h.b16 %v1611
  %v3940 = vunpack.c.l.b16 %v1612
  %v3941 = vunpack.c.h.b16 %v1612
  %v3942 = vunpack.c.l.b16 %v1613
  %v3943 = vunpack.c.h.b16 %v1613
  %v3944 = vunpack.c.l.b16 %v1614
  %v3945 = vunpack.c.h.b16 %v1614
  %v3946 = vunpack.c.l.b16 %v1615
  %v3947 = vunpack.c.h.b16 %v1615
  %v3948 = vunpack.c.l.b16 %v1616
  %v3949 = vunpack.c.h.b16 %v1616
  %v3950 = vunpack.c.l.b16 %v1617
  %v3951 = vunpack.c.h.b16 %v1617
  %v3952 = vunpack.c.l.b16 %v1618
  %v3953 = vunpack.c.h.b16 %v1618
  %v3954 = vunpack.c.l.b16 %v1619
  %v3955 = vunpack.c.h.b16 %v1619
  %v3956 = vunpack.c.l.b16 %v1620
  %v3957 = vunpack.c.h.b16 %v1620
  %v3958 = vunpack.c.l.b16 %v1621
  %v3959 = vunpack.c.h.b16 %v1621
  %v3960 = vunpack.c.l.b16 %v1622
  %v3961 = vunpack.c.h.b16 %v1622
  %v3962 = vunpack.c.l.b16 %v1623
  %v3963 = vunpack.c.h.b16 %v1623
  %v3964 = vunpack.c.l.b16 %v1624
  %v3965 = vunpack.c.h.b16 %v1624
  %v3966 = vunpack.c.l.b16 %v1625
  %v3967 = vunpack.c.h.b16 %v1625
  %v3968 = vunpack.c.l.b16 %v1626
  %v3969 = vunpack.c.h.b16 %v1626
  %v3970 = vunpack.c.l.b16 %v1627
  %v3971 = vunpack.c.h.b16 %v1627
  %v3972 = vunpack.c.l.b16 %v1628
  %v3973 = vunpack.c.h.b16 %v1628
  %v3974 = vunpack.c.l.b16 %v1629
  %v3975 = vunpack.c.h.b16 %v1629
  %v3976 = vunpack.c.l.b16 %v1630
  %v3977 = vunpack.c.h.b16 %v1630
  %v3978 = vunpack.c.l.b16 %v1631
  %v3979 = vunpack.c.h.b16 %v1631
  %v3980 = vunpack.c.l.b16 %v1632
  %v3981 = vunpack.c.h.b16 %v1632
  %v3982 = vunpack.c.l.b16 %v1633
  %v3983 = vunpack.c.h.b16 %v1633
  %v3984 = vunpack.c.l.b16 %v1634
  %v3985 = vunpack.c.h.b16 %v1634
  %v3986 = vunpack.c.l.b16 %v1635
  %v3987 = vunpack.c.h.b16 %v1635
  %v3988 = vunpack.c.l.b16 %v1636
  %v3989 = vunpack.c.h.b16 %v1636
  %v3990 = vunpack.c.l.b16 %v1637
  %v3991 = vunpack.c.h.b16 %v1637
  %v3992 = vunpack.c.l.b16 %v1638
  %v3993 = vunpack.c.h.b16 %v1638
  %v3994 = vunpack.c.l.b16 %v1639
  %v3995 = vunpack.c.h.b16 %v1639
  %v3996 = vunpack.c.l.b16 %v1640
  %v3997 = vunpack.c.h.b16 %v1640
  %v3998 = vunpack.c.l.b16 %v1641
  %v3999 = vunpack.c.h.b16 %v1641
  %v4000 = vunpack.c.l.b16 %v1642
  %v4001 = vunpack.c.h.b16 %v1642
  %v4002 = vunpack.c.l.b16 %v1643
  %v4003 = vunpack.c.h.b16 %v1643
  %v4004 = vunpack.c.l.b16 %v1644
  %v4005 = vunpack.c.h.b16 %v1644
  %v4006 = vunpack.c.l.b16 %v1645
  %v4007 = vunpack.c.h.b16 %v1645
  %v4008 = vunpack.c.l.b16 %v1646
  %v4009 = vunpack.c.h.b16 %v1646
  %v4010 = vunpack.c.l.b16 %v1647
  %v4011 = vunpack.c.h.b16 %v1647
  %v4012 = vunpack.c.l.b16 %v1648
  %v4013 = vunpack.c.h.b16 %v1648
  %v4014 = vunpack.c.l.b16 %v1649
  %v4015 = vunpack.c.h.b16 %v1649
  %v4016 = vunpack.c.l.b16 %v1650
  %v4017 = vunpack.c.h.b16 %v1650
  %v4018 = vunpack.c.l.b16 %v1651
  %v4019 = vunpack.c.h.b16 %v1651
  %v4020 = vunpack.c.l.b16 %v1652
  %v4021 = vunpack.c.h.b16 %v1652
  %v4022 = vunpack.c.l.b16 %v1653
  %v4023 = vunpack.c.h.b16 %v1653
  %v4024 = vunpack.c.l.b16 %v1654
  %v4025 = vunpack.c.h.b16 %v1654
  %v4026 = vunpack.c.l.b16 %v1655
  %v4027 = vunpack.c.h.b16 %v1655
  %v4028 = vunpack.c.l.b16 %v1656
  %v4029 = vunpack.c.h.b16 %v1656
  %v4030 = vunpack.c.l.b16 %v1657
  %v4031 = vunpack.c.h.b16 %v1657
  %v4032 = vunpack.c.l.b16 %v1658
  %v4033 = vunpack.c.h.b16 %v1658
  %v4034 = vunpack.c.l.b16 %v1659
  %v4035 = vunpack.c.h.b16 %v1659
  %v4036 = vunpack.c.l.b16 %v1660
  %v4037 = vunpack.c.h.b16 %v1660
  %v4038 = vunpack.c.l.b16 %v1661
  %v4039 = vunpack.c.h.b16 %v1661
  %v4040 = vunpack.c.l.b16 %v1662
  %v4041 = vunpack.c.h.b16 %v1662
  %v4042 = vunpack.c.l.b16 %v1663
  %v4043 = vunpack.c.h.b16 %v1663
  %v4044 = vunpack.c.l.b16 %v1664
  %v4045 = vunpack.c.h.b16 %v1664
  %v4046 = vunpack.c.l.b16 %v1665
  %v4047 = vunpack.c.h.b16 %v1665
  %v4048 = vunpack.c.l.b16 %v1666
  %v4049 = vunpack.c.h.b16 %v1666
  %v4050 = vunpack.c.l.b16 %v1667
  %v4051 = vunpack.c.h.b16 %v1667
  %v4052 = vunpack.c.l.b16 %v1668
  %v4053 = vunpack.c.h.b16 %v1668
  %v4054 = vunpack.c.l.b16 %v1669
  %v4055 = vunpack.c.h.b16 %v1669
  %v4056 = vunpack.c.l.b16 %v1670
  %v4057 = vunpack.c.h.b16 %v1670
  %v4058 = vunpack.c.l.b16 %v1671
  %v4059 = vunpack.c.h.b16 %v1671
  %v4060 = vunpack.c.l.b16 %v1672
  %v4061 = vunpack.c.h.b16 %v1672
  %v4062 = vunpack.c.l.b16 %v1673
  %v4063 = vunpack.c.h.b16 %v1673
  %v4064 = vunpack.c.l.b16 %v1674
  %v4065 = vunpack.c.h.b16 %v1674
  %v4066 = vunpack.c.l.b16 %v1675
  %v4067 = vunpack.c.h.b16 %v1675
  %v4068 = vunpack.c.l.b16 %v1676
  %v4069 = vunpack.c.h.b16 %v1676
  %v4070 = vunpack.c.l.b16 %v1677
  %v4071 = vunpack.c.h.b16 %v1677
  %v4072 = vunpack.c.l.b16 %v1678
  %v4073 = vunpack.c.h.b16 %v1678
  %v4074 = vunpack.c.l.b16 %v1679
  %v4075 = vunpack.c.h.b16 %v1679
  %v4076 = vunpack.c.l.b16 %v1680
  %v4077 = vunpack.c.h.b16 %v1680
  %v4078 = vunpack.c.l.b16 %v1681
  %v4079 = vunpack.c.h.b16 %v1681
  %v4080 = vunpack.c.l.b16 %v1682
  %v4081 = vunpack.c.h.b16 %v1682
  %v4082 = vunpack.c.l.b16 %v1683
  %v4083 = vunpack.c.h.b16 %v1683
  %v4084 = vunpack.c.l.b16 %v1684
  %v4085 = vunpack.c.h.b16 %v1684
  %v4086 = vunpack.c.l.b16 %v1685
  %v4087 = vunpack.c.h.b16 %v1685
  %v4088 = vunpack.c.l.b16 %v1686
  %v4089 = vunpack.c.h.b16 %v1686
  %v4090 = vunpack.c.l.b16 %v1687
  %v4091 = vunpack.c.h.b16 %v1687
  %v4092 = vunpack.c.l.b16 %v1688
  %v4093 = vunpack.c.h.b16 %v1688
  %v4094 = vunpack.c.l.b16 %v1689
  %v4095 = vunpack.c.h.b16 %v1689
  %v4096 = vunpack.c.l.b16 %v1690
  %v4097 = vunpack.c.h.b16 %v1690
  %v4098 = vunpack.c.l.b16 %v1691
  %v4099 = vunpack.c.h.b16 %v1691
  %v4100 = vunpack.c.l.b16 %v1692
  %v4101 = vunpack.c.h.b16 %v1692
  %v4102 = vunpack.c.l.b16 %v1693
  %v4103 = vunpack.c.h.b16 %v1693
  %v4104 = vunpack.c.l.b16 %v1694
  %v4105 = vunpack.c.h.b16 %v1694
  %v4106 = vunpack.c.l.b16 %v1695
  %v4107 = vunpack.c.h.b16 %v1695
  %v4108 = vunpack.c.l.b16 %v1696
  %v4109 = vunpack.c.h.b16 %v1696
  %v4110 = vunpack.c.l.b16 %v1697
  %v4111 = vunpack.c.h.b16 %v1697
  %v4112 = vunpack.c.l.b16 %v1698
  %v4113 = vunpack.c.h.b16 %v1698
  %v4114 = vunpack.c.l.b16 %v1699
  %v4115 = vunpack.c.h.b16 %v1699
  %v4116 = vunpack.c.l.b16 %v1700
  %v4117 = vunpack.c.h.b16 %v1700
  %v4118 = vunpack.c.l.b16 %v1701
  %v4119 = vunpack.c.h.b16 %v1701
  %v4120 = vunpack.c.l.b16 %v1702
  %v4121 = vunpack.c.h.b16 %v1702
  %v4122 = vunpack.c.l.b16 %v1703
  %v4123 = vunpack.c.h.b16 %v1703
  %v4124 = vunpack.c.l.b16 %v1704
  %v4125 = vunpack.c.h.b16 %v1704
  %v4126 = vunpack.c.l.b16 %v1705
  %v4127 = vunpack.c.h.b16 %v1705
  %v4128 = vunpack.c.l.b16 %v1706
  %v4129 = vunpack.c.h.b16 %v1706
  %v4130 = vunpack.c.l.b16 %v1707
  %v4131 = vunpack.c.h.b16 %v1707
  %v4132 = vunpack.c.l.b16 %v1708
  %v4133 = vunpack.c.h.b16 %v1708
  %v4134 = vunpack.c.l.b16 %v1709
  %v4135 = vunpack.c.h.b16 %v1709
  %v4136 = vunpack.c.l.b16 %v1710
  %v4137 = vunpack.c.h.b16 %v1710
  %v4138 = vunpack.c.l.b16 %v1711
  %v4139 = vunpack.c.h.b16 %v1711
  %v4140 = vunpack.c.l.b16 %v1712
  %v4141 = vunpack.c.h.b16 %v1712
  %v4142 = vunpack.c.l.b16 %v1713
  %v4143 = vunpack.c.h.b16 %v1713
  %v4144 = vunpack.c.l.b16 %v1714
  %v4145 = vunpack.c.h.b16 %v1714
  %v4146 = vunpack.c.l.b16 %v1715
  %v4147 = vunpack.c.h.b16 %v1715
  %v4148 = vunpack.c.l.b16 %v1716
  %v4149 = vunpack.c.h.b16 %v1716
  %v4150 = vunpack.c.l.b16 %v1717
  %v4151 = vunpack.c.h.b16 %v1717
  %v4152 = vunpack.c.l.b16 %v1718
  %v4153 = vunpack.c.h.b16 %v1718
  %v4154 = vunpack.c.l.b16 %v1719
  %v4155 = vunpack.c.h.b16 %v1719
  %v4156 = vunpack.c.l.b16 %v1720
  %v4157 = vunpack.c.h.b16 %v1720
  %v4158 = vunpack.c.l.b16 %v1721
  %v4159 = vunpack.c.h.b16 %v1721
  %v4160 = vunpack.c.l.b16 %v1722
  %v4161 = vunpack.c.h.b16 %v1722
  %v4162 = vunpack.c.l.b16 %v1723
  %v4163 = vunpack.c.h.b16 %v1723
  %v4164 = vunpack.c.l.b16 %v1724
  %v4165 = vunpack.c.h.b16 %v1724
  %v4166 = vunpack.c.l.b16 %v1725
  %v4167 = vunpack.c.h.b16 %v1725
  %v4168 = vunpack.c.l.b16 %v1726
  %v4169 = vunpack.c.h.b16 %v1726
  %v4170 = vunpack.c.l.b16 %v1727
  %v4171 = vunpack.c.h.b16 %v1727
  %v4172 = vunpack.c.l.b16 %v1728
  %v4173 = vunpack.c.h.b16 %v1728
  %v4174 = vunpack.c.l.b16 %v1729
  %v4175 = vunpack.c.h.b16 %v1729
  %v4176 = vunpack.c.l.b16 %v1730
  %v4177 = vunpack.c.h.b16 %v1730
  %v4178 = vunpack.c.l.b16 %v1731
  %v4179 = vunpack.c.h.b16 %v1731
  %v4180 = vunpack.c.l.b16 %v1732
  %v4181 = vunpack.c.h.b16 %v1732
  %v4182 = vunpack.c.l.b16 %v1733
  %v4183 = vunpack.c.h.b16 %v1733
  %v4184 = vunpack.c.l.b16 %v1734
  %v4185 = vunpack.c.h.b16 %v1734
  %v4186 = vunpack.c.l.b16 %v1735
  %v4187 = vunpack.c.h.b16 %v1735
  %v4188 = vunpack.c.l.b16 %v1736
  %v4189 = vunpack.c.h.b16 %v1736
  %v4190 = vunpack.c.l.b16 %v1737
  %v4191 = vunpack.c.h.b16 %v1737
  %v4192 = vunpack.c.l.b16 %v1738
  %v4193 = vunpack.c.h.b16 %v1738
  %v4194 = vunpack.c.l.b16 %v1739
  %v4195 = vunpack.c.h.b16 %v1739
  %v4196 = vunpack.c.l.b16 %v1740
  %v4197 = vunpack.c.h.b16 %v1740
  %v4198 = vunpack.c.l.b16 %v1741
  %v4199 = vunpack.c.h.b16 %v1741
  %v4200 = vunpack.c.l.b16 %v1742
  %v4201 = vunpack.c.h.b16 %v1742
  %v4202 = vunpack.c.l.b16 %v1743
  %v4203 = vunpack.c.h.b16 %v1743
  %v4204 = vunpack.c.l.b16 %v1744
  %v4205 = vunpack.c.h.b16 %v1744
  %v4206 = vunpack.c.l.b16 %v1745
  %v4207 = vunpack.c.h.b16 %v1745
  %v4208 = vunpack.c.l.b16 %v1746
  %v4209 = vunpack.c.h.b16 %v1746
  %v4210 = vunpack.c.l.b16 %v1747
  %v4211 = vunpack.c.h.b16 %v1747
  %v4212 = vunpack.c.l.b16 %v1748
  %v4213 = vunpack.c.h.b16 %v1748
  %v4214 = vunpack.c.l.b16 %v1749
  %v4215 = vunpack.c.h.b16 %v1749
  %v4216 = vunpack.c.l.b16 %v1750
  %v4217 = vunpack.c.h.b16 %v1750
  %v4218 = vunpack.c.l.b16 %v1751
  %v4219 = vunpack.c.h.b16 %v1751
  %v4220 = vunpack.c.l.b16 %v1752
  %v4221 = vunpack.c.h.b16 %v1752
  %v4222 = vunpack.c.l.b16 %v1753
  %v4223 = vunpack.c.h.b16 %v1753
  %v4224 = vunpack.c.l.b16 %v1754
  %v4225 = vunpack.c.h.b16 %v1754
  %v4226 = vunpack.c.l.b16 %v1755
  %v4227 = vunpack.c.h.b16 %v1755
  %v4228 = vunpack.c.l.b16 %v1756
  %v4229 = vunpack.c.h.b16 %v1756
  %v4230 = vunpack.c.l.b16 %v1757
  %v4231 = vunpack.c.h.b16 %v1757
  %v4232 = vunpack.c.l.b16 %v1758
  %v4233 = vunpack.c.h.b16 %v1758
  %v4234 = vunpack.c.l.b16 %v1759
  %v4235 = vunpack.c.h.b16 %v1759
  %v4236 = vunpack.c.l.b16 %v1760
  %v4237 = vunpack.c.h.b16 %v1760
  %v4238 = vunpack.c.l.b16 %v1761
  %v4239 = vunpack.c.h.b16 %v1761
  %v4240 = vunpack.c.l.b16 %v1762
  %v4241 = vunpack.c.h.b16 %v1762
  %v4242 = vunpack.c.l.b16 %v1763
  %v4243 = vunpack.c.h.b16 %v1763
  %v4244 = vunpack.c.l.b16 %v1764
  %v4245 = vunpack.c.h.b16 %v1764
  %v4246 = vunpack.c.l.b16 %v1765
  %v4247 = vunpack.c.h.b16 %v1765
  %v4248 = vunpack.c.l.b16 %v1766
  %v4249 = vunpack.c.h.b16 %v1766
  %v4250 = vunpack.c.l.b16 %v1767
  %v4251 = vunpack.c.h.b16 %v1767
  %v4252 = vunpack.c.l.b16 %v1768
  %v4253 = vunpack.c.h.b16 %v1768
  %v4254 = vunpack.c.l.b16 %v1769
  %v4255 = vunpack.c.h.b16 %v1769
  %v4256 = vunpack.c.l.b16 %v1770
  %v4257 = vunpack.c.h.b16 %v1770
  %v4258 = vunpack.c.l.b16 %v1771
  %v4259 = vunpack.c.h.b16 %v1771
  %v4260 = vunpack.c.l.b16 %v1772
  %v4261 = vunpack.c.h.b16 %v1772
  %v4262 = vunpack.c.l.b16 %v1773
  %v4263 = vunpack.c.h.b16 %v1773
  %v4264 = vunpack.c.l.b16 %v1774
  %v4265 = vunpack.c.h.b16 %v1774
  %v4266 = vunpack.c.l.b16 %v1775
  %v4267 = vunpack.c.h.b16 %v1775
  %v4268 = vunpack.c.l.b16 %v1776
  %v4269 = vunpack.c.h.b16 %v1776
  %v4270 = vunpack.c.l.b16 %v1777
  %v4271 = vunpack.c.h.b16 %v1777
  %v4272 = vunpack.c.l.b16 %v1778
  %v4273 = vunpack.c.h.b16 %v1778
  %v4274 = vunpack.c.l.b16 %v1779
  %v4275 = vunpack.c.h.b16 %v1779
  %v4276 = vunpack.c.l.b16 %v1780
  %v4277 = vunpack.c.h.b16 %v1780
  %v4278 = vunpack.c.l.b16 %v1781
  %v4279 = vunpack.c.h.b16 %v1781
  %v4280 = vunpack.c.l.b16 %v1782
  %v4281 = vunpack.c.h.b16 %v1782
  %v4282 = vunpack.c.l.b16 %v1783
  %v4283 = vunpack.c.h.b16 %v1783
  %v4284 = vunpack.c.l.b16 %v1784
  %v4285 = vunpack.c.h.b16 %v1784
  %v4286 = vunpack.c.l.b16 %v1785
  %v4287 = vunpack.c.h.b16 %v1785
  %v4288 = vunpack.c.l.b16 %v1786
  %v4289 = vunpack.c.h.b16 %v1786
  %v4290 = vunpack.c.l.b16 %v1787
  %v4291 = vunpack.c.h.b16 %v1787
  %v4292 = vunpack.c.l.b16 %v1788
  %v4293 = vunpack.c.h.b16 %v1788
  %v4294 = vunpack.c.l.b16 %v1789
  %v4295 = vunpack.c.h.b16 %v1789
  %v4296 = vunpack.c.l.b16 %v1790
  %v4297 = vunpack.c.h.b16 %v1790
  %v4298 = vunpack.c.l.b16 %v1791
  %v4299 = vunpack.c.h.b16 %v1791
  %v4300 = vunpack.c.l.b16 %v1792
  %v4301 = vunpack.c.h.b16 %v1792
  %v4302 = vunpack.c.l.b16 %v1793
  %v4303 = vunpack.c.h.b16 %v1793
  %v4304 = vunpack.c.l.b16 %v1794
  %v4305 = vunpack.c.h.b16 %v1794
  %v4306 = vunpack.c.l.b16 %v1795
  %v4307 = vunpack.c.h.b16 %v1795
  %v4308 = vunpack.c.l.b16 %v1796
  %v4309 = vunpack.c.h.b16 %v1796
  %v4310 = vunpack.c.l.b16 %v1797
  %v4311 = vunpack.c.h.b16 %v1797
  %v4312 = vunpack.c.l.b16 %v1798
  %v4313 = vunpack.c.h.b16 %v1798
  %v4314 = vunpack.c.l.b16 %v1799
  %v4315 = vunpack.c.h.b16 %v1799
  %v4316 = vunpack.c.l.b16 %v1800
  %v4317 = vunpack.c.h.b16 %v1800
  %v4318 = vunpack.c.l.b16 %v1801
  %v4319 = vunpack.c.h.b16 %v1801
  %v4320 = vunpack.c.l.b16 %v1802
  %v4321 = vunpack.c.h.b16 %v1802
  %v4322 = vunpack.c.l.b16 %v1803
  %v4323 = vunpack.c.h.b16 %v1803
  %v4324 = vunpack.c.l.b16 %v1804
  %v4325 = vunpack.c.h.b16 %v1804
  %v4326 = vunpack.c.l.b16 %v1805
  %v4327 = vunpack.c.h.b16 %v1805
  %v4328 = vunpack.c.l.b16 %v1806
  %v4329 = vunpack.c.h.b16 %v1806
  %v4330 = vunpack.c.l.b16 %v1807
  %v4331 = vunpack.c.h.b16 %v1807
  %v4332 = vunpack.c.l.b16 %v1808
  %v4333 = vunpack.c.h.b16 %v1808
  %v4334 = vunpack.c.l.b16 %v1809
  %v4335 = vunpack.c.h.b16 %v1809
  %v4336 = vunpack.c.l.b16 %v1810
  %v4337 = vunpack.c.h.b16 %v1810
  %v4338 = vunpack.c.l.b16 %v1811
  %v4339 = vunpack.c.h.b16 %v1811
  %v4340 = vunpack.c.l.b16 %v1812
  %v4341 = vunpack.c.h.b16 %v1812
  %v4342 = vunpack.c.l.b16 %v1813
  %v4343 = vunpack.c.h.b16 %v1813
  %v4344 = vunpack.c.l.b16 %v1814
  %v4345 = vunpack.c.h.b16 %v1814
  %v4346 = vunpack.c.l.b16 %v1815
  %v4347 = vunpack.c.h.b16 %v1815
  %v4348 = vunpack.c.l.b16 %v1816
  %v4349 = vunpack.c.h.b16 %v1816
  %v4350 = vunpack.c.l.b16 %v1817
  %v4351 = vunpack.c.h.b16 %v1817
  %v4352 = vunpack.c.l.b16 %v1818
  %v4353 = vunpack.c.h.b16 %v1818
  %v4354 = vunpack.c.l.b16 %v1819
  %v4355 = vunpack.c.h.b16 %v1819
  %v4356 = vunpack.c.l.b16 %v1820
  %v4357 = vunpack.c.h.b16 %v1820
  %v4358 = vunpack.c.l.b16 %v1821
  %v4359 = vunpack.c.h.b16 %v1821
  %v4360 = vunpack.c.l.b16 %v1822
  %v4361 = vunpack.c.h.b16 %v1822
  %v4362 = vunpack.c.l.b16 %v1823
  %v4363 = vunpack.c.h.b16 %v1823
  %v4364 = vunpack.c.l.b16 %v1824
  %v4365 = vunpack.c.h.b16 %v1824
  %v4366 = vunpack.c.l.b16 %v1825
  %v4367 = vunpack.c.h.b16 %v1825
  %v4368 = vunpack.c.l.b16 %v1826
  %v4369 = vunpack.c.h.b16 %v1826
  %v4370 = vunpack.c.l.b16 %v1827
  %v4371 = vunpack.c.h.b16 %v1827
  %v4372 = vunpack.c.l.b16 %v1828
  %v4373 = vunpack.c.h.b16 %v1828
  %v4374 = vunpack.c.l.b16 %v1829
  %v4375 = vunpack.c.h.b16 %v1829
  %v4376 = vunpack.c.l.b16 %v1830
  %v4377 = vunpack.c.h.b16 %v1830
  %v4378 = vunpack.c.l.b16 %v1831
  %v4379 = vunpack.c.h.b16 %v1831
  %v4380 = vunpack.c.l.b16 %v1832
  %v4381 = vunpack.c.h.b16 %v1832
  %v4382 = vunpack.c.l.b16 %v1833
  %v4383 = vunpack.c.h.b16 %v1833
  %v4384 = vunpack.c.l.b16 %v1834
  %v4385 = vunpack.c.h.b16 %v1834
  %v4386 = vunpack.c.l.b16 %v1835
  %v4387 = vunpack.c.h.b16 %v1835
  %v4388 = vunpack.c.l.b16 %v1836
  %v4389 = vunpack.c.h.b16 %v1836
  %v4390 = vunpack.c.l.b16 %v1837
  %v4391 = vunpack.c.h.b16 %v1837
  %v4392 = vunpack.c.l.b16 %v1838
  %v4393 = vunpack.c.h.b16 %v1838
  %v4394 = vunpack.c.l.b16 %v1839
  %v4395 = vunpack.c.h.b16 %v1839
  %v4396 = vunpack.c.l.b16 %v1840
  %v4397 = vunpack.c.h.b16 %v1840
  %v4398 = vunpack.c.l.b16 %v1841
  %v4399 = vunpack.c.h.b16 %v1841
  %v4400 = vunpack.c.l.b16 %v1842
  %v4401 = vunpack.c.h.b16 %v1842
  %v4402 = vunpack.c.l.b16 %v1843
  %v4403 = vunpack.c.h.b16 %v1843
  %v4404 = vunpack.c.l.b16 %v1844
  %v4405 = vunpack.c.h.b16 %v1844
  %v4406 = vunpack.c.l.b16 %v1845
  %v4407 = vunpack.c.h.b16 %v1845
  %v4408 = vunpack.c.l.b16 %v1846
  %v4409 = vunpack.c.h.b16 %v1846
  %v4410 = vunpack.c.l.b16 %v1847
  %v4411 = vunpack.c.h.b16 %v1847
  %v4412 = vunpack.c.l.b16 %v1848
  %v4413 = vunpack.c.h.b16 %v1848
  %v4414 = vunpack.c.l.b16 %v1849
  %v4415 = vunpack.c.h.b16 %v1849
  %v4416 = vunpack.c.l.b16 %v1850
  %v4417 = vunpack.c.h.b16 %v1850
  %v4418 = vunpack.c.l.b16 %v1851
  %v4419 = vunpack.c.h.b16 %v1851
  %v4420 = vunpack.c.l.b16 %v1852
  %v4421 = vunpack.c.h.b16 %v1852
  %v4422 = vunpack.c.l.b16 %v1853
  %v4423 = vunpack.c.h.b16 %v1853
  %v4424 = vunpack.c.l.b16 %v1854
  %v4425 = vunpack.c.h.b16 %v1854
  %v4426 = vunpack.c.l.b16 %v1855
  %v4427 = vunpack.c.h.b16 %v1855
  %v4428 = vunpack.c.l.b16 %v1856
  %v4429 = vunpack.c.h.b16 %v1856
  %v4430 = vunpack.c.l.b16 %v1857
  %v4431 = vunpack.c.h.b16 %v1857
  %v4432 = vunpack.c.l.b16 %v1858
  %v4433 = vunpack.c.h.b16 %v1858
  %v4434 = vunpack.c.l.b16 %v1859
  %v4435 = vunpack.c.h.b16 %v1859
  %v4436 = vunpack.c.l.b16 %v1860
  %v4437 = vunpack.c.h.b16 %v1860
  %v4438 = vunpack.c.l.b16 %v1861
  %v4439 = vunpack.c.h.b16 %v1861
  %v4440 = vunpack.c.l.b16 %v1862
  %v4441 = vunpack.c.h.b16 %v1862
  %v4442 = vunpack.c.l.b16 %v1863
  %v4443 = vunpack.c.h.b16 %v1863
  %v4444 = vunpack.c.l.b16 %v1864
  %v4445 = vunpack.c.h.b16 %v1864
  %v4446 = vunpack.c.l.b16 %v1865
  %v4447 = vunpack.c.h.b16 %v1865
  %v4448 = vunpack.c.l.b16 %v1866
  %v4449 = vunpack.c.h.b16 %v1866
  %v4450 = vunpack.c.l.b16 %v1867
  %v4451 = vunpack.c.h.b16 %v1867
  %v4452 = vunpack.c.l.b16 %v1868
  %v4453 = vunpack.c.h.b16 %v1868
  %v4454 = vunpack.c.l.b16 %v1869
  %v4455 = vunpack.c.h.b16 %v1869
  %v4456 = vunpack.c.l.b16 %v1870
  %v4457 = vunpack.c.h.b16 %v1870
  %v4458 = vunpack.c.l.b16 %v1871
  %v4459 = vunpack.c.h.b16 %v1871
  %v4460 = vunpack.c.l.b16 %v1872
  %v4461 = vunpack.c.h.b16 %v1872
  %v4462 = vunpack.c.l.b16 %v1873
  %v4463 = vunpack.c.h.b16 %v1873
  %v4464 = vunpack.c.l.b16 %v1874
  %v4465 = vunpack.c.h.b16 %v1874
  %v4466 = vunpack.c.l.b16 %v1875
  %v4467 = vunpack.c.h.b16 %v1875
  %v4468 = vunpack.c.l.b16 %v1876
  %v4469 = vunpack.c.h.b16 %v1876
  %v4470 = vunpack.c.l.b16 %v1877
  %v4471 = vunpack.c.h.b16 %v1877
  %v4472 = vunpack.c.l.b16 %v1878
  %v4473 = vunpack.c.h.b16 %v1878
  %v4474 = vunpack.c.l.b16 %v1879
  %v4475 = vunpack.c.h.b16 %v1879
  %v4476 = vunpack.c.l.b16 %v1880
  %v4477 = vunpack.c.h.b16 %v1880
  %v4478 = vunpack.c.l.b16 %v1881
  %v4479 = vunpack.c.h.b16 %v1881
  %v4480 = vunpack.c.l.b16 %v1882
  %v4481 = vunpack.c.h.b16 %v1882
  %v4482 = vunpack.c.l.b16 %v1883
  %v4483 = vunpack.c.h.b16 %v1883
  %v4484 = vunpack.c.l.b16 %v1884
  %v4485 = vunpack.c.h.b16 %v1884
  %v4486 = vunpack.c.l.b16 %v1885
  %v4487 = vunpack.c.h.b16 %v1885
  %v4488 = vunpack.c.l.b16 %v1886
  %v4489 = vunpack.c.h.b16 %v1886
  %v4490 = vunpack.c.l.b16 %v1887
  %v4491 = vunpack.c.h.b16 %v1887
  %v4492 = vunpack.c.l.b16 %v1888
  %v4493 = vunpack.c.h.b16 %v1888
  %v4494 = vunpack.c.l.b16 %v1889
  %v4495 = vunpack.c.h.b16 %v1889
  %v4496 = vunpack.c.l.b16 %v1890
  %v4497 = vunpack.c.h.b16 %v1890
  %v4498 = vunpack.c.l.b16 %v1891
  %v4499 = vunpack.c.h.b16 %v1891
  %v4500 = vunpack.c.l.b16 %v1892
  %v4501 = vunpack.c.h.b16 %v1892
  %v4502 = vunpack.c.l.b16 %v1893
  %v4503 = vunpack.c.h.b16 %v1893
  %v4504 = vunpack.c.l.b16 %v1894
  %v4505 = vunpack.c.h.b16 %v1894
  %v4506 = vunpack.c.l.b16 %v1895
  %v4507 = vunpack.c.h.b16 %v1895
  %v4508 = vunpack.c.l.b16 %v1896
  %v4509 = vunpack.c.h.b16 %v1896
  %v4510 = vunpack.c.l.b16 %v1897
  %v4511 = vunpack.c.h.b16 %v1897
  %v4512 = vunpack.c.l.b16 %v1898
  %v4513 = vunpack.c.h.b16 %v1898
  %v4514 = vunpack.c.l.b16 %v1899
  %v4515 = vunpack.c.h.b16 %v1899
  %v4516 = vunpack.c.l.b16 %v1900
  %v4517 = vunpack.c.h.b16 %v1900
  %v4518 = vunpack.c.l.b16 %v1901
  %v4519 = vunpack.c.h.b16 %v1901
  %v4520 = vunpack.c.l.b16 %v1902
  %v4521 = vunpack.c.h.b16 %v1902
  %v4522 = vunpack.c.l.b16 %v1903
  %v4523 = vunpack.c.h.b16 %v1903
  %v4524 = vunpack.c.l.b16 %v1904
  %v4525 = vunpack.c.h.b16 %v1904
  %v4526 = vunpack.c.l.b16 %v1905
  %v4527 = vunpack.c.h.b16 %v1905
  %v4528 = vunpack.c.l.b16 %v1906
  %v4529 = vunpack.c.h.b16 %v1906
  %v4530 = vunpack.c.l.b16 %v1907
  %v4531 = vunpack.c.h.b16 %v1907
  %v4532 = vunpack.c.l.b16 %v1908
  %v4533 = vunpack.c.h.b16 %v1908
  %v4534 = vunpack.c.l.b16 %v1909
  %v4535 = vunpack.c.h.b16 %v1909
  %v4536 = vunpack.c.l.b16 %v1910
  %v4537 = vunpack.c.h.b16 %v1910
  %v4538 = vunpack.c.l.b16 %v1911
  %v4539 = vunpack.c.h.b16 %v1911
  %v4540 = vunpack.c.l.b16 %v1912
  %v4541 = vunpack.c.h.b16 %v1912
  %v4542 = vunpack.c.l.b16 %v1913
  %v4543 = vunpack.c.h.b16 %v1913
  %v4544 = vunpack.c.l.b16 %v1914
  %v4545 = vunpack.c.h.b16 %v1914
  %v4546 = vunpack.c.l.b16 %v1915
  %v4547 = vunpack.c.h.b16 %v1915
  %v4548 = vunpack.c.l.b16 %v1916
  %v4549 = vunpack.c.h.b16 %v1916
  %v4550 = vunpack.c.l.b16 %v1917
  %v4551 = vunpack.c.h.b16 %v1917
  %v4552 = vunpack.c.l.b16 %v1918
  %v4553 = vunpack.c.h.b16 %v1918
  %v4554 = vunpack.c.l.b16 %v1919
  %v4555 = vunpack.c.h.b16 %v1919
  %v4556 = vunpack.c.l.b16 %v1920
  %v4557 = vunpack.c.h.b16 %v1920
  %v4558 = vunpack.c.l.b16 %v1921
  %v4559 = vunpack.c.h.b16 %v1921
  %v4560 = vunpack.c.l.b16 %v1922
  %v4561 = vunpack.c.h.b16 %v1922
  %v4562 = vunpack.c.l.b16 %v1923
  %v4563 = vunpack.c.h.b16 %v1923
  %v4564 = vunpack.c.l.b16 %v1924
  %v4565 = vunpack.c.h.b16 %v1924
  %v4566 = vunpack.c.l.b16 %v1925
  %v4567 = vunpack.c.h.b16 %v1925
  %v4568 = vunpack.c.l.b16 %v1926
  %v4569 = vunpack.c.h.b16 %v1926
  %v4570 = vunpack.c.l.b16 %v1927
  %v4571 = vunpack.c.h.b16 %v1927
  %v4572 = vunpack.c.l.b16 %v1928
  %v4573 = vunpack.c.h.b16 %v1928
  %v4574 = vunpack.c.l.b16 %v1929
  %v4575 = vunpack.c.h.b16 %v1929
  %v4576 = vunpack.c.l.b16 %v1930
  %v4577 = vunpack.c.h.b16 %v1930
  %v4578 = vunpack.c.l.b16 %v1931
  %v4579 = vunpack.c.h.b16 %v1931
  %v4580 = vunpack.c.l.b16 %v1932
  %v4581 = vunpack.c.h.b16 %v1932
  %v4582 = vunpack.c.l.b16 %v1933
  %v4583 = vunpack.c.h.b16 %v1933
  %v4584 = vunpack.c.l.b16 %v1934
  %v4585 = vunpack.c.h.b16 %v1934
  %v4586 = vunpack.c.l.b16 %v1935
  %v4587 = vunpack.c.h.b16 %v1935
  %v4588 = vunpack.c.l.b16 %v1936
  %v4589 = vunpack.c.h.b16 %v1936
  %v4590 = vunpack.c.l.b16 %v1937
  %v4591 = vunpack.c.h.b16 %v1937
  %v4592 = vunpack.c.l.b16 %v1938
  %v4593 = vunpack.c.h.b16 %v1938
  %v4594 = vunpack.c.l.b16 %v1939
  %v4595 = vunpack.c.h.b16 %v1939
  %v4596 = vunpack.c.l.b16 %v1940
  %v4597 = vunpack.c.h.b16 %v1940
  %v4598 = vunpack.c.l.b16 %v1941
  %v4599 = vunpack.c.h.b16 %v1941
  %v4600 = vunpack.c.l.b16 %v1942
  %v4601 = vunpack.c.h.b16 %v1942
  %v4602 = vunpack.c.l.b16 %v1943
  %v4603 = vunpack.c.h.b16 %v1943
  %v4604 = vunpack.c.l.b16 %v1944
  %v4605 = vunpack.c.h.b16 %v1944
  %v4606 = vunpack.c.l.b16 %v1945
  %v4607 = vunpack.c.h.b16 %v1945
  %v4608 = vunpack.c.l.b16 %v1946
  %v4609 = vunpack.c.h.b16 %v1946
  %v4610 = vunpack.c.l.b16 %v1947
  %v4611 = vunpack.c.h.b16 %v1947
  %v4612 = vunpack.c.l.b16 %v1948
  %v4613 = vunpack.c.h.b16 %v1948
  %v4614 = vunpack.c.l.b16 %v1949
  %v4615 = vunpack.c.h.b16 %v1949
  %v4616 = vunpack.c.l.b16 %v1950
  %v4617 = vunpack.c.h.b16 %v1950
  %v4618 = vunpack.c.l.b16 %v1951
  %v4619 = vunpack.c.h.b16 %v1951
  %v4620 = vunpack.c.l.b16 %v1952
  %v4621 = vunpack.c.h.b16 %v1952
  %v4622 = vunpack.c.l.b16 %v1953
  %v4623 = vunpack.c.h.b16 %v1953
  %v4624 = vunpack.c.l.b16 %v1954
  %v4625 = vunpack.c.h.b16 %v1954
  %v4626 = vunpack.c.l.b16 %v1955
  %v4627 = vunpack.c.h.b16 %v1955
  %v4628 = vunpack.c.l.b16 %v1956
  %v4629 = vunpack.c.h.b16 %v1956
  %v4630 = vunpack.c.l.b16 %v1957
  %v4631 = vunpack.c.h.b16 %v1957
  %v4632 = vunpack.c.l.b16 %v1958
  %v4633 = vunpack.c.h.b16 %v1958
  %v4634 = vunpack.c.l.b16 %v1959
  %v4635 = vunpack.c.h.b16 %v1959
  %v4636 = vunpack.c.l.b16 %v1960
  %v4637 = vunpack.c.h.b16 %v1960
  %v4638 = vunpack.c.l.b16 %v1961
  %v4639 = vunpack.c.h.b16 %v1961
  %v4640 = vunpack.c.l.b16 %v1962
  %v4641 = vunpack.c.h.b16 %v1962
  %v4642 = vunpack.c.l.b16 %v1963
  %v4643 = vunpack.c.h.b16 %v1963
  %v4644 = vunpack.c.l.b16 %v1964
  %v4645 = vunpack.c.h.b16 %v1964
  %v4646 = vunpack.c.l.b16 %v1965
  %v4647 = vunpack.c.h.b16 %v1965
  %v4648 = vunpack.c.l.b16 %v1966
  %v4649 = vunpack.c.h.b16 %v1966
  %v4650 = vunpack.c.l.b16 %v1967
  %v4651 = vunpack.c.h.b16 %v1967
  %v4652 = vunpack.c.l.b16 %v1968
  %v4653 = vunpack.c.h.b16 %v1968
  %v4654 = vunpack.c.l.b16 %v1969
  %v4655 = vunpack.c.h.b16 %v1969
  %v4656 = vunpack.c.l.b16 %v1970
  %v4657 = vunpack.c.h.b16 %v1970
  %v4658 = vunpack.c.l.b16 %v1971
  %v4659 = vunpack.c.h.b16 %v1971
  %v4660 = vunpack.c.l.b16 %v1972
  %v4661 = vunpack.c.h.b16 %v1972
  %v4662 = vunpack.c.l.b16 %v1973
  %v4663 = vunpack.c.h.b16 %v1973
  %v4664 = vunpack.c.l.b16 %v1974
  %v4665 = vunpack.c.h.b16 %v1974
  %v4666 = vunpack.c.l.b16 %v1975
  %v4667 = vunpack.c.h.b16 %v1975
  %v4668 = vunpack.c.l.b16 %v1976
  %v4669 = vunpack.c.h.b16 %v1976
  %v4670 = vunpack.c.l.b16 %v1977
  %v4671 = vunpack.c.h.b16 %v1977
  %v4672 = vunpack.c.l.b16 %v1978
  %v4673 = vunpack.c.h.b16 %v1978
  %v4674 = vunpack.c.l.b16 %v1979
  %v4675 = vunpack.c.h.b16 %v1979
  %v4676 = vunpack.c.l.b16 %v1980
  %v4677 = vunpack.c.h.b16 %v1980
  %v4678 = vunpack.c.l.b16 %v1981
  %v4679 = vunpack.c.h.b16 %v1981
  %v4680 = vunpack.c.l.b16 %v1982
  %v4681 = vunpack.c.h.b16 %v1982
  %v4682 = vunpack.c.l.b16 %v1983
  %v4683 = vunpack.c.h.b16 %v1983
  %v4684 = vunpack.c.l.b16 %v1984
  %v4685 = vunpack.c.h.b16 %v1984
  %v4686 = vunpack.c.l.b16 %v1985
  %v4687 = vunpack.c.h.b16 %v1985
  %v4688 = vunpack.c.l.b16 %v1986
  %v4689 = vunpack.c.h.b16 %v1986
  %v4690 = vunpack.c.l.b16 %v1987
  %v4691 = vunpack.c.h.b16 %v1987
  %v4692 = vunpack.c.l.b16 %v1988
  %v4693 = vunpack.c.h.b16 %v1988
  %v4694 = vunpack.c.l.b16 %v1989
  %v4695 = vunpack.c.h.b16 %v1989
  %v4696 = vunpack.c.l.b16 %v1990
  %v4697 = vunpack.c.h.b16 %v1990
  %v4698 = vunpack.c.l.b16 %v1991
  %v4699 = vunpack.c.h.b16 %v1991
  %v4700 = vunpack.c.l.b16 %v1992
  %v4701 = vunpack.c.h.b16 %v1992
  %v4702 = vunpack.c.l.b16 %v1993
  %v4703 = vunpack.c.h.b16 %v1993
  %v4704 = vunpack.c.l.b16 %v1994
  %v4705 = vunpack.c.h.b16 %v1994
  %v4706 = vunpack.c.l.b16 %v1995
  %v4707 = vunpack.c.h.b16 %v1995
  %v4708 = vunpack.c.l.b16 %v1996
  %v4709 = vunpack.c.h.b16 %v1996
  %v4710 = vunpack.c.l.b16 %v1997
  %v4711 = vunpack.c.h.b16 %v1997
  %v4712 = vunpack.c.l.b16 %v1998
  %v4713 = vunpack.c.h.b16 %v1998
  %v4714 = vunpack.c.l.b16 %v1999
  %v4715 = vunpack.c.h.b16 %v1999
  %v4716 = vunpack.c.l.b16 %v2000
  %v4717 = vunpack.c.h.b16 %v2000
  %v4718 = vunpack.c.l.b16 %v2001
  %v4719 = vunpack.c.h.b16 %v2001
  %v4720 = vunpack.c.l.b16 %v2002
  %v4721 = vunpack.c.h.b16 %v2002
  %v4722 = vunpack.c.l.b16 %v2003
  %v4723 = vunpack.c.h.b16 %v2003
  %v4724 = vunpack.c.l.b16 %v2004
  %v4725 = vunpack.c.h.b16 %v2004
  %v4726 = vunpack.c.l.b16 %v2005
  %v4727 = vunpack.c.h.b16 %v2005
  %v4728 = vunpack.c.l.b16 %v2006
  %v4729 = vunpack.c.h.b16 %v2006
  %v4730 = vunpack.c.l.b16 %v2007
  %v4731 = vunpack.c.h.b16 %v2007
  %v4732 = vunpack.c.l.b16 %v2008
  %v4733 = vunpack.c.h.b16 %v2008
  %v4734 = vunpack.c.l.b16 %v2009
  %v4735 = vunpack.c.h.b16 %v2009
  %v4736 = vunpack.c.l.b16 %v2010
  %v4737 = vunpack.c.h.b16 %v2010
  %v4738 = vunpack.c.l.b16 %v2011
  %v4739 = vunpack.c.h.b16 %v2011
  %v4740 = vunpack.c.l.b16 %v2012
  %v4741 = vunpack.c.h.b16 %v2012
  %v4742 = vunpack.c.l.b16 %v2013
  %v4743 = vunpack.c.h.b16 %v2013
  %v4744 = vunpack.c.l.b16 %v2014
  %v4745 = vunpack.c.h.b16 %v2014
  %v4746 = vunpack.c.l.b16 %v2015
  %v4747 = vunpack.c.h.b16 %v2015
  %v4748 = vunpack.c.l.b16 %v2016
  %v4749 = vunpack.c.h.b16 %v2016
  %v4750 = vunpack.c.l.b16 %v2017
  %v4751 = vunpack.c.h.b16 %v2017
  %v4752 = vunpack.c.l.b16 %v2018
  %v4753 = vunpack.c.h.b16 %v2018
  %v4754 = vunpack.c.l.b16 %v2019
  %v4755 = vunpack.c.h.b16 %v2019
  %v4756 = vunpack.c.l.b16 %v2020
  %v4757 = vunpack.c.h.b16 %v2020
  %v4758 = vunpack.c.l.b16 %v2021
  %v4759 = vunpack.c.h.b16 %v2021
  %v4760 = vunpack.c.l.b16 %v2022
  %v4761 = vunpack.c.h.b16 %v2022
  %v4762 = vunpack.c.l.b16 %v2023
  %v4763 = vunpack.c.h.b16 %v2023
  %v4764 = vunpack.c.l.b16 %v2024
  %v4765 = vunpack.c.h.b16 %v2024
  %v4766 = vunpack.c.l.b16 %v2025
  %v4767 = vunpack.c.h.b16 %v2025
  %v4768 = vunpack.c.l.b16 %v2026
  %v4769 = vunpack.c.h.b16 %v2026
  %v4770 = vunpack.c.l.b16 %v2027
  %v4771 = vunpack.c.h.b16 %v2027
  %v4772 = vunpack.c.l.b16 %v2028
  %v4773 = vunpack.c.h.b16 %v2028
  %v4774 = vunpack.c.l.b16 %v2029
  %v4775 = vunpack.c.h.b16 %v2029
  %v4776 = vunpack.c.l.b16 %v2030
  %v4777 = vunpack.c.h.b16 %v2030
  %v4778 = vunpack.c.l.b16 %v2031
  %v4779 = vunpack.c.h.b16 %v2031
  %v4780 = vunpack.c.l.b16 %v2032
  %v4781 = vunpack.c.h.b16 %v2032
  %v4782 = vunpack.c.l.b16 %v2033
  %v4783 = vunpack.c.h.b16 %v2033
  %v4784 = vunpack.c.l.b16 %v2034
  %v4785 = vunpack.c.h.b16 %v2034
  %v4786 = vunpack.c.l.b16 %v2035
  %v4787 = vunpack.c.h.b16 %v2035
  %v4788 = vunpack.c.l.b16 %v2036
  %v4789 = vunpack.c.h.b16 %v2036
  %v4790 = vunpack.c.l.b16 %v2037
  %v4791 = vunpack.c.h.b16 %v2037
  %v4792 = vunpack.c.l.b16 %v2038
  %v4793 = vunpack.c.h.b16 %v2038
  %v4794 = vunpack.c.l.b16 %v2039
  %v4795 = vunpack.c.h.b16 %v2039
  %v4796 = vunpack.c.l.b16 %v2040
  %v4797 = vunpack.c.h.b16 %v2040
  %v4798 = vunpack.c.l.b16 %v2041
  %v4799 = vunpack.c.h.b16 %v2041
  %v4800 = vunpack.c.l.b16 %v2042
  %v4801 = vunpack.c.h.b16 %v2042
  %v4802 = vunpack.c.l.b16 %v2043
  %v4803 = vunpack.c.h.b16 %v2043
  %v4804 = vunpack.c.l.b16 %v2044
  %v4805 = vunpack.c.h.b16 %v2044
  %v4806 = vunpack.c.l.b16 %v2045
  %v4807 = vunpack.c.h.b16 %v2045
  %v4808 = vunpack.c.l.b16 %v2046
  %v4809 = vunpack.c.h.b16 %v2046
  %v4810 = vunpack.c.l.b16 %v2047
  %v4811 = vunpack.c.h.b16 %v2047
  %v4812 = vunpack.c.l.b16 %v2048
  %v4813 = vunpack.c.h.b16 %v2048
  %v4814 = vunpack.c.l.b16 %v2049
  %v4815 = vunpack.c.h.b16 %v2049
  %v4816 = vunpack.c.l.b16 %v2050
  %v4817 = vunpack.c.h.b16 %v2050
  %v4818 = vunpack.c.l.b16 %v2051
  %v4819 = vunpack.c.h.b16 %v2051
  %v4820 = vunpack.c.l.b16 %v2052
  %v4821 = vunpack.c.h.b16 %v2052
  %v4822 = vunpack.c.l.b16 %v2053
  %v4823 = vunpack.c.h.b16 %v2053
  %v4824 = vunpack.c.l.b16 %v2054
  %v4825 = vunpack.c.h.b16 %v2054
  %v4826 = vunpack.c.l.b16 %v2055
  %v4827 = vunpack.c.h.b16 %v2055
  %v4828 = vunpack.c.l.b16 %v2056
  %v4829 = vunpack.c.h.b16 %v2056
  %v4830 = vunpack.c.l.b16 %v2057
  %v4831 = vunpack.c.h.b16 %v2057
  %v4832 = vunpack.c.l.b16 %v2058
  %v4833 = vunpack.c.h.b16 %v2058
  %v4834 = vunpack.c.l.b16 %v2059
  %v4835 = vunpack.c.h.b16 %v2059
  %v4836 = vunpack.c.l.b16 %v2060
  %v4837 = vunpack.c.h.b16 %v2060
  %v4838 = vunpack.c.l.b16 %v2061
  %v4839 = vunpack.c.h.b16 %v2061
  %v4840 = vunpack.c.l.b16 %v2062
  %v4841 = vunpack.c.h.b16 %v2062
  %v4842 = vunpack.c.l.b16 %v2063
  %v4843 = vunpack.c.h.b16 %v2063
  %v4844 = vunpack.c.l.b16 %v2064
  %v4845 = vunpack.c.h.b16 %v2064
  %v4846 = vunpack.c.l.b16 %v2065
  %v4847 = vunpack.c.h.b16 %v2065
  %v4848 = vunpack.c.l.b16 %v2066
  %v4849 = vunpack.c.h.b16 %v2066
  %v4850 = vunpack.c.l.b16 %v2067
  %v4851 = vunpack.c.h.b16 %v2067
  %v4852 = vunpack.c.l.b16 %v2068
  %v4853 = vunpack.c.h.b16 %v2068
  %v4854 = vunpack.c.l.b16 %v2069
  %v4855 = vunpack.c.h.b16 %v2069
  %v4856 = vunpack.c.l.b16 %v2070
  %v4857 = vunpack.c.h.b16 %v2070
  %v4858 = vunpack.c.l.b16 %v2071
  %v4859 = vunpack.c.h.b16 %v2071
  %v4860 = vunpack.c.l.b16 %v2072
  %v4861 = vunpack.c.h.b16 %v2072
  %v4862 = vunpack.c.l.b16 %v2073
  %v4863 = vunpack.c.h.b16 %v2073
  %v4864 = vunpack.c.l.b16 %v2074
  %v4865 = vunpack.c.h.b16 %v2074
  %v4866 = vunpack.c.l.b16 %v2075
  %v4867 = vunpack.c.h.b16 %v2075
  %v4868 = vunpack.c.l.b16 %v2076
  %v4869 = vunpack.c.h.b16 %v2076
  %v4870 = vunpack.c.l.b16 %v2077
  %v4871 = vunpack.c.h.b16 %v2077
  %v4872 = vunpack.c.l.b16 %v2078
  %v4873 = vunpack.c.h.b16 %v2078
  %v4874 = vunpack.c.l.b16 %v2079
  %v4875 = vunpack.c.h.b16 %v2079
  %v4876 = vunpack.c.l.b16 %v2080
  %v4877 = vunpack.c.h.b16 %v2080
  %v4878 = vunpack.c.l.b16 %v2081
  %v4879 = vunpack.c.h.b16 %v2081
  %v4880 = vunpack.c.l.b16 %v2082
  %v4881 = vunpack.c.h.b16 %v2082
  %v4882 = vunpack.c.l.b16 %v2083
  %v4883 = vunpack.c.h.b16 %v2083
  %v4884 = vunpack.c.l.b16 %v2084
  %v4885 = vunpack.c.h.b16 %v2084
  %v4886 = vunpack.c.l.b16 %v2085
  %v4887 = vunpack.c.h.b16 %v2085
  %v4888 = vunpack.c.l.b16 %v2086
  %v4889 = vunpack.c.h.b16 %v2086
  %v4890 = vunpack.c.l.b16 %v2087
  %v4891 = vunpack.c.h.b16 %v2087
  %v4892 = vunpack.c.l.b16 %v2088
  %v4893 = vunpack.c.h.b16 %v2088
  %v4894 = vunpack.c.l.b16 %v2089
  %v4895 = vunpack.c.h.b16 %v2089
  %v4896 = vunpack.c.l.b16 %v2090
  %v4897 = vunpack.c.h.b16 %v2090
  %v4898 = vunpack.c.l.b16 %v2091
  %v4899 = vunpack.c.h.b16 %v2091
  %v4900 = vunpack.c.l.b16 %v2092
  %v4901 = vunpack.c.h.b16 %v2092
  %v4902 = vunpack.c.l.b16 %v2093
  %v4903 = vunpack.c.h.b16 %v2093
  %v4904 = vunpack.c.l.b16 %v2094
  %v4905 = vunpack.c.h.b16 %v2094
  %v4906 = vunpack.c.l.b16 %v2095
  %v4907 = vunpack.c.h.b16 %v2095
  %v4908 = vunpack.c.l.b16 %v2096
  %v4909 = vunpack.c.h.b16 %v2096
  %v4910 = vunpack.c.l.b16 %v2097
  %v4911 = vunpack.c.h.b16 %v2097
  %v4912 = vunpack.c.l.b16 %v2098
  %v4913 = vunpack.c.h.b16 %v2098
  %v4914 = vunpack.c.l.b16 %v2099
  %v4915 = vunpack.c.h.b16 %v2099
  %v4916 = vunpack.c.l.b16 %v2100
  %v4917 = vunpack.c.h.b16 %v2100
  %v4918 = vunpack.c.l.b16 %v2101
  %v4919 = vunpack.c.h.b16 %v2101
  %v4920 = vunpack.c.l.b16 %v2102
  %v4921 = vunpack.c.h.b16 %v2102
  %v4922 = vunpack.c.l.b16 %v2103
  %v4923 = vunpack.c.h.b16 %v2103
  %v4924 = vunpack.c.l.b16 %v2104
  %v4925 = vunpack.c.h.b16 %v2104
  %v4926 = vunpack.c.l.b16 %v2105
  %v4927 = vunpack.c.h.b16 %v2105
  %v4928 = vunpack.c.l.b16 %v2106
  %v4929 = vunpack.c.h.b16 %v2106
  %v4930 = vunpack.c.l.b16 %v2107
  %v4931 = vunpack.c.h.b16 %v2107
  %v4932 = vunpack.c.l.b16 %v2108
  %v4933 = vunpack.c.h.b16 %v2108
  %v4934 = vunpack.c.l.b16 %v2109
  %v4935 = vunpack.c.h.b16 %v2109
  %v4936 = vunpack.c.l.b16 %v2110
  %v4937 = vunpack.c.h.b16 %v2110
  %v4938 = vunpack.c.l.b16 %v2111
  %v4939 = vunpack.c.h.b16 %v2111
  %v4940 = vunpack.c.l.b16 %v2112
  %v4941 = vunpack.c.h.b16 %v2112
  %v4942 = vunpack.c.l.b16 %v2113
  %v4943 = vunpack.c.h.b16 %v2113
  %v4944 = vunpack.c.l.b16 %v2114
  %v4945 = vunpack.c.h.b16 %v2114
  %v4946 = vunpack.c.l.b16 %v2115
  %v4947 = vunpack.c.h.b16 %v2115
  %v4948 = vunpack.c.l.b16 %v2116
  %v4949 = vunpack.c.h.b16 %v2116
  %v4950 = vunpack.c.l.b16 %v2117
  %v4951 = vunpack.c.h.b16 %v2117
  %v4952 = vunpack.c.l.b16 %v2118
  %v4953 = vunpack.c.h.b16 %v2118
  %v4954 = vunpack.c.l.b16 %v2119
  %v4955 = vunpack.c.h.b16 %v2119
  %v4956 = vunpack.c.l.b16 %v2120
  %v4957 = vunpack.c.h.b16 %v2120
  %v4958 = vunpack.c.l.b16 %v2121
  %v4959 = vunpack.c.h.b16 %v2121
  %v4960 = vunpack.c.l.b16 %v2122
  %v4961 = vunpack.c.h.b16 %v2122
  %v4962 = vunpack.c.l.b16 %v2123
  %v4963 = vunpack.c.h.b16 %v2123
  %v4964 = vunpack.c.l.b16 %v2124
  %v4965 = vunpack.c.h.b16 %v2124
  %v4966 = vunpack.c.l.b16 %v2125
  %v4967 = vunpack.c.h.b16 %v2125
  %v4968 = vunpack.c.l.b16 %v2126
  %v4969 = vunpack.c.h.b16 %v2126
  %v4970 = vunpack.c.l.b16 %v2127
  %v4971 = vunpack.c.h.b16 %v2127
  %v4972 = vunpack.c.l.b16 %v2128
  %v4973 = vunpack.c.h.b16 %v2128
  %v4974 = vunpack.c.l.b16 %v2129
  %v4975 = vunpack.c.h.b16 %v2129
  %v4976 = vunpack.c.l.b16 %v2130
  %v4977 = vunpack.c.h.b16 %v2130
  %v4978 = vunpack.c.l.b16 %v2131
  %v4979 = vunpack.c.h.b16 %v2131
  %v4980 = vunpack.c.l.b16 %v2132
  %v4981 = vunpack.c.h.b16 %v2132
  %v4982 = vunpack.c.l.b16 %v2133
  %v4983 = vunpack.c.h.b16 %v2133
  %v4984 = vunpack.c.l.b16 %v2134
  %v4985 = vunpack.c.h.b16 %v2134
  %v4986 = vunpack.c.l.b16 %v2135
  %v4987 = vunpack.c.h.b16 %v2135
  %v4988 = vunpack.c.l.b16 %v2136
  %v4989 = vunpack.c.h.b16 %v2136
  %v4990 = vunpack.c.l.b16 %v2137
  %v4991 = vunpack.c.h.b16 %v2137
  %v4992 = vunpack.c.l.b16 %v2138
  %v4993 = vunpack.c.h.b16 %v2138
  %v4994 = vunpack.c.l.b16 %v2139
  %v4995 = vunpack.c.h.b16 %v2139
  %v4996 = vunpack.c.l.b16 %v2140
  %v4997 = vunpack.c.h.b16 %v2140
  %v4998 = vunpack.c.l.b16 %v2141
  %v4999 = vunpack.c.h.b16 %v2141
  %v5000 = vunpack.c.l.b16 %v2142
  %v5001 = vunpack.c.h.b16 %v2142
  %v5002 = vunpack.c.l.b16 %v2143
  %v5003 = vunpack.c.h.b16 %v2143
  %v5004 = vunpack.c.l.b16 %v2144
  %v5005 = vunpack.c.h.b16 %v2144
  %v5006 = vunpack.c.l.b16 %v2145
  %v5007 = vunpack.c.h.b16 %v2145
  %v5008 = vunpack.c.l.b16 %v2146
  %v5009 = vunpack.c.h.b16 %v2146
  %v5010 = vunpack.c.l.b16 %v2147
  %v5011 = vunpack.c.h.b16 %v2147
  %v5012 = vunpack.c.l.b16 %v2148
  %v5013 = vunpack.c.h.b16 %v2148
  %v5014 = vunpack.c.l.b16 %v2149
  %v5015 = vunpack.c.h.b16 %v2149
  %v5016 = vunpack.c.l.b16 %v2150
  %v5017 = vunpack.c.h.b16 %v2150
  %v5018 = vunpack.c.l.b16 %v2151
  %v5019 = vunpack.c.h.b16 %v2151
  %v5020 = vunpack.c.l.b16 %v2152
  %v5021 = vunpack.c.h.b16 %v2152
  %v5022 = vunpack.c.l.b16 %v2153
  %v5023 = vunpack.c.h.b16 %v2153
  %v5024 = vunpack.c.l.b16 %v2154
  %v5025 = vunpack.c.h.b16 %v2154
  %v5026 = vunpack.c.l.b16 %v2155
  %v5027 = vunpack.c.h.b16 %v2155
  %v5028 = vunpack.c.l.b16 %v2156
  %v5029 = vunpack.c.h.b16 %v2156
  %v5030 = vunpack.c.l.b16 %v2157
  %v5031 = vunpack.c.h.b16 %v2157
  %v5032 = vunpack.c.l.b16 %v2158
  %v5033 = vunpack.c.h.b16 %v2158
  %v5034 = vunpack.c.l.b16 %v2159
  %v5035 = vunpack.c.h.b16 %v2159
  %v5036 = vunpack.c.l.b16 %v2160
  %v5037 = vunpack.c.h.b16 %v2160
  %v5038 = vunpack.c.l.b16 %v2161
  %v5039 = vunpack.c.h.b16 %v2161
  %v5040 = vunpack.c.l.b16 %v2162
  %v5041 = vunpack.c.h.b16 %v2162
  %v5042 = vunpack.c.l.b16 %v2163
  %v5043 = vunpack.c.h.b16 %v2163
  %v5044 = vunpack.c.l.b16 %v2164
  %v5045 = vunpack.c.h.b16 %v2164
  %v5046 = vunpack.c.l.b16 %v2165
  %v5047 = vunpack.c.h.b16 %v2165
  %v5048 = vunpack.c.l.b16 %v2166
  %v5049 = vunpack.c.h.b16 %v2166
  %v5050 = vunpack.c.l.b16 %v2167
  %v5051 = vunpack.c.h.b16 %v2167
  %v5052 = vunpack.c.l.b16 %v2168
  %v5053 = vunpack.c.h.b16 %v2168
  %v5054 = vunpack.c.l.b16 %v2169
  %v5055 = vunpack.c.h.b16 %v2169
  %v5056 = vunpack.c.l.b16 %v2170
  %v5057 = vunpack.c.h.b16 %v2170
  %v5058 = vunpack.c.l.b16 %v2171
  %v5059 = vunpack.c.h.b16 %v2171
  %v5060 = vunpack.c.l.b16 %v2172
  %v5061 = vunpack.c.h.b16 %v2172
  %v5062 = vunpack.c.l.b16 %v2173
  %v5063 = vunpack.c.h.b16 %v2173
  %v5064 = vunpack.c.l.b16 %v2174
  %v5065 = vunpack.c.h.b16 %v2174
  %v5066 = vunpack.c.l.b16 %v2175
  %v5067 = vunpack.c.h.b16 %v2175
  %v5068 = vunpack.c.l.b16 %v2176
  %v5069 = vunpack.c.h.b16 %v2176
  %v5070 = vunpack.c.l.b16 %v2177
  %v5071 = vunpack.c.h.b16 %v2177
  %v5072 = vunpack.c.l.b16 %v2178
  %v5073 = vunpack.c.h.b16 %v2178
  %v5074 = vunpack.c.l.b16 %v2179
  %v5075 = vunpack.c.h.b16 %v2179
  %v5076 = vunpack.c.l.b16 %v2180
  %v5077 = vunpack.c.h.b16 %v2180
  %v5078 = vunpack.c.l.b16 %v2181
  %v5079 = vunpack.c.h.b16 %v2181
  %v5080 = vunpack.c.l.b16 %v2182
  %v5081 = vunpack.c.h.b16 %v2182
  %v5082 = vunpack.c.l.b16 %v2183
  %v5083 = vunpack.c.h.b16 %v2183
  %v5084 = vunpack.c.l.b16 %v2184
  %v5085 = vunpack.c.h.b16 %v2184
  %v5086 = vunpack.c.l.b16 %v2185
  %v5087 = vunpack.c.h.b16 %v2185
  %v5088 = vunpack.c.l.b16 %v2186
  %v5089 = vunpack.c.h.b16 %v2186
  %v5090 = vunpack.c.l.b16 %v2187
  %v5091 = vunpack.c.h.b16 %v2187
  %v5092 = vunpack.c.l.b16 %v2188
  %v5093 = vunpack.c.h.b16 %v2188
  %v5094 = vunpack.c.l.b16 %v2189
  %v5095 = vunpack.c.h.b16 %v2189
  %v5096 = vunpack.c.l.b16 %v2190
  %v5097 = vunpack.c.h.b16 %v2190
  %v5098 = vunpack.c.l.b16 %v2191
  %v5099 = vunpack.c.h.b16 %v2191
  %v5100 = vunpack.c.l.b16 %v2192
  %v5101 = vunpack.c.h.b16 %v2192
  %v5102 = vunpack.c.l.b16 %v2193
  %v5103 = vunpack.c.h.b16 %v2193
  %v5104 = vunpack.c.l.b16 %v2194
  %v5105 = vunpack.c.h.b16 %v2194
  %v5106 = vunpack.c.l.b16 %v2195
  %v5107 = vunpack.c.h.b16 %v2195
  %v5108 = vunpack.c.l.b16 %v2196
  %v5109 = vunpack.c.h.b16 %v2196
  %v5110 = vunpack.c.l.b16 %v2197
  %v5111 = vunpack.c.h.b16 %v2197
  %v5112 = vunpack.c.l.b16 %v2198
  %v5113 = vunpack.c.h.b16 %v2198
  %v5114 = vunpack.c.l.b16 %v2199
  %v5115 = vunpack.c.h.b16 %v2199
  %v5116 = vunpack.c.l.b16 %v2200
  %v5117 = vunpack.c.h.b16 %v2200
  %v5118 = vunpack.c.l.b16 %v2201
  %v5119 = vunpack.c.h.b16 %v2201
  %v5120 = vunpack.c.l.b16 %v2202
  %v5121 = vunpack.c.h.b16 %v2202
  %v5122 = vunpack.c.l.b16 %v2203
  %v5123 = vunpack.c.h.b16 %v2203
  %v5124 = vunpack.c.l.b16 %v2204
  %v5125 = vunpack.c.h.b16 %v2204
  %v5126 = vunpack.c.l.b16 %v2205
  %v5127 = vunpack.c.h.b16 %v2205
  %v5128 = vunpack.c.l.b16 %v2206
  %v5129 = vunpack.c.h.b16 %v2206
  %v5130 = vunpack.c.l.b16 %v2207
  %v5131 = vunpack.c.h.b16 %v2207
  %v5132 = vunpack.c.l.b16 %v2208
  %v5133 = vunpack.c.h.b16 %v2208
  %v5134 = vunpack.c.l.b16 %v2209
  %v5135 = vunpack.c.h.b16 %v2209
  %v5136 = vunpack.c.l.b16 %v2210
  %v5137 = vunpack.c.h.b16 %v2210
  %v5138 = vunpack.c.l.b16 %v2211
  %v5139 = vunpack.c.h.b16 %v2211
  %v5140 = vunpack.c.l.b16 %v2212
  %v5141 = vunpack.c.h.b16 %v2212
  %v5142 = vunpack.c.l.b16 %v2213
  %v5143 = vunpack.c.h.b16 %v2213
  %v5144 = vunpack.c.l.b16 %v2214
  %v5145 = vunpack.c.h.b16 %v2214
  %v5146 = vunpack.c.l.b16 %v2215
  %v5147 = vunpack.c.h.b16 %v2215
  %v5148 = vunpack.c.l.b16 %v2216
  %v5149 = vunpack.c.h.b16 %v2216
  %v5150 = vunpack.c.l.b16 %v2217
  %v5151 = vunpack.c.h.b16 %v2217
  %v5152 = vunpack.c.l.b16 %v2218
  %v5153 = vunpack.c.h.b16 %v2218
  %v5154 = vunpack.c.l.b16 %v2219
  %v5155 = vunpack.c.h.b16 %v2219
  %v5156 = vunpack.c.l.b16 %v2220
  %v5157 = vunpack.c.h.b16 %v2220
  %v5158 = vunpack.c.l.b16 %v2221
  %v5159 = vunpack.c.h.b16 %v2221
  %v5160 = vunpack.c.l.b16 %v2222
  %v5161 = vunpack.c.h.b16 %v2222
  %v5162 = vunpack.c.l.b16 %v2223
  %v5163 = vunpack.c.h.b16 %v2223
  %v5164 = vunpack.c.l.b16 %v2224
  %v5165 = vunpack.c.h.b16 %v2224
  %v5166 = vunpack.c.l.b16 %v2225
  %v5167 = vunpack.c.h.b16 %v2225
  %v5168 = vunpack.c.l.b16 %v2226
  %v5169 = vunpack.c.h.b16 %v2226
  %v5170 = vunpack.c.l.b16 %v2227
  %v5171 = vunpack.c.h.b16 %v2227
  %v5172 = vunpack.c.l.b16 %v2228
  %v5173 = vunpack.c.h.b16 %v2228
  %v5174 = vunpack.c.l.b16 %v2229
  %v5175 = vunpack.c.h.b16 %v2229
  %v5176 = vunpack.c.l.b16 %v2230
  %v5177 = vunpack.c.h.b16 %v2230
  %v5178 = vunpack.c.l.b16 %v2231
  %v5179 = vunpack.c.h.b16 %v2231
  %v5180 = vunpack.c.l.b16 %v2232
  %v5181 = vunpack.c.h.b16 %v2232
  %v5182 = vunpack.c.l.b16 %v2233
  %v5183 = vunpack.c.h.b16 %v2233
  %v5184 = vunpack.c.l.b16 %v2234
  %v5185 = vunpack.c.h.b16 %v2234
  %v5186 = vunpack.c.l.b16 %v2235
  %v5187 = vunpack.c.h.b16 %v2235
  %v5188 = vunpack.c.l.b16 %v2236
  %v5189 = vunpack.c.h.b16 %v2236
  %v5190 = vunpack.c.l.b16 %v2237
  %v5191 = vunpack.c.h.b16 %v2237
  %v5192 = vunpack.c.l.b16 %v2238
  %v5193 = vunpack.c.h.b16 %v2238
  %v5194 = vunpack.c.l.b16 %v2239
  %v5195 = vunpack.c.h.b16 %v2239
  %v5196 = vunpack.c.l.b16 %v2240
  %v5197 = vunpack.c.h.b16 %v2240
  %v5198 = vunpack.c.l.b16 %v2241
  %v5199 = vunpack.c.h.b16 %v2241
  %v5200 = vunpack.c.l.b16 %v2242
  %v5201 = vunpack.c.h.b16 %v2242
  %v5202 = vunpack.c.l.b16 %v2243
  %v5203 = vunpack.c.h.b16 %v2243
  %v5204 = vunpack.c.l.b16 %v2244
  %v5205 = vunpack.c.h.b16 %v2244
  %v5206 = vunpack.c.l.b16 %v2245
  %v5207 = vunpack.c.h.b16 %v2245
  %v5208 = vunpack.c.l.b16 %v2246
  %v5209 = vunpack.c.h.b16 %v2246
  %v5210 = vunpack.c.l.b16 %v2247
  %v5211 = vunpack.c.h.b16 %v2247
  %v5212 = vunpack.c.l.b16 %v2248
  %v5213 = vunpack.c.h.b16 %v2248
  %v5214 = vunpack.c.l.b16 %v2249
  %v5215 = vunpack.c.h.b16 %v2249
  %v5216 = vunpack.c.l.b16 %v2250
  %v5217 = vunpack.c.h.b16 %v2250
  %v5218 = vunpack.c.l.b16 %v2251
  %v5219 = vunpack.c.h.b16 %v2251
  %v5220 = vunpack.c.l.b16 %v2252
  %v5221 = vunpack.c.h.b16 %v2252
  %v5222 = vunpack.c.l.b16 %v2253
  %v5223 = vunpack.c.h.b16 %v2253
  %v5224 = vunpack.c.l.b16 %v2254
  %v5225 = vunpack.c.h.b16 %v2254
  %v5226 = vunpack.c.l.b16 %v2255
  %v5227 = vunpack.c.h.b16 %v2255
  %v5228 = vunpack.c.l.b16 %v2256
  %v5229 = vunpack.c.h.b16 %v2256
  %v5230 = vunpack.c.l.b16 %v2257
  %v5231 = vunpack.c.h.b16 %v2257
  %v5232 = vunpack.c.l.b16 %v2258
  %v5233 = vunpack.c.h.b16 %v2258
  %v5234 = vunpack.c.l.b16 %v2259
  %v5235 = vunpack.c.h.b16 %v2259
  %v5236 = vunpack.c.l.b16 %v2260
  %v5237 = vunpack.c.h.b16 %v2260
  %v5238 = vunpack.c.l.b16 %v2261
  %v5239 = vunpack.c.h.b16 %v2261
  %v5240 = vunpack.c.l.b16 %v2262
  %v5241 = vunpack.c.h.b16 %v2262
  %v5242 = vunpack.c.l.b16 %v2263
  %v5243 = vunpack.c.h.b16 %v2263
  %v5244 = vunpack.c.l.b16 %v2264
  %v5245 = vunpack.c.h.b16 %v2264
  %v5246 = vunpack.c.l.b16 %v2265
  %v5247 = vunpack.c.h.b16 %v2265
  %v5248 = vunpack.c.l.b16 %v2266
  %v5249 = vunpack.c.h.b16 %v2266
  %v5250 = vunpack.c.l.b16 %v2267
  %v5251 = vunpack.c.h.b16 %v2267
  %v5252 = vunpack.c.l.b16 %v2268
  %v5253 = vunpack.c.h.b16 %v2268
  %v5254 = vunpack.c.l.b16 %v2269
  %v5255 = vunpack.c.h.b16 %v2269
  %v5256 = vunpack.c.l.b16 %v2270
  %v5257 = vunpack.c.h.b16 %v2270
  %v5258 = vunpack.c.l.b16 %v2271
  %v5259 = vunpack.c.h.b16 %v2271
  %v5260 = vunpack.c.l.b16 %v2272
  %v5261 = vunpack.c.h.b16 %v2272
  %v5262 = vunpack.c.l.b16 %v2273
  %v5263 = vunpack.c.h.b16 %v2273
  %v5264 = vunpack.c.l.b16 %v2274
  %v5265 = vunpack.c.h.b16 %v2274
  %v5266 = vunpack.c.l.b16 %v2275
  %v5267 = vunpack.c.h.b16 %v2275
  %v5268 = vunpack.c.l.b16 %v2276
  %v5269 = vunpack.c.h.b16 %v2276
  %v5270 = vunpack.c.l.b16 %v2277
  %v5271 = vunpack.c.h.b16 %v2277
  %v5272 = vunpack.c.l.b16 %v2278
  %v5273 = vunpack.c.h.b16 %v2278
  %v5274 = vunpack.c.l.b16 %v2279
  %v5275 = vunpack.c.h.b16 %v2279
  %v5276 = vunpack.c.l.b16 %v2280
  %v5277 = vunpack.c.h.b16 %v2280
  %v5278 = vunpack.c.l.b16 %v2281
  %v5279 = vunpack.c.h.b16 %v2281
  %v5280 = vunpack.c.l.b16 %v2282
  %v5281 = vunpack.c.h.b16 %v2282
  %v5282 = vunpack.c.l.b16 %v2283
  %v5283 = vunpack.c.h.b16 %v2283
  %v5284 = vunpack.c.l.b16 %v2284
  %v5285 = vunpack.c.h.b16 %v2284
  %v5286 = vunpack.c.l.b16 %v2285
  %v5287 = vunpack.c.h.b16 %v2285
  %v5288 = vunpack.c.l.b16 %v2286
  %v5289 = vunpack.c.h.b16 %v2286
  %v5290 = vunpack.c.l.b16 %v2287
  %v5291 = vunpack.c.h.b16 %v2287
  %v5292 = vunpack.c.l.b16 %v2288
  %v5293 = vunpack.c.h.b16 %v2288
  %v5294 = vunpack.c.l.b16 %v2289
  %v5295 = vunpack.c.h.b16 %v2289
  %v5296 = vunpack.c.l.b16 %v2290
  %v5297 = vunpack.c.h.b16 %v2290
  %v5298 = vunpack.c.l.b16 %v2291
  %v5299 = vunpack.c.h.b16 %v2291
  %v5300 = vunpack.c.l.b16 %v2292
  %v5301 = vunpack.c.h.b16 %v2292
  %v5302 = vunpack.c.l.b16 %v2293
  %v5303 = vunpack.c.h.b16 %v2293
  %v5304 = vunpack.c.l.b16 %v2294
  %v5305 = vunpack.c.h.b16 %v2294
  %v5306 = vunpack.c.l.b16 %v2295
  %v5307 = vunpack.c.h.b16 %v2295
  %v5308 = vunpack.c.l.b16 %v2296
  %v5309 = vunpack.c.h.b16 %v2296
  %v5310 = vunpack.c.l.b16 %v2297
  %v5311 = vunpack.c.h.b16 %v2297
  %v5312 = vunpack.c.l.b16 %v2298
  %v5313 = vunpack.c.h.b16 %v2298
  %v5314 = vunpack.c.l.b16 %v2299
  %v5315 = vunpack.c.h.b16 %v2299
  %v5316 = vunpack.c.l.b16 %v2300
  %v5317 = vunpack.c.h.b16 %v2300
  %v5318 = vunpack.c.l.b16 %v2301
  %v5319 = vunpack.c.h.b16 %v2301
  %v5320 = vunpack.c.l.b16 %v2302
  %v5321 = vunpack.c.h.b16 %v2302
  %v5322 = vunpack.c.l.b16 %v2303
  %v5323 = vunpack.c.h.b16 %v2303
  %v5324 = vunpack.c.l.b16 %v2304
  %v5325 = vunpack.c.h.b16 %v2304
  %v5326 = vunpack.c.l.b16 %v2305
  %v5327 = vunpack.c.h.b16 %v2305
  %v5328 = vunpack.c.l.b16 %v2306
  %v5329 = vunpack.c.h.b16 %v2306
  %v5330 = vunpack.c.l.b16 %v2307
  %v5331 = vunpack.c.h.b16 %v2307
  %v5332 = vunpack.c.l.b16 %v2308
  %v5333 = vunpack.c.h.b16 %v2308
  %v5334 = vunpack.c.l.b16 %v2309
  %v5335 = vunpack.c.h.b16 %v2309
  %v5336 = vunpack.c.l.b16 %v2310
  %v5337 = vunpack.c.h.b16 %v2310
  %v5338 = vunpack.c.l.b16 %v2311
  %v5339 = vunpack.c.h.b16 %v2311
  %v5340 = vunpack.c.l.b16 %v2312
  %v5341 = vunpack.c.h.b16 %v2312
  %v5342 = vunpack.c.l.b16 %v2313
  %v5343 = vunpack.c.h.b16 %v2313
  %v5344 = vunpack.c.l.b16 %v2314
  %v5345 = vunpack.c.h.b16 %v2314
  %v5346 = vunpack.c.l.b16 %v2315
  %v5347 = vunpack.c.h.b16 %v2315
  %v5348 = vunpack.c.l.b16 %v2316
  %v5349 = vunpack.c.h.b16 %v2316
  %v5350 = vunpack.c.l.b16 %v2317
  %v5351 = vunpack.c.h.b16 %v2317
  %v5352 = vunpack.c.l.b16 %v2318
  %v5353 = vunpack.c.h.b16 %v2318
  %v5354 = vunpack.c.l.b16 %v2319
  %v5355 = vunpack.c.h.b16 %v2319
  %v5356 = vunpack.c.l.b16 %v2320
  %v5357 = vunpack.c.h.b16 %v2320
  %v5358 = vunpack.c.l.b16 %v2321
  %v5359 = vunpack.c.h.b16 %v2321
  %v5360 = vunpack.c.l.b16 %v2322
  %v5361 = vunpack.c.h.b16 %v2322
  %v5362 = vunpack.c.l.b16 %v2323
  %v5363 = vunpack.c.h.b16 %v2323
  %v5364 = vunpack.c.l.b16 %v2324
  %v5365 = vunpack.c.h.b16 %v2324
  %v5366 = vunpack.c.l.b16 %v2325
  %v5367 = vunpack.c.h.b16 %v2325
  %v5368 = vunpack.c.l.b16 %v2326
  %v5369 = vunpack.c.h.b16 %v2326
  %v5370 = vunpack.c.l.b16 %v2327
  %v5371 = vunpack.c.h.b16 %v2327
  %v5372 = vunpack.c.l.b16 %v2328
  %v5373 = vunpack.c.h.b16 %v2328
  %v5374 = vunpack.c.l.b16 %v2329
  %v5375 = vunpack.c.h.b16 %v2329
  %v5376 = vunpack.c.l.b16 %v2330
  %v5377 = vunpack.c.h.b16 %v2330
  %v5378 = vunpack.c.l.b16 %v2331
  %v5379 = vunpack.c.h.b16 %v2331
  %v5380 = vunpack.c.l.b16 %v2332
  %v5381 = vunpack.c.h.b16 %v2332
  %v5382 = vunpack.c.l.b16 %v2333
  %v5383 = vunpack.c.h.b16 %v2333
  %v5384 = vunpack.c.l.b16 %v2334
  %v5385 = vunpack.c.h.b16 %v2334
  %v5386 = vunpack.c.l.b16 %v2335
  %v5387 = vunpack.c.h.b16 %v2335
  %v5388 = vunpack.c.l.b16 %v2336
  %v5389 = vunpack.c.h.b16 %v2336
  %v5390 = vunpack.c.l.b16 %v2337
  %v5391 = vunpack.c.h.b16 %v2337
  %v5392 = vunpack.c.l.b16 %v2338
  %v5393 = vunpack.c.h.b16 %v2338
  %v5394 = vunpack.c.l.b16 %v2339
  %v5395 = vunpack.c.h.b16 %v2339
  %v5396 = vunpack.c.l.b16 %v2340
  %v5397 = vunpack.c.h.b16 %v2340
  %v5398 = vunpack.c.l.b16 %v2341
  %v5399 = vunpack.c.h.b16 %v2341
  %v5400 = vunpack.c.l.b16 %v2342
  %v5401 = vunpack.c.h.b16 %v2342
  %v5402 = vunpack.c.l.b16 %v2343
  %v5403 = vunpack.c.h.b16 %v2343
  %v5404 = vunpack.c.l.b16 %v2344
  %v5405 = vunpack.c.h.b16 %v2344
  %v5406 = vunpack.c.l.b16 %v2345
  %v5407 = vunpack.c.h.b16 %v2345
  %v5408 = vunpack.c.l.b16 %v2346
  %v5409 = vunpack.c.h.b16 %v2346
  %v5410 = vunpack.c.l.b16 %v2347
  %v5411 = vunpack.c.h.b16 %v2347
  %v5412 = vunpack.c.l.b16 %v2348
  %v5413 = vunpack.c.h.b16 %v2348
  %v5414 = vunpack.c.l.b16 %v2349
  %v5415 = vunpack.c.h.b16 %v2349
  %v5416 = vunpack.c.l.b16 %v2350
  %v5417 = vunpack.c.h.b16 %v2350
  %v5418 = vunpack.c.l.b16 %v2351
  %v5419 = vunpack.c.h.b16 %v2351
  %v5420 = vunpack.c.l.b16 %v2352
  %v5421 = vunpack.c.h.b16 %v2352
  %v5422 = vunpack.c.l.b16 %v2353
  %v5423 = vunpack.c.h.b16 %v2353
  %v5424 = vunpack.c.l.b16 %v2354
  %v5425 = vunpack.c.h.b16 %v2354
  %v5426 = vunpack.c.l.b16 %v2355
  %v5427 = vunpack.c.h.b16 %v2355
  %v5428 = vunpack.c.l.b16 %v2356
  %v5429 = vunpack.c.h.b16 %v2356
  %v5430 = vunpack.c.l.b16 %v2357
  %v5431 = vunpack.c.h.b16 %v2357
  %v5432 = vunpack.c.l.b16 %v2358
  %v5433 = vunpack.c.h.b16 %v2358
  %v5434 = vunpack.c.l.b16 %v2359
  %v5435 = vunpack.c.h.b16 %v2359
  %v5436 = vunpack.c.l.b16 %v2360
  %v5437 = vunpack.c.h.b16 %v2360
  %v5438 = vunpack.c.l.b16 %v2361
  %v5439 = vunpack.c.h.b16 %v2361
  %v5440 = vunpack.c.l.b16 %v2362
  %v5441 = vunpack.c.h.b16 %v2362
  %v5442 = vunpack.c.l.b16 %v2363
  %v5443 = vunpack.c.h.b16 %v2363
  %v5444 = vunpack.c.l.b16 %v2364
  %v5445 = vunpack.c.h.b16 %v2364
  %v5446 = vunpack.c.l.b16 %v2365
  %v5447 = vunpack.c.h.b16 %v2365
  %v5448 = vunpack.c.l.b16 %v2366
  %v5449 = vunpack.c.h.b16 %v2366
  %v5450 = vunpack.c.l.b16 %v2367
  %v5451 = vunpack.c.h.b16 %v2367
  %v5452 = vunpack.c.l.b16 %v2368
  %v5453 = vunpack.c.h.b16 %v2368
  %v5454 = vunpack.c.l.b16 %v2369
  %v5455 = vunpack.c.h.b16 %v2369
  %v5456 = vunpack.c.l.b16 %v2370
  %v5457 = vunpack.c.h.b16 %v2370
  %v5458 = vunpack.c.l.b16 %v2371
  %v5459 = vunpack.c.h.b16 %v2371
  %v5460 = vunpack.c.l.b16 %v2372
  %v5461 = vunpack.c.h.b16 %v2372
  %v5462 = vunpack.c.l.b16 %v2373
  %v5463 = vunpack.c.h.b16 %v2373
  %v5464 = vunpack.c.l.b16 %v2374
  %v5465 = vunpack.c.h.b16 %v2374
  %v5466 = vunpack.c.l.b16 %v2375
  %v5467 = vunpack.c.h.b16 %v2375
  %v5468 = vunpack.c.l.b16 %v2376
  %v5469 = vunpack.c.h.b16 %v2376
  %v5470 = vunpack.c.l.b16 %v2377
  %v5471 = vunpack.c.h.b16 %v2377
  %v5472 = vunpack.c.l.b16 %v2378
  %v5473 = vunpack.c.h.b16 %v2378
  %v5474 = vunpack.c.l.b16 %v2379
  %v5475 = vunpack.c.h.b16 %v2379
  %v5476 = vunpack.c.l.b16 %v2380
  %v5477 = vunpack.c.h.b16 %v2380
  %v5478 = vunpack.c.l.b16 %v2381
  %v5479 = vunpack.c.h.b16 %v2381
  %v5480 = vunpack.c.l.b16 %v2382
  %v5481 = vunpack.c.h.b16 %v2382
  %v5482 = vunpack.c.l.b16 %v2383
  %v5483 = vunpack.c.h.b16 %v2383
  %v5484 = vunpack.c.l.b16 %v2384
  %v5485 = vunpack.c.h.b16 %v2384
  %v5486 = vunpack.c.l.b16 %v2385
  %v5487 = vunpack.c.h.b16 %v2385
  %v5488 = vunpack.c.l.b16 %v2386
  %v5489 = vunpack.c.h.b16 %v2386
  %v5490 = vunpack.c.l.b16 %v2387
  %v5491 = vunpack.c.h.b16 %v2387
  %v5492 = vunpack.c.l.b16 %v2388
  %v5493 = vunpack.c.h.b16 %v2388
  %v5494 = vunpack.c.l.b16 %v2389
  %v5495 = vunpack.c.h.b16 %v2389
  %v5496 = vunpack.c.l.b16 %v2390
  %v5497 = vunpack.c.h.b16 %v2390
  %v5498 = vunpack.c.l.b16 %v2391
  %v5499 = vunpack.c.h.b16 %v2391
  %v5500 = vunpack.c.l.b16 %v2392
  %v5501 = vunpack.c.h.b16 %v2392
  %v5502 = vunpack.c.l.b16 %v2393
  %v5503 = vunpack.c.h.b16 %v2393
  %v5504 = vunpack.c.l.b16 %v2394
  %v5505 = vunpack.c.h.b16 %v2394
  %v5506 = vunpack.c.l.b16 %v2395
  %v5507 = vunpack.c.h.b16 %v2395
  %v5508 = vunpack.c.l.b16 %v2396
  %v5509 = vunpack.c.h.b16 %v2396
  %v5510 = vunpack.c.l.b16 %v2397
  %v5511 = vunpack.c.h.b16 %v2397
  %v5512 = vunpack.c.l.b16 %v2398
  %v5513 = vunpack.c.h.b16 %v2398
  %v5514 = vunpack.c.l.b16 %v2399
  %v5515 = vunpack.c.h.b16 %v2399
  %v5516 = vunpack.c.l.b16 %v2400
  %v5517 = vunpack.c.h.b16 %v2400
  %v5518 = vunpack.c.l.b16 %v2401
  %v5519 = vunpack.c.h.b16 %v2401
  %v5520 = vunpack.c.l.b16 %v2402
  %v5521 = vunpack.c.h.b16 %v2402
  %v5522 = vunpack.c.l.b16 %v2403
  %v5523 = vunpack.c.h.b16 %v2403
  %v5524 = vunpack.c.l.b16 %v2404
  %v5525 = vunpack.c.h.b16 %v2404
  %v5526 = vunpack.c.l.b16 %v2405
  %v5527 = vunpack.c.h.b16 %v2405
  %v5528 = vunpack.c.l.b16 %v2406
  %v5529 = vunpack.c.h.b16 %v2406
  %v5530 = vunpack.c.l.b16 %v2407
  %v5531 = vunpack.c.h.b16 %v2407
  %v5532 = vunpack.c.l.b16 %v2408
  %v5533 = vunpack.c.h.b16 %v2408
  %v5534 = vunpack.c.l.b16 %v2409
  %v5535 = vunpack.c.h.b16 %v2409
  %v5536 = vunpack.c.l.b16 %v2410
  %v5537 = vunpack.c.h.b16 %v2410
  %v5538 = vunpack.c.l.b16 %v2411
  %v5539 = vunpack.c.h.b16 %v2411
  %v5540 = vunpack.c.l.b16 %v2412
  %v5541 = vunpack.c.h.b16 %v2412
  %v5542 = vunpack.c.l.b16 %v2413
  %v5543 = vunpack.c.h.b16 %v2413
  %v5544 = vunpack.c.l.b16 %v2414
  %v5545 = vunpack.c.h.b16 %v2414
  %v5546 = vunpack.c.l.b16 %v2415
  %v5547 = vunpack.c.h.b16 %v2415
  %v5548 = vunpack.c.l.b16 %v2416
  %v5549 = vunpack.c.h.b16 %v2416
  %v5550 = vunpack.c.l.b16 %v2417
  %v5551 = vunpack.c.h.b16 %v2417
  %v5552 = vunpack.c.l.b16 %v2418
  %v5553 = vunpack.c.h.b16 %v2418
  %v5554 = vunpack.c.l.b16 %v2419
  %v5555 = vunpack.c.h.b16 %v2419
  %v5556 = vunpack.c.l.b16 %v2420
  %v5557 = vunpack.c.h.b16 %v2420
  %v5558 = vunpack.c.l.b16 %v2421
  %v5559 = vunpack.c.h.b16 %v2421
  %v5560 = vunpack.c.l.b16 %v2422
  %v5561 = vunpack.c.h.b16 %v2422
  %v5562 = vunpack.c.l.b16 %v2423
  %v5563 = vunpack.c.h.b16 %v2423
  %v5564 = vunpack.c.l.b16 %v2424
  %v5565 = vunpack.c.h.b16 %v2424
  %v5566 = vunpack.c.l.b16 %v2425
  %v5567 = vunpack.c.h.b16 %v2425
  %v5568 = vunpack.c.l.b16 %v2426
  %v5569 = vunpack.c.h.b16 %v2426
  %v5570 = vunpack.c.l.b16 %v2427
  %v5571 = vunpack.c.h.b16 %v2427
  %v5572 = vunpack.c.l.b16 %v2428
  %v5573 = vunpack.c.h.b16 %v2428
  %v5574 = vunpack.c.l.b16 %v2429
  %v5575 = vunpack.c.h.b16 %v2429
  %v5576 = vunpack.c.l.b16 %v2430
  %v5577 = vunpack.c.h.b16 %v2430
  %v5578 = vunpack.c.l.b16 %v2431
  %v5579 = vunpack.c.h.b16 %v2431
  %v5580 = vunpack.c.l.b16 %v2432
  %v5581 = vunpack.c.h.b16 %v2432
  %v5582 = vunpack.c.l.b16 %v2433
  %v5583 = vunpack.c.h.b16 %v2433
  %v5584 = vunpack.c.l.b16 %v2434
  %v5585 = vunpack.c.h.b16 %v2434
  %v5586 = vunpack.c.l.b16 %v2435
  %v5587 = vunpack.c.h.b16 %v2435
  %v5588 = vunpack.c.l.b16 %v2436
  %v5589 = vunpack.c.h.b16 %v2436
  %v5590 = vunpack.c.l.b16 %v2437
  %v5591 = vunpack.c.h.b16 %v2437
  %v5592 = vunpack.c.l.b16 %v2438
  %v5593 = vunpack.c.h.b16 %v2438
  %v5594 = vunpack.c.l.b16 %v2439
  %v5595 = vunpack.c.h.b16 %v2439
  %v5596 = vunpack.c.l.b16 %v2440
  %v5597 = vunpack.c.h.b16 %v2440
  %v5598 = vunpack.c.l.b16 %v2441
  %v5599 = vunpack.c.h.b16 %v2441
  %v5600 = vunpack.c.l.b16 %v2442
  %v5601 = vunpack.c.h.b16 %v2442
  %v5602 = vunpack.c.l.b16 %v2443
  %v5603 = vunpack.c.h.b16 %v2443
  %v5604 = vunpack.c.l.b16 %v2444
  %v5605 = vunpack.c.h.b16 %v2444
  %v5606 = vunpack.c.l.b16 %v2445
  %v5607 = vunpack.c.h.b16 %v2445
  %v5608 = vunpack.c.l.b16 %v2446
  %v5609 = vunpack.c.h.b16 %v2446
  %v5610 = vunpack.c.l.b16 %v2447
  %v5611 = vunpack.c.h.b16 %v2447
  %v5612 = vunpack.c.l.b16 %v2448
  %v5613 = vunpack.c.h.b16 %v2448
  %v5614 = vunpack.c.l.b16 %v2449
  %v5615 = vunpack.c.h.b16 %v2449
  %v5616 = vunpack.c.l.b16 %v2450
  %v5617 = vunpack.c.h.b16 %v2450
  %v5618 = vunpack.c.l.b16 %v2451
  %v5619 = vunpack.c.h.b16 %v2451
  %v5620 = vunpack.c.l.b16 %v2452
  %v5621 = vunpack.c.h.b16 %v2452
  %v5622 = vunpack.c.l.b16 %v2453
  %v5623 = vunpack.c.h.b16 %v2453
  %v5624 = vunpack.c.l.b16 %v2454
  %v5625 = vunpack.c.h.b16 %v2454
  %v5626 = vunpack.c.l.b16 %v2455
  %v5627 = vunpack.c.h.b16 %v2455
  %v5628 = vunpack.c.l.b16 %v2456
  %v5629 = vunpack.c.h.b16 %v2456
  %v5630 = vunpack.c.l.b16 %v2457
  %v5631 = vunpack.c.h.b16 %v2457
  %v5632 = vunpack.c.l.b16 %v2458
  %v5633 = vunpack.c.h.b16 %v2458
  %v5634 = vunpack.c.l.b16 %v2459
  %v5635 = vunpack.c.h.b16 %v2459
  %v5636 = vunpack.c.l.b16 %v2460
  %v5637 = vunpack.c.h.b16 %v2460
  %v5638 = vunpack.c.l.b16 %v2461
  %v5639 = vunpack.c.h.b16 %v2461
  %v5640 = vunpack.c.l.b16 %v2462
  %v5641 = vunpack.c.h.b16 %v2462
  %v5642 = vunpack.c.l.b16 %v2463
  %v5643 = vunpack.c.h.b16 %v2463
  %v5644 = vunpack.c.l.b16 %v2464
  %v5645 = vunpack.c.h.b16 %v2464
  %v5646 = vunpack.c.l.b16 %v2465
  %v5647 = vunpack.c.h.b16 %v2465
  %v5648 = vunpack.c.l.b16 %v2466
  %v5649 = vunpack.c.h.b16 %v2466
  %v5650 = vunpack.c.l.b16 %v2467
  %v5651 = vunpack.c.h.b16 %v2467
  %v5652 = vunpack.c.l.b16 %v2468
  %v5653 = vunpack.c.h.b16 %v2468
  %v5654 = vunpack.c.l.b16 %v2469
  %v5655 = vunpack.c.h.b16 %v2469
  %v5656 = vunpack.c.l.b16 %v2470
  %v5657 = vunpack.c.h.b16 %v2470
  %v5658 = vunpack.c.l.b16 %v2471
  %v5659 = vunpack.c.h.b16 %v2471
  %v5660 = vunpack.c.l.b16 %v2472
  %v5661 = vunpack.c.h.b16 %v2472
  %v5662 = vunpack.c.l.b16 %v2473
  %v5663 = vunpack.c.h.b16 %v2473
  %v5664 = vunpack.c.l.b16 %v2474
  %v5665 = vunpack.c.h.b16 %v2474
  %v5666 = vunpack.c.l.b16 %v2475
  %v5667 = vunpack.c.h.b16 %v2475
  %v5668 = vunpack.c.l.b16 %v2476
  %v5669 = vunpack.c.h.b16 %v2476
  %v5670 = vunpack.c.l.b16 %v2477
  %v5671 = vunpack.c.h.b16 %v2477
  %v5672 = vunpack.c.l.b16 %v2478
  %v5673 = vunpack.c.h.b16 %v2478
  %v5674 = vunpack.c.l.b16 %v2479
  %v5675 = vunpack.c.h.b16 %v2479
  %v5676 = vunpack.c.l.b16 %v2480
  %v5677 = vunpack.c.h.b16 %v2480
  %v5678 = vunpack.c.l.b16 %v2481
  %v5679 = vunpack.c.h.b16 %v2481
  %v5680 = vunpack.c.l.b16 %v2482
  %v5681 = vunpack.c.h.b16 %v2482
  %v5682 = vunpack.c.l.b16 %v2483
  %v5683 = vunpack.c.h.b16 %v2483
  %v5684 = vunpack.c.l.b16 %v2484
  %v5685 = vunpack.c.h.b16 %v2484
  %v5686 = vunpack.c.l.b16 %v2485
  %v5687 = vunpack.c.h.b16 %v2485
  %v5688 = vunpack.c.l.b16 %v2486
  %v5689 = vunpack.c.h.b16 %v2486
  %v5690 = vunpack.c.l.b16 %v2487
  %v5691 = vunpack.c.h.b16 %v2487
  %v5692 = vunpack.c.l.b16 %v2488
  %v5693 = vunpack.c.h.b16 %v2488
  %v5694 = vunpack.c.l.b16 %v2489
  %v5695 = vunpack.c.h.b16 %v2489
  %v5696 = vunpack.c.l.b16 %v2490
  %v5697 = vunpack.c.h.b16 %v2490
  %v5698 = vunpack.c.l.b16 %v2491
  %v5699 = vunpack.c.h.b16 %v2491
  %v5700 = vunpack.c.l.b16 %v2492
  %v5701 = vunpack.c.h.b16 %v2492
  %v5702 = vunpack.c.l.b16 %v2493
  %v5703 = vunpack.c.h.b16 %v2493
  %v5704 = vunpack.c.l.b16 %v2494
  %v5705 = vunpack.c.h.b16 %v2494
  %v5706 = vunpack.c.l.b16 %v2495
  %v5707 = vunpack.c.h.b16 %v2495
  %v5708 = vunpack.c.l.b16 %v2496
  %v5709 = vunpack.c.h.b16 %v2496
  %v5710 = vunpack.c.l.b16 %v2497
  %v5711 = vunpack.c.h.b16 %v2497
  %v5712 = vunpack.c.l.b16 %v2498
  %v5713 = vunpack.c.h.b16 %v2498
  %v5714 = vunpack.c.l.b16 %v2499
  %v5715 = vunpack.c.h.b16 %v2499
  %v5716 = vunpack.c.l.b16 %v2500
  %v5717 = vunpack.c.h.b16 %v2500
  %v5718 = vunpack.c.l.b16 %v2501
  %v5719 = vunpack.c.h.b16 %v2501
  %v5720 = vunpack.c.l.b16 %v2502
  %v5721 = vunpack.c.h.b16 %v2502
  %v5722 = vunpack.c.l.b16 %v2503
  %v5723 = vunpack.c.h.b16 %v2503
  %v5724 = vunpack.c.l.b16 %v2504
  %v5725 = vunpack.c.h.b16 %v2504
  %v5726 = vunpack.c.l.b16 %v2505
  %v5727 = vunpack.c.h.b16 %v2505
  %v5728 = vunpack.c.l.b16 %v2506
  %v5729 = vunpack.c.h.b16 %v2506
  %v5730 = vunpack.c.l.b16 %v2507
  %v5731 = vunpack.c.h.b16 %v2507
  %v5732 = vunpack.c.l.b16 %v2508
  %v5733 = vunpack.c.h.b16 %v2508
  %v5734 = vunpack.c.l.b16 %v2509
  %v5735 = vunpack.c.h.b16 %v2509
  %v5736 = vunpack.c.l.b16 %v2510
  %v5737 = vunpack.c.h.b16 %v2510
  %v5738 = vunpack.c.l.b16 %v2511
  %v5739 = vunpack.c.h.b16 %v2511
  %v5740 = vunpack.c.l.b16 %v2512
  %v5741 = vunpack.c.h.b16 %v2512
  %v5742 = vunpack.c.l.b16 %v2513
  %v5743 = vunpack.c.h.b16 %v2513
  %v5744 = vunpack.c.l.b16 %v2514
  %v5745 = vunpack.c.h.b16 %v2514
  %v5746 = vunpack.c.l.b16 %v2515
  %v5747 = vunpack.c.h.b16 %v2515
  %v5748 = vunpack.c.l.b16 %v2516
  %v5749 = vunpack.c.h.b16 %v2516
  %v5750 = vunpack.c.l.b16 %v2517
  %v5751 = vunpack.c.h.b16 %v2517
  %v5752 = vunpack.c.l.b16 %v2518
  %v5753 = vunpack.c.h.b16 %v2518
  %v5754 = vunpack.c.l.b16 %v2519
  %v5755 = vunpack.c.h.b16 %v2519
  %v5756 = vunpack.c.l.b16 %v2520
  %v5757 = vunpack.c.h.b16 %v2520
  %v5758 = vunpack.c.l.b16 %v2521
  %v5759 = vunpack.c.h.b16 %v2521
  %v5760 = vunpack.c.l.b16 %v2522
  %v5761 = vunpack.c.h.b16 %v2522
  %v5762 = vunpack.c.l.b16 %v2523
  %v5763 = vunpack.c.h.b16 %v2523
  %v5764 = vpack.c.b16 %v3748, %v3716
  %v5765 = vpack.c.b16 %v3749, %v3717
  %v5766 = vpack.c.b16 %v3750, %v3718
  %v5767 = vpack.c.b16 %v3751, %v3719
  %v5768 = vpack.c.b16 %v3752, %v3720
  %v5769 = vpack.c.b16 %v3753, %v3721
  %v5770 = vpack.c.b16 %v3754, %v3722
  %v5771 = vpack.c.b16 %v3755, %v3723
  %v5772 = vpack.c.b16 %v3756, %v3724
  %v5773 = vpack.c.b16 %v3757, %v3725
  %v5774 = vpack.c.b16 %v3758, %v3726
  %v5775 = vpack.c.b16 %v3759, %v3727
  %v5776 = vpack.c.b16 %v3760, %v3728
  %v5777 = vpack.c.b16 %v3761, %v3729
  %v5778 = vpack.c.b16 %v3762, %v3730
  %v5779 = vpack.c.b16 %v3763, %v3731
  %v5780 = vpack.c.b16 %v3764, %v3732
  %v5781 = vpack.c.b16 %v3765, %v3733
  %v5782 = vpack.c.b16 %v3766, %v3734
  %v5783 = vpack.c.b16 %v3767, %v3735
  %v5784 = vpack.c.b16 %v3768, %v3736
  %v5785 = vpack.c.b16 %v3769, %v3737
  %v5786 = vpack.c.b16 %v3770, %v3738
  %v5787 = vpack.c.b16 %v3771, %v3739
  %v5788 = vpack.c.b16 %v3772, %v3740
  %v5789 = vpack.c.b16 %v3773, %v3741
  %v5790 = vpack.c.b16 %v3774, %v3742
  %v5791 = vpack.c.b16 %v3775, %v3743
  %v5792 = vpack.c.b16 %v3776, %v3744
  %v5793 = vpack.c.b16 %v3777, %v3745
  %v5794 = vpack.c.b16 %v3778, %v3746
  %v5795 = vpack.c.b16 %v3779, %v3747
  %v5796 = vpack.c.b16 %v3812, %v3780
  %v5797 = vpack.c.b16 %v3813, %v3781
  %v5798 = vpack.c.b16 %v3814, %v3782
  %v5799 = vpack.c.b16 %v3815, %v3783
  %v5800 = vpack.c.b16 %v3816, %v3784
  %v5801 = vpack.c.b16 %v3817, %v3785
  %v5802 = vpack.c.b16 %v3818, %v3786
  %v5803 = vpack.c.b16 %v3819, %v3787
  %v5804 = vpack.c.b16 %v3820, %v3788
  %v5805 = vpack.c.b16 %v3821, %v3789
  %v5806 = vpack.c.b16 %v3822, %v3790
  %v5807 = vpack.c.b16 %v3823, %v3791
  %v5808 = vpack.c.b16 %v3824, %v3792
  %v5809 = vpack.c.b16 %v3825, %v3793
  %v5810 = vpack.c.b16 %v3826, %v3794
  %v5811 = vpack.c.b16 %v3827, %v3795
  %v5812 = vpack.c.b16 %v3828, %v3796
  %v5813 = vpack.c.b16 %v3829, %v3797
  %v5814 = vpack.c.b16 %v3830, %v3798
  %v5815 = vpack.c.b16 %v3831, %v3799
  %v5816 = vpack.c.b16 %v3832, %v3800
  %v5817 = vpack.c.b16 %v3833, %v3801
  %v5818 = vpack.c.b16 %v3834, %v3802
  %v5819 = vpack.c.b16 %v3835, %v3803
  %v5820 = vpack.c.b16 %v3836, %v3804
  %v5821 = vpack.c.b16 %v3837, %v3805
  %v5822 = vpack.c.b16 %v3838, %v3806
  %v5823 = vpack.c.b16 %v3839, %v3807
  %v5824 = vpack.c.b16 %v3840, %v3808
  %v5825 = vpack.c.b16 %v3841, %v3809
  %v5826 = vpack.c.b16 %v3842, %v3810
  %v5827 = vpack.c.b16 %v3843, %v3811
  %v5828 = vpack.c.b16 %v3876, %v3844
  %v5829 = vpack.c.b16 %v3877, %v3845
  %v5830 = vpack.c.b16 %v3878, %v3846
  %v5831 = vpack.c.b16 %v3879, %v3847
  %v5832 = vpack.c.b16 %v3880, %v3848
  %v5833 = vpack.c.b16 %v3881, %v3849
  %v5834 = vpack.c.b16 %v3882, %v3850
  %v5835 = vpack.c.b16 %v3883, %v3851
  %v5836 = vpack.c.b16 %v3884, %v3852
  %v5837 = vpack.c.b16 %v3885, %v3853
  %v5838 = vpack.c.b16 %v3886, %v3854
  %v5839 = vpack.c.b16 %v3887, %v3855
  %v5840 = vpack.c.b16 %v3888, %v3856
  %v5841 = vpack.c.b16 %v3889, %v3857
  %v5842 = vpack.c.b16 %v3890, %v3858
  %v5843 = vpack.c.b16 %v3891, %v3859
  %v5844 = vpack.c.b16 %v3892, %v3860
  %v5845 = vpack.c.b16 %v3893, %v3861
  %v5846 = vpack.c.b16 %v3894, %v3862
  %v5847 = vpack.c.b16 %v3895, %v3863
  %v5848 = vpack.c.b16 %v3896, %v3864
  %v5849 = vpack.c.b16 %v3897, %v3865
  %v5850 = vpack.c.b16 %v3898, %v3866
  %v5851 = vpack.c.b16 %v3899, %v3867
  %v5852 = vpack.c.b16 %v3900, %v3868
  %v5853 = vpack.c.b16 %v3901, %v3869
  %v5854 = vpack.c.b16 %v3902, %v3870
  %v5855 = vpack.c.b16 %v3903, %v3871
  %v5856 = vpack.c.b16 %v3904, %v3872
  %v5857 = vpack.c.b16 %v3905, %v3873
  %v5858 = vpack.c.b16 %v3906, %v3874
  %v5859 = vpack.c.b16 %v3907, %v3875
  %v5860 = vpack.c.b16 %v3940, %v3908
  %v5861 = vpack.c.b16 %v3941, %v3909
  %v5862 = vpack.c.b16 %v3942, %v3910
  %v5863 = vpack.c.b16 %v3943, %v3911
  %v5864 = vpack.c.b16 %v3944, %v3912
  %v5865 = vpack.c.b16 %v3945, %v3913
  %v5866 = vpack.c.b16 %v3946, %v3914
  %v5867 = vpack.c.b16 %v3947, %v3915
  %v5868 = vpack.c.b16 %v3948, %v3916
  %v5869 = vpack.c.b16 %v3949, %v3917
  %v5870 = vpack.c.b16 %v3950, %v3918
  %v5871 = vpack.c.b16 %v3951, %v3919
  %v5872 = vpack.c.b16 %v3952, %v3920
  %v5873 = vpack.c.b16 %v3953, %v3921
  %v5874 = vpack.c.b16 %v3954, %v3922
  %v5875 = vpack.c.b16 %v3955, %v3923
  %v5876 = vpack.c.b16 %v3956, %v3924
  %v5877 = vpack.c.b16 %v3957, %v3925
  %v5878 = vpack.c.b16 %v3958, %v3926
  %v5879 = vpack.c.b16 %v3959, %v3927
  %v5880 = vpack.c.b16 %v3960, %v3928
  %v5881 = vpack.c.b16 %v3961, %v3929
  %v5882 = vpack.c.b16 %v3962, %v3930
  %v5883 = vpack.c.b16 %v3963, %v3931
  %v5884 = vpack.c.b16 %v3964, %v3932
  %v5885 = vpack.c.b16 %v3965, %v3933
  %v5886 = vpack.c.b16 %v3966, %v3934
  %v5887 = vpack.c.b16 %v3967, %v3935
  %v5888 = vpack.c.b16 %v3968, %v3936
  %v5889 = vpack.c.b16 %v3969, %v3937
  %v5890 = vpack.c.b16 %v3970, %v3938
  %v5891 = vpack.c.b16 %v3971, %v3939
  %v5892 = vpack.c.b16 %v4004, %v3972
  %v5893 = vpack.c.b16 %v4005, %v3973
  %v5894 = vpack.c.b16 %v4006, %v3974
  %v5895 = vpack.c.b16 %v4007, %v3975
  %v5896 = vpack.c.b16 %v4008, %v3976
  %v5897 = vpack.c.b16 %v4009, %v3977
  %v5898 = vpack.c.b16 %v4010, %v3978
  %v5899 = vpack.c.b16 %v4011, %v3979
  %v5900 = vpack.c.b16 %v4012, %v3980
  %v5901 = vpack.c.b16 %v4013, %v3981
  %v5902 = vpack.c.b16 %v4014, %v3982
  %v5903 = vpack.c.b16 %v4015, %v3983
  %v5904 = vpack.c.b16 %v4016, %v3984
  %v5905 = vpack.c.b16 %v4017, %v3985
  %v5906 = vpack.c.b16 %v4018, %v3986
  %v5907 = vpack.c.b16 %v4019, %v3987
  %v5908 = vpack.c.b16 %v4020, %v3988
  %v5909 = vpack.c.b16 %v4021, %v3989
  %v5910 = vpack.c.b16 %v4022, %v3990
  %v5911 = vpack.c.b16 %v4023, %v3991
  %v5912 = vpack.c.b16 %v4024, %v3992
  %v5913 = vpack.c.b16 %v4025, %v3993
  %v5914 = vpack.c.b16 %v4026, %v3994
  %v5915 = vpack.c.b16 %v4027, %v3995
  %v5916 = vpack.c.b16 %v4028, %v3996
  %v5917 = vpack.c.b16 %v4029, %v3997
  %v5918 = vpack.c.b16 %v4030, %v3998
  %v5919 = vpack.c.b16 %v4031, %v3999
  %v5920 = vpack.c.b16 %v4032, %v4000
  %v5921 = vpack.c.b16 %v4033, %v4001
  %v5922 = vpack.c.b16 %v4034, %v4002
  %v5923 = vpack.c.b16 %v4035, %v4003
  %v5924 = vpack.c.b16 %v4068, %v4036
  %v5925 = vpack.c.b16 %v4069, %v4037
  %v5926 = vpack.c.b16 %v4070, %v4038
  %v5927 = vpack.c.b16 %v4071, %v4039
  %v5928 = vpack.c.b16 %v4072, %v4040
  %v5929 = vpack.c.b16 %v4073, %v4041
  %v5930 = vpack.c.b16 %v4074, %v4042
  %v5931 = vpack.c.b16 %v4075, %v4043
  %v5932 = vpack.c.b16 %v4076, %v4044
  %v5933 = vpack.c.b16 %v4077, %v4045
  %v5934 = vpack.c.b16 %v4078, %v4046
  %v5935 = vpack.c.b16 %v4079, %v4047
  %v5936 = vpack.c.b16 %v4080, %v4048
  %v5937 = vpack.c.b16 %v4081, %v4049
  %v5938 = vpack.c.b16 %v4082, %v4050
  %v5939 = vpack.c.b16 %v4083, %v4051
  %v5940 = vpack.c.b16 %v4084, %v4052
  %v5941 = vpack.c.b16 %v4085, %v4053
  %v5942 = vpack.c.b16 %v4086, %v4054
  %v5943 = vpack.c.b16 %v4087, %v4055
  %v5944 = vpack.c.b16 %v4088, %v4056
  %v5945 = vpack.c.b16 %v4089, %v4057
  %v5946 = vpack.c.b16 %v4090, %v4058
  %v5947 = vpack.c.b16 %v4091, %v4059
  %v5948 = vpack.c.b16 %v4092, %v4060
  %v5949 = vpack.c.b16 %v4093, %v4061
  %v5950 = vpack.c.b16 %v4094, %v4062
  %v5951 = vpack.c.b16 %v4095, %v4063
  %v5952 = vpack.c.b16 %v4096, %v4064
  %v5953 = vpack.c.b16 %v4097, %v4065
  %v5954 = vpack.c.b16 %v4098, %v4066
  %v5955 = vpack.c.b16 %v4099, %v4067
  %v5956 = vpack.c.b16 %v4132, %v4100
  %v5957 = vpack.c.b16 %v4133, %v4101
  %v5958 = vpack.c.b16 %v4134, %v4102
  %v5959 = vpack.c.b16 %v4135, %v4103
  %v5960 = vpack.c.b16 %v4136, %v4104
  %v5961 = vpack.c.b16 %v4137, %v4105
  %v5962 = vpack.c.b16 %v4138, %v4106
  %v5963 = vpack.c.b16 %v4139, %v4107
  %v5964 = vpack.c.b16 %v4140, %v4108
  %v5965 = vpack.c.b16 %v4141, %v4109
  %v5966 = vpack.c.b16 %v4142, %v4110
  %v5967 = vpack.c.b16 %v4143, %v4111
  %v5968 = vpack.c.b16 %v4144, %v4112
  %v5969 = vpack.c.b16 %v4145, %v4113
  %v5970 = vpack.c.b16 %v4146, %v4114
  %v5971 = vpack.c.b16 %v4147, %v4115
  %v5972 = vpack.c.b16 %v4148, %v4116
  %v5973 = vpack.c.b16 %v4149, %v4117
  %v5974 = vpack.c.b16 %v4150, %v4118
  %v5975 = vpack.c.b16 %v4151, %v4119
  %v5976 = vpack.c.b16 %v4152, %v4120
  %v5977 = vpack.c.b16 %v4153, %v4121
  %v5978 = vpack.c.b16 %v4154, %v4122
  %v5979 = vpack.c.b16 %v4155, %v4123
  %v5980 = vpack.c.b16 %v4156, %v4124
  %v5981 = vpack.c.b16 %v4157, %v4125
  %v5982 = vpack.c.b16 %v4158, %v4126
  %v5983 = vpack.c.b16 %v4159, %v4127
  %v5984 = vpack.c.b16 %v4160, %v4128
  %v5985 = vpack.c.b16 %v4161, %v4129
  %v5986 = vpack.c.b16 %v4162, %v4130
  %v5987 = vpack.c.b16 %v4163, %v4131
  %v5988 = vpack.c.b16 %v4196, %v4164
  %v5989 = vpack.c.b16 %v4197, %v4165
  %v5990 = vpack.c.b16 %v4198, %v4166
  %v5991 = vpack.c.b16 %v4199, %v4167
  %v5992 = vpack.c.b16 %v4200, %v4168
  %v5993 = vpack.c.b16 %v4201, %v4169
  %v5994 = vpack.c.b16 %v4202, %v4170
  %v5995 = vpack.c.b16 %v4203, %v4171
  %v5996 = vpack.c.b16 %v4204, %v4172
  %v5997 = vpack.c.b16 %v4205, %v4173
  %v5998 = vpack.c.b16 %v4206, %v4174
  %v5999 = vpack.c.b16 %v4207, %v4175
  %v6000 = vpack.c.b16 %v4208, %v4176
  %v6001 = vpack.c.b16 %v4209, %v4177
  %v6002 = vpack.c.b16 %v4210, %v4178
  %v6003 = vpack.c.b16 %v4211, %v4179
  %v6004 = vpack.c.b16 %v4212, %v4180
  %v6005 = vpack.c.b16 %v4213, %v4181
  %v6006 = vpack.c.b16 %v4214, %v4182
  %v6007 = vpack.c.b16 %v4215, %v4183
  %v6008 = vpack.c.b16 %v4216, %v4184
  %v6009 = vpack.c.b16 %v4217, %v4185
  %v6010 = vpack.c.b16 %v4218, %v4186
  %v6011 = vpack.c.b16 %v4219, %v4187
  %v6012 = vpack.c.b16 %v4220, %v4188
  %v6013 = vpack.c.b16 %v4221, %v4189
  %v6014 = vpack.c.b16 %v4222, %v4190
  %v6015 = vpack.c.b16 %v4223, %v4191
  %v6016 = vpack.c.b16 %v4224, %v4192
  %v6017 = vpack.c.b16 %v4225, %v4193
  %v6018 = vpack.c.b16 %v4226, %v4194
  %v6019 = vpack.c.b16 %v4227, %v4195
  %v6020 = vpack.c.b16 %v4260, %v4228
  %v6021 = vpack.c.b16 %v4261, %v4229
  %v6022 = vpack.c.b16 %v4262, %v4230
  %v6023 = vpack.c.b16 %v4263, %v4231
  %v6024 = vpack.c.b16 %v4264, %v4232
  %v6025 = vpack.c.b16 %v4265, %v4233
  %v6026 = vpack.c.b16 %v4266, %v4234
  %v6027 = vpack.c.b16 %v4267, %v4235
  %v6028 = vpack.c.b16 %v4268, %v4236
  %v6029 = vpack.c.b16 %v4269, %v4237
  %v6030 = vpack.c.b16 %v4270, %v4238
  %v6031 = vpack.c.b16 %v4271, %v4239
  %v6032 = vpack.c.b16 %v4272, %v4240
  %v6033 = vpack.c.b16 %v4273, %v4241
  %v6034 = vpack.c.b16 %v4274, %v4242
  %v6035 = vpack.c.b16 %v4275, %v4243
  %v6036 = vpack.c.b16 %v4276, %v4244
  %v6037 = vpack.c.b16 %v4277, %v4245
  %v6038 = vpack.c.b16 %v4278, %v4246
  %v6039 = vpack.c.b16 %v4279, %v4247
  %v6040 = vpack.c.b16 %v4280, %v4248
  %v6041 = vpack.c.b16 %v4281, %v4249
  %v6042 = vpack.c.b16 %v4282, %v4250
  %v6043 = vpack.c.b16 %v4283, %v4251
  %v6044 = vpack.c.b16 %v4284, %v4252
  %v6045 = vpack.c.b16 %v4285, %v4253
  %v6046 = vpack.c.b16 %v4286, %v4254
  %v6047 = vpack.c.b16 %v4287, %v4255
  %v6048 = vpack.c.b16 %v4288, %v4256
  %v6049 = vpack.c.b16 %v4289, %v4257
  %v6050 = vpack.c.b16 %v4290, %v4258
  %v6051 = vpack.c.b16 %v4291, %v4259
  %v6052 = vpack.c.b16 %v4324, %v4292
  %v6053 = vpack.c.b16 %v4325, %v4293
  %v6054 = vpack.c.b16 %v4326, %v4294
  %v6055 = vpack.c.b16 %v4327, %v4295
  %v6056 = vpack.c.b16 %v4328, %v4296
  %v6057 = vpack.c.b16 %v4329, %v4297
  %v6058 = vpack.c.b16 %v4330, %v4298
  %v6059 = vpack.c.b16 %v4331, %v4299
  %v6060 = vpack.c.b16 %v4332, %v4300
  %v6061 = vpack.c.b16 %v4333, %v4301
  %v6062 = vpack.c.b16 %v4334, %v4302
  %v6063 = vpack.c.b16 %v4335, %v4303
  %v6064 = vpack.c.b16 %v4336, %v4304
  %v6065 = vpack.c.b16 %v4337, %v4305
  %v6066 = vpack.c.b16 %v4338, %v4306
  %v6067 = vpack.c.b16 %v4339, %v4307
  %v6068 = vpack.c.b16 %v4340, %v4308
  %v6069 = vpack.c.b16 %v4341, %v4309
  %v6070 = vpack.c.b16 %v4342, %v4310
  %v6071 = vpack.c.b16 %v4343, %v4311
  %v6072 = vpack.c.b16 %v4344, %v4312
  %v6073 = vpack.c.b16 %v4345, %v4313
  %v6074 = vpack.c.b16 %v4346, %v4314
  %v6075 = vpack.c.b16 %v4347, %v4315
  %v6076 = vpack.c.b16 %v4348, %v4316
  %v6077 = vpack.c.b16 %v4349, %v4317
  %v6078 = vpack.c.b16 %v4350, %v4318
  %v6079 = vpack.c.b16 %v4351, %v4319
  %v6080 = vpack.c.b16 %v4352, %v4320
  %v6081 = vpack.c.b16 %v4353, %v4321
  %v6082 = vpack.c.b16 %v4354, %v4322
  %v6083 = vpack.c.b16 %v4355, %v4323
  %v6084 = vpack.c.b16 %v4388, %v4356
  %v6085 = vpack.c.b16 %v4389, %v4357
  %v6086 = vpack.c.b16 %v4390, %v4358
  %v6087 = vpack.c.b16 %v4391, %v4359
  %v6088 = vpack.c.b16 %v4392, %v4360
  %v6089 = vpack.c.b16 %v4393, %v4361
  %v6090 = vpack.c.b16 %v4394, %v4362
  %v6091 = vpack.c.b16 %v4395, %v4363
  %v6092 = vpack.c.b16 %v4396, %v4364
  %v6093 = vpack.c.b16 %v4397, %v4365
  %v6094 = vpack.c.b16 %v4398, %v4366
  %v6095 = vpack.c.b16 %v4399, %v4367
  %v6096 = vpack.c.b16 %v4400, %v4368
  %v6097 = vpack.c.b16 %v4401, %v4369
  %v6098 = vpack.c.b16 %v4402, %v4370
  %v6099 = vpack.c.b16 %v4403, %v4371
  %v6100 = vpack.c.b16 %v4404, %v4372
  %v6101 = vpack.c.b16 %v4405, %v4373
  %v6102 = vpack.c.b16 %v4406, %v4374
  %v6103 = vpack.c.b16 %v4407, %v4375
  %v6104 = vpack.c.b16 %v4408, %v4376
  %v6105 = vpack.c.b16 %v4409, %v4377
  %v6106 = vpack.c.b16 %v4410, %v4378
  %v6107 = vpack.c.b16 %v4411, %v4379
  %v6108 = vpack.c.b16 %v4412, %v4380
  %v6109 = vpack.c.b16 %v4413, %v4381
  %v6110 = vpack.c.b16 %v4414, %v4382
  %v6111 = vpack.c.b16 %v4415, %v4383
  %v6112 = vpack.c.b16 %v4416, %v4384
  %v6113 = vpack.c.b16 %v4417, %v4385
  %v6114 = vpack.c.b16 %v4418, %v4386
  %v6115 = vpack.c.b16 %v4419, %v4387
  %v6116 = vpack.c.b16 %v4452, %v4420
  %v6117 = vpack.c.b16 %v4453, %v4421
  %v6118 = vpack.c.b16 %v4454, %v4422
  %v6119 = vpack.c.b16 %v4455, %v4423
  %v6120 = vpack.c.b16 %v4456, %v4424
  %v6121 = vpack.c.b16 %v4457, %v4425
  %v6122 = vpack.c.b16 %v4458, %v4426
  %v6123 = vpack.c.b16 %v4459, %v4427
  %v6124 = vpack.c.b16 %v4460, %v4428
  %v6125 = vpack.c.b16 %v4461, %v4429
  %v6126 = vpack.c.b16 %v4462, %v4430
  %v6127 = vpack.c.b16 %v4463, %v4431
  %v6128 = vpack.c.b16 %v4464, %v4432
  %v6129 = vpack.c.b16 %v4465, %v4433
  %v6130 = vpack.c.b16 %v4466, %v4434
  %v6131 = vpack.c.b16 %v4467, %v4435
  %v6132 = vpack.c.b16 %v4468, %v4436
  %v6133 = vpack.c.b16 %v4469, %v4437
  %v6134 = vpack.c.b16 %v4470, %v4438
  %v6135 = vpack.c.b16 %v4471, %v4439
  %v6136 = vpack.c.b16 %v4472, %v4440
  %v6137 = vpack.c.b16 %v4473, %v4441
  %v6138 = vpack.c.b16 %v4474, %v4442
  %v6139 = vpack.c.b16 %v4475, %v4443
  %v6140 = vpack.c.b16 %v4476, %v4444
  %v6141 = vpack.c.b16 %v4477, %v4445
  %v6142 = vpack.c.b16 %v4478, %v4446
  %v6143 = vpack.c.b16 %v4479, %v4447
  %v6144 = vpack.c.b16 %v4480, %v4448
  %v6145 = vpack.c.b16 %v4481, %v4449
  %v6146 = vpack.c.b16 %v4482, %v4450
  %v6147 = vpack.c.b16 %v4483, %v4451
  %v6148 = vpack.c.b16 %v4516, %v4484
  %v6149 = vpack.c.b16 %v4517, %v4485
  %v6150 = vpack.c.b16 %v4518, %v4486
  %v6151 = vpack.c.b16 %v4519, %v4487
  %v6152 = vpack.c.b16 %v4520, %v4488
  %v6153 = vpack.c.b16 %v4521, %v4489
  %v6154 = vpack.c.b16 %v4522, %v4490
  %v6155 = vpack.c.b16 %v4523, %v4491
  %v6156 = vpack.c.b16 %v4524, %v4492
  %v6157 = vpack.c.b16 %v4525, %v4493
  %v6158 = vpack.c.b16 %v4526, %v4494
  %v6159 = vpack.c.b16 %v4527, %v4495
  %v6160 = vpack.c.b16 %v4528, %v4496
  %v6161 = vpack.c.b16 %v4529, %v4497
  %v6162 = vpack.c.b16 %v4530, %v4498
  %v6163 = vpack.c.b16 %v4531, %v4499
  %v6164 = vpack.c.b16 %v4532, %v4500
  %v6165 = vpack.c.b16 %v4533, %v4501
  %v6166 = vpack.c.b16 %v4534, %v4502
  %v6167 = vpack.c.b16 %v4535, %v4503
  %v6168 = vpack.c.b16 %v4536, %v4504
  %v6169 = vpack.c.b16 %v4537, %v4505
  %v6170 = vpack.c.b16 %v4538, %v4506
  %v6171 = vpack.c.b16 %v4539, %v4507
  %v6172 = vpack.c.b16 %v4540, %v4508
  %v6173 = vpack.c.b16 %v4541, %v4509
  %v6174 = vpack.c.b16 %v4542, %v4510
  %v6175 = vpack.c.b16 %v4543, %v4511
  %v6176 = vpack.c.b16 %v4544, %v4512
  %v6177 = vpack.c.b16 %v4545, %v4513
  %v6178 = vpack.c.b16 %v4546, %v4514
  %v6179 = vpack.c.b16 %v4547, %v4515
  %v6180 = vpack.c.b16 %v4580, %v4548
  %v6181 = vpack.c.b16 %v4581, %v4549
  %v6182 = vpack.c.b16 %v4582, %v4550
  %v6183 = vpack.c.b16 %v4583, %v4551
  %v6184 = vpack.c.b16 %v4584, %v4552
  %v6185 = vpack.c.b16 %v4585, %v4553
  %v6186 = vpack.c.b16 %v4586, %v4554
  %v6187 = vpack.c.b16 %v4587, %v4555
  %v6188 = vpack.c.b16 %v4588, %v4556
  %v6189 = vpack.c.b16 %v4589, %v4557
  %v6190 = vpack.c.b16 %v4590, %v4558
  %v6191 = vpack.c.b16 %v4591, %v4559
  %v6192 = vpack.c.b16 %v4592, %v4560
  %v6193 = vpack.c.b16 %v4593, %v4561
  %v6194 = vpack.c.b16 %v4594, %v4562
  %v6195 = vpack.c.b16 %v4595, %v4563
  %v6196 = vpack.c.b16 %v4596, %v4564
  %v6197 = vpack.c.b16 %v4597, %v4565
  %v6198 = vpack.c.b16 %v4598, %v4566
  %v6199 = vpack.c.b16 %v4599, %v4567
  %v6200 = vpack.c.b16 %v4600, %v4568
  %v6201 = vpack.c.b16 %v4601, %v4569
  %v6202 = vpack.c.b16 %v4602, %v4570
  %v6203 = vpack.c.b16 %v4603, %v4571
  %v6204 = vpack.c.b16 %v4604, %v4572
  %v6205 = vpack.c.b16 %v4605, %v4573
  %v6206 = vpack.c.b16 %v4606, %v4574
  %v6207 = vpack.c.b16 %v4607, %v4575
  %v6208 = vpack.c.b16 %v4608, %v4576
  %v6209 = vpack.c.b16 %v4609, %v4577
  %v6210 = vpack.c.b16 %v4610, %v4578
  %v6211 = vpack.c.b16 %v4611, %v4579
  %v6212 = vpack.c.b16 %v4644, %v4612
  %v6213 = vpack.c.b16 %v4645, %v4613
  %v6214 = vpack.c.b16 %v4646, %v4614
  %v6215 = vpack.c.b16 %v4647, %v4615
  %v6216 = vpack.c.b16 %v4648, %v4616
  %v6217 = vpack.c.b16 %v4649, %v4617
  %v6218 = vpack.c.b16 %v4650, %v4618
  %v6219 = vpack.c.b16 %v4651, %v4619
  %v6220 = vpack.c.b16 %v4652, %v4620
  %v6221 = vpack.c.b16 %v4653, %v4621
  %v6222 = vpack.c.b16 %v4654, %v4622
  %v6223 = vpack.c.b16 %v4655, %v4623
  %v6224 = vpack.c.b16 %v4656, %v4624
  %v6225 = vpack.c.b16 %v4657, %v4625
  %v6226 = vpack.c.b16 %v4658, %v4626
  %v6227 = vpack.c.b16 %v4659, %v4627
  %v6228 = vpack.c.b16 %v4660, %v4628
  %v6229 = vpack.c.b16 %v4661, %v4629
  %v6230 = vpack.c.b16 %v4662, %v4630
  %v6231 = vpack.c.b16 %v4663, %v4631
  %v6232 = vpack.c.b16 %v4664, %v4632
  %v6233 = vpack.c.b16 %v4665, %v4633
  %v6234 = vpack.c.b16 %v4666, %v4634
  %v6235 = vpack.c.b16 %v4667, %v4635
  %v6236 = vpack.c.b16 %v4668, %v4636
  %v6237 = vpack.c.b16 %v4669, %v4637
  %v6238 = vpack.c.b16 %v4670, %v4638
  %v6239 = vpack.c.b16 %v4671, %v4639
  %v6240 = vpack.c.b16 %v4672, %v4640
  %v6241 = vpack.c.b16 %v4673, %v4641
  %v6242 = vpack.c.b16 %v4674, %v4642
  %v6243 = vpack.c.b16 %v4675, %v4643
  %v6244 = vpack.c.b16 %v4708, %v4676
  %v6245 = vpack.c.b16 %v4709, %v4677
  %v6246 = vpack.c.b16 %v4710, %v4678
  %v6247 = vpack.c.b16 %v4711, %v4679
  %v6248 = vpack.c.b16 %v4712, %v4680
  %v6249 = vpack.c.b16 %v4713, %v4681
  %v6250 = vpack.c.b16 %v4714, %v4682
  %v6251 = vpack.c.b16 %v4715, %v4683
  %v6252 = vpack.c.b16 %v4716, %v4684
  %v6253 = vpack.c.b16 %v4717, %v4685
  %v6254 = vpack.c.b16 %v4718, %v4686
  %v6255 = vpack.c.b16 %v4719, %v4687
  %v6256 = vpack.c.b16 %v4720, %v4688
  %v6257 = vpack.c.b16 %v4721, %v4689
  %v6258 = vpack.c.b16 %v4722, %v4690
  %v6259 = vpack.c.b16 %v4723, %v4691
  %v6260 = vpack.c.b16 %v4724, %v4692
  %v6261 = vpack.c.b16 %v4725, %v4693
  %v6262 = vpack.c.b16 %v4726, %v4694
  %v6263 = vpack.c.b16 %v4727, %v4695
  %v6264 = vpack.c.b16 %v4728, %v4696
  %v6265 = vpack.c.b16 %v4729, %v4697
  %v6266 = vpack.c.b16 %v4730, %v4698
  %v6267 = vpack.c.b16 %v4731, %v4699
  %v6268 = vpack.c.b16 %v4732, %v4700
  %v6269 = vpack.c.b16 %v4733, %v4701
  %v6270 = vpack.c.b16 %v4734, %v4702
  %v6271 = vpack.c.b16 %v4735, %v4703
  %v6272 = vpack.c.b16 %v4736, %v4704
  %v6273 = vpack.c.b16 %v4737, %v4705
  %v6274 = vpack.c.b16 %v4738, %v4706
  %v6275 = vpack.c.b16 %v4739, %v4707
  %v6276 = vpack.c.b16 %v4772, %v4740
  %v6277 = vpack.c.b16 %v4773, %v4741
  %v6278 = vpack.c.b16 %v4774, %v4742
  %v6279 = vpack.c.b16 %v4775, %v4743
  %v6280 = vpack.c.b16 %v4776, %v4744
  %v6281 = vpack.c.b16 %v4777, %v4745
  %v6282 = vpack.c.b16 %v4778, %v4746
  %v6283 = vpack.c.b16 %v4779, %v4747
  %v6284 = vpack.c.b16 %v4780, %v4748
  %v6285 = vpack.c.b16 %v4781, %v4749
  %v6286 = vpack.c.b16 %v4782, %v4750
  %v6287 = vpack.c.b16 %v4783, %v4751
  %v6288 = vpack.c.b16 %v4784, %v4752
  %v6289 = vpack.c.b16 %v4785, %v4753
  %v6290 = vpack.c.b16 %v4786, %v4754
  %v6291 = vpack.c.b16 %v4787, %v4755
  %v6292 = vpack.c.b16 %v4788, %v4756
  %v6293 = vpack.c.b16 %v4789, %v4757
  %v6294 = vpack.c.b16 %v4790, %v4758
  %v6295 = vpack.c.b16 %v4791, %v4759
  %v6296 = vpack.c.b16 %v4792, %v4760
  %v6297 = vpack.c.b16 %v4793, %v4761
  %v6298 = vpack.c.b16 %v4794, %v4762
  %v6299 = vpack.c.b16 %v4795, %v4763
  %v6300 = vpack.c.b16 %v4796, %v4764
  %v6301 = vpack.c.b16 %v4797, %v4765
  %v6302 = vpack.c.b16 %v4798, %v4766
  %v6303 = vpack.c.b16 %v4799, %v4767
  %v6304 = vpack.c.b16 %v4800, %v4768
  %v6305 = vpack.c.b16 %v4801, %v4769
  %v6306 = vpack.c.b16 %v4802, %v4770
  %v6307 = vpack.c.b16 %v4803, %v4771
  %v6308 = vpack.c.b16 %v4836, %v4804
  %v6309 = vpack.c.b16 %v4837, %v4805
  %v6310 = vpack.c.b16 %v4838, %v4806
  %v6311 = vpack.c.b16 %v4839, %v4807
  %v6312 = vpack.c.b16 %v4840, %v4808
  %v6313 = vpack.c.b16 %v4841, %v4809
  %v6314 = vpack.c.b16 %v4842, %v4810
  %v6315 = vpack.c.b16 %v4843, %v4811
  %v6316 = vpack.c.b16 %v4844, %v4812
  %v6317 = vpack.c.b16 %v4845, %v4813
  %v6318 = vpack.c.b16 %v4846, %v4814
  %v6319 = vpack.c.b16 %v4847, %v4815
  %v6320 = vpack.c.b16 %v4848, %v4816
  %v6321 = vpack.c.b16 %v4849, %v4817
  %v6322 = vpack.c.b16 %v4850, %v4818
  %v6323 = vpack.c.b16 %v4851, %v4819
  %v6324 = vpack.c.b16 %v4852, %v4820
  %v6325 = vpack.c.b16 %v4853, %v4821
  %v6326 = vpack.c.b16 %v4854, %v4822
  %v6327 = vpack.c.b16 %v4855, %v4823
  %v6328 = vpack.c.b16 %v4856, %v4824
  %v6329 = vpack.c.b16 %v4857, %v4825
  %v6330 = vpack.c.b16 %v4858, %v4826
  %v6331 = vpack.c.b16 %v4859, %v4827
  %v6332 = vpack.c.b16 %v4860, %v4828
  %v6333 = vpack.c.b16 %v4861, %v4829
  %v6334 = vpack.c.b16 %v4862, %v4830
  %v6335 = vpack.c.b16 %v4863, %v4831
  %v6336 = vpack.c.b16 %v4864, %v4832
  %v6337 = vpack.c.b16 %v4865, %v4833
  %v6338 = vpack.c.b16 %v4866, %v4834
  %v6339 = vpack.c.b16 %v4867, %v4835
  %v6340 = vpack.c.b16 %v4900, %v4868
  %v6341 = vpack.c.b16 %v4901, %v4869
  %v6342 = vpack.c.b16 %v4902, %v4870
  %v6343 = vpack.c.b16 %v4903, %v4871
  %v6344 = vpack.c.b16 %v4904, %v4872
  %v6345 = vpack.c.b16 %v4905, %v4873
  %v6346 = vpack.c.b16 %v4906, %v4874
  %v6347 = vpack.c.b16 %v4907, %v4875
  %v6348 = vpack.c.b16 %v4908, %v4876
  %v6349 = vpack.c.b16 %v4909, %v4877
  %v6350 = vpack.c.b16 %v4910, %v4878
  %v6351 = vpack.c.b16 %v4911, %v4879
  %v6352 = vpack.c.b16 %v4912, %v4880
  %v6353 = vpack.c.b16 %v4913, %v4881
  %v6354 = vpack.c.b16 %v4914, %v4882
  %v6355 = vpack.c.b16 %v4915, %v4883
  %v6356 = vpack.c.b16 %v4916, %v4884
  %v6357 = vpack.c.b16 %v4917, %v4885
  %v6358 = vpack.c.b16 %v4918, %v4886
  %v6359 = vpack.c.b16 %v4919, %v4887
  %v6360 = vpack.c.b16 %v4920, %v4888
  %v6361 = vpack.c.b16 %v4921, %v4889
  %v6362 = vpack.c.b16 %v4922, %v4890
  %v6363 = vpack.c.b16 %v4923, %v4891
  %v6364 = vpack.c.b16 %v4924, %v4892
  %v6365 = vpack.c.b16 %v4925, %v4893
  %v6366 = vpack.c.b16 %v4926, %v4894
  %v6367 = vpack.c.b16 %v4927, %v4895
  %v6368 = vpack.c.b16 %v4928, %v4896
  %v6369 = vpack.c.b16 %v4929, %v4897
  %v6370 = vpack.c.b16 %v4930, %v4898
  %v6371 = vpack.c.b16 %v4931, %v4899
  %v6372 = vpack.c.b16 %v4964, %v4932
  %v6373 = vpack.c.b16 %v4965, %v4933
  %v6374 = vpack.c.b16 %v4966, %v4934
  %v6375 = vpack.c.b16 %v4967, %v4935
  %v6376 = vpack.c.b16 %v4968, %v4936
  %v6377 = vpack.c.b16 %v4969, %v4937
  %v6378 = vpack.c.b16 %v4970, %v4938
  %v6379 = vpack.c.b16 %v4971, %v4939
  %v6380 = vpack.c.b16 %v4972, %v4940
  %v6381 = vpack.c.b16 %v4973, %v4941
  %v6382 = vpack.c.b16 %v4974, %v4942
  %v6383 = vpack.c.b16 %v4975, %v4943
  %v6384 = vpack.c.b16 %v4976, %v4944
  %v6385 = vpack.c.b16 %v4977, %v4945
  %v6386 = vpack.c.b16 %v4978, %v4946
  %v6387 = vpack.c.b16 %v4979, %v4947
  %v6388 = vpack.c.b16 %v4980, %v4948
  %v6389 = vpack.c.b16 %v4981, %v4949
  %v6390 = vpack.c.b16 %v4982, %v4950
  %v6391 = vpack.c.b16 %v4983, %v4951
  %v6392 = vpack.c.b16 %v4984, %v4952
  %v6393 = vpack.c.b16 %v4985, %v4953
  %v6394 = vpack.c.b16 %v4986, %v4954
  %v6395 = vpack.c.b16 %v4987, %v4955
  %v6396 = vpack.c.b16 %v4988, %v4956
  %v6397 = vpack.c.b16 %v4989, %v4957
  %v6398 = vpack.c.b16 %v4990, %v4958
  %v6399 = vpack.c.b16 %v4991, %v4959
  %v6400 = vpack.c.b16 %v4992, %v4960
  %v6401 = vpack.c.b16 %v4993, %v4961
  %v6402 = vpack.c.b16 %v4994, %v4962
  %v6403 = vpack.c.b16 %v4995, %v4963
  %v6404 = vpack.c.b16 %v5028, %v4996
  %v6405 = vpack.c.b16 %v5029, %v4997
  %v6406 = vpack.c.b16 %v5030, %v4998
  %v6407 = vpack.c.b16 %v5031, %v4999
  %v6408 = vpack.c.b16 %v5032, %v5000
  %v6409 = vpack.c.b16 %v5033, %v5001
  %v6410 = vpack.c.b16 %v5034, %v5002
  %v6411 = vpack.c.b16 %v5035, %v5003
  %v6412 = vpack.c.b16 %v5036, %v5004
  %v6413 = vpack.c.b16 %v5037, %v5005
  %v6414 = vpack.c.b16 %v5038, %v5006
  %v6415 = vpack.c.b16 %v5039, %v5007
  %v6416 = vpack.c.b16 %v5040, %v5008
  %v6417 = vpack.c.b16 %v5041, %v5009
  %v6418 = vpack.c.b16 %v5042, %v5010
  %v6419 = vpack.c.b16 %v5043, %v5011
  %v6420 = vpack.c.b16 %v5044, %v5012
  %v6421 = vpack.c.b16 %v5045, %v5013
  %v6422 = vpack.c.b16 %v5046, %v5014
  %v6423 = vpack.c.b16 %v5047, %v5015
  %v6424 = vpack.c.b16 %v5048, %v5016
  %v6425 = vpack.c.b16 %v5049, %v5017
  %v6426 = vpack.c.b16 %v5050, %v5018
  %v6427 = vpack.c.b16 %v5051, %v5019
  %v6428 = vpack.c.b16 %v5052, %v5020
  %v6429 = vpack.c.b16 %v5053, %v5021
  %v6430 = vpack.c.b16 %v5054, %v5022
  %v6431 = vpack.c.b16 %v5055, %v5023
  %v6432 = vpack.c.b16 %v5056, %v5024
  %v6433 = vpack.c.b16 %v5057, %v5025
  %v6434 = vpack.c.b16 %v5058, %v5026
  %v6435 = vpack.c.b16 %v5059, %v5027
  %v6436 = vpack.c.b16 %v5092, %v5060
  %v6437 = vpack.c.b16 %v5093, %v5061
  %v6438 = vpack.c.b16 %v5094, %v5062
  %v6439 = vpack.c.b16 %v5095, %v5063
  %v6440 = vpack.c.b16 %v5096, %v5064
  %v6441 = vpack.c.b16 %v5097, %v5065
  %v6442 = vpack.c.b16 %v5098, %v5066
  %v6443 = vpack.c.b16 %v5099, %v5067
  %v6444 = vpack.c.b16 %v5100, %v5068
  %v6445 = vpack.c.b16 %v5101, %v5069
  %v6446 = vpack.c.b16 %v5102, %v5070
  %v6447 = vpack.c.b16 %v5103, %v5071
  %v6448 = vpack.c.b16 %v5104, %v5072
  %v6449 = vpack.c.b16 %v5105, %v5073
  %v6450 = vpack.c.b16 %v5106, %v5074
  %v6451 = vpack.c.b16 %v5107, %v5075
  %v6452 = vpack.c.b16 %v5108, %v5076
  %v6453 = vpack.c.b16 %v5109, %v5077
  %v6454 = vpack.c.b16 %v5110, %v5078
  %v6455 = vpack.c.b16 %v5111, %v5079
  %v6456 = vpack.c.b16 %v5112, %v5080
  %v6457 = vpack.c.b16 %v5113, %v5081
  %v6458 = vpack.c.b16 %v5114, %v5082
  %v6459 = vpack.c.b16 %v5115, %v5083
  %v6460 = vpack.c.b16 %v5116, %v5084
  %v6461 = vpack.c.b16 %v5117, %v5085
  %v6462 = vpack.c.b16 %v5118, %v5086
  %v6463 = vpack.c.b16 %v5119, %v5087
  %v6464 = vpack.c.b16 %v5120, %v5088
  %v6465 = vpack.c.b16 %v5121, %v5089
  %v6466 = vpack.c.b16 %v5122, %v5090
  %v6467 = vpack.c.b16 %v5123, %v5091
  %v6468 = vpack.c.b16 %v5156, %v5124
  %v6469 = vpack.c.b16 %v5157, %v5125
  %v6470 = vpack.c.b16 %v5158, %v5126
  %v6471 = vpack.c.b16 %v5159, %v5127
  %v6472 = vpack.c.b16 %v5160, %v5128
  %v6473 = vpack.c.b16 %v5161, %v5129
  %v6474 = vpack.c.b16 %v5162, %v5130
  %v6475 = vpack.c.b16 %v5163, %v5131
  %v6476 = vpack.c.b16 %v5164, %v5132
  %v6477 = vpack.c.b16 %v5165, %v5133
  %v6478 = vpack.c.b16 %v5166, %v5134
  %v6479 = vpack.c.b16 %v5167, %v5135
  %v6480 = vpack.c.b16 %v5168, %v5136
  %v6481 = vpack.c.b16 %v5169, %v5137
  %v6482 = vpack.c.b16 %v5170, %v5138
  %v6483 = vpack.c.b16 %v5171, %v5139
  %v6484 = vpack.c.b16 %v5172, %v5140
  %v6485 = vpack.c.b16 %v5173, %v5141
  %v6486 = vpack.c.b16 %v5174, %v5142
  %v6487 = vpack.c.b16 %v5175, %v5143
  %v6488 = vpack.c.b16 %v5176, %v5144
  %v6489 = vpack.c.b16 %v5177, %v5145
  %v6490 = vpack.c.b16 %v5178, %v5146
  %v6491 = vpack.c.b16 %v5179, %v5147
  %v6492 = vpack.c.b16 %v5180, %v5148
  %v6493 = vpack.c.b16 %v5181, %v5149
  %v6494 = vpack.c.b16 %v5182, %v5150
  %v6495 = vpack.c.b16 %v5183, %v5151
  %v6496 = vpack.c.b16 %v5184, %v5152
  %v6497 = vpack.c.b16 %v5185, %v5153
  %v6498 = vpack.c.b16 %v5186, %v5154
  %v6499 = vpack.c.b16 %v5187, %v5155
  %v6500 = vpack.c.b16 %v5220, %v5188
  %v6501 = vpack.c.b16 %v5221, %v5189
  %v6502 = vpack.c.b16 %v5222, %v5190
  %v6503 = vpack.c.b16 %v5223, %v5191
  %v6504 = vpack.c.b16 %v5224, %v5192
  %v6505 = vpack.c.b16 %v5225, %v5193
  %v6506 = vpack.c.b16 %v5226, %v5194
  %v6507 = vpack.c.b16 %v5227, %v5195
  %v6508 = vpack.c.b16 %v5228, %v5196
  %v6509 = vpack.c.b16 %v5229, %v5197
  %v6510 = vpack.c.b16 %v5230, %v5198
  %v6511 = vpack.c.b16 %v5231, %v5199
  %v6512 = vpack.c.b16 %v5232, %v5200
  %v6513 = vpack.c.b16 %v5233, %v5201
  %v6514 = vpack.c.b16 %v5234, %v5202
  %v6515 = vpack.c.b16 %v5235, %v5203
  %v6516 = vpack.c.b16 %v5236, %v5204
  %v6517 = vpack.c.b16 %v5237, %v5205
  %v6518 = vpack.c.b16 %v5238, %v5206
  %v6519 = vpack.c.b16 %v5239, %v5207
  %v6520 = vpack.c.b16 %v5240, %v5208
  %v6521 = vpack.c.b16 %v5241, %v5209
  %v6522 = vpack.c.b16 %v5242, %v5210
  %v6523 = vpack.c.b16 %v5243, %v5211
  %v6524 = vpack.c.b16 %v5244, %v5212
  %v6525 = vpack.c.b16 %v5245, %v5213
  %v6526 = vpack.c.b16 %v5246, %v5214
  %v6527 = vpack.c.b16 %v5247, %v5215
  %v6528 = vpack.c.b16 %v5248, %v5216
  %v6529 = vpack.c.b16 %v5249, %v5217
  %v6530 = vpack.c.b16 %v5250, %v5218
  %v6531 = vpack.c.b16 %v5251, %v5219
  %v6532 = vpack.c.b16 %v5284, %v5252
  %v6533 = vpack.c.b16 %v5285, %v5253
  %v6534 = vpack.c.b16 %v5286, %v5254
  %v6535 = vpack.c.b16 %v5287, %v5255
  %v6536 = vpack.c.b16 %v5288, %v5256
  %v6537 = vpack.c.b16 %v5289, %v5257
  %v6538 = vpack.c.b16 %v5290, %v5258
  %v6539 = vpack.c.b16 %v5291, %v5259
  %v6540 = vpack.c.b16 %v5292, %v5260
  %v6541 = vpack.c.b16 %v5293, %v5261
  %v6542 = vpack.c.b16 %v5294, %v5262
  %v6543 = vpack.c.b16 %v5295, %v5263
  %v6544 = vpack.c.b16 %v5296, %v5264
  %v6545 = vpack.c.b16 %v5297, %v5265
  %v6546 = vpack.c.b16 %v5298, %v5266
  %v6547 = vpack.c.b16 %v5299, %v5267
  %v6548 = vpack.c.b16 %v5300, %v5268
  %v6549 = vpack.c.b16 %v5301, %v5269
  %v6550 = vpack.c.b16 %v5302, %v5270
  %v6551 = vpack.c.b16 %v5303, %v5271
  %v6552 = vpack.c.b16 %v5304, %v5272
  %v6553 = vpack.c.b16 %v5305, %v5273
  %v6554 = vpack.c.b16 %v5306, %v5274
  %v6555 = vpack.c.b16 %v5307, %v5275
  %v6556 = vpack.c.b16 %v5308, %v5276
  %v6557 = vpack.c.b16 %v5309, %v5277
  %v6558 = vpack.c.b16 %v5310, %v5278
  %v6559 = vpack.c.b16 %v5311, %v5279
  %v6560 = vpack.c.b16 %v5312, %v5280
  %v6561 = vpack.c.b16 %v5313, %v5281
  %v6562 = vpack.c.b16 %v5314, %v5282
  %v6563 = vpack.c.b16 %v5315, %v5283
  %v6564 = vpack.c.b16 %v5348, %v5316
  %v6565 = vpack.c.b16 %v5349, %v5317
  %v6566 = vpack.c.b16 %v5350, %v5318
  %v6567 = vpack.c.b16 %v5351, %v5319
  %v6568 = vpack.c.b16 %v5352, %v5320
  %v6569 = vpack.c.b16 %v5353, %v5321
  %v6570 = vpack.c.b16 %v5354, %v5322
  %v6571 = vpack.c.b16 %v5355, %v5323
  %v6572 = vpack.c.b16 %v5356, %v5324
  %v6573 = vpack.c.b16 %v5357, %v5325
  %v6574 = vpack.c.b16 %v5358, %v5326
  %v6575 = vpack.c.b16 %v5359, %v5327
  %v6576 = vpack.c.b16 %v5360, %v5328
  %v6577 = vpack.c.b16 %v5361, %v5329
  %v6578 = vpack.c.b16 %v5362, %v5330
  %v6579 = vpack.c.b16 %v5363, %v5331
  %v6580 = vpack.c.b16 %v5364, %v5332
  %v6581 = vpack.c.b16 %v5365, %v5333
  %v6582 = vpack.c.b16 %v5366, %v5334
  %v6583 = vpack.c.b16 %v5367, %v5335
  %v6584 = vpack.c.b16 %v5368, %v5336
  %v6585 = vpack.c.b16 %v5369, %v5337
  %v6586 = vpack.c.b16 %v5370, %v5338
  %v6587 = vpack.c.b16 %v5371, %v5339
  %v6588 = vpack.c.b16 %v5372, %v5340
  %v6589 = vpack.c.b16 %v5373, %v5341
  %v6590 = vpack.c.b16 %v5374, %v5342
  %v6591 = vpack.c.b16 %v5375, %v5343
  %v6592 = vpack.c.b16 %v5376, %v5344
  %v6593 = vpack.c.b16 %v5377, %v5345
  %v6594 = vpack.c.b16 %v5378, %v5346
  %v6595 = vpack.c.b16 %v5379, %v5347
  %v6596 = vpack.c.b16 %v5412, %v5380
  %v6597 = vpack.c.b16 %v5413, %v5381
  %v6598 = vpack.c.b16 %v5414, %v5382
  %v6599 = vpack.c.b16 %v5415, %v5383
  %v6600 = vpack.c.b16 %v5416, %v5384
  %v6601 = vpack.c.b16 %v5417, %v5385
  %v6602 = vpack.c.b16 %v5418, %v5386
  %v6603 = vpack.c.b16 %v5419, %v5387
  %v6604 = vpack.c.b16 %v5420, %v5388
  %v6605 = vpack.c.b16 %v5421, %v5389
  %v6606 = vpack.c.b16 %v5422, %v5390
  %v6607 = vpack.c.b16 %v5423, %v5391
  %v6608 = vpack.c.b16 %v5424, %v5392
  %v6609 = vpack.c.b16 %v5425, %v5393
  %v6610 = vpack.c.b16 %v5426, %v5394
  %v6611 = vpack.c.b16 %v5427, %v5395
  %v6612 = vpack.c.b16 %v5428, %v5396
  %v6613 = vpack.c.b16 %v5429, %v5397
  %v6614 = vpack.c.b16 %v5430, %v5398
  %v6615 = vpack.c.b16 %v5431, %v5399
  %v6616 = vpack.c.b16 %v5432, %v5400
  %v6617 = vpack.c.b16 %v5433, %v5401
  %v6618 = vpack.c.b16 %v5434, %v5402
  %v6619 = vpack.c.b16 %v5435, %v5403
  %v6620 = vpack.c.b16 %v5436, %v5404
  %v6621 = vpack.c.b16 %v5437, %v5405
  %v6622 = vpack.c.b16 %v5438, %v5406
  %v6623 = vpack.c.b16 %v5439, %v5407
  %v6624 = vpack.c.b16 %v5440, %v5408
  %v6625 = vpack.c.b16 %v5441, %v5409
  %v6626 = vpack.c.b16 %v5442, %v5410
  %v6627 = vpack.c.b16 %v5443, %v5411
  %v6628 = vpack.c.b16 %v5476, %v5444
  %v6629 = vpack.c.b16 %v5477, %v5445
  %v6630 = vpack.c.b16 %v5478, %v5446
  %v6631 = vpack.c.b16 %v5479, %v5447
  %v6632 = vpack.c.b16 %v5480, %v5448
  %v6633 = vpack.c.b16 %v5481, %v5449
  %v6634 = vpack.c.b16 %v5482, %v5450
  %v6635 = vpack.c.b16 %v5483, %v5451
  %v6636 = vpack.c.b16 %v5484, %v5452
  %v6637 = vpack.c.b16 %v5485, %v5453
  %v6638 = vpack.c.b16 %v5486, %v5454
  %v6639 = vpack.c.b16 %v5487, %v5455
  %v6640 = vpack.c.b16 %v5488, %v5456
  %v6641 = vpack.c.b16 %v5489, %v5457
  %v6642 = vpack.c.b16 %v5490, %v5458
  %v6643 = vpack.c.b16 %v5491, %v5459
  %v6644 = vpack.c.b16 %v5492, %v5460
  %v6645 = vpack.c.b16 %v5493, %v5461
  %v6646 = vpack.c.b16 %v5494, %v5462
  %v6647 = vpack.c.b16 %v5495, %v5463
  %v6648 = vpack.c.b16 %v5496, %v5464
  %v6649 = vpack.c.b16 %v5497, %v5465
  %v6650 = vpack.c.b16 %v5498, %v5466
  %v6651 = vpack.c.b16 %v5499, %v5467
  %v6652 = vpack.c.b16 %v5500, %v5468
  %v6653 = vpack.c.b16 %v5501, %v5469
  %v6654 = vpack.c.b16 %v5502, %v5470
  %v6655 = vpack.c.b16 %v5503, %v5471
  %v6656 = vpack.c.b16 %v5504, %v5472
  %v6657 = vpack.c.b16 %v5505, %v5473
  %v6658 = vpack.c.b16 %v5506, %v5474
  %v6659 = vpack.c.b16 %v5507, %v5475
  %v6660 = vpack.c.b16 %v5540, %v5508
  %v6661 = vpack.c.b16 %v5541, %v5509
  %v6662 = vpack.c.b16 %v5542, %v5510
  %v6663 = vpack.c.b16 %v5543, %v5511
  %v6664 = vpack.c.b16 %v5544, %v5512
  %v6665 = vpack.c.b16 %v5545, %v5513
  %v6666 = vpack.c.b16 %v5546, %v5514
  %v6667 = vpack.c.b16 %v5547, %v5515
  %v6668 = vpack.c.b16 %v5548, %v5516
  %v6669 = vpack.c.b16 %v5549, %v5517
  %v6670 = vpack.c.b16 %v5550, %v5518
  %v6671 = vpack.c.b16 %v5551, %v5519
  %v6672 = vpack.c.b16 %v5552, %v5520
  %v6673 = vpack.c.b16 %v5553, %v5521
  %v6674 = vpack.c.b16 %v5554, %v5522
  %v6675 = vpack.c.b16 %v5555, %v5523
  %v6676 = vpack.c.b16 %v5556, %v5524
  %v6677 = vpack.c.b16 %v5557, %v5525
  %v6678 = vpack.c.b16 %v5558, %v5526
  %v6679 = vpack.c.b16 %v5559, %v5527
  %v6680 = vpack.c.b16 %v5560, %v5528
  %v6681 = vpack.c.b16 %v5561, %v5529
  %v6682 = vpack.c.b16 %v5562, %v5530
  %v6683 = vpack.c.b16 %v5563, %v5531
  %v6684 = vpack.c.b16 %v5564, %v5532
  %v6685 = vpack.c.b16 %v5565, %v5533
  %v6686 = vpack.c.b16 %v5566, %v5534
  %v6687 = vpack.c.b16 %v5567, %v5535
  %v6688 = vpack.c.b16 %v5568, %v5536
  %v6689 = vpack.c.b16 %v5569, %v5537
  %v6690 = vpack.c.b16 %v5570, %v5538
  %v6691 = vpack.c.b16 %v5571, %v5539
  %v6692 = vpack.c.b16 %v5604, %v5572
  %v6693 = vpack.c.b16 %v5605, %v5573
  %v6694 = vpack.c.b16 %v5606, %v5574
  %v6695 = vpack.c.b16 %v5607, %v5575
  %v6696 = vpack.c.b16 %v5608, %v5576
  %v6697 = vpack.c.b16 %v5609, %v5577
  %v6698 = vpack.c.b16 %v5610, %v5578
  %v6699 = vpack.c.b16 %v5611, %v5579
  %v6700 = vpack.c.b16 %v5612, %v5580
  %v6701 = vpack.c.b16 %v5613, %v5581
  %v6702 = vpack.c.b16 %v5614, %v5582
  %v6703 = vpack.c.b16 %v5615, %v5583
  %v6704 = vpack.c.b16 %v5616, %v5584
  %v6705 = vpack.c.b16 %v5617, %v5585
  %v6706 = vpack.c.b16 %v5618, %v5586
  %v6707 = vpack.c.b16 %v5619, %v5587
  %v6708 = vpack.c.b16 %v5620, %v5588
  %v6709 = vpack.c.b16 %v5621, %v5589
  %v6710 = vpack.c.b16 %v5622, %v5590
  %v6711 = vpack.c.b16 %v5623, %v5591
  %v6712 = vpack.c.b16 %v5624, %v5592
  %v6713 = vpack.c.b16 %v5625, %v5593
  %v6714 = vpack.c.b16 %v5626, %v5594
  %v6715 = vpack.c.b16 %v5627, %v5595
  %v6716 = vpack.c.b16 %v5628, %v5596
  %v6717 = vpack.c.b16 %v5629, %v5597
  %v6718 = vpack.c.b16 %v5630, %v5598
  %v6719 = vpack.c.b16 %v5631, %v5599
  %v6720 = vpack.c.b16 %v5632, %v5600
  %v6721 = vpack.c.b16 %v5633, %v5601
  %v6722 = vpack.c.b16 %v5634, %v5602
  %v6723 = vpack.c.b16 %v5635, %v5603
  %v6724 = vpack.c.b16 %v5668, %v5636
  %v6725 = vpack.c.b16 %v5669, %v5637
  %v6726 = vpack.c.b16 %v5670, %v5638
  %v6727 = vpack.c.b16 %v5671, %v5639
  %v6728 = vpack.c.b16 %v5672, %v5640
  %v6729 = vpack.c.b16 %v5673, %v5641
  %v6730 = vpack.c.b16 %v5674, %v5642
  %v6731 = vpack.c.b16 %v5675, %v5643
  %v6732 = vpack.c.b16 %v5676, %v5644
  %v6733 = vpack.c.b16 %v5677, %v5645
  %v6734 = vpack.c.b16 %v5678, %v5646
  %v6735 = vpack.c.b16 %v5679, %v5647
  %v6736 = vpack.c.b16 %v5680, %v5648
  %v6737 = vpack.c.b16 %v5681, %v5649
  %v6738 = vpack.c.b16 %v5682, %v5650
  %v6739 = vpack.c.b16 %v5683, %v5651
  %v6740 = vpack.c.b16 %v5684, %v5652
  %v6741 = vpack.c.b16 %v5685, %v5653
  %v6742 = vpack.c.b16 %v5686, %v5654
  %v6743 = vpack.c.b16 %v5687, %v5655
  %v6744 = vpack.c.b16 %v5688, %v5656
  %v6745 = vpack.c.b16 %v5689, %v5657
  %v6746 = vpack.c.b16 %v5690, %v5658
  %v6747 = vpack.c.b16 %v5691, %v5659
  %v6748 = vpack.c.b16 %v5692, %v5660
  %v6749 = vpack.c.b16 %v5693, %v5661
  %v6750 = vpack.c.b16 %v5694, %v5662
  %v6751 = vpack.c.b16 %v5695, %v5663
  %v6752 = vpack.c.b16 %v5696, %v5664
  %v6753 = vpack.c.b16 %v5697, %v5665
  %v6754 = vpack.c.b16 %v5698, %v5666
  %v6755 = vpack.c.b16 %v5699, %v5667
  %v6756 = vpack.c.b16 %v5732, %v5700
  %v6757 = vpack.c.b16 %v5733, %v5701
  %v6758 = vpack.c.b16 %v5734, %v5702
  %v6759 = vpack.c.b16 %v5735, %v5703
  %v6760 = vpack.c.b16 %v5736, %v5704
  %v6761 = vpack.c.b16 %v5737, %v5705
  %v6762 = vpack.c.b16 %v5738, %v5706
  %v6763 = vpack.c.b16 %v5739, %v5707
  %v6764 = vpack.c.b16 %v5740, %v5708
  %v6765 = vpack.c.b16 %v5741, %v5709
  %v6766 = vpack.c.b16 %v5742, %v5710
  %v6767 = vpack.c.b16 %v5743, %v5711
  %v6768 = vpack.c.b16 %v5744, %v5712
  %v6769 = vpack.c.b16 %v5745, %v5713
  %v6770 = vpack.c.b16 %v5746, %v5714
  %v6771 = vpack.c.b16 %v5747, %v5715
  %v6772 = vpack.c.b16 %v5748, %v5716
  %v6773 = vpack.c.b16 %v5749, %v5717
  %v6774 = vpack.c.b16 %v5750, %v5718
  %v6775 = vpack.c.b16 %v5751, %v5719
  %v6776 = vpack.c.b16 %v5752, %v5720
  %v6777 = vpack.c.b16 %v5753, %v5721
  %v6778 = vpack.c.b16 %v5754, %v5722
  %v6779 = vpack.c.b16 %v5755, %v5723
  %v6780 = vpack.c.b16 %v5756, %v5724
  %v6781 = vpack.c.b16 %v5757, %v5725
  %v6782 = vpack.c.b16 %v5758, %v5726
  %v6783 = vpack.c.b16 %v5759, %v5727
  %v6784 = vpack.c.b16 %v5760, %v5728
  %v6785 = vpack.c.b16 %v5761, %v5729
  %v6786 = vpack.c.b16 %v5762, %v5730
  %v6787 = vpack.c.b16 %v5763, %v5731
  %7812 = vmatprep.subr.bf16.mxu0 %v5765
  %7813 = vmatpush1.bf16.msra.mxu0 %v5764
  %7814 = vmatprep.subr.bf16.mxu0 %v5797
  %7815 = vmatpush1.bf16.msra.mxu0 %v5796
  %7816 = vmatprep.subr.bf16.mxu0 %v5829
  %7817 = vmatpush1.bf16.msra.mxu0 %v5828
  %7818 = vmatprep.subr.bf16.mxu0 %v5861
  %7819 = vmatpush1.bf16.msra.mxu0 %v5860
  %7820 = vmatprep.subr.bf16.mxu0 %v5893
  %7821 = vmatpush1.bf16.msra.mxu0 %v5892
  %7822 = vmatprep.subr.bf16.mxu0 %v5925
  %7823 = vmatpush1.bf16.msra.mxu0 %v5924
  %7824 = vmatprep.subr.bf16.mxu0 %v5957
  %7825 = vmatpush1.bf16.msra.mxu0 %v5956
  %7826 = vmatprep.subr.bf16.mxu0 %v5989
  %7827 = vmatpush1.bf16.msra.mxu0 %v5988
  %7828 = vmatprep.subr.bf16.mxu0 %v6021
  %7829 = vmatpush1.bf16.msra.mxu0 %v6020
  %7830 = vmatprep.subr.bf16.mxu0 %v6053
  %7831 = vmatpush1.bf16.msra.mxu0 %v6052
  %7832 = vmatprep.subr.bf16.mxu0 %v6085
  %7833 = vmatpush1.bf16.msra.mxu0 %v6084
  %7834 = vmatprep.subr.bf16.mxu0 %v6117
  %7835 = vmatpush1.bf16.msra.mxu0 %v6116
  %7836 = vmatprep.subr.bf16.mxu0 %v6149
  %7837 = vmatpush1.bf16.msra.mxu0 %v6148
  %7838 = vmatprep.subr.bf16.mxu0 %v6181
  %7839 = vmatpush1.bf16.msra.mxu0 %v6180
  %7840 = vmatprep.subr.bf16.mxu0 %v6213
  %7841 = vmatpush1.bf16.msra.mxu0 %v6212
  %7842 = vmatprep.subr.bf16.mxu0 %v6245
  %7843 = vmatpush1.bf16.msra.mxu0 %v6244
  %7844 = vmatprep.mubr.bf16.mxu0 %v1497
  %7845 = vmatmul.mubr.bf16.gmra.mrb[0].mxu0 %v1496
  %v7846 = vpop.f32.mrb[0].mxu0
  %v7847 = vadd.f32 %v2535, %v7846
  %v7848 = vpop.f32.mrb[0].mxu0
  %v7849 = vadd.f32 %v2539, %v7848
  %v7850 = vpop.f32.mrb[0].mxu0
  %v7851 = vadd.f32 %v2535, %v7850
  %v7852 = vpop.f32.mrb[0].mxu0
  %v7853 = vadd.f32 %v2539, %v7852
  %7854 = vdwg.mxu0
  %7855 = vmatprep.subr.bf16.mxu0 %v6277
  %7856 = vmatpush1.bf16.msra.mxu0 %v6276
  %7857 = vmatprep.subr.bf16.mxu0 %v6309
  %7858 = vmatpush1.bf16.msra.mxu0 %v6308
  %7859 = vmatprep.subr.bf16.mxu0 %v6341
  %7860 = vmatpush1.bf16.msra.mxu0 %v6340
  %7861 = vmatprep.subr.bf16.mxu0 %v6373
  %7862 = vmatpush1.bf16.msra.mxu0 %v6372
  %7863 = vmatprep.subr.bf16.mxu0 %v6405
  %7864 = vmatpush1.bf16.msra.mxu0 %v6404
  %7865 = vmatprep.subr.bf16.mxu0 %v6437
  %7866 = vmatpush1.bf16.msra.mxu0 %v6436
  %7867 = vmatprep.subr.bf16.mxu0 %v6469
  %7868 = vmatpush1.bf16.msra.mxu0 %v6468
  %7869 = vmatprep.subr.bf16.mxu0 %v6501
  %7870 = vmatpush1.bf16.msra.mxu0 %v6500
  %7871 = vmatprep.subr.bf16.mxu0 %v6533
  %7872 = vmatpush1.bf16.msra.mxu0 %v6532
  %7873 = vmatprep.subr.bf16.mxu0 %v6565
  %7874 = vmatpush1.bf16.msra.mxu0 %v6564
  %7875 = vmatprep.subr.bf16.mxu0 %v6597
  %7876 = vmatpush1.bf16.msra.mxu0 %v6596
  %7877 = vmatprep.subr.bf16.mxu0 %v6629
  %7878 = vmatpush1.bf16.msra.mxu0 %v6628
  %7879 = vmatprep.subr.bf16.mxu0 %v6661
  %7880 = vmatpush1.bf16.msra.mxu0 %v6660
  %7881 = vmatprep.subr.bf16.mxu0 %v6693
  %7882 = vmatpush1.bf16.msra.mxu0 %v6692
  %7883 = vmatprep.subr.bf16.mxu0 %v6725
  %7884 = vmatpush1.bf16.msra.mxu0 %v6724
  %7885 = vmatprep.subr.bf16.mxu0 %v6757
  %7886 = vmatpush1.bf16.msra.mxu0 %v6756
  %7887 = vmatprep.mubr.bf16.mxu0 %v1499
  %7888 = vmatmul.mubr.bf16.gmra.mrb[0].mxu0 %v1498
  %v7889 = vpop.f32.mrb[0].mxu0
  %v7890 = vadd.f32 %v7847, %v7889
  %v7891 = vpop.f32.mrb[0].mxu0
  %v7892 = vadd.f32 %v7849, %v7891
  %v7893 = vpop.f32.mrb[0].mxu0
  %v7894 = vadd.f32 %v7851, %v7893
  %v7895 = vpop.f32.mrb[0].mxu0
  %v7896 = vadd.f32 %v7853, %v7895
  %7897 = vdwg.mxu0
  %7898 = vmatprep.subr.bf16.mxu0 %v5767
  %7899 = vmatpush1.bf16.msra.mxu0 %v5766
  %7900 = vmatprep.subr.bf16.mxu0 %v5799
  %7901 = vmatpush1.bf16.msra.mxu0 %v5798
  %7902 = vmatprep.subr.bf16.mxu0 %v5831
  %7903 = vmatpush1.bf16.msra.mxu0 %v5830
  %7904 = vmatprep.subr.bf16.mxu0 %v5863
  %7905 = vmatpush1.bf16.msra.mxu0 %v5862
  %7906 = vmatprep.subr.bf16.mxu0 %v5895
  %7907 = vmatpush1.bf16.msra.mxu0 %v5894
  %7908 = vmatprep.subr.bf16.mxu0 %v5927
  %7909 = vmatpush1.bf16.msra.mxu0 %v5926
  %7910 = vmatprep.subr.bf16.mxu0 %v5959
  %7911 = vmatpush1.bf16.msra.mxu0 %v5958
  %7912 = vmatprep.subr.bf16.mxu0 %v5991
  %7913 = vmatpush1.bf16.msra.mxu0 %v5990
  %7914 = vmatprep.subr.bf16.mxu0 %v6023
  %7915 = vmatpush1.bf16.msra.mxu0 %v6022
  %7916 = vmatprep.subr.bf16.mxu0 %v6055
  %7917 = vmatpush1.bf16.msra.mxu0 %v6054
  %7918 = vmatprep.subr.bf16.mxu0 %v6087
  %7919 = vmatpush1.bf16.msra.mxu0 %v6086
  %7920 = vmatprep.subr.bf16.mxu0 %v6119
  %7921 = vmatpush1.bf16.msra.mxu0 %v6118
  %7922 = vmatprep.subr.bf16.mxu0 %v6151
  %7923 = vmatpush1.bf16.msra.mxu0 %v6150
  %7924 = vmatprep.subr.bf16.mxu0 %v6183
  %7925 = vmatpush1.bf16.msra.mxu0 %v6182
  %7926 = vmatprep.subr.bf16.mxu0 %v6215
  %7927 = vmatpush1.bf16.msra.mxu0 %v6214
  %7928 = vmatprep.subr.bf16.mxu0 %v6247
  %7929 = vmatpush1.bf16.msra.mxu0 %v6246
  %7930 = vmatprep.mubr.bf16.mxu0 %v1497
  %7931 = vmatmul.mubr.bf16.gmra.mrb[0].mxu0 %v1496
  %v7932 = vpop.f32.mrb[0].mxu0
  %v7933 = vadd.f32 %v2543, %v7932
  %v7934 = vpop.f32.mrb[0].mxu0
  %v7935 = vadd.f32 %v2547, %v7934
  %v7936 = vpop.f32.mrb[0].mxu0
  %v7937 = vadd.f32 %v2543, %v7936
  %v7938 = vpop.f32.mrb[0].mxu0
  %v7939 = vadd.f32 %v2547, %v7938
  %7940 = vdwg.mxu0
  %7941 = vmatprep.subr.bf16.mxu0 %v6279
  %7942 = vmatpush1.bf16.msra.mxu0 %v6278
  %7943 = vmatprep.subr.bf16.mxu0 %v6311
  %7944 = vmatpush1.bf16.msra.mxu0 %v6310
  %7945 = vmatprep.subr.bf16.mxu0 %v6343
  %7946 = vmatpush1.bf16.msra.mxu0 %v6342
  %7947 = vmatprep.subr.bf16.mxu0 %v6375
  %7948 = vmatpush1.bf16.msra.mxu0 %v6374
  %7949 = vmatprep.subr.bf16.mxu0 %v6407
  %7950 = vmatpush1.bf16.msra.mxu0 %v6406
  %7951 = vmatprep.subr.bf16.mxu0 %v6439
  %7952 = vmatpush1.bf16.msra.mxu0 %v6438
  %7953 = vmatprep.subr.bf16.mxu0 %v6471
  %7954 = vmatpush1.bf16.msra.mxu0 %v6470
  %7955 = vmatprep.subr.bf16.mxu0 %v6503
  %7956 = vmatpush1.bf16.msra.mxu0 %v6502
  %7957 = vmatprep.subr.bf16.mxu0 %v6535
  %7958 = vmatpush1.bf16.msra.mxu0 %v6534
  %7959 = vmatprep.subr.bf16.mxu0 %v6567
  %7960 = vmatpush1.bf16.msra.mxu0 %v6566
  %7961 = vmatprep.subr.bf16.mxu0 %v6599
  %7962 = vmatpush1.bf16.msra.mxu0 %v6598
  %7963 = vmatprep.subr.bf16.mxu0 %v6631
  %7964 = vmatpush1.bf16.msra.mxu0 %v6630
  %7965 = vmatprep.subr.bf16.mxu0 %v6663
  %7966 = vmatpush1.bf16.msra.mxu0 %v6662
  %7967 = vmatprep.subr.bf16.mxu0 %v6695
  %7968 = vmatpush1.bf16.msra.mxu0 %v6694
  %7969 = vmatprep.subr.bf16.mxu0 %v6727
  %7970 = vmatpush1.bf16.msra.mxu0 %v6726
  %7971 = vmatprep.subr.bf16.mxu0 %v6759
  %7972 = vmatpush1.bf16.msra.mxu0 %v6758
  %7973 = vmatprep.mubr.bf16.mxu0 %v1499
  %7974 = vmatmul.mubr.bf16.gmra.mrb[0].mxu0 %v1498
  %v7975 = vpop.f32.mrb[0].mxu0
  %v7976 = vadd.f32 %v7933, %v7975
  %v7977 = vpop.f32.mrb[0].mxu0
  %v7978 = vadd.f32 %v7935, %v7977
  %v7979 = vpop.f32.mrb[0].mxu0
  %v7980 = vadd.f32 %v7937, %v7979
  %v7981 = vpop.f32.mrb[0].mxu0
  %v7982 = vadd.f32 %v7939, %v7981
  %7983 = vdwg.mxu0
  %7984 = vmatprep.subr.bf16.mxu0 %v5769
  %7985 = vmatpush1.bf16.msra.mxu0 %v5768
  %7986 = vmatprep.subr.bf16.mxu0 %v5801
  %7987 = vmatpush1.bf16.msra.mxu0 %v5800
  %7988 = vmatprep.subr.bf16.mxu0 %v5833
  %7989 = vmatpush1.bf16.msra.mxu0 %v5832
  %7990 = vmatprep.subr.bf16.mxu0 %v5865
  %7991 = vmatpush1.bf16.msra.mxu0 %v5864
  %7992 = vmatprep.subr.bf16.mxu0 %v5897
  %7993 = vmatpush1.bf16.msra.mxu0 %v5896
  %7994 = vmatprep.subr.bf16.mxu0 %v5929
  %7995 = vmatpush1.bf16.msra.mxu0 %v5928
  %7996 = vmatprep.subr.bf16.mxu0 %v5961
  %7997 = vmatpush1.bf16.msra.mxu0 %v5960
  %7998 = vmatprep.subr.bf16.mxu0 %v5993
  %7999 = vmatpush1.bf16.msra.mxu0 %v5992
  %8000 = vmatprep.subr.bf16.mxu0 %v6025
  %8001 = vmatpush1.bf16.msra.mxu0 %v6024
  %8002 = vmatprep.subr.bf16.mxu0 %v6057
  %8003 = vmatpush1.bf16.msra.mxu0 %v6056
  %8004 = vmatprep.subr.bf16.mxu0 %v6089
  %8005 = vmatpush1.bf16.msra.mxu0 %v6088
  %8006 = vmatprep.subr.bf16.mxu0 %v6121
  %8007 = vmatpush1.bf16.msra.mxu0 %v6120
  %8008 = vmatprep.subr.bf16.mxu0 %v6153
  %8009 = vmatpush1.bf16.msra.mxu0 %v6152
  %8010 = vmatprep.subr.bf16.mxu0 %v6185
  %8011 = vmatpush1.bf16.msra.mxu0 %v6184
  %8012 = vmatprep.subr.bf16.mxu0 %v6217
  %8013 = vmatpush1.bf16.msra.mxu0 %v6216
  %8014 = vmatprep.subr.bf16.mxu0 %v6249
  %8015 = vmatpush1.bf16.msra.mxu0 %v6248
  %8016 = vmatprep.mubr.bf16.mxu0 %v1497
  %8017 = vmatmul.mubr.bf16.gmra.mrb[0].mxu0 %v1496
  %v8018 = vpop.f32.mrb[0].mxu0
  %v8019 = vadd.f32 %v2551, %v8018
  %v8020 = vpop.f32.mrb[0].mxu0
  %v8021 = vadd.f32 %v2555, %v8020
  %v8022 = vpop.f32.mrb[0].mxu0
  %v8023 = vadd.f32 %v2551, %v8022
  %v8024 = vpop.f32.mrb[0].mxu0
  %v8025 = vadd.f32 %v2555, %v8024
  %8026 = vdwg.mxu0
  %8027 = vmatprep.subr.bf16.mxu0 %v6281
  %8028 = vmatpush1.bf16.msra.mxu0 %v6280
  %8029 = vmatprep.subr.bf16.mxu0 %v6313
  %8030 = vmatpush1.bf16.msra.mxu0 %v6312
  %8031 = vmatprep.subr.bf16.mxu0 %v6345
  %8032 = vmatpush1.bf16.msra.mxu0 %v6344
  %8033 = vmatprep.subr.bf16.mxu0 %v6377
  %8034 = vmatpush1.bf16.msra.mxu0 %v6376
  %8035 = vmatprep.subr.bf16.mxu0 %v6409
  %8036 = vmatpush1.bf16.msra.mxu0 %v6408
  %8037 = vmatprep.subr.bf16.mxu0 %v6441
  %8038 = vmatpush1.bf16.msra.mxu0 %v6440
  %8039 = vmatprep.subr.bf16.mxu0 %v6473
  %8040 = vmatpush1.bf16.msra.mxu0 %v6472
  %8041 = vmatprep.subr.bf16.mxu0 %v6505
  %8042 = vmatpush1.bf16.msra.mxu0 %v6504
  %8043 = vmatprep.subr.bf16.mxu0 %v6537
  %8044 = vmatpush1.bf16.msra.mxu0 %v6536
  %8045 = vmatprep.subr.bf16.mxu0 %v6569
  %8046 = vmatpush1.bf16.msra.mxu0 %v6568
  %8047 = vmatprep.subr.bf16.mxu0 %v6601
  %8048 = vmatpush1.bf16.msra.mxu0 %v6600
  %8049 = vmatprep.subr.bf16.mxu0 %v6633
  %8050 = vmatpush1.bf16.msra.mxu0 %v6632
  %8051 = vmatprep.subr.bf16.mxu0 %v6665
  %8052 = vmatpush1.bf16.msra.mxu0 %v6664
  %8053 = vmatprep.subr.bf16.mxu0 %v6697
  %8054 = vmatpush1.bf16.msra.mxu0 %v6696
  %8055 = vmatprep.subr.bf16.mxu0 %v6729
  %8056 = vmatpush1.bf16.msra.mxu0 %v6728
  %8057 = vmatprep.subr.bf16.mxu0 %v6761
  %8058 = vmatpush1.bf16.msra.mxu0 %v6760
  %8059 = vmatprep.mubr.bf16.mxu0 %v1499
  %8060 = vmatmul.mubr.bf16.gmra.mrb[0].mxu0 %v1498
  %v8061 = vpop.f32.mrb[0].mxu0
  %v8062 = vadd.f32 %v8019, %v8061
  %v8063 = vpop.f32.mrb[0].mxu0
  %v8064 = vadd.f32 %v8021, %v8063
  %v8065 = vpop.f32.mrb[0].mxu0
  %v8066 = vadd.f32 %v8023, %v8065
  %v8067 = vpop.f32.mrb[0].mxu0
  %v8068 = vadd.f32 %v8025, %v8067
  %8069 = vdwg.mxu0
  %8070 = vmatprep.subr.bf16.mxu0 %v5771
  %8071 = vmatpush1.bf16.msra.mxu0 %v5770
  %8072 = vmatprep.subr.bf16.mxu0 %v5803
  %8073 = vmatpush1.bf16.msra.mxu0 %v5802
  %8074 = vmatprep.subr.bf16.mxu0 %v5835
  %8075 = vmatpush1.bf16.msra.mxu0 %v5834
  %8076 = vmatprep.subr.bf16.mxu0 %v5867
  %8077 = vmatpush1.bf16.msra.mxu0 %v5866
  %8078 = vmatprep.subr.bf16.mxu0 %v5899
  %8079 = vmatpush1.bf16.msra.mxu0 %v5898
  %8080 = vmatprep.subr.bf16.mxu0 %v5931
  %8081 = vmatpush1.bf16.msra.mxu0 %v5930
  %8082 = vmatprep.subr.bf16.mxu0 %v5963
  %8083 = vmatpush1.bf16.msra.mxu0 %v5962
  %8084 = vmatprep.subr.bf16.mxu0 %v5995
  %8085 = vmatpush1.bf16.msra.mxu0 %v5994
  %8086 = vmatprep.subr.bf16.mxu0 %v6027
  %8087 = vmatpush1.bf16.msra.mxu0 %v6026
  %8088 = vmatprep.subr.bf16.mxu0 %v6059
  %8089 = vmatpush1.bf16.msra.mxu0 %v6058
  %8090 = vmatprep.subr.bf16.mxu0 %v6091
  %8091 = vmatpush1.bf16.msra.mxu0 %v6090
  %8092 = vmatprep.subr.bf16.mxu0 %v6123
  %8093 = vmatpush1.bf16.msra.mxu0 %v6122
  %8094 = vmatprep.subr.bf16.mxu0 %v6155
  %8095 = vmatpush1.bf16.msra.mxu0 %v6154
  %8096 = vmatprep.subr.bf16.mxu0 %v6187
  %8097 = vmatpush1.bf16.msra.mxu0 %v6186
  %8098 = vmatprep.subr.bf16.mxu0 %v6219
  %8099 = vmatpush1.bf16.msra.mxu0 %v6218
  %8100 = vmatprep.subr.bf16.mxu0 %v6251
  %8101 = vmatpush1.bf16.msra.mxu0 %v6250
  %8102 = vmatprep.mubr.bf16.mxu0 %v1497
  %8103 = vmatmul.mubr.bf16.gmra.mrb[0].mxu0 %v1496
  %v8104 = vpop.f32.mrb[0].mxu0
  %v8105 = vadd.f32 %v2559, %v8104
  %v8106 = vpop.f32.mrb[0].mxu0
  %v8107 = vadd.f32 %v2563, %v8106
  %v8108 = vpop.f32.mrb[0].mxu0
  %v8109 = vadd.f32 %v2559, %v8108
  %v8110 = vpop.f32.mrb[0].mxu0
  %v8111 = vadd.f32 %v2563, %v8110
  %8112 = vdwg.mxu0
  %8113 = vmatprep.subr.bf16.mxu0 %v6283
  %8114 = vmatpush1.bf16.msra.mxu0 %v6282
  %8115 = vmatprep.subr.bf16.mxu0 %v6315
  %8116 = vmatpush1.bf16.msra.mxu0 %v6314
  %8117 = vmatprep.subr.bf16.mxu0 %v6347
  %8118 = vmatpush1.bf16.msra.mxu0 %v6346
  %8119 = vmatprep.subr.bf16.mxu0 %v6379
  %8120 = vmatpush1.bf16.msra.mxu0 %v6378
  %8121 = vmatprep.subr.bf16.mxu0 %v6411
  %8122 = vmatpush1.bf16.msra.mxu0 %v6410
  %8123 = vmatprep.subr.bf16.mxu0 %v6443
  %8124 = vmatpush1.bf16.msra.mxu0 %v6442
  %8125 = vmatprep.subr.bf16.mxu0 %v6475
  %8126 = vmatpush1.bf16.msra.mxu0 %v6474
  %8127 = vmatprep.subr.bf16.mxu0 %v6507
  %8128 = vmatpush1.bf16.msra.mxu0 %v6506
  %8129 = vmatprep.subr.bf16.mxu0 %v6539
  %8130 = vmatpush1.bf16.msra.mxu0 %v6538
  %8131 = vmatprep.subr.bf16.mxu0 %v6571
  %8132 = vmatpush1.bf16.msra.mxu0 %v6570
  %8133 = vmatprep.subr.bf16.mxu0 %v6603
  %8134 = vmatpush1.bf16.msra.mxu0 %v6602
  %8135 = vmatprep.subr.bf16.mxu0 %v6635
  %8136 = vmatpush1.bf16.msra.mxu0 %v6634
  %8137 = vmatprep.subr.bf16.mxu0 %v6667
  %8138 = vmatpush1.bf16.msra.mxu0 %v6666
  %8139 = vmatprep.subr.bf16.mxu0 %v6699
  %8140 = vmatpush1.bf16.msra.mxu0 %v6698
  %8141 = vmatprep.subr.bf16.mxu0 %v6731
  %8142 = vmatpush1.bf16.msra.mxu0 %v6730
  %8143 = vmatprep.subr.bf16.mxu0 %v6763
  %8144 = vmatpush1.bf16.msra.mxu0 %v6762
  %8145 = vmatprep.mubr.bf16.mxu0 %v1499
  %8146 = vmatmul.mubr.bf16.gmra.mrb[0].mxu0 %v1498
  %v8147 = vpop.f32.mrb[0].mxu0
  %v8148 = vadd.f32 %v8105, %v8147
  %v8149 = vpop.f32.mrb[0].mxu0
  %v8150 = vadd.f32 %v8107, %v8149
  %v8151 = vpop.f32.mrb[0].mxu0
  %v8152 = vadd.f32 %v8109, %v8151
  %v8153 = vpop.f32.mrb[0].mxu0
  %v8154 = vadd.f32 %v8111, %v8153
  %8155 = vdwg.mxu0
  %8156 = vmatprep.subr.bf16.mxu0 %v5773
  %8157 = vmatpush1.bf16.msra.mxu0 %v5772
  %8158 = vmatprep.subr.bf16.mxu0 %v5805
  %8159 = vmatpush1.bf16.msra.mxu0 %v5804
  %8160 = vmatprep.subr.bf16.mxu0 %v5837
  %8161 = vmatpush1.bf16.msra.mxu0 %v5836
  %8162 = vmatprep.subr.bf16.mxu0 %v5869
  %8163 = vmatpush1.bf16.msra.mxu0 %v5868
  %8164 = vmatprep.subr.bf16.mxu0 %v5901
  %8165 = vmatpush1.bf16.msra.mxu0 %v5900
  %8166 = vmatprep.subr.bf16.mxu0 %v5933
  %8167 = vmatpush1.bf16.msra.mxu0 %v5932
  %8168 = vmatprep.subr.bf16.mxu0 %v5965
  %8169 = vmatpush1.bf16.msra.mxu0 %v5964
  %8170 = vmatprep.subr.bf16.mxu0 %v5997
  %8171 = vmatpush1.bf16.msra.mxu0 %v5996
  %8172 = vmatprep.subr.bf16.mxu0 %v6029
  %8173 = vmatpush1.bf16.msra.mxu0 %v6028
  %8174 = vmatprep.subr.bf16.mxu0 %v6061
  %8175 = vmatpush1.bf16.msra.mxu0 %v6060
  %8176 = vmatprep.subr.bf16.mxu0 %v6093
  %8177 = vmatpush1.bf16.msra.mxu0 %v6092
  %8178 = vmatprep.subr.bf16.mxu0 %v6125
  %8179 = vmatpush1.bf16.msra.mxu0 %v6124
  %8180 = vmatprep.subr.bf16.mxu0 %v6157
  %8181 = vmatpush1.bf16.msra.mxu0 %v6156
  %8182 = vmatprep.subr.bf16.mxu0 %v6189
  %8183 = vmatpush1.bf16.msra.mxu0 %v6188
  %8184 = vmatprep.subr.bf16.mxu0 %v6221
  %8185 = vmatpush1.bf16.msra.mxu0 %v6220
  %8186 = vmatprep.subr.bf16.mxu0 %v6253
  %8187 = vmatpush1.bf16.msra.mxu0 %v6252
  %8188 = vmatprep.mubr.bf16.mxu0 %v1497
  %8189 = vmatmul.mubr.bf16.gmra.mrb[0].mxu0 %v1496
  %v8190 = vpop.f32.mrb[0].mxu0
  %v8191 = vadd.f32 %v2567, %v8190
  %v8192 = vpop.f32.mrb[0].mxu0
  %v8193 = vadd.f32 %v2571, %v8192
  %v8194 = vpop.f32.mrb[0].mxu0
  %v8195 = vadd.f32 %v2567, %v8194
  %v8196 = vpop.f32.mrb[0].mxu0
  %v8197 = vadd.f32 %v2571, %v8196
  %8198 = vdwg.mxu0
  %8199 = vmatprep.subr.bf16.mxu0 %v6285
  %8200 = vmatpush1.bf16.msra.mxu0 %v6284
  %8201 = vmatprep.subr.bf16.mxu0 %v6317
  %8202 = vmatpush1.bf16.msra.mxu0 %v6316
  %8203 = vmatprep.subr.bf16.mxu0 %v6349
  %8204 = vmatpush1.bf16.msra.mxu0 %v6348
  %8205 = vmatprep.subr.bf16.mxu0 %v6381
  %8206 = vmatpush1.bf16.msra.mxu0 %v6380
  %8207 = vmatprep.subr.bf16.mxu0 %v6413
  %8208 = vmatpush1.bf16.msra.mxu0 %v6412
  %8209 = vmatprep.subr.bf16.mxu0 %v6445
  %8210 = vmatpush1.bf16.msra.mxu0 %v6444
  %8211 = vmatprep.subr.bf16.mxu0 %v6477
  %8212 = vmatpush1.bf16.msra.mxu0 %v6476
  %8213 = vmatprep.subr.bf16.mxu0 %v6509
  %8214 = vmatpush1.bf16.msra.mxu0 %v6508
  %8215 = vmatprep.subr.bf16.mxu0 %v6541
  %8216 = vmatpush1.bf16.msra.mxu0 %v6540
  %8217 = vmatprep.subr.bf16.mxu0 %v6573
  %8218 = vmatpush1.bf16.msra.mxu0 %v6572
  %8219 = vmatprep.subr.bf16.mxu0 %v6605
  %8220 = vmatpush1.bf16.msra.mxu0 %v6604
  %8221 = vmatprep.subr.bf16.mxu0 %v6637
  %8222 = vmatpush1.bf16.msra.mxu0 %v6636
  %8223 = vmatprep.subr.bf16.mxu0 %v6669
  %8224 = vmatpush1.bf16.msra.mxu0 %v6668
  %8225 = vmatprep.subr.bf16.mxu0 %v6701
  %8226 = vmatpush1.bf16.msra.mxu0 %v6700
  %8227 = vmatprep.subr.bf16.mxu0 %v6733
  %8228 = vmatpush1.bf16.msra.mxu0 %v6732
  %8229 = vmatprep.subr.bf16.mxu0 %v6765
  %8230 = vmatpush1.bf16.msra.mxu0 %v6764
  %8231 = vmatprep.mubr.bf16.mxu0 %v1499
  %8232 = vmatmul.mubr.bf16.gmra.mrb[0].mxu0 %v1498
  %v8233 = vpop.f32.mrb[0].mxu0
  %v8234 = vadd.f32 %v8191, %v8233
  %v8235 = vpop.f32.mrb[0].mxu0
  %v8236 = vadd.f32 %v8193, %v8235
  %v8237 = vpop.f32.mrb[0].mxu0
  %v8238 = vadd.f32 %v8195, %v8237
  %v8239 = vpop.f32.mrb[0].mxu0
  %v8240 = vadd.f32 %v8197, %v8239
  %8241 = vdwg.mxu0
  %8242 = vmatprep.subr.bf16.mxu0 %v5775
  %8243 = vmatpush1.bf16.msra.mxu0 %v5774
  %8244 = vmatprep.subr.bf16.mxu0 %v5807
  %8245 = vmatpush1.bf16.msra.mxu0 %v5806
  %8246 = vmatprep.subr.bf16.mxu0 %v5839
  %8247 = vmatpush1.bf16.msra.mxu0 %v5838
  %8248 = vmatprep.subr.bf16.mxu0 %v5871
  %8249 = vmatpush1.bf16.msra.mxu0 %v5870
  %8250 = vmatprep.subr.bf16.mxu0 %v5903
  %8251 = vmatpush1.bf16.msra.mxu0 %v5902
  %8252 = vmatprep.subr.bf16.mxu0 %v5935
  %8253 = vmatpush1.bf16.msra.mxu0 %v5934
  %8254 = vmatprep.subr.bf16.mxu0 %v5967
  %8255 = vmatpush1.bf16.msra.mxu0 %v5966
  %8256 = vmatprep.subr.bf16.mxu0 %v5999
  %8257 = vmatpush1.bf16.msra.mxu0 %v5998
  %8258 = vmatprep.subr.bf16.mxu0 %v6031
  %8259 = vmatpush1.bf16.msra.mxu0 %v6030
  %8260 = vmatprep.subr.bf16.mxu0 %v6063
  %8261 = vmatpush1.bf16.msra.mxu0 %v6062
  %8262 = vmatprep.subr.bf16.mxu0 %v6095
  %8263 = vmatpush1.bf16.msra.mxu0 %v6094
  %8264 = vmatprep.subr.bf16.mxu0 %v6127
  %8265 = vmatpush1.bf16.msra.mxu0 %v6126
  %8266 = vmatprep.subr.bf16.mxu0 %v6159
  %8267 = vmatpush1.bf16.msra.mxu0 %v6158
  %8268 = vmatprep.subr.bf16.mxu0 %v6191
  %8269 = vmatpush1.bf16.msra.mxu0 %v6190
  %8270 = vmatprep.subr.bf16.mxu0 %v6223
  %8271 = vmatpush1.bf16.msra.mxu0 %v6222
  %8272 = vmatprep.subr.bf16.mxu0 %v6255
  %8273 = vmatpush1.bf16.msra.mxu0 %v6254
  %8274 = vmatprep.mubr.bf16.mxu0 %v1497
  %8275 = vmatmul.mubr.bf16.gmra.mrb[0].mxu0 %v1496
  %v8276 = vpop.f32.mrb[0].mxu0
  %v8277 = vadd.f32 %v2575, %v8276
  %v8278 = vpop.f32.mrb[0].mxu0
  %v8279 = vadd.f32 %v2579, %v8278
  %v8280 = vpop.f32.mrb[0].mxu0
  %v8281 = vadd.f32 %v2575, %v8280
  %v8282 = vpop.f32.mrb[0].mxu0
  %v8283 = vadd.f32 %v2579, %v8282
  %8284 = vdwg.mxu0
  %8285 = vmatprep.subr.bf16.mxu0 %v6287
  %8286 = vmatpush1.bf16.msra.mxu0 %v6286
  %8287 = vmatprep.subr.bf16.mxu0 %v6319
  %8288 = vmatpush1.bf16.msra.mxu0 %v6318
  %8289 = vmatprep.subr.bf16.mxu0 %v6351
  %8290 = vmatpush1.bf16.msra.mxu0 %v6350
  %8291 = vmatprep.subr.bf16.mxu0 %v6383
  %8292 = vmatpush1.bf16.msra.mxu0 %v6382
  %8293 = vmatprep.subr.bf16.mxu0 %v6415
  %8294 = vmatpush1.bf16.msra.mxu0 %v6414
  %8295 = vmatprep.subr.bf16.mxu0 %v6447
  %8296 = vmatpush1.bf16.msra.mxu0 %v6446
  %8297 = vmatprep.subr.bf16.mxu0 %v6479
  %8298 = vmatpush1.bf16.msra.mxu0 %v6478
  %8299 = vmatprep.subr.bf16.mxu0 %v6511
  %8300 = vmatpush1.bf16.msra.mxu0 %v6510
  %8301 = vmatprep.subr.bf16.mxu0 %v6543
  %8302 = vmatpush1.bf16.msra.mxu0 %v6542
  %8303 = vmatprep.subr.bf16.mxu0 %v6575
  %8304 = vmatpush1.bf16.msra.mxu0 %v6574
  %8305 = vmatprep.subr.bf16.mxu0 %v6607
  %8306 = vmatpush1.bf16.msra.mxu0 %v6606
  %8307 = vmatprep.subr.bf16.mxu0 %v6639
  %8308 = vmatpush1.bf16.msra.mxu0 %v6638
  %8309 = vmatprep.subr.bf16.mxu0 %v6671
  %8310 = vmatpush1.bf16.msra.mxu0 %v6670
  %8311 = vmatprep.subr.bf16.mxu0 %v6703
  %8312 = vmatpush1.bf16.msra.mxu0 %v6702
  %8313 = vmatprep.subr.bf16.mxu0 %v6735
  %8314 = vmatpush1.bf16.msra.mxu0 %v6734
  %8315 = vmatprep.subr.bf16.mxu0 %v6767
  %8316 = vmatpush1.bf16.msra.mxu0 %v6766
  %8317 = vmatprep.mubr.bf16.mxu0 %v1499
  %8318 = vmatmul.mubr.bf16.gmra.mrb[0].mxu0 %v1498
  %v8319 = vpop.f32.mrb[0].mxu0
  %v8320 = vadd.f32 %v8277, %v8319
  %v8321 = vpop.f32.mrb[0].mxu0
  %v8322 = vadd.f32 %v8279, %v8321
  %v8323 = vpop.f32.mrb[0].mxu0
  %v8324 = vadd.f32 %v8281, %v8323
  %v8325 = vpop.f32.mrb[0].mxu0
  %v8326 = vadd.f32 %v8283, %v8325
  %8327 = vdwg.mxu0
  %8328 = vmatprep.subr.bf16.mxu0 %v5777
  %8329 = vmatpush1.bf16.msra.mxu0 %v5776
  %8330 = vmatprep.subr.bf16.mxu0 %v5809
  %8331 = vmatpush1.bf16.msra.mxu0 %v5808
  %8332 = vmatprep.subr.bf16.mxu0 %v5841
  %8333 = vmatpush1.bf16.msra.mxu0 %v5840
  %8334 = vmatprep.subr.bf16.mxu0 %v5873
  %8335 = vmatpush1.bf16.msra.mxu0 %v5872
  %8336 = vmatprep.subr.bf16.mxu0 %v5905
  %8337 = vmatpush1.bf16.msra.mxu0 %v5904
  %8338 = vmatprep.subr.bf16.mxu0 %v5937
  %8339 = vmatpush1.bf16.msra.mxu0 %v5936
  %8340 = vmatprep.subr.bf16.mxu0 %v5969
  %8341 = vmatpush1.bf16.msra.mxu0 %v5968
  %8342 = vmatprep.subr.bf16.mxu0 %v6001
  %8343 = vmatpush1.bf16.msra.mxu0 %v6000
  %8344 = vmatprep.subr.bf16.mxu0 %v6033
  %8345 = vmatpush1.bf16.msra.mxu0 %v6032
  %8346 = vmatprep.subr.bf16.mxu0 %v6065
  %8347 = vmatpush1.bf16.msra.mxu0 %v6064
  %8348 = vmatprep.subr.bf16.mxu0 %v6097
  %8349 = vmatpush1.bf16.msra.mxu0 %v6096
  %8350 = vmatprep.subr.bf16.mxu0 %v6129
  %8351 = vmatpush1.bf16.msra.mxu0 %v6128
  %8352 = vmatprep.subr.bf16.mxu0 %v6161
  %8353 = vmatpush1.bf16.msra.mxu0 %v6160
  %8354 = vmatprep.subr.bf16.mxu0 %v6193
  %8355 = vmatpush1.bf16.msra.mxu0 %v6192
  %8356 = vmatprep.subr.bf16.mxu0 %v6225
  %8357 = vmatpush1.bf16.msra.mxu0 %v6224
  %8358 = vmatprep.subr.bf16.mxu0 %v6257
  %8359 = vmatpush1.bf16.msra.mxu0 %v6256
  %8360 = vmatprep.mubr.bf16.mxu0 %v1497
  %8361 = vmatmul.mubr.bf16.gmra.mrb[0].mxu0 %v1496
  %v8362 = vpop.f32.mrb[0].mxu0
  %v8363 = vadd.f32 %v2583, %v8362
  %v8364 = vpop.f32.mrb[0].mxu0
  %v8365 = vadd.f32 %v2587, %v8364
  %v8366 = vpop.f32.mrb[0].mxu0
  %v8367 = vadd.f32 %v2583, %v8366
  %v8368 = vpop.f32.mrb[0].mxu0
  %v8369 = vadd.f32 %v2587, %v8368
  %8370 = vdwg.mxu0
  %8371 = vmatprep.subr.bf16.mxu0 %v6289
  %8372 = vmatpush1.bf16.msra.mxu0 %v6288
  %8373 = vmatprep.subr.bf16.mxu0 %v6321
  %8374 = vmatpush1.bf16.msra.mxu0 %v6320
  %8375 = vmatprep.subr.bf16.mxu0 %v6353
  %8376 = vmatpush1.bf16.msra.mxu0 %v6352
  %8377 = vmatprep.subr.bf16.mxu0 %v6385
  %8378 = vmatpush1.bf16.msra.mxu0 %v6384
  %8379 = vmatprep.subr.bf16.mxu0 %v6417
  %8380 = vmatpush1.bf16.msra.mxu0 %v6416
  %8381 = vmatprep.subr.bf16.mxu0 %v6449
  %8382 = vmatpush1.bf16.msra.mxu0 %v6448
  %8383 = vmatprep.subr.bf16.mxu0 %v6481
  %8384 = vmatpush1.bf16.msra.mxu0 %v6480
  %8385 = vmatprep.subr.bf16.mxu0 %v6513
  %8386 = vmatpush1.bf16.msra.mxu0 %v6512
  %8387 = vmatprep.subr.bf16.mxu0 %v6545
  %8388 = vmatpush1.bf16.msra.mxu0 %v6544
  %8389 = vmatprep.subr.bf16.mxu0 %v6577
  %8390 = vmatpush1.bf16.msra.mxu0 %v6576
  %8391 = vmatprep.subr.bf16.mxu0 %v6609
  %8392 = vmatpush1.bf16.msra.mxu0 %v6608
  %8393 = vmatprep.subr.bf16.mxu0 %v6641
  %8394 = vmatpush1.bf16.msra.mxu0 %v6640
  %8395 = vmatprep.subr.bf16.mxu0 %v6673
  %8396 = vmatpush1.bf16.msra.mxu0 %v6672
  %8397 = vmatprep.subr.bf16.mxu0 %v6705
  %8398 = vmatpush1.bf16.msra.mxu0 %v6704
  %8399 = vmatprep.subr.bf16.mxu0 %v6737
  %8400 = vmatpush1.bf16.msra.mxu0 %v6736
  %8401 = vmatprep.subr.bf16.mxu0 %v6769
  %8402 = vmatpush1.bf16.msra.mxu0 %v6768
  %8403 = vmatprep.mubr.bf16.mxu0 %v1499
  %8404 = vmatmul.mubr.bf16.gmra.mrb[0].mxu0 %v1498
  %v8405 = vpop.f32.mrb[0].mxu0
  %v8406 = vadd.f32 %v8363, %v8405
  %v8407 = vpop.f32.mrb[0].mxu0
  %v8408 = vadd.f32 %v8365, %v8407
  %v8409 = vpop.f32.mrb[0].mxu0
  %v8410 = vadd.f32 %v8367, %v8409
  %v8411 = vpop.f32.mrb[0].mxu0
  %v8412 = vadd.f32 %v8369, %v8411
  %8413 = vdwg.mxu0
  %8414 = vmatprep.subr.bf16.mxu0 %v5779
  %8415 = vmatpush1.bf16.msra.mxu0 %v5778
  %8416 = vmatprep.subr.bf16.mxu0 %v5811
  %8417 = vmatpush1.bf16.msra.mxu0 %v5810
  %8418 = vmatprep.subr.bf16.mxu0 %v5843
  %8419 = vmatpush1.bf16.msra.mxu0 %v5842
  %8420 = vmatprep.subr.bf16.mxu0 %v5875
  %8421 = vmatpush1.bf16.msra.mxu0 %v5874
  %8422 = vmatprep.subr.bf16.mxu0 %v5907
  %8423 = vmatpush1.bf16.msra.mxu0 %v5906
  %8424 = vmatprep.subr.bf16.mxu0 %v5939
  %8425 = vmatpush1.bf16.msra.mxu0 %v5938
  %8426 = vmatprep.subr.bf16.mxu0 %v5971
  %8427 = vmatpush1.bf16.msra.mxu0 %v5970
  %8428 = vmatprep.subr.bf16.mxu0 %v6003
  %8429 = vmatpush1.bf16.msra.mxu0 %v6002
  %8430 = vmatprep.subr.bf16.mxu0 %v6035
  %8431 = vmatpush1.bf16.msra.mxu0 %v6034
  %8432 = vmatprep.subr.bf16.mxu0 %v6067
  %8433 = vmatpush1.bf16.msra.mxu0 %v6066
  %8434 = vmatprep.subr.bf16.mxu0 %v6099
  %8435 = vmatpush1.bf16.msra.mxu0 %v6098
  %8436 = vmatprep.subr.bf16.mxu0 %v6131
  %8437 = vmatpush1.bf16.msra.mxu0 %v6130
  %8438 = vmatprep.subr.bf16.mxu0 %v6163
  %8439 = vmatpush1.bf16.msra.mxu0 %v6162
  %8440 = vmatprep.subr.bf16.mxu0 %v6195
  %8441 = vmatpush1.bf16.msra.mxu0 %v6194
  %8442 = vmatprep.subr.bf16.mxu0 %v6227
  %8443 = vmatpush1.bf16.msra.mxu0 %v6226
  %8444 = vmatprep.subr.bf16.mxu0 %v6259
  %8445 = vmatpush1.bf16.msra.mxu0 %v6258
  %8446 = vmatprep.mubr.bf16.mxu0 %v1497
  %8447 = vmatmul.mubr.bf16.gmra.mrb[0].mxu0 %v1496
  %v8448 = vpop.f32.mrb[0].mxu0
  %v8449 = vadd.f32 %v2591, %v8448
  %v8450 = vpop.f32.mrb[0].mxu0
  %v8451 = vadd.f32 %v2595, %v8450
  %v8452 = vpop.f32.mrb[0].mxu0
  %v8453 = vadd.f32 %v2591, %v8452
  %v8454 = vpop.f32.mrb[0].mxu0
  %v8455 = vadd.f32 %v2595, %v8454
  %8456 = vdwg.mxu0
  %8457 = vmatprep.subr.bf16.mxu0 %v6291
  %8458 = vmatpush1.bf16.msra.mxu0 %v6290
  %8459 = vmatprep.subr.bf16.mxu0 %v6323
  %8460 = vmatpush1.bf16.msra.mxu0 %v6322
  %8461 = vmatprep.subr.bf16.mxu0 %v6355
  %8462 = vmatpush1.bf16.msra.mxu0 %v6354
  %8463 = vmatprep.subr.bf16.mxu0 %v6387
  %8464 = vmatpush1.bf16.msra.mxu0 %v6386
  %8465 = vmatprep.subr.bf16.mxu0 %v6419
  %8466 = vmatpush1.bf16.msra.mxu0 %v6418
  %8467 = vmatprep.subr.bf16.mxu0 %v6451
  %8468 = vmatpush1.bf16.msra.mxu0 %v6450
  %8469 = vmatprep.subr.bf16.mxu0 %v6483
  %8470 = vmatpush1.bf16.msra.mxu0 %v6482
  %8471 = vmatprep.subr.bf16.mxu0 %v6515
  %8472 = vmatpush1.bf16.msra.mxu0 %v6514
  %8473 = vmatprep.subr.bf16.mxu0 %v6547
  %8474 = vmatpush1.bf16.msra.mxu0 %v6546
  %8475 = vmatprep.subr.bf16.mxu0 %v6579
  %8476 = vmatpush1.bf16.msra.mxu0 %v6578
  %8477 = vmatprep.subr.bf16.mxu0 %v6611
  %8478 = vmatpush1.bf16.msra.mxu0 %v6610
  %8479 = vmatprep.subr.bf16.mxu0 %v6643
  %8480 = vmatpush1.bf16.msra.mxu0 %v6642
  %8481 = vmatprep.subr.bf16.mxu0 %v6675
  %8482 = vmatpush1.bf16.msra.mxu0 %v6674
  %8483 = vmatprep.subr.bf16.mxu0 %v6707
  %8484 = vmatpush1.bf16.msra.mxu0 %v6706
  %8485 = vmatprep.subr.bf16.mxu0 %v6739
  %8486 = vmatpush1.bf16.msra.mxu0 %v6738
  %8487 = vmatprep.subr.bf16.mxu0 %v6771
  %8488 = vmatpush1.bf16.msra.mxu0 %v6770
  %8489 = vmatprep.mubr.bf16.mxu0 %v1499
  %8490 = vmatmul.mubr.bf16.gmra.mrb[0].mxu0 %v1498
  %v8491 = vpop.f32.mrb[0].mxu0
  %v8492 = vadd.f32 %v8449, %v8491
  %v8493 = vpop.f32.mrb[0].mxu0
  %v8494 = vadd.f32 %v8451, %v8493
  %v8495 = vpop.f32.mrb[0].mxu0
  %v8496 = vadd.f32 %v8453, %v8495
  %v8497 = vpop.f32.mrb[0].mxu0
  %v8498 = vadd.f32 %v8455, %v8497
  %8499 = vdwg.mxu0
  %8500 = vmatprep.subr.bf16.mxu0 %v5781
  %8501 = vmatpush1.bf16.msra.mxu0 %v5780
  %8502 = vmatprep.subr.bf16.mxu0 %v5813
  %8503 = vmatpush1.bf16.msra.mxu0 %v5812
  %8504 = vmatprep.subr.bf16.mxu0 %v5845
  %8505 = vmatpush1.bf16.msra.mxu0 %v5844
  %8506 = vmatprep.subr.bf16.mxu0 %v5877
  %8507 = vmatpush1.bf16.msra.mxu0 %v5876
  %8508 = vmatprep.subr.bf16.mxu0 %v5909
  %8509 = vmatpush1.bf16.msra.mxu0 %v5908
  %8510 = vmatprep.subr.bf16.mxu0 %v5941
  %8511 = vmatpush1.bf16.msra.mxu0 %v5940
  %8512 = vmatprep.subr.bf16.mxu0 %v5973
  %8513 = vmatpush1.bf16.msra.mxu0 %v5972
  %8514 = vmatprep.subr.bf16.mxu0 %v6005
  %8515 = vmatpush1.bf16.msra.mxu0 %v6004
  %8516 = vmatprep.subr.bf16.mxu0 %v6037
  %8517 = vmatpush1.bf16.msra.mxu0 %v6036
  %8518 = vmatprep.subr.bf16.mxu0 %v6069
  %8519 = vmatpush1.bf16.msra.mxu0 %v6068
  %8520 = vmatprep.subr.bf16.mxu0 %v6101
  %8521 = vmatpush1.bf16.msra.mxu0 %v6100
  %8522 = vmatprep.subr.bf16.mxu0 %v6133
  %8523 = vmatpush1.bf16.msra.mxu0 %v6132
  %8524 = vmatprep.subr.bf16.mxu0 %v6165
  %8525 = vmatpush1.bf16.msra.mxu0 %v6164
  %8526 = vmatprep.subr.bf16.mxu0 %v6197
  %8527 = vmatpush1.bf16.msra.mxu0 %v6196
  %8528 = vmatprep.subr.bf16.mxu0 %v6229
  %8529 = vmatpush1.bf16.msra.mxu0 %v6228
  %8530 = vmatprep.subr.bf16.mxu0 %v6261
  %8531 = vmatpush1.bf16.msra.mxu0 %v6260
  %8532 = vmatprep.mubr.bf16.mxu0 %v1497
  %8533 = vmatmul.mubr.bf16.gmra.mrb[0].mxu0 %v1496
  %v8534 = vpop.f32.mrb[0].mxu0
  %v8535 = vadd.f32 %v2599, %v8534
  %v8536 = vpop.f32.mrb[0].mxu0
  %v8537 = vadd.f32 %v2603, %v8536
  %v8538 = vpop.f32.mrb[0].mxu0
  %v8539 = vadd.f32 %v2599, %v8538
  %v8540 = vpop.f32.mrb[0].mxu0
  %v8541 = vadd.f32 %v2603, %v8540
  %8542 = vdwg.mxu0
  %8543 = vmatprep.subr.bf16.mxu0 %v6293
  %8544 = vmatpush1.bf16.msra.mxu0 %v6292
  %8545 = vmatprep.subr.bf16.mxu0 %v6325
  %8546 = vmatpush1.bf16.msra.mxu0 %v6324
  %8547 = vmatprep.subr.bf16.mxu0 %v6357
  %8548 = vmatpush1.bf16.msra.mxu0 %v6356
  %8549 = vmatprep.subr.bf16.mxu0 %v6389
  %8550 = vmatpush1.bf16.msra.mxu0 %v6388
  %8551 = vmatprep.subr.bf16.mxu0 %v6421
  %8552 = vmatpush1.bf16.msra.mxu0 %v6420
  %8553 = vmatprep.subr.bf16.mxu0 %v6453
  %8554 = vmatpush1.bf16.msra.mxu0 %v6452
  %8555 = vmatprep.subr.bf16.mxu0 %v6485
  %8556 = vmatpush1.bf16.msra.mxu0 %v6484
  %8557 = vmatprep.subr.bf16.mxu0 %v6517
  %8558 = vmatpush1.bf16.msra.mxu0 %v6516
  %8559 = vmatprep.subr.bf16.mxu0 %v6549
  %8560 = vmatpush1.bf16.msra.mxu0 %v6548
  %8561 = vmatprep.subr.bf16.mxu0 %v6581
  %8562 = vmatpush1.bf16.msra.mxu0 %v6580
  %8563 = vmatprep.subr.bf16.mxu0 %v6613
  %8564 = vmatpush1.bf16.msra.mxu0 %v6612
  %8565 = vmatprep.subr.bf16.mxu0 %v6645
  %8566 = vmatpush1.bf16.msra.mxu0 %v6644
  %8567 = vmatprep.subr.bf16.mxu0 %v6677
  %8568 = vmatpush1.bf16.msra.mxu0 %v6676
  %8569 = vmatprep.subr.bf16.mxu0 %v6709
  %8570 = vmatpush1.bf16.msra.mxu0 %v6708
  %8571 = vmatprep.subr.bf16.mxu0 %v6741
  %8572 = vmatpush1.bf16.msra.mxu0 %v6740
  %8573 = vmatprep.subr.bf16.mxu0 %v6773
  %8574 = vmatpush1.bf16.msra.mxu0 %v6772
  %8575 = vmatprep.mubr.bf16.mxu0 %v1499
  %8576 = vmatmul.mubr.bf16.gmra.mrb[0].mxu0 %v1498
  %v8577 = vpop.f32.mrb[0].mxu0
  %v8578 = vadd.f32 %v8535, %v8577
  %v8579 = vpop.f32.mrb[0].mxu0
  %v8580 = vadd.f32 %v8537, %v8579
  %v8581 = vpop.f32.mrb[0].mxu0
  %v8582 = vadd.f32 %v8539, %v8581
  %v8583 = vpop.f32.mrb[0].mxu0
  %v8584 = vadd.f32 %v8541, %v8583
  %8585 = vdwg.mxu0
  %8586 = vmatprep.subr.bf16.mxu0 %v5783
  %8587 = vmatpush1.bf16.msra.mxu0 %v5782
  %8588 = vmatprep.subr.bf16.mxu0 %v5815
  %8589 = vmatpush1.bf16.msra.mxu0 %v5814
  %8590 = vmatprep.subr.bf16.mxu0 %v5847
  %8591 = vmatpush1.bf16.msra.mxu0 %v5846
  %8592 = vmatprep.subr.bf16.mxu0 %v5879
  %8593 = vmatpush1.bf16.msra.mxu0 %v5878
  %8594 = vmatprep.subr.bf16.mxu0 %v5911
  %8595 = vmatpush1.bf16.msra.mxu0 %v5910
  %8596 = vmatprep.subr.bf16.mxu0 %v5943
  %8597 = vmatpush1.bf16.msra.mxu0 %v5942
  %8598 = vmatprep.subr.bf16.mxu0 %v5975
  %8599 = vmatpush1.bf16.msra.mxu0 %v5974
  %8600 = vmatprep.subr.bf16.mxu0 %v6007
  %8601 = vmatpush1.bf16.msra.mxu0 %v6006
  %8602 = vmatprep.subr.bf16.mxu0 %v6039
  %8603 = vmatpush1.bf16.msra.mxu0 %v6038
  %8604 = vmatprep.subr.bf16.mxu0 %v6071
  %8605 = vmatpush1.bf16.msra.mxu0 %v6070
  %8606 = vmatprep.subr.bf16.mxu0 %v6103
  %8607 = vmatpush1.bf16.msra.mxu0 %v6102
  %8608 = vmatprep.subr.bf16.mxu0 %v6135
  %8609 = vmatpush1.bf16.msra.mxu0 %v6134
  %8610 = vmatprep.subr.bf16.mxu0 %v6167
  %8611 = vmatpush1.bf16.msra.mxu0 %v6166
  %8612 = vmatprep.subr.bf16.mxu0 %v6199
  %8613 = vmatpush1.bf16.msra.mxu0 %v6198
  %8614 = vmatprep.subr.bf16.mxu0 %v6231
  %8615 = vmatpush1.bf16.msra.mxu0 %v6230
  %8616 = vmatprep.subr.bf16.mxu0 %v6263
  %8617 = vmatpush1.bf16.msra.mxu0 %v6262
  %8618 = vmatprep.mubr.bf16.mxu0 %v1497
  %8619 = vmatmul.mubr.bf16.gmra.mrb[0].mxu0 %v1496
  %v8620 = vpop.f32.mrb[0].mxu0
  %v8621 = vadd.f32 %v2607, %v8620
  %v8622 = vpop.f32.mrb[0].mxu0
  %v8623 = vadd.f32 %v2611, %v8622
  %v8624 = vpop.f32.mrb[0].mxu0
  %v8625 = vadd.f32 %v2607, %v8624
  %v8626 = vpop.f32.mrb[0].mxu0
  %v8627 = vadd.f32 %v2611, %v8626
  %8628 = vdwg.mxu0
  %8629 = vmatprep.subr.bf16.mxu0 %v6295
  %8630 = vmatpush1.bf16.msra.mxu0 %v6294
  %8631 = vmatprep.subr.bf16.mxu0 %v6327
  %8632 = vmatpush1.bf16.msra.mxu0 %v6326
  %8633 = vmatprep.subr.bf16.mxu0 %v6359
  %8634 = vmatpush1.bf16.msra.mxu0 %v6358
  %8635 = vmatprep.subr.bf16.mxu0 %v6391
  %8636 = vmatpush1.bf16.msra.mxu0 %v6390
  %8637 = vmatprep.subr.bf16.mxu0 %v6423
  %8638 = vmatpush1.bf16.msra.mxu0 %v6422
  %8639 = vmatprep.subr.bf16.mxu0 %v6455
  %8640 = vmatpush1.bf16.msra.mxu0 %v6454
  %8641 = vmatprep.subr.bf16.mxu0 %v6487
  %8642 = vmatpush1.bf16.msra.mxu0 %v6486
  %8643 = vmatprep.subr.bf16.mxu0 %v6519
  %8644 = vmatpush1.bf16.msra.mxu0 %v6518
  %8645 = vmatprep.subr.bf16.mxu0 %v6551
  %8646 = vmatpush1.bf16.msra.mxu0 %v6550
  %8647 = vmatprep.subr.bf16.mxu0 %v6583
  %8648 = vmatpush1.bf16.msra.mxu0 %v6582
  %8649 = vmatprep.subr.bf16.mxu0 %v6615
  %8650 = vmatpush1.bf16.msra.mxu0 %v6614
  %8651 = vmatprep.subr.bf16.mxu0 %v6647
  %8652 = vmatpush1.bf16.msra.mxu0 %v6646
  %8653 = vmatprep.subr.bf16.mxu0 %v6679
  %8654 = vmatpush1.bf16.msra.mxu0 %v6678
  %8655 = vmatprep.subr.bf16.mxu0 %v6711
  %8656 = vmatpush1.bf16.msra.mxu0 %v6710
  %8657 = vmatprep.subr.bf16.mxu0 %v6743
  %8658 = vmatpush1.bf16.msra.mxu0 %v6742
  %8659 = vmatprep.subr.bf16.mxu0 %v6775
  %8660 = vmatpush1.bf16.msra.mxu0 %v6774
  %8661 = vmatprep.mubr.bf16.mxu0 %v1499
  %8662 = vmatmul.mubr.bf16.gmra.mrb[0].mxu0 %v1498
  %v8663 = vpop.f32.mrb[0].mxu0
  %v8664 = vadd.f32 %v8621, %v8663
  %v8665 = vpop.f32.mrb[0].mxu0
  %v8666 = vadd.f32 %v8623, %v8665
  %v8667 = vpop.f32.mrb[0].mxu0
  %v8668 = vadd.f32 %v8625, %v8667
  %v8669 = vpop.f32.mrb[0].mxu0
  %v8670 = vadd.f32 %v8627, %v8669
  %8671 = vdwg.mxu0
  %8672 = vmatprep.subr.bf16.mxu0 %v5785
  %8673 = vmatpush1.bf16.msra.mxu0 %v5784
  %8674 = vmatprep.subr.bf16.mxu0 %v5817
  %8675 = vmatpush1.bf16.msra.mxu0 %v5816
  %8676 = vmatprep.subr.bf16.mxu0 %v5849
  %8677 = vmatpush1.bf16.msra.mxu0 %v5848
  %8678 = vmatprep.subr.bf16.mxu0 %v5881
  %8679 = vmatpush1.bf16.msra.mxu0 %v5880
  %8680 = vmatprep.subr.bf16.mxu0 %v5913
  %8681 = vmatpush1.bf16.msra.mxu0 %v5912
  %8682 = vmatprep.subr.bf16.mxu0 %v5945
  %8683 = vmatpush1.bf16.msra.mxu0 %v5944
  %8684 = vmatprep.subr.bf16.mxu0 %v5977
  %8685 = vmatpush1.bf16.msra.mxu0 %v5976
  %8686 = vmatprep.subr.bf16.mxu0 %v6009
  %8687 = vmatpush1.bf16.msra.mxu0 %v6008
  %8688 = vmatprep.subr.bf16.mxu0 %v6041
  %8689 = vmatpush1.bf16.msra.mxu0 %v6040
  %8690 = vmatprep.subr.bf16.mxu0 %v6073
  %8691 = vmatpush1.bf16.msra.mxu0 %v6072
  %8692 = vmatprep.subr.bf16.mxu0 %v6105
  %8693 = vmatpush1.bf16.msra.mxu0 %v6104
  %8694 = vmatprep.subr.bf16.mxu0 %v6137
  %8695 = vmatpush1.bf16.msra.mxu0 %v6136
  %8696 = vmatprep.subr.bf16.mxu0 %v6169
  %8697 = vmatpush1.bf16.msra.mxu0 %v6168
  %8698 = vmatprep.subr.bf16.mxu0 %v6201
  %8699 = vmatpush1.bf16.msra.mxu0 %v6200
  %8700 = vmatprep.subr.bf16.mxu0 %v6233
  %8701 = vmatpush1.bf16.msra.mxu0 %v6232
  %8702 = vmatprep.subr.bf16.mxu0 %v6265
  %8703 = vmatpush1.bf16.msra.mxu0 %v6264
  %8704 = vmatprep.mubr.bf16.mxu0 %v1497
  %8705 = vmatmul.mubr.bf16.gmra.mrb[0].mxu0 %v1496
  %v8706 = vpop.f32.mrb[0].mxu0
  %v8707 = vadd.f32 %v2615, %v8706
  %v8708 = vpop.f32.mrb[0].mxu0
  %v8709 = vadd.f32 %v2619, %v8708
  %v8710 = vpop.f32.mrb[0].mxu0
  %v8711 = vadd.f32 %v2615, %v8710
  %v8712 = vpop.f32.mrb[0].mxu0
  %v8713 = vadd.f32 %v2619, %v8712
  %8714 = vdwg.mxu0
  %8715 = vmatprep.subr.bf16.mxu0 %v6297
  %8716 = vmatpush1.bf16.msra.mxu0 %v6296
  %8717 = vmatprep.subr.bf16.mxu0 %v6329
  %8718 = vmatpush1.bf16.msra.mxu0 %v6328
  %8719 = vmatprep.subr.bf16.mxu0 %v6361
  %8720 = vmatpush1.bf16.msra.mxu0 %v6360
  %8721 = vmatprep.subr.bf16.mxu0 %v6393
  %8722 = vmatpush1.bf16.msra.mxu0 %v6392
  %8723 = vmatprep.subr.bf16.mxu0 %v6425
  %8724 = vmatpush1.bf16.msra.mxu0 %v6424
  %8725 = vmatprep.subr.bf16.mxu0 %v6457
  %8726 = vmatpush1.bf16.msra.mxu0 %v6456
  %8727 = vmatprep.subr.bf16.mxu0 %v6489
  %8728 = vmatpush1.bf16.msra.mxu0 %v6488
  %8729 = vmatprep.subr.bf16.mxu0 %v6521
  %8730 = vmatpush1.bf16.msra.mxu0 %v6520
  %8731 = vmatprep.subr.bf16.mxu0 %v6553
  %8732 = vmatpush1.bf16.msra.mxu0 %v6552
  %8733 = vmatprep.subr.bf16.mxu0 %v6585
  %8734 = vmatpush1.bf16.msra.mxu0 %v6584
  %8735 = vmatprep.subr.bf16.mxu0 %v6617
  %8736 = vmatpush1.bf16.msra.mxu0 %v6616
  %8737 = vmatprep.subr.bf16.mxu0 %v6649
  %8738 = vmatpush1.bf16.msra.mxu0 %v6648
  %8739 = vmatprep.subr.bf16.mxu0 %v6681
  %8740 = vmatpush1.bf16.msra.mxu0 %v6680
  %8741 = vmatprep.subr.bf16.mxu0 %v6713
  %8742 = vmatpush1.bf16.msra.mxu0 %v6712
  %8743 = vmatprep.subr.bf16.mxu0 %v6745
  %8744 = vmatpush1.bf16.msra.mxu0 %v6744
  %8745 = vmatprep.subr.bf16.mxu0 %v6777
  %8746 = vmatpush1.bf16.msra.mxu0 %v6776
  %8747 = vmatprep.mubr.bf16.mxu0 %v1499
  %8748 = vmatmul.mubr.bf16.gmra.mrb[0].mxu0 %v1498
  %v8749 = vpop.f32.mrb[0].mxu0
  %v8750 = vadd.f32 %v8707, %v8749
  %v8751 = vpop.f32.mrb[0].mxu0
  %v8752 = vadd.f32 %v8709, %v8751
  %v8753 = vpop.f32.mrb[0].mxu0
  %v8754 = vadd.f32 %v8711, %v8753
  %v8755 = vpop.f32.mrb[0].mxu0
  %v8756 = vadd.f32 %v8713, %v8755
  %8757 = vdwg.mxu0
  %8758 = vmatprep.subr.bf16.mxu0 %v5787
  %8759 = vmatpush1.bf16.msra.mxu0 %v5786
  %8760 = vmatprep.subr.bf16.mxu0 %v5819
  %8761 = vmatpush1.bf16.msra.mxu0 %v5818
  %8762 = vmatprep.subr.bf16.mxu0 %v5851
  %8763 = vmatpush1.bf16.msra.mxu0 %v5850
  %8764 = vmatprep.subr.bf16.mxu0 %v5883
  %8765 = vmatpush1.bf16.msra.mxu0 %v5882
  %8766 = vmatprep.subr.bf16.mxu0 %v5915
  %8767 = vmatpush1.bf16.msra.mxu0 %v5914
  %8768 = vmatprep.subr.bf16.mxu0 %v5947
  %8769 = vmatpush1.bf16.msra.mxu0 %v5946
  %8770 = vmatprep.subr.bf16.mxu0 %v5979
  %8771 = vmatpush1.bf16.msra.mxu0 %v5978
  %8772 = vmatprep.subr.bf16.mxu0 %v6011
  %8773 = vmatpush1.bf16.msra.mxu0 %v6010
  %8774 = vmatprep.subr.bf16.mxu0 %v6043
  %8775 = vmatpush1.bf16.msra.mxu0 %v6042
  %8776 = vmatprep.subr.bf16.mxu0 %v6075
  %8777 = vmatpush1.bf16.msra.mxu0 %v6074
  %8778 = vmatprep.subr.bf16.mxu0 %v6107
  %8779 = vmatpush1.bf16.msra.mxu0 %v6106
  %8780 = vmatprep.subr.bf16.mxu0 %v6139
  %8781 = vmatpush1.bf16.msra.mxu0 %v6138
  %8782 = vmatprep.subr.bf16.mxu0 %v6171
  %8783 = vmatpush1.bf16.msra.mxu0 %v6170
  %8784 = vmatprep.subr.bf16.mxu0 %v6203
  %8785 = vmatpush1.bf16.msra.mxu0 %v6202
  %8786 = vmatprep.subr.bf16.mxu0 %v6235
  %8787 = vmatpush1.bf16.msra.mxu0 %v6234
  %8788 = vmatprep.subr.bf16.mxu0 %v6267
  %8789 = vmatpush1.bf16.msra.mxu0 %v6266
  %8790 = vmatprep.mubr.bf16.mxu0 %v1497
  %8791 = vmatmul.mubr.bf16.gmra.mrb[0].mxu0 %v1496
  %v8792 = vpop.f32.mrb[0].mxu0
  %v8793 = vadd.f32 %v2623, %v8792
  %v8794 = vpop.f32.mrb[0].mxu0
  %v8795 = vadd.f32 %v2627, %v8794
  %v8796 = vpop.f32.mrb[0].mxu0
  %v8797 = vadd.f32 %v2623, %v8796
  %v8798 = vpop.f32.mrb[0].mxu0
  %v8799 = vadd.f32 %v2627, %v8798
  %8800 = vdwg.mxu0
  %8801 = vmatprep.subr.bf16.mxu0 %v6299
  %8802 = vmatpush1.bf16.msra.mxu0 %v6298
  %8803 = vmatprep.subr.bf16.mxu0 %v6331
  %8804 = vmatpush1.bf16.msra.mxu0 %v6330
  %8805 = vmatprep.subr.bf16.mxu0 %v6363
  %8806 = vmatpush1.bf16.msra.mxu0 %v6362
  %8807 = vmatprep.subr.bf16.mxu0 %v6395
  %8808 = vmatpush1.bf16.msra.mxu0 %v6394
  %8809 = vmatprep.subr.bf16.mxu0 %v6427
  %8810 = vmatpush1.bf16.msra.mxu0 %v6426
  %8811 = vmatprep.subr.bf16.mxu0 %v6459
  %8812 = vmatpush1.bf16.msra.mxu0 %v6458
  %8813 = vmatprep.subr.bf16.mxu0 %v6491
  %8814 = vmatpush1.bf16.msra.mxu0 %v6490
  %8815 = vmatprep.subr.bf16.mxu0 %v6523
  %8816 = vmatpush1.bf16.msra.mxu0 %v6522
  %8817 = vmatprep.subr.bf16.mxu0 %v6555
  %8818 = vmatpush1.bf16.msra.mxu0 %v6554
  %8819 = vmatprep.subr.bf16.mxu0 %v6587
  %8820 = vmatpush1.bf16.msra.mxu0 %v6586
  %8821 = vmatprep.subr.bf16.mxu0 %v6619
  %8822 = vmatpush1.bf16.msra.mxu0 %v6618
  %8823 = vmatprep.subr.bf16.mxu0 %v6651
  %8824 = vmatpush1.bf16.msra.mxu0 %v6650
  %8825 = vmatprep.subr.bf16.mxu0 %v6683
  %8826 = vmatpush1.bf16.msra.mxu0 %v6682
  %8827 = vmatprep.subr.bf16.mxu0 %v6715
  %8828 = vmatpush1.bf16.msra.mxu0 %v6714
  %8829 = vmatprep.subr.bf16.mxu0 %v6747
  %8830 = vmatpush1.bf16.msra.mxu0 %v6746
  %8831 = vmatprep.subr.bf16.mxu0 %v6779
  %8832 = vmatpush1.bf16.msra.mxu0 %v6778
  %8833 = vmatprep.mubr.bf16.mxu0 %v1499
  %8834 = vmatmul.mubr.bf16.gmra.mrb[0].mxu0 %v1498
  %v8835 = vpop.f32.mrb[0].mxu0
  %v8836 = vadd.f32 %v8793, %v8835
  %v8837 = vpop.f32.mrb[0].mxu0
  %v8838 = vadd.f32 %v8795, %v8837
  %v8839 = vpop.f32.mrb[0].mxu0
  %v8840 = vadd.f32 %v8797, %v8839
  %v8841 = vpop.f32.mrb[0].mxu0
  %v8842 = vadd.f32 %v8799, %v8841
  %8843 = vdwg.mxu0
  %8844 = vmatprep.subr.bf16.mxu0 %v5789
  %8845 = vmatpush1.bf16.msra.mxu0 %v5788
  %8846 = vmatprep.subr.bf16.mxu0 %v5821
  %8847 = vmatpush1.bf16.msra.mxu0 %v5820
  %8848 = vmatprep.subr.bf16.mxu0 %v5853
  %8849 = vmatpush1.bf16.msra.mxu0 %v5852
  %8850 = vmatprep.subr.bf16.mxu0 %v5885
  %8851 = vmatpush1.bf16.msra.mxu0 %v5884
  %8852 = vmatprep.subr.bf16.mxu0 %v5917
  %8853 = vmatpush1.bf16.msra.mxu0 %v5916
  %8854 = vmatprep.subr.bf16.mxu0 %v5949
  %8855 = vmatpush1.bf16.msra.mxu0 %v5948
  %8856 = vmatprep.subr.bf16.mxu0 %v5981
  %8857 = vmatpush1.bf16.msra.mxu0 %v5980
  %8858 = vmatprep.subr.bf16.mxu0 %v6013
  %8859 = vmatpush1.bf16.msra.mxu0 %v6012
  %8860 = vmatprep.subr.bf16.mxu0 %v6045
  %8861 = vmatpush1.bf16.msra.mxu0 %v6044
  %8862 = vmatprep.subr.bf16.mxu0 %v6077
  %8863 = vmatpush1.bf16.msra.mxu0 %v6076
  %8864 = vmatprep.subr.bf16.mxu0 %v6109
  %8865 = vmatpush1.bf16.msra.mxu0 %v6108
  %8866 = vmatprep.subr.bf16.mxu0 %v6141
  %8867 = vmatpush1.bf16.msra.mxu0 %v6140
  %8868 = vmatprep.subr.bf16.mxu0 %v6173
  %8869 = vmatpush1.bf16.msra.mxu0 %v6172
  %8870 = vmatprep.subr.bf16.mxu0 %v6205
  %8871 = vmatpush1.bf16.msra.mxu0 %v6204
  %8872 = vmatprep.subr.bf16.mxu0 %v6237
  %8873 = vmatpush1.bf16.msra.mxu0 %v6236
  %8874 = vmatprep.subr.bf16.mxu0 %v6269
  %8875 = vmatpush1.bf16.msra.mxu0 %v6268
  %8876 = vmatprep.mubr.bf16.mxu0 %v1497
  %8877 = vmatmul.mubr.bf16.gmra.mrb[0].mxu0 %v1496
  %v8878 = vpop.f32.mrb[0].mxu0
  %v8879 = vadd.f32 %v2631, %v8878
  %v8880 = vpop.f32.mrb[0].mxu0
  %v8881 = vadd.f32 %v2635, %v8880
  %v8882 = vpop.f32.mrb[0].mxu0
  %v8883 = vadd.f32 %v2631, %v8882
  %v8884 = vpop.f32.mrb[0].mxu0
  %v8885 = vadd.f32 %v2635, %v8884
  %8886 = vdwg.mxu0
  %8887 = vmatprep.subr.bf16.mxu0 %v6301
  %8888 = vmatpush1.bf16.msra.mxu0 %v6300
  %8889 = vmatprep.subr.bf16.mxu0 %v6333
  %8890 = vmatpush1.bf16.msra.mxu0 %v6332
  %8891 = vmatprep.subr.bf16.mxu0 %v6365
  %8892 = vmatpush1.bf16.msra.mxu0 %v6364
  %8893 = vmatprep.subr.bf16.mxu0 %v6397
  %8894 = vmatpush1.bf16.msra.mxu0 %v6396
  %8895 = vmatprep.subr.bf16.mxu0 %v6429
  %8896 = vmatpush1.bf16.msra.mxu0 %v6428
  %8897 = vmatprep.subr.bf16.mxu0 %v6461
  %8898 = vmatpush1.bf16.msra.mxu0 %v6460
  %8899 = vmatprep.subr.bf16.mxu0 %v6493
  %8900 = vmatpush1.bf16.msra.mxu0 %v6492
  %8901 = vmatprep.subr.bf16.mxu0 %v6525
  %8902 = vmatpush1.bf16.msra.mxu0 %v6524
  %8903 = vmatprep.subr.bf16.mxu0 %v6557
  %8904 = vmatpush1.bf16.msra.mxu0 %v6556
  %8905 = vmatprep.subr.bf16.mxu0 %v6589
  %8906 = vmatpush1.bf16.msra.mxu0 %v6588
  %8907 = vmatprep.subr.bf16.mxu0 %v6621
  %8908 = vmatpush1.bf16.msra.mxu0 %v6620
  %8909 = vmatprep.subr.bf16.mxu0 %v6653
  %8910 = vmatpush1.bf16.msra.mxu0 %v6652
  %8911 = vmatprep.subr.bf16.mxu0 %v6685
  %8912 = vmatpush1.bf16.msra.mxu0 %v6684
  %8913 = vmatprep.subr.bf16.mxu0 %v6717
  %8914 = vmatpush1.bf16.msra.mxu0 %v6716
  %8915 = vmatprep.subr.bf16.mxu0 %v6749
  %8916 = vmatpush1.bf16.msra.mxu0 %v6748
  %8917 = vmatprep.subr.bf16.mxu0 %v6781
  %8918 = vmatpush1.bf16.msra.mxu0 %v6780
  %8919 = vmatprep.mubr.bf16.mxu0 %v1499
  %8920 = vmatmul.mubr.bf16.gmra.mrb[0].mxu0 %v1498
  %v8921 = vpop.f32.mrb[0].mxu0
  %v8922 = vadd.f32 %v8879, %v8921
  %v8923 = vpop.f32.mrb[0].mxu0
  %v8924 = vadd.f32 %v8881, %v8923
  %v8925 = vpop.f32.mrb[0].mxu0
  %v8926 = vadd.f32 %v8883, %v8925
  %v8927 = vpop.f32.mrb[0].mxu0
  %v8928 = vadd.f32 %v8885, %v8927
  %8929 = vdwg.mxu0
  %8930 = vmatprep.subr.bf16.mxu0 %v5791
  %8931 = vmatpush1.bf16.msra.mxu0 %v5790
  %8932 = vmatprep.subr.bf16.mxu0 %v5823
  %8933 = vmatpush1.bf16.msra.mxu0 %v5822
  %8934 = vmatprep.subr.bf16.mxu0 %v5855
  %8935 = vmatpush1.bf16.msra.mxu0 %v5854
  %8936 = vmatprep.subr.bf16.mxu0 %v5887
  %8937 = vmatpush1.bf16.msra.mxu0 %v5886
  %8938 = vmatprep.subr.bf16.mxu0 %v5919
  %8939 = vmatpush1.bf16.msra.mxu0 %v5918
  %8940 = vmatprep.subr.bf16.mxu0 %v5951
  %8941 = vmatpush1.bf16.msra.mxu0 %v5950
  %8942 = vmatprep.subr.bf16.mxu0 %v5983
  %8943 = vmatpush1.bf16.msra.mxu0 %v5982
  %8944 = vmatprep.subr.bf16.mxu0 %v6015
  %8945 = vmatpush1.bf16.msra.mxu0 %v6014
  %8946 = vmatprep.subr.bf16.mxu0 %v6047
  %8947 = vmatpush1.bf16.msra.mxu0 %v6046
  %8948 = vmatprep.subr.bf16.mxu0 %v6079
  %8949 = vmatpush1.bf16.msra.mxu0 %v6078
  %8950 = vmatprep.subr.bf16.mxu0 %v6111
  %8951 = vmatpush1.bf16.msra.mxu0 %v6110
  %8952 = vmatprep.subr.bf16.mxu0 %v6143
  %8953 = vmatpush1.bf16.msra.mxu0 %v6142
  %8954 = vmatprep.subr.bf16.mxu0 %v6175
  %8955 = vmatpush1.bf16.msra.mxu0 %v6174
  %8956 = vmatprep.subr.bf16.mxu0 %v6207
  %8957 = vmatpush1.bf16.msra.mxu0 %v6206
  %8958 = vmatprep.subr.bf16.mxu0 %v6239
  %8959 = vmatpush1.bf16.msra.mxu0 %v6238
  %8960 = vmatprep.subr.bf16.mxu0 %v6271
  %8961 = vmatpush1.bf16.msra.mxu0 %v6270
  %8962 = vmatprep.mubr.bf16.mxu0 %v1497
  %8963 = vmatmul.mubr.bf16.gmra.mrb[0].mxu0 %v1496
  %v8964 = vpop.f32.mrb[0].mxu0
  %v8965 = vadd.f32 %v2639, %v8964
  %v8966 = vpop.f32.mrb[0].mxu0
  %v8967 = vadd.f32 %v2643, %v8966
  %v8968 = vpop.f32.mrb[0].mxu0
  %v8969 = vadd.f32 %v2639, %v8968
  %v8970 = vpop.f32.mrb[0].mxu0
  %v8971 = vadd.f32 %v2643, %v8970
  %8972 = vdwg.mxu0
  %8973 = vmatprep.subr.bf16.mxu0 %v6303
  %8974 = vmatpush1.bf16.msra.mxu0 %v6302
  %8975 = vmatprep.subr.bf16.mxu0 %v6335
  %8976 = vmatpush1.bf16.msra.mxu0 %v6334
  %8977 = vmatprep.subr.bf16.mxu0 %v6367
  %8978 = vmatpush1.bf16.msra.mxu0 %v6366
  %8979 = vmatprep.subr.bf16.mxu0 %v6399
  %8980 = vmatpush1.bf16.msra.mxu0 %v6398
  %8981 = vmatprep.subr.bf16.mxu0 %v6431
  %8982 = vmatpush1.bf16.msra.mxu0 %v6430
  %8983 = vmatprep.subr.bf16.mxu0 %v6463
  %8984 = vmatpush1.bf16.msra.mxu0 %v6462
  %8985 = vmatprep.subr.bf16.mxu0 %v6495
  %8986 = vmatpush1.bf16.msra.mxu0 %v6494
  %8987 = vmatprep.subr.bf16.mxu0 %v6527
  %8988 = vmatpush1.bf16.msra.mxu0 %v6526
  %8989 = vmatprep.subr.bf16.mxu0 %v6559
  %8990 = vmatpush1.bf16.msra.mxu0 %v6558
  %8991 = vmatprep.subr.bf16.mxu0 %v6591
  %8992 = vmatpush1.bf16.msra.mxu0 %v6590
  %8993 = vmatprep.subr.bf16.mxu0 %v6623
  %8994 = vmatpush1.bf16.msra.mxu0 %v6622
  %8995 = vmatprep.subr.bf16.mxu0 %v6655
  %8996 = vmatpush1.bf16.msra.mxu0 %v6654
  %8997 = vmatprep.subr.bf16.mxu0 %v6687
  %8998 = vmatpush1.bf16.msra.mxu0 %v6686
  %8999 = vmatprep.subr.bf16.mxu0 %v6719
  %9000 = vmatpush1.bf16.msra.mxu0 %v6718
  %9001 = vmatprep.subr.bf16.mxu0 %v6751
  %9002 = vmatpush1.bf16.msra.mxu0 %v6750
  %9003 = vmatprep.subr.bf16.mxu0 %v6783
  %9004 = vmatpush1.bf16.msra.mxu0 %v6782
  %9005 = vmatprep.mubr.bf16.mxu0 %v1499
  %9006 = vmatmul.mubr.bf16.gmra.mrb[0].mxu0 %v1498
  %v9007 = vpop.f32.mrb[0].mxu0
  %v9008 = vadd.f32 %v8965, %v9007
  %v9009 = vpop.f32.mrb[0].mxu0
  %v9010 = vadd.f32 %v8967, %v9009
  %v9011 = vpop.f32.mrb[0].mxu0
  %v9012 = vadd.f32 %v8969, %v9011
  %v9013 = vpop.f32.mrb[0].mxu0
  %v9014 = vadd.f32 %v8971, %v9013
  %9015 = vdwg.mxu0
  %9016 = vmatprep.subr.bf16.mxu0 %v5793
  %9017 = vmatpush1.bf16.msra.mxu0 %v5792
  %9018 = vmatprep.subr.bf16.mxu0 %v5825
  %9019 = vmatpush1.bf16.msra.mxu0 %v5824
  %9020 = vmatprep.subr.bf16.mxu0 %v5857
  %9021 = vmatpush1.bf16.msra.mxu0 %v5856
  %9022 = vmatprep.subr.bf16.mxu0 %v5889
  %9023 = vmatpush1.bf16.msra.mxu0 %v5888
  %9024 = vmatprep.subr.bf16.mxu0 %v5921
  %9025 = vmatpush1.bf16.msra.mxu0 %v5920
  %9026 = vmatprep.subr.bf16.mxu0 %v5953
  %9027 = vmatpush1.bf16.msra.mxu0 %v5952
  %9028 = vmatprep.subr.bf16.mxu0 %v5985
  %9029 = vmatpush1.bf16.msra.mxu0 %v5984
  %9030 = vmatprep.subr.bf16.mxu0 %v6017
  %9031 = vmatpush1.bf16.msra.mxu0 %v6016
  %9032 = vmatprep.subr.bf16.mxu0 %v6049
  %9033 = vmatpush1.bf16.msra.mxu0 %v6048
  %9034 = vmatprep.subr.bf16.mxu0 %v6081
  %9035 = vmatpush1.bf16.msra.mxu0 %v6080
  %9036 = vmatprep.subr.bf16.mxu0 %v6113
  %9037 = vmatpush1.bf16.msra.mxu0 %v6112
  %9038 = vmatprep.subr.bf16.mxu0 %v6145
  %9039 = vmatpush1.bf16.msra.mxu0 %v6144
  %9040 = vmatprep.subr.bf16.mxu0 %v6177
  %9041 = vmatpush1.bf16.msra.mxu0 %v6176
  %9042 = vmatprep.subr.bf16.mxu0 %v6209
  %9043 = vmatpush1.bf16.msra.mxu0 %v6208
  %9044 = vmatprep.subr.bf16.mxu0 %v6241
  %9045 = vmatpush1.bf16.msra.mxu0 %v6240
  %9046 = vmatprep.subr.bf16.mxu0 %v6273
  %9047 = vmatpush1.bf16.msra.mxu0 %v6272
  %9048 = vmatprep.mubr.bf16.mxu0 %v1497
  %9049 = vmatmul.mubr.bf16.gmra.mrb[0].mxu0 %v1496
  %v9050 = vpop.f32.mrb[0].mxu0
  %v9051 = vadd.f32 %v2647, %v9050
  %v9052 = vpop.f32.mrb[0].mxu0
  %v9053 = vadd.f32 %v2651, %v9052
  %v9054 = vpop.f32.mrb[0].mxu0
  %v9055 = vadd.f32 %v2647, %v9054
  %v9056 = vpop.f32.mrb[0].mxu0
  %v9057 = vadd.f32 %v2651, %v9056
  %9058 = vdwg.mxu0
  %9059 = vmatprep.subr.bf16.mxu0 %v6305
  %9060 = vmatpush1.bf16.msra.mxu0 %v6304
  %9061 = vmatprep.subr.bf16.mxu0 %v6337
  %9062 = vmatpush1.bf16.msra.mxu0 %v6336
  %9063 = vmatprep.subr.bf16.mxu0 %v6369
  %9064 = vmatpush1.bf16.msra.mxu0 %v6368
  %9065 = vmatprep.subr.bf16.mxu0 %v6401
  %9066 = vmatpush1.bf16.msra.mxu0 %v6400
  %9067 = vmatprep.subr.bf16.mxu0 %v6433
  %9068 = vmatpush1.bf16.msra.mxu0 %v6432
  %9069 = vmatprep.subr.bf16.mxu0 %v6465
  %9070 = vmatpush1.bf16.msra.mxu0 %v6464
  %9071 = vmatprep.subr.bf16.mxu0 %v6497
  %9072 = vmatpush1.bf16.msra.mxu0 %v6496
  %9073 = vmatprep.subr.bf16.mxu0 %v6529
  %9074 = vmatpush1.bf16.msra.mxu0 %v6528
  %9075 = vmatprep.subr.bf16.mxu0 %v6561
  %9076 = vmatpush1.bf16.msra.mxu0 %v6560
  %9077 = vmatprep.subr.bf16.mxu0 %v6593
  %9078 = vmatpush1.bf16.msra.mxu0 %v6592
  %9079 = vmatprep.subr.bf16.mxu0 %v6625
  %9080 = vmatpush1.bf16.msra.mxu0 %v6624
  %9081 = vmatprep.subr.bf16.mxu0 %v6657
  %9082 = vmatpush1.bf16.msra.mxu0 %v6656
  %9083 = vmatprep.subr.bf16.mxu0 %v6689
  %9084 = vmatpush1.bf16.msra.mxu0 %v6688
  %9085 = vmatprep.subr.bf16.mxu0 %v6721
  %9086 = vmatpush1.bf16.msra.mxu0 %v6720
  %9087 = vmatprep.subr.bf16.mxu0 %v6753
  %9088 = vmatpush1.bf16.msra.mxu0 %v6752
  %9089 = vmatprep.subr.bf16.mxu0 %v6785
  %9090 = vmatpush1.bf16.msra.mxu0 %v6784
  %9091 = vmatprep.mubr.bf16.mxu0 %v1499
  %9092 = vmatmul.mubr.bf16.gmra.mrb[0].mxu0 %v1498
  %v9093 = vpop.f32.mrb[0].mxu0
  %v9094 = vadd.f32 %v9051, %v9093
  %v9095 = vpop.f32.mrb[0].mxu0
  %v9096 = vadd.f32 %v9053, %v9095
  %v9097 = vpop.f32.mrb[0].mxu0
  %v9098 = vadd.f32 %v9055, %v9097
  %v9099 = vpop.f32.mrb[0].mxu0
  %v9100 = vadd.f32 %v9057, %v9099
  %9101 = vdwg.mxu0
  %9102 = vmatprep.subr.bf16.mxu0 %v5795
  %9103 = vmatpush1.bf16.msra.mxu0 %v5794
  %9104 = vmatprep.subr.bf16.mxu0 %v5827
  %9105 = vmatpush1.bf16.msra.mxu0 %v5826
  %9106 = vmatprep.subr.bf16.mxu0 %v5859
  %9107 = vmatpush1.bf16.msra.mxu0 %v5858
  %9108 = vmatprep.subr.bf16.mxu0 %v5891
  %9109 = vmatpush1.bf16.msra.mxu0 %v5890
  %9110 = vmatprep.subr.bf16.mxu0 %v5923
  %9111 = vmatpush1.bf16.msra.mxu0 %v5922
  %9112 = vmatprep.subr.bf16.mxu0 %v5955
  %9113 = vmatpush1.bf16.msra.mxu0 %v5954
  %9114 = vmatprep.subr.bf16.mxu0 %v5987
  %9115 = vmatpush1.bf16.msra.mxu0 %v5986
  %9116 = vmatprep.subr.bf16.mxu0 %v6019
  %9117 = vmatpush1.bf16.msra.mxu0 %v6018
  %9118 = vmatprep.subr.bf16.mxu0 %v6051
  %9119 = vmatpush1.bf16.msra.mxu0 %v6050
  %9120 = vmatprep.subr.bf16.mxu0 %v6083
  %9121 = vmatpush1.bf16.msra.mxu0 %v6082
  %9122 = vmatprep.subr.bf16.mxu0 %v6115
  %9123 = vmatpush1.bf16.msra.mxu0 %v6114
  %9124 = vmatprep.subr.bf16.mxu0 %v6147
  %9125 = vmatpush1.bf16.msra.mxu0 %v6146
  %9126 = vmatprep.subr.bf16.mxu0 %v6179
  %9127 = vmatpush1.bf16.msra.mxu0 %v6178
  %9128 = vmatprep.subr.bf16.mxu0 %v6211
  %9129 = vmatpush1.bf16.msra.mxu0 %v6210
  %9130 = vmatprep.subr.bf16.mxu0 %v6243
  %9131 = vmatpush1.bf16.msra.mxu0 %v6242
  %9132 = vmatprep.subr.bf16.mxu0 %v6275
  %9133 = vmatpush1.bf16.msra.mxu0 %v6274
  %9134 = vmatprep.mubr.bf16.mxu0 %v1497
  %9135 = vmatmul.mubr.bf16.gmra.mrb[0].mxu0 %v1496
  %v9136 = vpop.f32.mrb[0].mxu0
  %v9137 = vadd.f32 %v2655, %v9136
  %v9138 = vpop.f32.mrb[0].mxu0
  %v9139 = vadd.f32 %v2659, %v9138
  %v9140 = vpop.f32.mrb[0].mxu0
  %v9141 = vadd.f32 %v2655, %v9140
  %v9142 = vpop.f32.mrb[0].mxu0
  %v9143 = vadd.f32 %v2659, %v9142
  %9144 = vdwg.mxu0
  %9145 = vmatprep.subr.bf16.mxu0 %v6307
  %9146 = vmatpush1.bf16.msra.mxu0 %v6306
  %9147 = vmatprep.subr.bf16.mxu0 %v6339
  %9148 = vmatpush1.bf16.msra.mxu0 %v6338
  %9149 = vmatprep.subr.bf16.mxu0 %v6371
  %9150 = vmatpush1.bf16.msra.mxu0 %v6370
  %9151 = vmatprep.subr.bf16.mxu0 %v6403
  %9152 = vmatpush1.bf16.msra.mxu0 %v6402
  %9153 = vmatprep.subr.bf16.mxu0 %v6435
  %9154 = vmatpush1.bf16.msra.mxu0 %v6434
  %9155 = vmatprep.subr.bf16.mxu0 %v6467
  %9156 = vmatpush1.bf16.msra.mxu0 %v6466
  %9157 = vmatprep.subr.bf16.mxu0 %v6499
  %9158 = vmatpush1.bf16.msra.mxu0 %v6498
  %9159 = vmatprep.subr.bf16.mxu0 %v6531
  %9160 = vmatpush1.bf16.msra.mxu0 %v6530
  %9161 = vmatprep.subr.bf16.mxu0 %v6563
  %9162 = vmatpush1.bf16.msra.mxu0 %v6562
  %9163 = vmatprep.subr.bf16.mxu0 %v6595
  %9164 = vmatpush1.bf16.msra.mxu0 %v6594
  %9165 = vmatprep.subr.bf16.mxu0 %v6627
  %9166 = vmatpush1.bf16.msra.mxu0 %v6626
  %9167 = vmatprep.subr.bf16.mxu0 %v6659
  %9168 = vmatpush1.bf16.msra.mxu0 %v6658
  %9169 = vmatprep.subr.bf16.mxu0 %v6691
  %9170 = vmatpush1.bf16.msra.mxu0 %v6690
  %9171 = vmatprep.subr.bf16.mxu0 %v6723
  %9172 = vmatpush1.bf16.msra.mxu0 %v6722
  %9173 = vmatprep.subr.bf16.mxu0 %v6755
  %9174 = vmatpush1.bf16.msra.mxu0 %v6754
  %9175 = vmatprep.subr.bf16.mxu0 %v6787
  %9176 = vmatpush1.bf16.msra.mxu0 %v6786
  %9177 = vmatprep.mubr.bf16.mxu0 %v1499
  %9178 = vmatmul.mubr.bf16.gmra.mrb[0].mxu0 %v1498
  %v9179 = vpop.f32.mrb[0].mxu0
  %v9180 = vadd.f32 %v9137, %v9179
  %v9181 = vpop.f32.mrb[0].mxu0
  %v9182 = vadd.f32 %v9139, %v9181
  %v9183 = vpop.f32.mrb[0].mxu0
  %v9184 = vadd.f32 %v9141, %v9183
  %v9185 = vpop.f32.mrb[0].mxu0
  %v9186 = vadd.f32 %v9143, %v9185
  %9187 = vdwg.mxu0
  %v9188 = vmax.f32 %v7890, %v7976
  %v9189 = vmax.f32 %v7892, %v7978
  %v9190 = vmax.f32 %v9188, %v8062
  %v9191 = vmax.f32 %v9189, %v8064
  %v9192 = vmax.f32 %v9190, %v8148
  %v9193 = vmax.f32 %v9191, %v8150
  %v9194 = vmax.f32 %v9192, %v8234
  %v9195 = vmax.f32 %v9193, %v8236
  %v9196 = vmax.f32 %v9194, %v8320
  %v9197 = vmax.f32 %v9195, %v8322
  %v9198 = vmax.f32 %v9196, %v8406
  %v9199 = vmax.f32 %v9197, %v8408
  %v9200 = vmax.f32 %v9198, %v8492
  %v9201 = vmax.f32 %v9199, %v8494
  %v9202 = vmax.f32 %v9200, %v8578
  %v9203 = vmax.f32 %v9201, %v8580
  %v9204 = vmax.f32 %v9202, %v8664
  %v9205 = vmax.f32 %v9203, %v8666
  %v9206 = vmax.f32 %v9204, %v8750
  %v9207 = vmax.f32 %v9205, %v8752
  %v9208 = vmax.f32 %v9206, %v8836
  %v9209 = vmax.f32 %v9207, %v8838
  %v9210 = vmax.f32 %v9208, %v8922
  %v9211 = vmax.f32 %v9209, %v8924
  %v9212 = vmax.f32 %v9210, %v9008
  %v9213 = vmax.f32 %v9211, %v9010
  %v9214 = vmax.f32 %v9212, %v9094
  %v9215 = vmax.f32 %v9213, %v9096
  %v9216 = vmax.f32 %v9214, %v9180
  %v9217 = vmax.f32 %v9215, %v9182
  %v9218 = vmax.f32 %v9216, %v9217
  %9219 = vmax.xlane.f32.xlu0 %v9218
  %v9220 = vpop.xlane.xlu0 %9219
  %v9221 = vmax.f32 %v7894, %v7980
  %v9222 = vmax.f32 %v7896, %v7982
  %v9223 = vmax.f32 %v9221, %v8066
  %v9224 = vmax.f32 %v9222, %v8068
  %v9225 = vmax.f32 %v9223, %v8152
  %v9226 = vmax.f32 %v9224, %v8154
  %v9227 = vmax.f32 %v9225, %v8238
  %v9228 = vmax.f32 %v9226, %v8240
  %v9229 = vmax.f32 %v9227, %v8324
  %v9230 = vmax.f32 %v9228, %v8326
  %v9231 = vmax.f32 %v9229, %v8410
  %v9232 = vmax.f32 %v9230, %v8412
  %v9233 = vmax.f32 %v9231, %v8496
  %v9234 = vmax.f32 %v9232, %v8498
  %v9235 = vmax.f32 %v9233, %v8582
  %v9236 = vmax.f32 %v9234, %v8584
  %v9237 = vmax.f32 %v9235, %v8668
  %v9238 = vmax.f32 %v9236, %v8670
  %v9239 = vmax.f32 %v9237, %v8754
  %v9240 = vmax.f32 %v9238, %v8756
  %v9241 = vmax.f32 %v9239, %v8840
  %v9242 = vmax.f32 %v9240, %v8842
  %v9243 = vmax.f32 %v9241, %v8926
  %v9244 = vmax.f32 %v9242, %v8928
  %v9245 = vmax.f32 %v9243, %v9012
  %v9246 = vmax.f32 %v9244, %v9014
  %v9247 = vmax.f32 %v9245, %v9098
  %v9248 = vmax.f32 %v9246, %v9100
  %v9249 = vmax.f32 %v9247, %v9184
  %v9250 = vmax.f32 %v9248, %v9186
  %v9251 = vmax.f32 %v9249, %v9250
  %9252 = vmax.xlane.f32.xlu0 %v9251
  %v9253 = vpop.xlane.xlu0 %9252
  %v9254 = vsub.f32 %v7890, %v9220
  %v9255 = vsub.f32 %v7892, %v9220
  %v9256 = vsub.f32 %v7976, %v9220
  %v9257 = vsub.f32 %v7978, %v9220
  %v9258 = vsub.f32 %v8062, %v9220
  %v9259 = vsub.f32 %v8064, %v9220
  %v9260 = vsub.f32 %v8148, %v9220
  %v9261 = vsub.f32 %v8150, %v9220
  %v9262 = vsub.f32 %v8234, %v9220
  %v9263 = vsub.f32 %v8236, %v9220
  %v9264 = vsub.f32 %v8320, %v9220
  %v9265 = vsub.f32 %v8322, %v9220
  %v9266 = vsub.f32 %v8406, %v9220
  %v9267 = vsub.f32 %v8408, %v9220
  %v9268 = vsub.f32 %v8492, %v9220
  %v9269 = vsub.f32 %v8494, %v9220
  %v9270 = vsub.f32 %v8578, %v9220
  %v9271 = vsub.f32 %v8580, %v9220
  %v9272 = vsub.f32 %v8664, %v9220
  %v9273 = vsub.f32 %v8666, %v9220
  %v9274 = vsub.f32 %v8750, %v9220
  %v9275 = vsub.f32 %v8752, %v9220
  %v9276 = vsub.f32 %v8836, %v9220
  %v9277 = vsub.f32 %v8838, %v9220
  %v9278 = vsub.f32 %v8922, %v9220
  %v9279 = vsub.f32 %v8924, %v9220
  %v9280 = vsub.f32 %v9008, %v9220
  %v9281 = vsub.f32 %v9010, %v9220
  %v9282 = vsub.f32 %v9094, %v9220
  %v9283 = vsub.f32 %v9096, %v9220
  %v9284 = vsub.f32 %v9180, %v9220
  %v9285 = vsub.f32 %v9182, %v9220
  %v9286 = vsub.f32 %v7894, %v9253
  %v9287 = vsub.f32 %v7896, %v9253
  %v9288 = vsub.f32 %v7980, %v9253
  %v9289 = vsub.f32 %v7982, %v9253
  %v9290 = vsub.f32 %v8066, %v9253
  %v9291 = vsub.f32 %v8068, %v9253
  %v9292 = vsub.f32 %v8152, %v9253
  %v9293 = vsub.f32 %v8154, %v9253
  %v9294 = vsub.f32 %v8238, %v9253
  %v9295 = vsub.f32 %v8240, %v9253
  %v9296 = vsub.f32 %v8324, %v9253
  %v9297 = vsub.f32 %v8326, %v9253
  %v9298 = vsub.f32 %v8410, %v9253
  %v9299 = vsub.f32 %v8412, %v9253
  %v9300 = vsub.f32 %v8496, %v9253
  %v9301 = vsub.f32 %v8498, %v9253
  %v9302 = vsub.f32 %v8582, %v9253
  %v9303 = vsub.f32 %v8584, %v9253
  %v9304 = vsub.f32 %v8668, %v9253
  %v9305 = vsub.f32 %v8670, %v9253
  %v9306 = vsub.f32 %v8754, %v9253
  %v9307 = vsub.f32 %v8756, %v9253
  %v9308 = vsub.f32 %v8840, %v9253
  %v9309 = vsub.f32 %v8842, %v9253
  %v9310 = vsub.f32 %v8926, %v9253
  %v9311 = vsub.f32 %v8928, %v9253
  %v9312 = vsub.f32 %v9012, %v9253
  %v9313 = vsub.f32 %v9014, %v9253
  %v9314 = vsub.f32 %v9098, %v9253
  %v9315 = vsub.f32 %v9100, %v9253
  %v9316 = vsub.f32 %v9184, %v9253
  %v9317 = vsub.f32 %v9186, %v9253
  %v9318 = vmul.f32 %v9254, 1.442695
  %v9319 = vpow.pop %v9318
  %v9320 = vmul.f32 %v9255, 1.442695
  %v9321 = vpow.pop %v9320
  %v9322 = vmul.f32 %v9256, 1.442695
  %v9323 = vpow.pop %v9322
  %v9324 = vmul.f32 %v9257, 1.442695
  %v9325 = vpow.pop %v9324
  %v9326 = vmul.f32 %v9258, 1.442695
  %v9327 = vpow.pop %v9326
  %v9328 = vmul.f32 %v9259, 1.442695
  %v9329 = vpow.pop %v9328
  %v9330 = vmul.f32 %v9260, 1.442695
  %v9331 = vpow.pop %v9330
  %v9332 = vmul.f32 %v9261, 1.442695
  %v9333 = vpow.pop %v9332
  %v9334 = vmul.f32 %v9262, 1.442695
  %v9335 = vpow.pop %v9334
  %v9336 = vmul.f32 %v9263, 1.442695
  %v9337 = vpow.pop %v9336
  %v9338 = vmul.f32 %v9264, 1.442695
  %v9339 = vpow.pop %v9338
  %v9340 = vmul.f32 %v9265, 1.442695
  %v9341 = vpow.pop %v9340
  %v9342 = vmul.f32 %v9266, 1.442695
  %v9343 = vpow.pop %v9342
  %v9344 = vmul.f32 %v9267, 1.442695
  %v9345 = vpow.pop %v9344
  %v9346 = vmul.f32 %v9268, 1.442695
  %v9347 = vpow.pop %v9346
  %v9348 = vmul.f32 %v9269, 1.442695
  %v9349 = vpow.pop %v9348
  %v9350 = vmul.f32 %v9270, 1.442695
  %v9351 = vpow.pop %v9350
  %v9352 = vmul.f32 %v9271, 1.442695
  %v9353 = vpow.pop %v9352
  %v9354 = vmul.f32 %v9272, 1.442695
  %v9355 = vpow.pop %v9354
  %v9356 = vmul.f32 %v9273, 1.442695
  %v9357 = vpow.pop %v9356
  %v9358 = vmul.f32 %v9274, 1.442695
  %v9359 = vpow.pop %v9358
  %v9360 = vmul.f32 %v9275, 1.442695
  %v9361 = vpow.pop %v9360
  %v9362 = vmul.f32 %v9276, 1.442695
  %v9363 = vpow.pop %v9362
  %v9364 = vmul.f32 %v9277, 1.442695
  %v9365 = vpow.pop %v9364
  %v9366 = vmul.f32 %v9278, 1.442695
  %v9367 = vpow.pop %v9366
  %v9368 = vmul.f32 %v9279, 1.442695
  %v9369 = vpow.pop %v9368
  %v9370 = vmul.f32 %v9280, 1.442695
  %v9371 = vpow.pop %v9370
  %v9372 = vmul.f32 %v9281, 1.442695
  %v9373 = vpow.pop %v9372
  %v9374 = vmul.f32 %v9282, 1.442695
  %v9375 = vpow.pop %v9374
  %v9376 = vmul.f32 %v9283, 1.442695
  %v9377 = vpow.pop %v9376
  %v9378 = vmul.f32 %v9284, 1.442695
  %v9379 = vpow.pop %v9378
  %v9380 = vmul.f32 %v9285, 1.442695
  %v9381 = vpow.pop %v9380
  %v9382 = vmul.f32 %v9286, 1.442695
  %v9383 = vpow.pop %v9382
  %v9384 = vmul.f32 %v9287, 1.442695
  %v9385 = vpow.pop %v9384
  %v9386 = vmul.f32 %v9288, 1.442695
  %v9387 = vpow.pop %v9386
  %v9388 = vmul.f32 %v9289, 1.442695
  %v9389 = vpow.pop %v9388
  %v9390 = vmul.f32 %v9290, 1.442695
  %v9391 = vpow.pop %v9390
  %v9392 = vmul.f32 %v9291, 1.442695
  %v9393 = vpow.pop %v9392
  %v9394 = vmul.f32 %v9292, 1.442695
  %v9395 = vpow.pop %v9394
  %v9396 = vmul.f32 %v9293, 1.442695
  %v9397 = vpow.pop %v9396
  %v9398 = vmul.f32 %v9294, 1.442695
  %v9399 = vpow.pop %v9398
  %v9400 = vmul.f32 %v9295, 1.442695
  %v9401 = vpow.pop %v9400
  %v9402 = vmul.f32 %v9296, 1.442695
  %v9403 = vpow.pop %v9402
  %v9404 = vmul.f32 %v9297, 1.442695
  %v9405 = vpow.pop %v9404
  %v9406 = vmul.f32 %v9298, 1.442695
  %v9407 = vpow.pop %v9406
  %v9408 = vmul.f32 %v9299, 1.442695
  %v9409 = vpow.pop %v9408
  %v9410 = vmul.f32 %v9300, 1.442695
  %v9411 = vpow.pop %v9410
  %v9412 = vmul.f32 %v9301, 1.442695
  %v9413 = vpow.pop %v9412
  %v9414 = vmul.f32 %v9302, 1.442695
  %v9415 = vpow.pop %v9414
  %v9416 = vmul.f32 %v9303, 1.442695
  %v9417 = vpow.pop %v9416
  %v9418 = vmul.f32 %v9304, 1.442695
  %v9419 = vpow.pop %v9418
  %v9420 = vmul.f32 %v9305, 1.442695
  %v9421 = vpow.pop %v9420
  %v9422 = vmul.f32 %v9306, 1.442695
  %v9423 = vpow.pop %v9422
  %v9424 = vmul.f32 %v9307, 1.442695
  %v9425 = vpow.pop %v9424
  %v9426 = vmul.f32 %v9308, 1.442695
  %v9427 = vpow.pop %v9426
  %v9428 = vmul.f32 %v9309, 1.442695
  %v9429 = vpow.pop %v9428
  %v9430 = vmul.f32 %v9310, 1.442695
  %v9431 = vpow.pop %v9430
  %v9432 = vmul.f32 %v9311, 1.442695
  %v9433 = vpow.pop %v9432
  %v9434 = vmul.f32 %v9312, 1.442695
  %v9435 = vpow.pop %v9434
  %v9436 = vmul.f32 %v9313, 1.442695
  %v9437 = vpow.pop %v9436
  %v9438 = vmul.f32 %v9314, 1.442695
  %v9439 = vpow.pop %v9438
  %v9440 = vmul.f32 %v9315, 1.442695
  %v9441 = vpow.pop %v9440
  %v9442 = vmul.f32 %v9316, 1.442695
  %v9443 = vpow.pop %v9442
  %v9444 = vmul.f32 %v9317, 1.442695
  %v9445 = vpow.pop %v9444
  %v9446 = vadd.f32 %v9319, %v9321
  %v9447 = vadd.f32 %v9446, %v9323
  %v9448 = vadd.f32 %v9447, %v9325
  %v9449 = vadd.f32 %v9448, %v9327
  %v9450 = vadd.f32 %v9449, %v9329
  %v9451 = vadd.f32 %v9450, %v9331
  %v9452 = vadd.f32 %v9451, %v9333
  %v9453 = vadd.f32 %v9452, %v9335
  %v9454 = vadd.f32 %v9453, %v9337
  %v9455 = vadd.f32 %v9454, %v9339
  %v9456 = vadd.f32 %v9455, %v9341
  %v9457 = vadd.f32 %v9456, %v9343
  %v9458 = vadd.f32 %v9457, %v9345
  %v9459 = vadd.f32 %v9458, %v9347
  %v9460 = vadd.f32 %v9459, %v9349
  %v9461 = vadd.f32 %v9460, %v9351
  %v9462 = vadd.f32 %v9461, %v9353
  %v9463 = vadd.f32 %v9462, %v9355
  %v9464 = vadd.f32 %v9463, %v9357
  %v9465 = vadd.f32 %v9464, %v9359
  %v9466 = vadd.f32 %v9465, %v9361
  %v9467 = vadd.f32 %v9466, %v9363
  %v9468 = vadd.f32 %v9467, %v9365
  %v9469 = vadd.f32 %v9468, %v9367
  %v9470 = vadd.f32 %v9469, %v9369
  %v9471 = vadd.f32 %v9470, %v9371
  %v9472 = vadd.f32 %v9471, %v9373
  %v9473 = vadd.f32 %v9472, %v9375
  %v9474 = vadd.f32 %v9473, %v9377
  %v9475 = vadd.f32 %v9474, %v9379
  %v9476 = vadd.f32 %v9475, %v9381
  %9477 = vadd.xlane.f32.xlu0 %v9476
  %v9478 = vpop.xlane.xlu0 %9477
  %v9479 = vadd.f32 %v9383, %v9385
  %v9480 = vadd.f32 %v9479, %v9387
  %v9481 = vadd.f32 %v9480, %v9389
  %v9482 = vadd.f32 %v9481, %v9391
  %v9483 = vadd.f32 %v9482, %v9393
  %v9484 = vadd.f32 %v9483, %v9395
  %v9485 = vadd.f32 %v9484, %v9397
  %v9486 = vadd.f32 %v9485, %v9399
  %v9487 = vadd.f32 %v9486, %v9401
  %v9488 = vadd.f32 %v9487, %v9403
  %v9489 = vadd.f32 %v9488, %v9405
  %v9490 = vadd.f32 %v9489, %v9407
  %v9491 = vadd.f32 %v9490, %v9409
  %v9492 = vadd.f32 %v9491, %v9411
  %v9493 = vadd.f32 %v9492, %v9413
  %v9494 = vadd.f32 %v9493, %v9415
  %v9495 = vadd.f32 %v9494, %v9417
  %v9496 = vadd.f32 %v9495, %v9419
  %v9497 = vadd.f32 %v9496, %v9421
  %v9498 = vadd.f32 %v9497, %v9423
  %v9499 = vadd.f32 %v9498, %v9425
  %v9500 = vadd.f32 %v9499, %v9427
  %v9501 = vadd.f32 %v9500, %v9429
  %v9502 = vadd.f32 %v9501, %v9431
  %v9503 = vadd.f32 %v9502, %v9433
  %v9504 = vadd.f32 %v9503, %v9435
  %v9505 = vadd.f32 %v9504, %v9437
  %v9506 = vadd.f32 %v9505, %v9439
  %v9507 = vadd.f32 %v9506, %v9441
  %v9508 = vadd.f32 %v9507, %v9443
  %v9509 = vadd.f32 %v9508, %v9445
  %9510 = vadd.xlane.f32.xlu0 %v9509
  %v9511 = vpop.xlane.xlu0 %9510
  %v9512 = vrcp.pop %v9478
  %v9513 = vrcp.pop %v9511
  %v9514 = vmul.f32 %v9478, %v9512
  %v9515 = vmul.f32 %v9511, %v9513
  %v9516 = vsub.f32 2.0, %v9514
  %v9517 = vsub.f32 2.0, %v9515
  %v9518 = vmul.f32 %v9512, %v9516
  %v9519 = vmul.f32 %v9513, %v9517
  %v9520 = vmul.f32 %v9319, %v9518
  %v9521 = vmul.f32 %v9321, %v9518
  %v9522 = vmul.f32 %v9323, %v9518
  %v9523 = vmul.f32 %v9325, %v9518
  %v9524 = vmul.f32 %v9327, %v9518
  %v9525 = vmul.f32 %v9329, %v9518
  %v9526 = vmul.f32 %v9331, %v9518
  %v9527 = vmul.f32 %v9333, %v9518
  %v9528 = vmul.f32 %v9335, %v9518
  %v9529 = vmul.f32 %v9337, %v9518
  %v9530 = vmul.f32 %v9339, %v9518
  %v9531 = vmul.f32 %v9341, %v9518
  %v9532 = vmul.f32 %v9343, %v9518
  %v9533 = vmul.f32 %v9345, %v9518
  %v9534 = vmul.f32 %v9347, %v9518
  %v9535 = vmul.f32 %v9349, %v9518
  %v9536 = vmul.f32 %v9351, %v9518
  %v9537 = vmul.f32 %v9353, %v9518
  %v9538 = vmul.f32 %v9355, %v9518
  %v9539 = vmul.f32 %v9357, %v9518
  %v9540 = vmul.f32 %v9359, %v9518
  %v9541 = vmul.f32 %v9361, %v9518
  %v9542 = vmul.f32 %v9363, %v9518
  %v9543 = vmul.f32 %v9365, %v9518
  %v9544 = vmul.f32 %v9367, %v9518
  %v9545 = vmul.f32 %v9369, %v9518
  %v9546 = vmul.f32 %v9371, %v9518
  %v9547 = vmul.f32 %v9373, %v9518
  %v9548 = vmul.f32 %v9375, %v9518
  %v9549 = vmul.f32 %v9377, %v9518
  %v9550 = vmul.f32 %v9379, %v9518
  %v9551 = vmul.f32 %v9381, %v9518
  %v9552 = vmul.f32 %v9383, %v9519
  %v9553 = vmul.f32 %v9385, %v9519
  %v9554 = vmul.f32 %v9387, %v9519
  %v9555 = vmul.f32 %v9389, %v9519
  %v9556 = vmul.f32 %v9391, %v9519
  %v9557 = vmul.f32 %v9393, %v9519
  %v9558 = vmul.f32 %v9395, %v9519
  %v9559 = vmul.f32 %v9397, %v9519
  %v9560 = vmul.f32 %v9399, %v9519
  %v9561 = vmul.f32 %v9401, %v9519
  %v9562 = vmul.f32 %v9403, %v9519
  %v9563 = vmul.f32 %v9405, %v9519
  %v9564 = vmul.f32 %v9407, %v9519
  %v9565 = vmul.f32 %v9409, %v9519
  %v9566 = vmul.f32 %v9411, %v9519
  %v9567 = vmul.f32 %v9413, %v9519
  %v9568 = vmul.f32 %v9415, %v9519
  %v9569 = vmul.f32 %v9417, %v9519
  %v9570 = vmul.f32 %v9419, %v9519
  %v9571 = vmul.f32 %v9421, %v9519
  %v9572 = vmul.f32 %v9423, %v9519
  %v9573 = vmul.f32 %v9425, %v9519
  %v9574 = vmul.f32 %v9427, %v9519
  %v9575 = vmul.f32 %v9429, %v9519
  %v9576 = vmul.f32 %v9431, %v9519
  %v9577 = vmul.f32 %v9433, %v9519
  %v9578 = vmul.f32 %v9435, %v9519
  %v9579 = vmul.f32 %v9437, %v9519
  %v9580 = vmul.f32 %v9439, %v9519
  %v9581 = vmul.f32 %v9441, %v9519
  %v9582 = vmul.f32 %v9443, %v9519
  %v9583 = vmul.f32 %v9445, %v9519
  %9584 = vst [vmem:[%s5] sm:$0xff] %v9520
  %9585 = vst [vmem:[%s5 + $0x8] sm:$0xff] %v9521
  %9586 = vst [vmem:[%s5 + $0x10] sm:$0xff] %v9522
  %9587 = vst [vmem:[%s5 + $0x18] sm:$0xff] %v9523
  %9588 = vst [vmem:[%s5 + $0x20] sm:$0xff] %v9524
  %9589 = vst [vmem:[%s5 + $0x28] sm:$0xff] %v9525
  %9590 = vst [vmem:[%s5 + $0x30] sm:$0xff] %v9526
  %9591 = vst [vmem:[%s5 + $0x38] sm:$0xff] %v9527
  %9592 = vst [vmem:[%s5 + $0x40] sm:$0xff] %v9528
  %9593 = vst [vmem:[%s5 + $0x48] sm:$0xff] %v9529
  %9594 = vst [vmem:[%s5 + $0x50] sm:$0xff] %v9530
  %9595 = vst [vmem:[%s5 + $0x58] sm:$0xff] %v9531
  %9596 = vst [vmem:[%s5 + $0x60] sm:$0xff] %v9532
  %9597 = vst [vmem:[%s5 + $0x68] sm:$0xff] %v9533
  %9598 = vst [vmem:[%s5 + $0x70] sm:$0xff] %v9534
  %9599 = vst [vmem:[%s5 + $0x78] sm:$0xff] %v9535
  %9600 = vst [vmem:[%s5 + $0x80] sm:$0xff] %v9536
  %9601 = vst [vmem:[%s5 + $0x88] sm:$0xff] %v9537
  %9602 = vst [vmem:[%s5 + $0x90] sm:$0xff] %v9538
  %9603 = vst [vmem:[%s5 + $0x98] sm:$0xff] %v9539
  %9604 = vst [vmem:[%s5 + $0xa0] sm:$0xff] %v9540
  %9605 = vst [vmem:[%s5 + $0xa8] sm:$0xff] %v9541
  %9606 = vst [vmem:[%s5 + $0xb0] sm:$0xff] %v9542
  %9607 = vst [vmem:[%s5 + $0xb8] sm:$0xff] %v9543
  %9608 = vst [vmem:[%s5 + $0xc0] sm:$0xff] %v9544
  %9609 = vst [vmem:[%s5 + $0xc8] sm:$0xff] %v9545
  %9610 = vst [vmem:[%s5 + $0xd0] sm:$0xff] %v9546
  %9611 = vst [vmem:[%s5 + $0xd8] sm:$0xff] %v9547
  %9612 = vst [vmem:[%s5 + $0xe0] sm:$0xff] %v9548
  %9613 = vst [vmem:[%s5 + $0xe8] sm:$0xff] %v9549
  %9614 = vst [vmem:[%s5 + $0xf0] sm:$0xff] %v9550
  %9615 = vst [vmem:[%s5 + $0xf8] sm:$0xff] %v9551
  %9616 = vst [vmem:[%s5 + $0x100] sm:$0xff] %v9552
  %9617 = vst [vmem:[%s5 + $0x108] sm:$0xff] %v9553
  %9618 = vst [vmem:[%s5 + $0x110] sm:$0xff] %v9554
  %9619 = vst [vmem:[%s5 + $0x118] sm:$0xff] %v9555
  %9620 = vst [vmem:[%s5 + $0x120] sm:$0xff] %v9556
  %9621 = vst [vmem:[%s5 + $0x128] sm:$0xff] %v9557
  %9622 = vst [vmem:[%s5 + $0x130] sm:$0xff] %v9558
  %9623 = vst [vmem:[%s5 + $0x138] sm:$0xff] %v9559
  %9624 = vst [vmem:[%s5 + $0x140] sm:$0xff] %v9560
  %9625 = vst [vmem:[%s5 + $0x148] sm:$0xff] %v9561
  %9626 = vst [vmem:[%s5 + $0x150] sm:$0xff] %v9562
  %9627 = vst [vmem:[%s5 + $0x158] sm:$0xff] %v9563
  %9628 = vst [vmem:[%s5 + $0x160] sm:$0xff] %v9564
  %9629 = vst [vmem:[%s5 + $0x168] sm:$0xff] %v9565
  %9630 = vst [vmem:[%s5 + $0x170] sm:$0xff] %v9566
  %9631 = vst [vmem:[%s5 + $0x178] sm:$0xff] %v9567
  %9632 = vst [vmem:[%s5 + $0x180] sm:$0xff] %v9568
  %9633 = vst [vmem:[%s5 + $0x188] sm:$0xff] %v9569
  %9634 = vst [vmem:[%s5 + $0x190] sm:$0xff] %v9570
  %9635 = vst [vmem:[%s5 + $0x198] sm:$0xff] %v9571
  %9636 = vst [vmem:[%s5 + $0x1a0] sm:$0xff] %v9572
  %9637 = vst [vmem:[%s5 + $0x1a8] sm:$0xff] %v9573
  %9638 = vst [vmem:[%s5 + $0x1b0] sm:$0xff] %v9574
  %9639 = vst [vmem:[%s5 + $0x1b8] sm:$0xff] %v9575
  %9640 = vst [vmem:[%s5 + $0x1c0] sm:$0xff] %v9576
  %9641 = vst [vmem:[%s5 + $0x1c8] sm:$0xff] %v9577
  %9642 = vst [vmem:[%s5 + $0x1d0] sm:$0xff] %v9578
  %9643 = vst [vmem:[%s5 + $0x1d8] sm:$0xff] %v9579
  %9644 = vst [vmem:[%s5 + $0x1e0] sm:$0xff] %v9580
  %9645 = vst [vmem:[%s5 + $0x1e8] sm:$0xff] %v9581
  %9646 = vst [vmem:[%s5 + $0x1f0] sm:$0xff] %v9582
  %9647 = vst [vmem:[%s5 + $0x1f8] sm:$0xff] %v9583
  // Predicated region
  $region22: #{chess_mlp_forward.1} parent=0 // pred_check
    _
  $region23: #{chess_mlp_forward.1} parent=0 // pred_check_branch
    %9649 = sbr.rel (0) target = $region25
  $region24: #{chess_mlp_forward.1} parent=0 // pred_region
    _
  $region25: #{chess_mlp_forward.1} parent=0 // pred_fallthru
    _
  // Predicated region
  $region26: #{chess_mlp_forward.1} parent=0 // pred_check
    _
  $region27: #{chess_mlp_forward.1} parent=0 // pred_check_branch
    %9651 = sbr.rel (0) target = $region29
  $region28: #{chess_mlp_forward.1} parent=0 // pred_region
    _
  $region29: #{chess_mlp_forward.1} parent=0 // pred_fallthru
    _

</llo_original>
